<compile_context>
chip_gen: v6e
topology: v6e:2x2x1
jax: 0.10.0
libtpu: 0.0.40
codegen_flags: <defaults>
</compile_context>

<pallas_src>
import functools

import jax
import jax.numpy as jnp
from jax.experimental import pallas as pl
from jax.experimental.pallas import tpu as pltpu


def _round_up(n, m):
    return ((n + m - 1) // m) * m


# ---------------------------------------------------------------------------
# Fused DeformConv2d(kernel_size=3, padding=0, stride=1, modulation=False)
#   + eval-mode BatchNorm2d + ReLU.  One batch element per grid step.
# ---------------------------------------------------------------------------
def _deform_bn_relu_kernel(x_ext_ref, x_src_ref, pw_ref, pb_ref, cw_ref,
                           a_ref, b_ref, o_ref, *, H, W, Wp, Q):
    f32 = jnp.float32
    O = cw_ref.shape[1]
    C = cw_ref.shape[2]

    x_ext = x_ext_ref[0]          # (C, L)   padded flat image + guard zeros
    x_src = x_src_ref[0]          # (C*H, W) un-padded source pixels (2-D view)

    # --- in-kernel patch extraction (replaces the 9x HBM im2col blow-up) ----
    # patch for tap (kh, kw) at padded-flat output pixel q is x_ext[q + kh*Wp + kw]
    patches = jnp.concatenate(
        [x_ext[:, (kh * Wp + kw):(kh * Wp + kw) + Q]
         for kh in range(3) for kw in range(3)], axis=0)          # (9C, Q)

    # --- p_conv: both offset halves + bias in ONE MXU matmul ---------------
    off = jnp.dot(pw_ref[...], patches,
                  preferred_element_type=f32) + pb_ref[...]        # (18, Q)

    # --- base output-pixel coordinates (p_0), regenerated from iota --------
    qf = jax.lax.broadcasted_iota(jnp.int32, (1, Q), 1).astype(f32)
    ipf = jnp.floor(qf / Wp)           # padded row index  == i + 1 (valid q)
    jpf = qf - ipf * Wp                # padded col index  == j + 1 (valid q)

    r_iota = jax.lax.broadcasted_iota(jnp.int32, (H, Q), 0).astype(f32)
    c_iota = jax.lax.broadcasted_iota(jnp.int32, (W, Q), 0).astype(f32)

    acc = jnp.zeros((O, Q), dtype=f32)
    for n in range(9):                               # 3x3 deformable taps
        kh, kw = n // 3, n % 3
        # sample coordinates p = p_0 + p_n + offset   (1, Q)
        px = ipf + float(kh - 1) + off[n:n + 1, :]
        py = jpf + float(kw - 1) + off[9 + n:10 + n, :]

        fx = jnp.floor(px)
        fy = jnp.floor(py)
        lt_x = jnp.clip(fx, 0.0, H - 1.0)
        rb_x = jnp.clip(fx + 1.0, 0.0, H - 1.0)
        lt_y = jnp.clip(fy, 0.0, W - 1.0)
        rb_y = jnp.clip(fy + 1.0, 0.0, W - 1.0)
        pcx = jnp.clip(px, 0.0, H - 1.0)
        pcy = jnp.clip(py, 0.0, W - 1.0)

        # separable bilinear weights (exact PyTorch clamping semantics)
        wx_lt = 1.0 + (lt_x - pcx)
        wx_rb = 1.0 - (rb_x - pcx)
        wy_lt = 1.0 + (lt_y - pcy)
        wy_rb = 1.0 - (rb_y - pcy)

        # separable one-hot sampling matrices:  Sx (H, Q), Sy (W, Q)
        sx = (jnp.where(r_iota == lt_x, wx_lt, 0.0)
              + jnp.where(r_iota == rb_x, wx_rb, 0.0))
        sy = (jnp.where(c_iota == lt_y, wy_lt, 0.0)
              + jnp.where(c_iota == rb_y, wy_rb, 0.0))

        # gather-as-matmul over columns, then weighted row reduction
        t = jnp.dot(x_src, sy, preferred_element_type=f32)         # (C*H, Q)
        z = jnp.sum(t.reshape(C, H, Q) * sx[None, :, :], axis=1)   # (C, Q)

        # final 3x3/stride-3 conv == per-tap (O, C) contraction, accumulated
        acc = acc + jnp.dot(cw_ref[n], z, preferred_element_type=f32)

    # fused eval-mode BatchNorm (scale/shift) + ReLU, lane-dense store
    out = jnp.maximum(acc * a_ref[...] + b_ref[...], 0.0)
    o_ref[0] = out.astype(o_ref.dtype)


def _deform_conv_bn_relu(x, p_w, p_b, conv_w, bn_gamma, bn_beta, bn_mean,
                         bn_var, eps=1e-5):
    """One DeformConv2d(ks=3, padding=0) -> BatchNorm2d(eval) -> ReLU block."""
    B, C, H, W = x.shape
    O = conv_w.shape[0]
    K = 9
    Hp, Wp = H + 2, W + 2
    HWp = Hp * Wp
    Q = _round_up(HWp, 128)                  # lane-dense output-pixel axis
    L = _round_up(Q + 2 * (Wp + 1), 128)     # padded-flat input + guard zeros
    f32 = jnp.float32

    x = x.astype(f32)
    # once-padded flat image with guard zeros: every 3x3 shift is a static
    # in-bounds lane slice inside the kernel (no im2col round-trip to HBM).
    xpadf = jnp.pad(x, ((0, 0), (0, 0), (1, 1), (1, 1))).reshape(B, C, HWp)
    x_ext = jnp.pad(xpadf, ((0, 0), (0, 0), (Wp + 1, L - HWp - (Wp + 1))))
    # free 2-D view of the un-padded source pixels for the gather matmul.
    x_src = x.reshape(B, C * H, W)

    # weight / BN re-layout (host side, pure data movement)
    pw = jnp.transpose(p_w, (0, 2, 3, 1)).reshape(2 * K, K * C).astype(f32)
    pb = p_b.reshape(2 * K, 1).astype(f32)
    cw = jnp.transpose(conv_w, (2, 3, 0, 1)).reshape(K, O, C).astype(f32)
    inv_std = 1.0 / jnp.sqrt(bn_var + eps)
    bn_a = (bn_gamma * inv_std).reshape(O, 1).astype(f32)
    bn_b = (bn_beta - bn_mean * bn_gamma * inv_std).reshape(O, 1).astype(f32)

    out_flat = pl.pallas_call(
        functools.partial(_deform_bn_relu_kernel, H=H, W=W, Wp=Wp, Q=Q),
        out_shape=jax.ShapeDtypeStruct((B, O, Q), f32),
        grid_spec=pltpu.PrefetchScalarGridSpec(
            num_scalar_prefetch=0,
            grid=(B,),
            in_specs=[
                pl.BlockSpec((1, C, L), lambda b: (b, 0, 0)),         # padded flat x
                pl.BlockSpec((1, C * H, W), lambda b: (b, 0, 0)),     # source pixels
                pl.BlockSpec((2 * K, K * C), lambda b: (0, 0)),       # p_conv weight
                pl.BlockSpec((2 * K, 1), lambda b: (0, 0)),           # p_conv bias
                pl.BlockSpec((K, O, C), lambda b: (0, 0, 0)),         # conv weight
                pl.BlockSpec((O, 1), lambda b: (0, 0)),               # BN scale
                pl.BlockSpec((O, 1), lambda b: (0, 0)),               # BN shift
            ],
            out_specs=pl.BlockSpec((1, O, Q), lambda b: (b, 0, 0)),
        ),
        compiler_params=pltpu.CompilerParams(
            dimension_semantics=("parallel",),
        ),
    )(x_ext, x_src, pw, pb, cw, bn_a, bn_b)

    # drop the pad / guard columns (pure layout op)
    out = out_flat[:, :, :HWp].reshape(B, O, Hp, Wp)[:, :, 1:H + 1, 1:W + 1]
    return out


def deform_down(x, params):
    """Forward of `deform_down`: MaxPool2d(2) -> double_deform_conv (inference)."""
    B, C, H, W = x.shape
    # MaxPool2d(2) -- pure layout/reduce op, done in the wrapper.
    xp = x.reshape(B, C, H // 2, 2, W // 2, 2).max(axis=(3, 5))
    h = _deform_conv_bn_relu(xp, params["p_w1"], params["p_b1"], params["conv_w1"],
                             params["bn_g1"], params["bn_b1"],
                             params["bn_m1"], params["bn_v1"])
    h = _deform_conv_bn_relu(h, params["p_w2"], params["p_b2"], params["conv_w2"],
                             params["bn_g2"], params["bn_b2"],
                             params["bn_m2"], params["bn_v2"])
    return h


# ---------------------------------------------------------------------------
# Pure-JAX reference mirroring the PyTorch forward exactly (for validation).
# ---------------------------------------------------------------------------
def _deform_conv_ref(x, p_w, p_b, conv_w):
    B, C, H, W = x.shape
    N = 9
    O = conv_w.shape[0]
    offset = jax.lax.conv_general_dilated(
        x, p_w, window_strides=(1, 1), padding=((1, 1), (1, 1)),
        dimension_numbers=("NCHW", "OIHW", "NCHW")) + p_b[None, :, None, None]
    pn_x = jnp.repeat(jnp.arange(-1, 2, dtype=x.dtype), 3)
    pn_y = jnp.tile(jnp.arange(-1, 2, dtype=x.dtype), 3)
    ii, jj = jnp.meshgrid(jnp.arange(1, H + 1, dtype=x.dtype),
                          jnp.arange(1, W + 1, dtype=x.dtype), indexing="ij")
    p_x = ii[None, None] + pn_x[None, :, None, None] + offset[:, :N]
    p_y = jj[None, None] + pn_y[None, :, None, None] + offset[:, N:]
    fx = jnp.floor(p_x)
    fy = jnp.floor(p_y)
    lt_x = jnp.clip(fx, 0, H - 1)
    lt_y = jnp.clip(fy, 0, W - 1)
    rb_x = jnp.clip(fx + 1, 0, H - 1)
    rb_y = jnp.clip(fy + 1, 0, W - 1)
    pcx = jnp.clip(p_x, 0, H - 1)
    pcy = jnp.clip(p_y, 0, W - 1)
    g_lt = (1 + (lt_x - pcx)) * (1 + (lt_y - pcy))
    g_rb = (1 - (rb_x - pcx)) * (1 - (rb_y - pcy))
    g_lb = (1 + (lt_x - pcx)) * (1 - (rb_y - pcy))
    g_rt = (1 - (rb_x - pcx)) * (1 + (lt_y - pcy))
    x_flat = x.reshape(B, C, H * W)

    def gather(qx, qy):
        idx = (qx * W + qy).astype(jnp.int32).reshape(B, 1, -1)
        idx = jnp.broadcast_to(idx, (B, C, idx.shape[-1]))
        return jnp.take_along_axis(x_flat, idx, axis=-1).reshape(B, C, N, H, W)

    x_off = (g_lt[:, None] * gather(lt_x, lt_y)
             + g_rb[:, None] * gather(rb_x, rb_y)
             + g_lb[:, None] * gather(lt_x, rb_y)
             + g_rt[:, None] * gather(rb_x, lt_y))
    return jnp.einsum("ocn,bcnhw->bohw", conv_w.reshape(O, C, N), x_off)


def _bn_relu_ref(x, gamma, beta, mean, var, eps=1e-5):
    xn = (x - mean[None, :, None, None]) / jnp.sqrt(var[None, :, None, None] + eps)
    return jnp.maximum(xn * gamma[None, :, None, None] + beta[None, :, None, None], 0.0)


def _deform_down_ref(x, p):
    B, C, H, W = x.shape
    xp = x.reshape(B, C, H // 2, 2, W // 2, 2).max(axis=(3, 5))
    h = _deform_conv_ref(xp, p["p_w1"], p["p_b1"], p["conv_w1"])
    h = _bn_relu_ref(h, p["bn_g1"], p["bn_b1"], p["bn_m1"], p["bn_v1"])
    h = _deform_conv_ref(h, p["p_w2"], p["p_b2"], p["conv_w2"])
    h = _bn_relu_ref(h, p["bn_g2"], p["bn_b2"], p["bn_m2"], p["bn_v2"])
    return h


if __name__ == "__main__":
    key = jax.random.PRNGKey(0)
    B, in_ch, out_ch, H, W = 2, 4, 8, 16, 16
    ks = jax.random.split(key, 15)
    x = jax.random.normal(ks[0], (B, in_ch, H, W), dtype=jnp.float32)

    params = {
        # DeformConv2d 1 (in_ch -> out_ch)
        "p_w1": 0.1 * jax.random.normal(ks[1], (18, in_ch, 3, 3), jnp.float32),
        "p_b1": 0.1 * jax.random.normal(ks[2], (18,), jnp.float32),
        "conv_w1": 0.3 * jax.random.normal(ks[3], (out_ch, in_ch, 3, 3), jnp.float32),
        "bn_g1": 1.0 + 0.1 * jax.random.normal(ks[4], (out_ch,), jnp.float32),
        "bn_b1": 0.1 * jax.random.normal(ks[5], (out_ch,), jnp.float32),
        "bn_m1": 0.1 * jax.random.normal(ks[6], (out_ch,), jnp.float32),
        "bn_v1": 1.0 + 0.1 * jnp.abs(jax.random.normal(ks[7], (out_ch,), jnp.float32)),
        # DeformConv2d 2 (out_ch -> out_ch)
        "p_w2": 0.1 * jax.random.normal(ks[8], (18, out_ch, 3, 3), jnp.float32),
        "p_b2": 0.1 * jax.random.normal(ks[9], (18,), jnp.float32),
        "conv_w2": 0.3 * jax.random.normal(ks[10], (out_ch, out_ch, 3, 3), jnp.float32),
        "bn_g2": 1.0 + 0.1 * jax.random.normal(ks[11], (out_ch,), jnp.float32),
        "bn_b2": 0.1 * jax.random.normal(ks[12], (out_ch,), jnp.float32),
        "bn_m2": 0.1 * jax.random.normal(ks[13], (out_ch,), jnp.float32),
        "bn_v2": 1.0 + 0.1 * jnp.abs(jax.random.normal(ks[14], (out_ch,), jnp.float32)),
    }

    out = jax.jit(deform_down)(x, params)
    jax.block_until_ready(out)

    ref = _deform_down_ref(x, params)
    assert out.shape == (B, out_ch, H // 2, W // 2), out.shape
    assert jnp.allclose(out, ref, atol=1e-3, rtol=1e-3), \
        float(jnp.max(jnp.abs(out - ref)))

    print("KERNEL_OK")
</pallas_src>

<mosaic_0001>
module attributes {stable_mosaic.version = 11 : i64} {
  func.func @_deform_bn_relu_kernel(%arg0: i32, %arg1: memref<1x4x256xf32, #tpu.memory_space<vmem>>, %arg2: memref<1x32x8xf32, #tpu.memory_space<vmem>>, %arg3: memref<18x36xf32, #tpu.memory_space<vmem>>, %arg4: memref<18x1xf32, #tpu.memory_space<vmem>>, %arg5: memref<9x8x4xf32, #tpu.memory_space<vmem>>, %arg6: memref<8x1xf32, #tpu.memory_space<vmem>>, %arg7: memref<8x1xf32, #tpu.memory_space<vmem>>, %arg8: memref<1x8x128xf32, #tpu.memory_space<vmem>>) attributes {dimension_semantics = [#tpu.dimension_semantics<parallel>], iteration_bounds = array<i64: 2>, scalar_prefetch = 0 : i64, scratch_operands = 0 : i64, tpu.core_type = #tpu.core_type<tc>, window_params = [{transform_indices = @transform_0, window_bounds = array<i64: 1, 4, 256>}, {transform_indices = @transform_1, window_bounds = array<i64: 1, 32, 8>}, {pipeline_mode = #tpu.pipeline_mode<synchronous>, transform_indices = @transform_2, window_bounds = array<i64: 18, 36>}, {pipeline_mode = #tpu.pipeline_mode<synchronous>, transform_indices = @transform_3, window_bounds = array<i64: 18, 1>}, {pipeline_mode = #tpu.pipeline_mode<synchronous>, transform_indices = @transform_4, window_bounds = array<i64: 9, 8, 4>}, {pipeline_mode = #tpu.pipeline_mode<synchronous>, transform_indices = @transform_5, window_bounds = array<i64: 8, 1>}, {pipeline_mode = #tpu.pipeline_mode<synchronous>, transform_indices = @transform_6, window_bounds = array<i64: 8, 1>}, {transform_indices = @transform_7, window_bounds = array<i64: 1, 8, 128>}]} {
    %c0 = arith.constant 0 : index
    %c0_0 = arith.constant 0 : index
    %c0_1 = arith.constant 0 : index
    %0 = vector.load %arg1[%c0, %c0_0, %c0_1] : memref<1x4x256xf32, #tpu.memory_space<vmem>>, vector<1x4x256xf32>
    %1 = vector.shape_cast %0 : vector<1x4x256xf32> to vector<4x256xf32>
    %c0_2 = arith.constant 0 : index
    %c0_3 = arith.constant 0 : index
    %c0_4 = arith.constant 0 : index
    %2 = vector.load %arg2[%c0_2, %c0_3, %c0_4] : memref<1x32x8xf32, #tpu.memory_space<vmem>>, vector<1x32x8xf32>
    %3 = vector.shape_cast %2 : vector<1x32x8xf32> to vector<32x8xf32>
    %4 = vector.extract_strided_slice %1 {offsets = [0, 0], sizes = [4, 128], strides = [1, 1]} : vector<4x256xf32> to vector<4x128xf32>
    %5 = vector.extract_strided_slice %1 {offsets = [0, 1], sizes = [4, 128], strides = [1, 1]} : vector<4x256xf32> to vector<4x128xf32>
    %6 = vector.extract_strided_slice %1 {offsets = [0, 2], sizes = [4, 128], strides = [1, 1]} : vector<4x256xf32> to vector<4x128xf32>
    %7 = vector.extract_strided_slice %1 {offsets = [0, 10], sizes = [4, 128], strides = [1, 1]} : vector<4x256xf32> to vector<4x128xf32>
    %8 = vector.extract_strided_slice %1 {offsets = [0, 11], sizes = [4, 128], strides = [1, 1]} : vector<4x256xf32> to vector<4x128xf32>
    %9 = vector.extract_strided_slice %1 {offsets = [0, 12], sizes = [4, 128], strides = [1, 1]} : vector<4x256xf32> to vector<4x128xf32>
    %10 = vector.extract_strided_slice %1 {offsets = [0, 20], sizes = [4, 128], strides = [1, 1]} : vector<4x256xf32> to vector<4x128xf32>
    %11 = vector.extract_strided_slice %1 {offsets = [0, 21], sizes = [4, 128], strides = [1, 1]} : vector<4x256xf32> to vector<4x128xf32>
    %12 = vector.extract_strided_slice %1 {offsets = [0, 22], sizes = [4, 128], strides = [1, 1]} : vector<4x256xf32> to vector<4x128xf32>
    %13 = tpu.concatenate %4, %5, %6, %7, %8, %9, %10, %11, %12 in 0 : vector<4x128xf32>, vector<4x128xf32>, vector<4x128xf32>, vector<4x128xf32>, vector<4x128xf32>, vector<4x128xf32>, vector<4x128xf32>, vector<4x128xf32>, vector<4x128xf32> -> vector<36x128xf32>
    %c0_5 = arith.constant 0 : index
    %c0_6 = arith.constant 0 : index
    %14 = vector.load %arg3[%c0_5, %c0_6] : memref<18x36xf32, #tpu.memory_space<vmem>>, vector<18x36xf32>
    %cst = arith.constant dense<0.000000e+00> : vector<18x128xf32>
    %15 = tpu.matmul %14, %13, %cst {dimension_numbers = #tpu.dot_dimension_numbers<[1], [0], [0], [1], [0, 0, 1, 1], [], []>} : vector<18x36xf32>, vector<36x128xf32>, vector<18x128xf32> -> vector<18x128xf32>
    %c0_7 = arith.constant 0 : index
    %c0_8 = arith.constant 0 : index
    %16 = vector.load %arg4[%c0_7, %c0_8] : memref<18x1xf32, #tpu.memory_space<vmem>>, vector<18x1xf32>
    %17 = vector.broadcast %16 : vector<18x1xf32> to vector<18x128xf32>
    %18 = arith.addf %15, %17 : vector<18x128xf32>
    %19 = tpu.iota {dimensions = array<i32: 1>} : vector<1x128xi32>
    %20 = arith.sitofp %19 : vector<1x128xi32> to vector<1x128xf32>
    %cst_9 = arith.constant 1.000000e+01 : f32
    %21 = vector.broadcast %cst_9 : f32 to vector<1x128xf32>
    %22 = arith.divf %20, %21 : vector<1x128xf32>
    %23 = math.floor %22 : vector<1x128xf32>
    %cst_10 = arith.constant 1.000000e+01 : f32
    %24 = vector.broadcast %cst_10 : f32 to vector<1x128xf32>
    %25 = arith.mulf %23, %24 : vector<1x128xf32>
    %26 = arith.subf %20, %25 : vector<1x128xf32>
    %27 = tpu.iota {dimensions = array<i32: 0>} : vector<8x128xi32>
    %28 = arith.sitofp %27 : vector<8x128xi32> to vector<8x128xf32>
    %29 = tpu.iota {dimensions = array<i32: 0>} : vector<8x128xi32>
    %30 = arith.sitofp %29 : vector<8x128xi32> to vector<8x128xf32>
    %cst_11 = arith.constant 0.000000e+00 : f32
    %31 = vector.broadcast %cst_11 : f32 to vector<8x128xf32>
    %cst_12 = arith.constant -1.000000e+00 : f32
    %32 = vector.broadcast %cst_12 : f32 to vector<1x128xf32>
    %33 = arith.addf %23, %32 : vector<1x128xf32>
    %34 = vector.extract_strided_slice %18 {offsets = [0, 0], sizes = [1, 128], strides = [1, 1]} : vector<18x128xf32> to vector<1x128xf32>
    %35 = arith.addf %33, %34 : vector<1x128xf32>
    %cst_13 = arith.constant -1.000000e+00 : f32
    %36 = vector.broadcast %cst_13 : f32 to vector<1x128xf32>
    %37 = arith.addf %26, %36 : vector<1x128xf32>
    %38 = vector.extract_strided_slice %18 {offsets = [9, 0], sizes = [1, 128], strides = [1, 1]} : vector<18x128xf32> to vector<1x128xf32>
    %39 = arith.addf %37, %38 : vector<1x128xf32>
    %40 = math.floor %35 : vector<1x128xf32>
    %41 = math.floor %39 : vector<1x128xf32>
    %cst_14 = arith.constant 0.000000e+00 : f32
    %cst_15 = arith.constant 7.000000e+00 : f32
    %42 = vector.broadcast %cst_14 : f32 to vector<1x128xf32>
    %43 = arith.maximumf %42, %40 : vector<1x128xf32>
    %44 = vector.broadcast %cst_15 : f32 to vector<1x128xf32>
    %45 = arith.minimumf %44, %43 : vector<1x128xf32>
    %cst_16 = arith.constant 1.000000e+00 : f32
    %46 = vector.broadcast %cst_16 : f32 to vector<1x128xf32>
    %47 = arith.addf %40, %46 : vector<1x128xf32>
    %cst_17 = arith.constant 0.000000e+00 : f32
    %cst_18 = arith.constant 7.000000e+00 : f32
    %48 = vector.broadcast %cst_17 : f32 to vector<1x128xf32>
    %49 = arith.maximumf %48, %47 : vector<1x128xf32>
    %50 = vector.broadcast %cst_18 : f32 to vector<1x128xf32>
    %51 = arith.minimumf %50, %49 : vector<1x128xf32>
    %cst_19 = arith.constant 0.000000e+00 : f32
    %cst_20 = arith.constant 7.000000e+00 : f32
    %52 = vector.broadcast %cst_19 : f32 to vector<1x128xf32>
    %53 = arith.maximumf %52, %41 : vector<1x128xf32>
    %54 = vector.broadcast %cst_20 : f32 to vector<1x128xf32>
    %55 = arith.minimumf %54, %53 : vector<1x128xf32>
    %cst_21 = arith.constant 1.000000e+00 : f32
    %56 = vector.broadcast %cst_21 : f32 to vector<1x128xf32>
    %57 = arith.addf %41, %56 : vector<1x128xf32>
    %cst_22 = arith.constant 0.000000e+00 : f32
    %cst_23 = arith.constant 7.000000e+00 : f32
    %58 = vector.broadcast %cst_22 : f32 to vector<1x128xf32>
    %59 = arith.maximumf %58, %57 : vector<1x128xf32>
    %60 = vector.broadcast %cst_23 : f32 to vector<1x128xf32>
    %61 = arith.minimumf %60, %59 : vector<1x128xf32>
    %cst_24 = arith.constant 0.000000e+00 : f32
    %cst_25 = arith.constant 7.000000e+00 : f32
    %62 = vector.broadcast %cst_24 : f32 to vector<1x128xf32>
    %63 = arith.maximumf %62, %35 : vector<1x128xf32>
    %64 = vector.broadcast %cst_25 : f32 to vector<1x128xf32>
    %65 = arith.minimumf %64, %63 : vector<1x128xf32>
    %cst_26 = arith.constant 0.000000e+00 : f32
    %cst_27 = arith.constant 7.000000e+00 : f32
    %66 = vector.broadcast %cst_26 : f32 to vector<1x128xf32>
    %67 = arith.maximumf %66, %39 : vector<1x128xf32>
    %68 = vector.broadcast %cst_27 : f32 to vector<1x128xf32>
    %69 = arith.minimumf %68, %67 : vector<1x128xf32>
    %70 = arith.subf %45, %65 : vector<1x128xf32>
    %cst_28 = arith.constant 1.000000e+00 : f32
    %71 = vector.broadcast %cst_28 : f32 to vector<1x128xf32>
    %72 = arith.addf %71, %70 : vector<1x128xf32>
    %73 = arith.subf %51, %65 : vector<1x128xf32>
    %cst_29 = arith.constant 1.000000e+00 : f32
    %74 = vector.broadcast %cst_29 : f32 to vector<1x128xf32>
    %75 = arith.subf %74, %73 : vector<1x128xf32>
    %76 = arith.subf %55, %69 : vector<1x128xf32>
    %cst_30 = arith.constant 1.000000e+00 : f32
    %77 = vector.broadcast %cst_30 : f32 to vector<1x128xf32>
    %78 = arith.addf %77, %76 : vector<1x128xf32>
    %79 = arith.subf %61, %69 : vector<1x128xf32>
    %cst_31 = arith.constant 1.000000e+00 : f32
    %80 = vector.broadcast %cst_31 : f32 to vector<1x128xf32>
    %81 = arith.subf %80, %79 : vector<1x128xf32>
    %82 = vector.broadcast %45 : vector<1x128xf32> to vector<8x128xf32>
    %83 = arith.cmpf oeq, %28, %82 : vector<8x128xf32>
    %cst_32 = arith.constant 0.000000e+00 : f32
    %84 = vector.shape_cast %72 : vector<1x128xf32> to vector<1x128xf32>
    %85 = vector.broadcast %84 : vector<1x128xf32> to vector<8x128xf32>
    %86 = vector.broadcast %cst_32 : f32 to vector<8x128xf32>
    %87 = arith.select %83, %85, %86 : vector<8x128xi1>, vector<8x128xf32>
    %88 = vector.broadcast %51 : vector<1x128xf32> to vector<8x128xf32>
    %89 = arith.cmpf oeq, %28, %88 : vector<8x128xf32>
    %cst_33 = arith.constant 0.000000e+00 : f32
    %90 = vector.shape_cast %75 : vector<1x128xf32> to vector<1x128xf32>
    %91 = vector.broadcast %90 : vector<1x128xf32> to vector<8x128xf32>
    %92 = vector.broadcast %cst_33 : f32 to vector<8x128xf32>
    %93 = arith.select %89, %91, %92 : vector<8x128xi1>, vector<8x128xf32>
    %94 = arith.addf %87, %93 : vector<8x128xf32>
    %95 = vector.broadcast %55 : vector<1x128xf32> to vector<8x128xf32>
    %96 = arith.cmpf oeq, %30, %95 : vector<8x128xf32>
    %cst_34 = arith.constant 0.000000e+00 : f32
    %97 = vector.shape_cast %78 : vector<1x128xf32> to vector<1x128xf32>
    %98 = vector.broadcast %97 : vector<1x128xf32> to vector<8x128xf32>
    %99 = vector.broadcast %cst_34 : f32 to vector<8x128xf32>
    %100 = arith.select %96, %98, %99 : vector<8x128xi1>, vector<8x128xf32>
    %101 = vector.broadcast %61 : vector<1x128xf32> to vector<8x128xf32>
    %102 = arith.cmpf oeq, %30, %101 : vector<8x128xf32>
    %cst_35 = arith.constant 0.000000e+00 : f32
    %103 = vector.shape_cast %81 : vector<1x128xf32> to vector<1x128xf32>
    %104 = vector.broadcast %103 : vector<1x128xf32> to vector<8x128xf32>
    %105 = vector.broadcast %cst_35 : f32 to vector<8x128xf32>
    %106 = arith.select %102, %104, %105 : vector<8x128xi1>, vector<8x128xf32>
    %107 = arith.addf %100, %106 : vector<8x128xf32>
    %cst_36 = arith.constant dense<0.000000e+00> : vector<32x128xf32>
    %108 = tpu.matmul %3, %107, %cst_36 {dimension_numbers = #tpu.dot_dimension_numbers<[1], [0], [0], [1], [0, 0, 1, 1], [], []>} : vector<32x8xf32>, vector<8x128xf32>, vector<32x128xf32> -> vector<32x128xf32>
    %109 = vector.shape_cast %108 : vector<32x128xf32> to vector<4x8x128xf32>
    %110 = vector.shape_cast %94 : vector<8x128xf32> to vector<1x8x128xf32>
    %111 = vector.broadcast %110 : vector<1x8x128xf32> to vector<4x8x128xf32>
    %112 = arith.mulf %109, %111 : vector<4x8x128xf32>
    %cst_37 = arith.constant dense<0.000000e+00> : vector<4x128xf32>
    %113 = vector.multi_reduction <add>, %112, %cst_37 [1] : vector<4x8x128xf32> to vector<4x128xf32>
    %c0_38 = arith.constant 0 : index
    %c0_39 = arith.constant 0 : index
    %c0_40 = arith.constant 0 : index
    %114 = vector.load %arg5[%c0_38, %c0_39, %c0_40] : memref<9x8x4xf32, #tpu.memory_space<vmem>>, vector<1x8x4xf32>
    %115 = vector.shape_cast %114 : vector<1x8x4xf32> to vector<8x4xf32>
    %cst_41 = arith.constant dense<0.000000e+00> : vector<8x128xf32>
    %116 = tpu.matmul %115, %113, %cst_41 {dimension_numbers = #tpu.dot_dimension_numbers<[1], [0], [0], [1], [0, 0, 1, 1], [], []>} : vector<8x4xf32>, vector<4x128xf32>, vector<8x128xf32> -> vector<8x128xf32>
    %117 = arith.addf %31, %116 : vector<8x128xf32>
    %cst_42 = arith.constant -1.000000e+00 : f32
    %118 = vector.broadcast %cst_42 : f32 to vector<1x128xf32>
    %119 = arith.addf %23, %118 : vector<1x128xf32>
    %120 = vector.extract_strided_slice %18 {offsets = [1, 0], sizes = [1, 128], strides = [1, 1]} : vector<18x128xf32> to vector<1x128xf32>
    %121 = arith.addf %119, %120 : vector<1x128xf32>
    %cst_43 = arith.constant 0.000000e+00 : f32
    %122 = vector.broadcast %cst_43 : f32 to vector<1x128xf32>
    %123 = arith.addf %26, %122 : vector<1x128xf32>
    %124 = vector.extract_strided_slice %18 {offsets = [10, 0], sizes = [1, 128], strides = [1, 1]} : vector<18x128xf32> to vector<1x128xf32>
    %125 = arith.addf %123, %124 : vector<1x128xf32>
    %126 = math.floor %121 : vector<1x128xf32>
    %127 = math.floor %125 : vector<1x128xf32>
    %cst_44 = arith.constant 0.000000e+00 : f32
    %cst_45 = arith.constant 7.000000e+00 : f32
    %128 = vector.broadcast %cst_44 : f32 to vector<1x128xf32>
    %129 = arith.maximumf %128, %126 : vector<1x128xf32>
    %130 = vector.broadcast %cst_45 : f32 to vector<1x128xf32>
    %131 = arith.minimumf %130, %129 : vector<1x128xf32>
    %cst_46 = arith.constant 1.000000e+00 : f32
    %132 = vector.broadcast %cst_46 : f32 to vector<1x128xf32>
    %133 = arith.addf %126, %132 : vector<1x128xf32>
    %cst_47 = arith.constant 0.000000e+00 : f32
    %cst_48 = arith.constant 7.000000e+00 : f32
    %134 = vector.broadcast %cst_47 : f32 to vector<1x128xf32>
    %135 = arith.maximumf %134, %133 : vector<1x128xf32>
    %136 = vector.broadcast %cst_48 : f32 to vector<1x128xf32>
    %137 = arith.minimumf %136, %135 : vector<1x128xf32>
    %cst_49 = arith.constant 0.000000e+00 : f32
    %cst_50 = arith.constant 7.000000e+00 : f32
    %138 = vector.broadcast %cst_49 : f32 to vector<1x128xf32>
    %139 = arith.maximumf %138, %127 : vector<1x128xf32>
    %140 = vector.broadcast %cst_50 : f32 to vector<1x128xf32>
    %141 = arith.minimumf %140, %139 : vector<1x128xf32>
    %cst_51 = arith.constant 1.000000e+00 : f32
    %142 = vector.broadcast %cst_51 : f32 to vector<1x128xf32>
    %143 = arith.addf %127, %142 : vector<1x128xf32>
    %cst_52 = arith.constant 0.000000e+00 : f32
    %cst_53 = arith.constant 7.000000e+00 : f32
    %144 = vector.broadcast %cst_52 : f32 to vector<1x128xf32>
    %145 = arith.maximumf %144, %143 : vector<1x128xf32>
    %146 = vector.broadcast %cst_53 : f32 to vector<1x128xf32>
    %147 = arith.minimumf %146, %145 : vector<1x128xf32>
    %cst_54 = arith.constant 0.000000e+00 : f32
    %cst_55 = arith.constant 7.000000e+00 : f32
    %148 = vector.broadcast %cst_54 : f32 to vector<1x128xf32>
    %149 = arith.maximumf %148, %121 : vector<1x128xf32>
    %150 = vector.broadcast %cst_55 : f32 to vector<1x128xf32>
    %151 = arith.minimumf %150, %149 : vector<1x128xf32>
    %cst_56 = arith.constant 0.000000e+00 : f32
    %cst_57 = arith.constant 7.000000e+00 : f32
    %152 = vector.broadcast %cst_56 : f32 to vector<1x128xf32>
    %153 = arith.maximumf %152, %125 : vector<1x128xf32>
    %154 = vector.broadcast %cst_57 : f32 to vector<1x128xf32>
    %155 = arith.minimumf %154, %153 : vector<1x128xf32>
    %156 = arith.subf %131, %151 : vector<1x128xf32>
    %cst_58 = arith.constant 1.000000e+00 : f32
    %157 = vector.broadcast %cst_58 : f32 to vector<1x128xf32>
    %158 = arith.addf %157, %156 : vector<1x128xf32>
    %159 = arith.subf %137, %151 : vector<1x128xf32>
    %cst_59 = arith.constant 1.000000e+00 : f32
    %160 = vector.broadcast %cst_59 : f32 to vector<1x128xf32>
    %161 = arith.subf %160, %159 : vector<1x128xf32>
    %162 = arith.subf %141, %155 : vector<1x128xf32>
    %cst_60 = arith.constant 1.000000e+00 : f32
    %163 = vector.broadcast %cst_60 : f32 to vector<1x128xf32>
    %164 = arith.addf %163, %162 : vector<1x128xf32>
    %165 = arith.subf %147, %155 : vector<1x128xf32>
    %cst_61 = arith.constant 1.000000e+00 : f32
    %166 = vector.broadcast %cst_61 : f32 to vector<1x128xf32>
    %167 = arith.subf %166, %165 : vector<1x128xf32>
    %168 = vector.broadcast %131 : vector<1x128xf32> to vector<8x128xf32>
    %169 = arith.cmpf oeq, %28, %168 : vector<8x128xf32>
    %cst_62 = arith.constant 0.000000e+00 : f32
    %170 = vector.shape_cast %158 : vector<1x128xf32> to vector<1x128xf32>
    %171 = vector.broadcast %170 : vector<1x128xf32> to vector<8x128xf32>
    %172 = vector.broadcast %cst_62 : f32 to vector<8x128xf32>
    %173 = arith.select %169, %171, %172 : vector<8x128xi1>, vector<8x128xf32>
    %174 = vector.broadcast %137 : vector<1x128xf32> to vector<8x128xf32>
    %175 = arith.cmpf oeq, %28, %174 : vector<8x128xf32>
    %cst_63 = arith.constant 0.000000e+00 : f32
    %176 = vector.shape_cast %161 : vector<1x128xf32> to vector<1x128xf32>
    %177 = vector.broadcast %176 : vector<1x128xf32> to vector<8x128xf32>
    %178 = vector.broadcast %cst_63 : f32 to vector<8x128xf32>
    %179 = arith.select %175, %177, %178 : vector<8x128xi1>, vector<8x128xf32>
    %180 = arith.addf %173, %179 : vector<8x128xf32>
    %181 = vector.broadcast %141 : vector<1x128xf32> to vector<8x128xf32>
    %182 = arith.cmpf oeq, %30, %181 : vector<8x128xf32>
    %cst_64 = arith.constant 0.000000e+00 : f32
    %183 = vector.shape_cast %164 : vector<1x128xf32> to vector<1x128xf32>
    %184 = vector.broadcast %183 : vector<1x128xf32> to vector<8x128xf32>
    %185 = vector.broadcast %cst_64 : f32 to vector<8x128xf32>
    %186 = arith.select %182, %184, %185 : vector<8x128xi1>, vector<8x128xf32>
    %187 = vector.broadcast %147 : vector<1x128xf32> to vector<8x128xf32>
    %188 = arith.cmpf oeq, %30, %187 : vector<8x128xf32>
    %cst_65 = arith.constant 0.000000e+00 : f32
    %189 = vector.shape_cast %167 : vector<1x128xf32> to vector<1x128xf32>
    %190 = vector.broadcast %189 : vector<1x128xf32> to vector<8x128xf32>
    %191 = vector.broadcast %cst_65 : f32 to vector<8x128xf32>
    %192 = arith.select %188, %190, %191 : vector<8x128xi1>, vector<8x128xf32>
    %193 = arith.addf %186, %192 : vector<8x128xf32>
    %cst_66 = arith.constant dense<0.000000e+00> : vector<32x128xf32>
    %194 = tpu.matmul %3, %193, %cst_66 {dimension_numbers = #tpu.dot_dimension_numbers<[1], [0], [0], [1], [0, 0, 1, 1], [], []>} : vector<32x8xf32>, vector<8x128xf32>, vector<32x128xf32> -> vector<32x128xf32>
    %195 = vector.shape_cast %194 : vector<32x128xf32> to vector<4x8x128xf32>
    %196 = vector.shape_cast %180 : vector<8x128xf32> to vector<1x8x128xf32>
    %197 = vector.broadcast %196 : vector<1x8x128xf32> to vector<4x8x128xf32>
    %198 = arith.mulf %195, %197 : vector<4x8x128xf32>
    %cst_67 = arith.constant dense<0.000000e+00> : vector<4x128xf32>
    %199 = vector.multi_reduction <add>, %198, %cst_67 [1] : vector<4x8x128xf32> to vector<4x128xf32>
    %c1 = arith.constant 1 : index
    %c0_68 = arith.constant 0 : index
    %c0_69 = arith.constant 0 : index
    %200 = vector.load %arg5[%c1, %c0_68, %c0_69] : memref<9x8x4xf32, #tpu.memory_space<vmem>>, vector<1x8x4xf32>
    %201 = vector.shape_cast %200 : vector<1x8x4xf32> to vector<8x4xf32>
    %cst_70 = arith.constant dense<0.000000e+00> : vector<8x128xf32>
    %202 = tpu.matmul %201, %199, %cst_70 {dimension_numbers = #tpu.dot_dimension_numbers<[1], [0], [0], [1], [0, 0, 1, 1], [], []>} : vector<8x4xf32>, vector<4x128xf32>, vector<8x128xf32> -> vector<8x128xf32>
    %203 = arith.addf %117, %202 : vector<8x128xf32>
    %cst_71 = arith.constant -1.000000e+00 : f32
    %204 = vector.broadcast %cst_71 : f32 to vector<1x128xf32>
    %205 = arith.addf %23, %204 : vector<1x128xf32>
    %206 = vector.extract_strided_slice %18 {offsets = [2, 0], sizes = [1, 128], strides = [1, 1]} : vector<18x128xf32> to vector<1x128xf32>
    %207 = arith.addf %205, %206 : vector<1x128xf32>
    %cst_72 = arith.constant 1.000000e+00 : f32
    %208 = vector.broadcast %cst_72 : f32 to vector<1x128xf32>
    %209 = arith.addf %26, %208 : vector<1x128xf32>
    %210 = vector.extract_strided_slice %18 {offsets = [11, 0], sizes = [1, 128], strides = [1, 1]} : vector<18x128xf32> to vector<1x128xf32>
    %211 = arith.addf %209, %210 : vector<1x128xf32>
    %212 = math.floor %207 : vector<1x128xf32>
    %213 = math.floor %211 : vector<1x128xf32>
    %cst_73 = arith.constant 0.000000e+00 : f32
    %cst_74 = arith.constant 7.000000e+00 : f32
    %214 = vector.broadcast %cst_73 : f32 to vector<1x128xf32>
    %215 = arith.maximumf %214, %212 : vector<1x128xf32>
    %216 = vector.broadcast %cst_74 : f32 to vector<1x128xf32>
    %217 = arith.minimumf %216, %215 : vector<1x128xf32>
    %cst_75 = arith.constant 1.000000e+00 : f32
    %218 = vector.broadcast %cst_75 : f32 to vector<1x128xf32>
    %219 = arith.addf %212, %218 : vector<1x128xf32>
    %cst_76 = arith.constant 0.000000e+00 : f32
    %cst_77 = arith.constant 7.000000e+00 : f32
    %220 = vector.broadcast %cst_76 : f32 to vector<1x128xf32>
    %221 = arith.maximumf %220, %219 : vector<1x128xf32>
    %222 = vector.broadcast %cst_77 : f32 to vector<1x128xf32>
    %223 = arith.minimumf %222, %221 : vector<1x128xf32>
    %cst_78 = arith.constant 0.000000e+00 : f32
    %cst_79 = arith.constant 7.000000e+00 : f32
    %224 = vector.broadcast %cst_78 : f32 to vector<1x128xf32>
    %225 = arith.maximumf %224, %213 : vector<1x128xf32>
    %226 = vector.broadcast %cst_79 : f32 to vector<1x128xf32>
    %227 = arith.minimumf %226, %225 : vector<1x128xf32>
    %cst_80 = arith.constant 1.000000e+00 : f32
    %228 = vector.broadcast %cst_80 : f32 to vector<1x128xf32>
    %229 = arith.addf %213, %228 : vector<1x128xf32>
    %cst_81 = arith.constant 0.000000e+00 : f32
    %cst_82 = arith.constant 7.000000e+00 : f32
    %230 = vector.broadcast %cst_81 : f32 to vector<1x128xf32>
    %231 = arith.maximumf %230, %229 : vector<1x128xf32>
    %232 = vector.broadcast %cst_82 : f32 to vector<1x128xf32>
    %233 = arith.minimumf %232, %231 : vector<1x128xf32>
    %cst_83 = arith.constant 0.000000e+00 : f32
    %cst_84 = arith.constant 7.000000e+00 : f32
    %234 = vector.broadcast %cst_83 : f32 to vector<1x128xf32>
    %235 = arith.maximumf %234, %207 : vector<1x128xf32>
    %236 = vector.broadcast %cst_84 : f32 to vector<1x128xf32>
    %237 = arith.minimumf %236, %235 : vector<1x128xf32>
    %cst_85 = arith.constant 0.000000e+00 : f32
    %cst_86 = arith.constant 7.000000e+00 : f32
    %238 = vector.broadcast %cst_85 : f32 to vector<1x128xf32>
    %239 = arith.maximumf %238, %211 : vector<1x128xf32>
    %240 = vector.broadcast %cst_86 : f32 to vector<1x128xf32>
    %241 = arith.minimumf %240, %239 : vector<1x128xf32>
    %242 = arith.subf %217, %237 : vector<1x128xf32>
    %cst_87 = arith.constant 1.000000e+00 : f32
    %243 = vector.broadcast %cst_87 : f32 to vector<1x128xf32>
    %244 = arith.addf %243, %242 : vector<1x128xf32>
    %245 = arith.subf %223, %237 : vector<1x128xf32>
    %cst_88 = arith.constant 1.000000e+00 : f32
    %246 = vector.broadcast %cst_88 : f32 to vector<1x128xf32>
    %247 = arith.subf %246, %245 : vector<1x128xf32>
    %248 = arith.subf %227, %241 : vector<1x128xf32>
    %cst_89 = arith.constant 1.000000e+00 : f32
    %249 = vector.broadcast %cst_89 : f32 to vector<1x128xf32>
    %250 = arith.addf %249, %248 : vector<1x128xf32>
    %251 = arith.subf %233, %241 : vector<1x128xf32>
    %cst_90 = arith.constant 1.000000e+00 : f32
    %252 = vector.broadcast %cst_90 : f32 to vector<1x128xf32>
    %253 = arith.subf %252, %251 : vector<1x128xf32>
    %254 = vector.broadcast %217 : vector<1x128xf32> to vector<8x128xf32>
    %255 = arith.cmpf oeq, %28, %254 : vector<8x128xf32>
    %cst_91 = arith.constant 0.000000e+00 : f32
    %256 = vector.shape_cast %244 : vector<1x128xf32> to vector<1x128xf32>
    %257 = vector.broadcast %256 : vector<1x128xf32> to vector<8x128xf32>
    %258 = vector.broadcast %cst_91 : f32 to vector<8x128xf32>
    %259 = arith.select %255, %257, %258 : vector<8x128xi1>, vector<8x128xf32>
    %260 = vector.broadcast %223 : vector<1x128xf32> to vector<8x128xf32>
    %261 = arith.cmpf oeq, %28, %260 : vector<8x128xf32>
    %cst_92 = arith.constant 0.000000e+00 : f32
    %262 = vector.shape_cast %247 : vector<1x128xf32> to vector<1x128xf32>
    %263 = vector.broadcast %262 : vector<1x128xf32> to vector<8x128xf32>
    %264 = vector.broadcast %cst_92 : f32 to vector<8x128xf32>
    %265 = arith.select %261, %263, %264 : vector<8x128xi1>, vector<8x128xf32>
    %266 = arith.addf %259, %265 : vector<8x128xf32>
    %267 = vector.broadcast %227 : vector<1x128xf32> to vector<8x128xf32>
    %268 = arith.cmpf oeq, %30, %267 : vector<8x128xf32>
    %cst_93 = arith.constant 0.000000e+00 : f32
    %269 = vector.shape_cast %250 : vector<1x128xf32> to vector<1x128xf32>
    %270 = vector.broadcast %269 : vector<1x128xf32> to vector<8x128xf32>
    %271 = vector.broadcast %cst_93 : f32 to vector<8x128xf32>
    %272 = arith.select %268, %270, %271 : vector<8x128xi1>, vector<8x128xf32>
    %273 = vector.broadcast %233 : vector<1x128xf32> to vector<8x128xf32>
    %274 = arith.cmpf oeq, %30, %273 : vector<8x128xf32>
    %cst_94 = arith.constant 0.000000e+00 : f32
    %275 = vector.shape_cast %253 : vector<1x128xf32> to vector<1x128xf32>
    %276 = vector.broadcast %275 : vector<1x128xf32> to vector<8x128xf32>
    %277 = vector.broadcast %cst_94 : f32 to vector<8x128xf32>
    %278 = arith.select %274, %276, %277 : vector<8x128xi1>, vector<8x128xf32>
    %279 = arith.addf %272, %278 : vector<8x128xf32>
    %cst_95 = arith.constant dense<0.000000e+00> : vector<32x128xf32>
    %280 = tpu.matmul %3, %279, %cst_95 {dimension_numbers = #tpu.dot_dimension_numbers<[1], [0], [0], [1], [0, 0, 1, 1], [], []>} : vector<32x8xf32>, vector<8x128xf32>, vector<32x128xf32> -> vector<32x128xf32>
    %281 = vector.shape_cast %280 : vector<32x128xf32> to vector<4x8x128xf32>
    %282 = vector.shape_cast %266 : vector<8x128xf32> to vector<1x8x128xf32>
    %283 = vector.broadcast %282 : vector<1x8x128xf32> to vector<4x8x128xf32>
    %284 = arith.mulf %281, %283 : vector<4x8x128xf32>
    %cst_96 = arith.constant dense<0.000000e+00> : vector<4x128xf32>
    %285 = vector.multi_reduction <add>, %284, %cst_96 [1] : vector<4x8x128xf32> to vector<4x128xf32>
    %c2 = arith.constant 2 : index
    %c0_97 = arith.constant 0 : index
    %c0_98 = arith.constant 0 : index
    %286 = vector.load %arg5[%c2, %c0_97, %c0_98] : memref<9x8x4xf32, #tpu.memory_space<vmem>>, vector<1x8x4xf32>
    %287 = vector.shape_cast %286 : vector<1x8x4xf32> to vector<8x4xf32>
    %cst_99 = arith.constant dense<0.000000e+00> : vector<8x128xf32>
    %288 = tpu.matmul %287, %285, %cst_99 {dimension_numbers = #tpu.dot_dimension_numbers<[1], [0], [0], [1], [0, 0, 1, 1], [], []>} : vector<8x4xf32>, vector<4x128xf32>, vector<8x128xf32> -> vector<8x128xf32>
    %289 = arith.addf %203, %288 : vector<8x128xf32>
    %cst_100 = arith.constant 0.000000e+00 : f32
    %290 = vector.broadcast %cst_100 : f32 to vector<1x128xf32>
    %291 = arith.addf %23, %290 : vector<1x128xf32>
    %292 = vector.extract_strided_slice %18 {offsets = [3, 0], sizes = [1, 128], strides = [1, 1]} : vector<18x128xf32> to vector<1x128xf32>
    %293 = arith.addf %291, %292 : vector<1x128xf32>
    %cst_101 = arith.constant -1.000000e+00 : f32
    %294 = vector.broadcast %cst_101 : f32 to vector<1x128xf32>
    %295 = arith.addf %26, %294 : vector<1x128xf32>
    %296 = vector.extract_strided_slice %18 {offsets = [12, 0], sizes = [1, 128], strides = [1, 1]} : vector<18x128xf32> to vector<1x128xf32>
    %297 = arith.addf %295, %296 : vector<1x128xf32>
    %298 = math.floor %293 : vector<1x128xf32>
    %299 = math.floor %297 : vector<1x128xf32>
    %cst_102 = arith.constant 0.000000e+00 : f32
    %cst_103 = arith.constant 7.000000e+00 : f32
    %300 = vector.broadcast %cst_102 : f32 to vector<1x128xf32>
    %301 = arith.maximumf %300, %298 : vector<1x128xf32>
    %302 = vector.broadcast %cst_103 : f32 to vector<1x128xf32>
    %303 = arith.minimumf %302, %301 : vector<1x128xf32>
    %cst_104 = arith.constant 1.000000e+00 : f32
    %304 = vector.broadcast %cst_104 : f32 to vector<1x128xf32>
    %305 = arith.addf %298, %304 : vector<1x128xf32>
    %cst_105 = arith.constant 0.000000e+00 : f32
    %cst_106 = arith.constant 7.000000e+00 : f32
    %306 = vector.broadcast %cst_105 : f32 to vector<1x128xf32>
    %307 = arith.maximumf %306, %305 : vector<1x128xf32>
    %308 = vector.broadcast %cst_106 : f32 to vector<1x128xf32>
    %309 = arith.minimumf %308, %307 : vector<1x128xf32>
    %cst_107 = arith.constant 0.000000e+00 : f32
    %cst_108 = arith.constant 7.000000e+00 : f32
    %310 = vector.broadcast %cst_107 : f32 to vector<1x128xf32>
    %311 = arith.maximumf %310, %299 : vector<1x128xf32>
    %312 = vector.broadcast %cst_108 : f32 to vector<1x128xf32>
    %313 = arith.minimumf %312, %311 : vector<1x128xf32>
    %cst_109 = arith.constant 1.000000e+00 : f32
    %314 = vector.broadcast %cst_109 : f32 to vector<1x128xf32>
    %315 = arith.addf %299, %314 : vector<1x128xf32>
    %cst_110 = arith.constant 0.000000e+00 : f32
    %cst_111 = arith.constant 7.000000e+00 : f32
    %316 = vector.broadcast %cst_110 : f32 to vector<1x128xf32>
    %317 = arith.maximumf %316, %315 : vector<1x128xf32>
    %318 = vector.broadcast %cst_111 : f32 to vector<1x128xf32>
    %319 = arith.minimumf %318, %317 : vector<1x128xf32>
    %cst_112 = arith.constant 0.000000e+00 : f32
    %cst_113 = arith.constant 7.000000e+00 : f32
    %320 = vector.broadcast %cst_112 : f32 to vector<1x128xf32>
    %321 = arith.maximumf %320, %293 : vector<1x128xf32>
    %322 = vector.broadcast %cst_113 : f32 to vector<1x128xf32>
    %323 = arith.minimumf %322, %321 : vector<1x128xf32>
    %cst_114 = arith.constant 0.000000e+00 : f32
    %cst_115 = arith.constant 7.000000e+00 : f32
    %324 = vector.broadcast %cst_114 : f32 to vector<1x128xf32>
    %325 = arith.maximumf %324, %297 : vector<1x128xf32>
    %326 = vector.broadcast %cst_115 : f32 to vector<1x128xf32>
    %327 = arith.minimumf %326, %325 : vector<1x128xf32>
    %328 = arith.subf %303, %323 : vector<1x128xf32>
    %cst_116 = arith.constant 1.000000e+00 : f32
    %329 = vector.broadcast %cst_116 : f32 to vector<1x128xf32>
    %330 = arith.addf %329, %328 : vector<1x128xf32>
    %331 = arith.subf %309, %323 : vector<1x128xf32>
    %cst_117 = arith.constant 1.000000e+00 : f32
    %332 = vector.broadcast %cst_117 : f32 to vector<1x128xf32>
    %333 = arith.subf %332, %331 : vector<1x128xf32>
    %334 = arith.subf %313, %327 : vector<1x128xf32>
    %cst_118 = arith.constant 1.000000e+00 : f32
    %335 = vector.broadcast %cst_118 : f32 to vector<1x128xf32>
    %336 = arith.addf %335, %334 : vector<1x128xf32>
    %337 = arith.subf %319, %327 : vector<1x128xf32>
    %cst_119 = arith.constant 1.000000e+00 : f32
    %338 = vector.broadcast %cst_119 : f32 to vector<1x128xf32>
    %339 = arith.subf %338, %337 : vector<1x128xf32>
    %340 = vector.broadcast %303 : vector<1x128xf32> to vector<8x128xf32>
    %341 = arith.cmpf oeq, %28, %340 : vector<8x128xf32>
    %cst_120 = arith.constant 0.000000e+00 : f32
    %342 = vector.shape_cast %330 : vector<1x128xf32> to vector<1x128xf32>
    %343 = vector.broadcast %342 : vector<1x128xf32> to vector<8x128xf32>
    %344 = vector.broadcast %cst_120 : f32 to vector<8x128xf32>
    %345 = arith.select %341, %343, %344 : vector<8x128xi1>, vector<8x128xf32>
    %346 = vector.broadcast %309 : vector<1x128xf32> to vector<8x128xf32>
    %347 = arith.cmpf oeq, %28, %346 : vector<8x128xf32>
    %cst_121 = arith.constant 0.000000e+00 : f32
    %348 = vector.shape_cast %333 : vector<1x128xf32> to vector<1x128xf32>
    %349 = vector.broadcast %348 : vector<1x128xf32> to vector<8x128xf32>
    %350 = vector.broadcast %cst_121 : f32 to vector<8x128xf32>
    %351 = arith.select %347, %349, %350 : vector<8x128xi1>, vector<8x128xf32>
    %352 = arith.addf %345, %351 : vector<8x128xf32>
    %353 = vector.broadcast %313 : vector<1x128xf32> to vector<8x128xf32>
    %354 = arith.cmpf oeq, %30, %353 : vector<8x128xf32>
    %cst_122 = arith.constant 0.000000e+00 : f32
    %355 = vector.shape_cast %336 : vector<1x128xf32> to vector<1x128xf32>
    %356 = vector.broadcast %355 : vector<1x128xf32> to vector<8x128xf32>
    %357 = vector.broadcast %cst_122 : f32 to vector<8x128xf32>
    %358 = arith.select %354, %356, %357 : vector<8x128xi1>, vector<8x128xf32>
    %359 = vector.broadcast %319 : vector<1x128xf32> to vector<8x128xf32>
    %360 = arith.cmpf oeq, %30, %359 : vector<8x128xf32>
    %cst_123 = arith.constant 0.000000e+00 : f32
    %361 = vector.shape_cast %339 : vector<1x128xf32> to vector<1x128xf32>
    %362 = vector.broadcast %361 : vector<1x128xf32> to vector<8x128xf32>
    %363 = vector.broadcast %cst_123 : f32 to vector<8x128xf32>
    %364 = arith.select %360, %362, %363 : vector<8x128xi1>, vector<8x128xf32>
    %365 = arith.addf %358, %364 : vector<8x128xf32>
    %cst_124 = arith.constant dense<0.000000e+00> : vector<32x128xf32>
    %366 = tpu.matmul %3, %365, %cst_124 {dimension_numbers = #tpu.dot_dimension_numbers<[1], [0], [0], [1], [0, 0, 1, 1], [], []>} : vector<32x8xf32>, vector<8x128xf32>, vector<32x128xf32> -> vector<32x128xf32>
    %367 = vector.shape_cast %366 : vector<32x128xf32> to vector<4x8x128xf32>
    %368 = vector.shape_cast %352 : vector<8x128xf32> to vector<1x8x128xf32>
    %369 = vector.broadcast %368 : vector<1x8x128xf32> to vector<4x8x128xf32>
    %370 = arith.mulf %367, %369 : vector<4x8x128xf32>
    %cst_125 = arith.constant dense<0.000000e+00> : vector<4x128xf32>
    %371 = vector.multi_reduction <add>, %370, %cst_125 [1] : vector<4x8x128xf32> to vector<4x128xf32>
    %c3 = arith.constant 3 : index
    %c0_126 = arith.constant 0 : index
    %c0_127 = arith.constant 0 : index
    %372 = vector.load %arg5[%c3, %c0_126, %c0_127] : memref<9x8x4xf32, #tpu.memory_space<vmem>>, vector<1x8x4xf32>
    %373 = vector.shape_cast %372 : vector<1x8x4xf32> to vector<8x4xf32>
    %cst_128 = arith.constant dense<0.000000e+00> : vector<8x128xf32>
    %374 = tpu.matmul %373, %371, %cst_128 {dimension_numbers = #tpu.dot_dimension_numbers<[1], [0], [0], [1], [0, 0, 1, 1], [], []>} : vector<8x4xf32>, vector<4x128xf32>, vector<8x128xf32> -> vector<8x128xf32>
    %375 = arith.addf %289, %374 : vector<8x128xf32>
    %cst_129 = arith.constant 0.000000e+00 : f32
    %376 = vector.broadcast %cst_129 : f32 to vector<1x128xf32>
    %377 = arith.addf %23, %376 : vector<1x128xf32>
    %378 = vector.extract_strided_slice %18 {offsets = [4, 0], sizes = [1, 128], strides = [1, 1]} : vector<18x128xf32> to vector<1x128xf32>
    %379 = arith.addf %377, %378 : vector<1x128xf32>
    %cst_130 = arith.constant 0.000000e+00 : f32
    %380 = vector.broadcast %cst_130 : f32 to vector<1x128xf32>
    %381 = arith.addf %26, %380 : vector<1x128xf32>
    %382 = vector.extract_strided_slice %18 {offsets = [13, 0], sizes = [1, 128], strides = [1, 1]} : vector<18x128xf32> to vector<1x128xf32>
    %383 = arith.addf %381, %382 : vector<1x128xf32>
    %384 = math.floor %379 : vector<1x128xf32>
    %385 = math.floor %383 : vector<1x128xf32>
    %cst_131 = arith.constant 0.000000e+00 : f32
    %cst_132 = arith.constant 7.000000e+00 : f32
    %386 = vector.broadcast %cst_131 : f32 to vector<1x128xf32>
    %387 = arith.maximumf %386, %384 : vector<1x128xf32>
    %388 = vector.broadcast %cst_132 : f32 to vector<1x128xf32>
    %389 = arith.minimumf %388, %387 : vector<1x128xf32>
    %cst_133 = arith.constant 1.000000e+00 : f32
    %390 = vector.broadcast %cst_133 : f32 to vector<1x128xf32>
    %391 = arith.addf %384, %390 : vector<1x128xf32>
    %cst_134 = arith.constant 0.000000e+00 : f32
    %cst_135 = arith.constant 7.000000e+00 : f32
    %392 = vector.broadcast %cst_134 : f32 to vector<1x128xf32>
    %393 = arith.maximumf %392, %391 : vector<1x128xf32>
    %394 = vector.broadcast %cst_135 : f32 to vector<1x128xf32>
    %395 = arith.minimumf %394, %393 : vector<1x128xf32>
    %cst_136 = arith.constant 0.000000e+00 : f32
    %cst_137 = arith.constant 7.000000e+00 : f32
    %396 = vector.broadcast %cst_136 : f32 to vector<1x128xf32>
    %397 = arith.maximumf %396, %385 : vector<1x128xf32>
    %398 = vector.broadcast %cst_137 : f32 to vector<1x128xf32>
    %399 = arith.minimumf %398, %397 : vector<1x128xf32>
    %cst_138 = arith.constant 1.000000e+00 : f32
    %400 = vector.broadcast %cst_138 : f32 to vector<1x128xf32>
    %401 = arith.addf %385, %400 : vector<1x128xf32>
    %cst_139 = arith.constant 0.000000e+00 : f32
    %cst_140 = arith.constant 7.000000e+00 : f32
    %402 = vector.broadcast %cst_139 : f32 to vector<1x128xf32>
    %403 = arith.maximumf %402, %401 : vector<1x128xf32>
    %404 = vector.broadcast %cst_140 : f32 to vector<1x128xf32>
    %405 = arith.minimumf %404, %403 : vector<1x128xf32>
    %cst_141 = arith.constant 0.000000e+00 : f32
    %cst_142 = arith.constant 7.000000e+00 : f32
    %406 = vector.broadcast %cst_141 : f32 to vector<1x128xf32>
    %407 = arith.maximumf %406, %379 : vector<1x128xf32>
    %408 = vector.broadcast %cst_142 : f32 to vector<1x128xf32>
    %409 = arith.minimumf %408, %407 : vector<1x128xf32>
    %cst_143 = arith.constant 0.000000e+00 : f32
    %cst_144 = arith.constant 7.000000e+00 : f32
    %410 = vector.broadcast %cst_143 : f32 to vector<1x128xf32>
    %411 = arith.maximumf %410, %383 : vector<1x128xf32>
    %412 = vector.broadcast %cst_144 : f32 to vector<1x128xf32>
    %413 = arith.minimumf %412, %411 : vector<1x128xf32>
    %414 = arith.subf %389, %409 : vector<1x128xf32>
    %cst_145 = arith.constant 1.000000e+00 : f32
    %415 = vector.broadcast %cst_145 : f32 to vector<1x128xf32>
    %416 = arith.addf %415, %414 : vector<1x128xf32>
    %417 = arith.subf %395, %409 : vector<1x128xf32>
    %cst_146 = arith.constant 1.000000e+00 : f32
    %418 = vector.broadcast %cst_146 : f32 to vector<1x128xf32>
    %419 = arith.subf %418, %417 : vector<1x128xf32>
    %420 = arith.subf %399, %413 : vector<1x128xf32>
    %cst_147 = arith.constant 1.000000e+00 : f32
    %421 = vector.broadcast %cst_147 : f32 to vector<1x128xf32>
    %422 = arith.addf %421, %420 : vector<1x128xf32>
    %423 = arith.subf %405, %413 : vector<1x128xf32>
    %cst_148 = arith.constant 1.000000e+00 : f32
    %424 = vector.broadcast %cst_148 : f32 to vector<1x128xf32>
    %425 = arith.subf %424, %423 : vector<1x128xf32>
    %426 = vector.broadcast %389 : vector<1x128xf32> to vector<8x128xf32>
    %427 = arith.cmpf oeq, %28, %426 : vector<8x128xf32>
    %cst_149 = arith.constant 0.000000e+00 : f32
    %428 = vector.shape_cast %416 : vector<1x128xf32> to vector<1x128xf32>
    %429 = vector.broadcast %428 : vector<1x128xf32> to vector<8x128xf32>
    %430 = vector.broadcast %cst_149 : f32 to vector<8x128xf32>
    %431 = arith.select %427, %429, %430 : vector<8x128xi1>, vector<8x128xf32>
    %432 = vector.broadcast %395 : vector<1x128xf32> to vector<8x128xf32>
    %433 = arith.cmpf oeq, %28, %432 : vector<8x128xf32>
    %cst_150 = arith.constant 0.000000e+00 : f32
    %434 = vector.shape_cast %419 : vector<1x128xf32> to vector<1x128xf32>
    %435 = vector.broadcast %434 : vector<1x128xf32> to vector<8x128xf32>
    %436 = vector.broadcast %cst_150 : f32 to vector<8x128xf32>
    %437 = arith.select %433, %435, %436 : vector<8x128xi1>, vector<8x128xf32>
    %438 = arith.addf %431, %437 : vector<8x128xf32>
    %439 = vector.broadcast %399 : vector<1x128xf32> to vector<8x128xf32>
    %440 = arith.cmpf oeq, %30, %439 : vector<8x128xf32>
    %cst_151 = arith.constant 0.000000e+00 : f32
    %441 = vector.shape_cast %422 : vector<1x128xf32> to vector<1x128xf32>
    %442 = vector.broadcast %441 : vector<1x128xf32> to vector<8x128xf32>
    %443 = vector.broadcast %cst_151 : f32 to vector<8x128xf32>
    %444 = arith.select %440, %442, %443 : vector<8x128xi1>, vector<8x128xf32>
    %445 = vector.broadcast %405 : vector<1x128xf32> to vector<8x128xf32>
    %446 = arith.cmpf oeq, %30, %445 : vector<8x128xf32>
    %cst_152 = arith.constant 0.000000e+00 : f32
    %447 = vector.shape_cast %425 : vector<1x128xf32> to vector<1x128xf32>
    %448 = vector.broadcast %447 : vector<1x128xf32> to vector<8x128xf32>
    %449 = vector.broadcast %cst_152 : f32 to vector<8x128xf32>
    %450 = arith.select %446, %448, %449 : vector<8x128xi1>, vector<8x128xf32>
    %451 = arith.addf %444, %450 : vector<8x128xf32>
    %cst_153 = arith.constant dense<0.000000e+00> : vector<32x128xf32>
    %452 = tpu.matmul %3, %451, %cst_153 {dimension_numbers = #tpu.dot_dimension_numbers<[1], [0], [0], [1], [0, 0, 1, 1], [], []>} : vector<32x8xf32>, vector<8x128xf32>, vector<32x128xf32> -> vector<32x128xf32>
    %453 = vector.shape_cast %452 : vector<32x128xf32> to vector<4x8x128xf32>
    %454 = vector.shape_cast %438 : vector<8x128xf32> to vector<1x8x128xf32>
    %455 = vector.broadcast %454 : vector<1x8x128xf32> to vector<4x8x128xf32>
    %456 = arith.mulf %453, %455 : vector<4x8x128xf32>
    %cst_154 = arith.constant dense<0.000000e+00> : vector<4x128xf32>
    %457 = vector.multi_reduction <add>, %456, %cst_154 [1] : vector<4x8x128xf32> to vector<4x128xf32>
    %c4 = arith.constant 4 : index
    %c0_155 = arith.constant 0 : index
    %c0_156 = arith.constant 0 : index
    %458 = vector.load %arg5[%c4, %c0_155, %c0_156] : memref<9x8x4xf32, #tpu.memory_space<vmem>>, vector<1x8x4xf32>
    %459 = vector.shape_cast %458 : vector<1x8x4xf32> to vector<8x4xf32>
    %cst_157 = arith.constant dense<0.000000e+00> : vector<8x128xf32>
    %460 = tpu.matmul %459, %457, %cst_157 {dimension_numbers = #tpu.dot_dimension_numbers<[1], [0], [0], [1], [0, 0, 1, 1], [], []>} : vector<8x4xf32>, vector<4x128xf32>, vector<8x128xf32> -> vector<8x128xf32>
    %461 = arith.addf %375, %460 : vector<8x128xf32>
    %cst_158 = arith.constant 0.000000e+00 : f32
    %462 = vector.broadcast %cst_158 : f32 to vector<1x128xf32>
    %463 = arith.addf %23, %462 : vector<1x128xf32>
    %464 = vector.extract_strided_slice %18 {offsets = [5, 0], sizes = [1, 128], strides = [1, 1]} : vector<18x128xf32> to vector<1x128xf32>
    %465 = arith.addf %463, %464 : vector<1x128xf32>
    %cst_159 = arith.constant 1.000000e+00 : f32
    %466 = vector.broadcast %cst_159 : f32 to vector<1x128xf32>
    %467 = arith.addf %26, %466 : vector<1x128xf32>
    %468 = vector.extract_strided_slice %18 {offsets = [14, 0], sizes = [1, 128], strides = [1, 1]} : vector<18x128xf32> to vector<1x128xf32>
    %469 = arith.addf %467, %468 : vector<1x128xf32>
    %470 = math.floor %465 : vector<1x128xf32>
    %471 = math.floor %469 : vector<1x128xf32>
    %cst_160 = arith.constant 0.000000e+00 : f32
    %cst_161 = arith.constant 7.000000e+00 : f32
    %472 = vector.broadcast %cst_160 : f32 to vector<1x128xf32>
    %473 = arith.maximumf %472, %470 : vector<1x128xf32>
    %474 = vector.broadcast %cst_161 : f32 to vector<1x128xf32>
    %475 = arith.minimumf %474, %473 : vector<1x128xf32>
    %cst_162 = arith.constant 1.000000e+00 : f32
    %476 = vector.broadcast %cst_162 : f32 to vector<1x128xf32>
    %477 = arith.addf %470, %476 : vector<1x128xf32>
    %cst_163 = arith.constant 0.000000e+00 : f32
    %cst_164 = arith.constant 7.000000e+00 : f32
    %478 = vector.broadcast %cst_163 : f32 to vector<1x128xf32>
    %479 = arith.maximumf %478, %477 : vector<1x128xf32>
    %480 = vector.broadcast %cst_164 : f32 to vector<1x128xf32>
    %481 = arith.minimumf %480, %479 : vector<1x128xf32>
    %cst_165 = arith.constant 0.000000e+00 : f32
    %cst_166 = arith.constant 7.000000e+00 : f32
    %482 = vector.broadcast %cst_165 : f32 to vector<1x128xf32>
    %483 = arith.maximumf %482, %471 : vector<1x128xf32>
    %484 = vector.broadcast %cst_166 : f32 to vector<1x128xf32>
    %485 = arith.minimumf %484, %483 : vector<1x128xf32>
    %cst_167 = arith.constant 1.000000e+00 : f32
    %486 = vector.broadcast %cst_167 : f32 to vector<1x128xf32>
    %487 = arith.addf %471, %486 : vector<1x128xf32>
    %cst_168 = arith.constant 0.000000e+00 : f32
    %cst_169 = arith.constant 7.000000e+00 : f32
    %488 = vector.broadcast %cst_168 : f32 to vector<1x128xf32>
    %489 = arith.maximumf %488, %487 : vector<1x128xf32>
    %490 = vector.broadcast %cst_169 : f32 to vector<1x128xf32>
    %491 = arith.minimumf %490, %489 : vector<1x128xf32>
    %cst_170 = arith.constant 0.000000e+00 : f32
    %cst_171 = arith.constant 7.000000e+00 : f32
    %492 = vector.broadcast %cst_170 : f32 to vector<1x128xf32>
    %493 = arith.maximumf %492, %465 : vector<1x128xf32>
    %494 = vector.broadcast %cst_171 : f32 to vector<1x128xf32>
    %495 = arith.minimumf %494, %493 : vector<1x128xf32>
    %cst_172 = arith.constant 0.000000e+00 : f32
    %cst_173 = arith.constant 7.000000e+00 : f32
    %496 = vector.broadcast %cst_172 : f32 to vector<1x128xf32>
    %497 = arith.maximumf %496, %469 : vector<1x128xf32>
    %498 = vector.broadcast %cst_173 : f32 to vector<1x128xf32>
    %499 = arith.minimumf %498, %497 : vector<1x128xf32>
    %500 = arith.subf %475, %495 : vector<1x128xf32>
    %cst_174 = arith.constant 1.000000e+00 : f32
    %501 = vector.broadcast %cst_174 : f32 to vector<1x128xf32>
    %502 = arith.addf %501, %500 : vector<1x128xf32>
    %503 = arith.subf %481, %495 : vector<1x128xf32>
    %cst_175 = arith.constant 1.000000e+00 : f32
    %504 = vector.broadcast %cst_175 : f32 to vector<1x128xf32>
    %505 = arith.subf %504, %503 : vector<1x128xf32>
    %506 = arith.subf %485, %499 : vector<1x128xf32>
    %cst_176 = arith.constant 1.000000e+00 : f32
    %507 = vector.broadcast %cst_176 : f32 to vector<1x128xf32>
    %508 = arith.addf %507, %506 : vector<1x128xf32>
    %509 = arith.subf %491, %499 : vector<1x128xf32>
    %cst_177 = arith.constant 1.000000e+00 : f32
    %510 = vector.broadcast %cst_177 : f32 to vector<1x128xf32>
    %511 = arith.subf %510, %509 : vector<1x128xf32>
    %512 = vector.broadcast %475 : vector<1x128xf32> to vector<8x128xf32>
    %513 = arith.cmpf oeq, %28, %512 : vector<8x128xf32>
    %cst_178 = arith.constant 0.000000e+00 : f32
    %514 = vector.shape_cast %502 : vector<1x128xf32> to vector<1x128xf32>
    %515 = vector.broadcast %514 : vector<1x128xf32> to vector<8x128xf32>
    %516 = vector.broadcast %cst_178 : f32 to vector<8x128xf32>
    %517 = arith.select %513, %515, %516 : vector<8x128xi1>, vector<8x128xf32>
    %518 = vector.broadcast %481 : vector<1x128xf32> to vector<8x128xf32>
    %519 = arith.cmpf oeq, %28, %518 : vector<8x128xf32>
    %cst_179 = arith.constant 0.000000e+00 : f32
    %520 = vector.shape_cast %505 : vector<1x128xf32> to vector<1x128xf32>
    %521 = vector.broadcast %520 : vector<1x128xf32> to vector<8x128xf32>
    %522 = vector.broadcast %cst_179 : f32 to vector<8x128xf32>
    %523 = arith.select %519, %521, %522 : vector<8x128xi1>, vector<8x128xf32>
    %524 = arith.addf %517, %523 : vector<8x128xf32>
    %525 = vector.broadcast %485 : vector<1x128xf32> to vector<8x128xf32>
    %526 = arith.cmpf oeq, %30, %525 : vector<8x128xf32>
    %cst_180 = arith.constant 0.000000e+00 : f32
    %527 = vector.shape_cast %508 : vector<1x128xf32> to vector<1x128xf32>
    %528 = vector.broadcast %527 : vector<1x128xf32> to vector<8x128xf32>
    %529 = vector.broadcast %cst_180 : f32 to vector<8x128xf32>
    %530 = arith.select %526, %528, %529 : vector<8x128xi1>, vector<8x128xf32>
    %531 = vector.broadcast %491 : vector<1x128xf32> to vector<8x128xf32>
    %532 = arith.cmpf oeq, %30, %531 : vector<8x128xf32>
    %cst_181 = arith.constant 0.000000e+00 : f32
    %533 = vector.shape_cast %511 : vector<1x128xf32> to vector<1x128xf32>
    %534 = vector.broadcast %533 : vector<1x128xf32> to vector<8x128xf32>
    %535 = vector.broadcast %cst_181 : f32 to vector<8x128xf32>
    %536 = arith.select %532, %534, %535 : vector<8x128xi1>, vector<8x128xf32>
    %537 = arith.addf %530, %536 : vector<8x128xf32>
    %cst_182 = arith.constant dense<0.000000e+00> : vector<32x128xf32>
    %538 = tpu.matmul %3, %537, %cst_182 {dimension_numbers = #tpu.dot_dimension_numbers<[1], [0], [0], [1], [0, 0, 1, 1], [], []>} : vector<32x8xf32>, vector<8x128xf32>, vector<32x128xf32> -> vector<32x128xf32>
    %539 = vector.shape_cast %538 : vector<32x128xf32> to vector<4x8x128xf32>
    %540 = vector.shape_cast %524 : vector<8x128xf32> to vector<1x8x128xf32>
    %541 = vector.broadcast %540 : vector<1x8x128xf32> to vector<4x8x128xf32>
    %542 = arith.mulf %539, %541 : vector<4x8x128xf32>
    %cst_183 = arith.constant dense<0.000000e+00> : vector<4x128xf32>
    %543 = vector.multi_reduction <add>, %542, %cst_183 [1] : vector<4x8x128xf32> to vector<4x128xf32>
    %c5 = arith.constant 5 : index
    %c0_184 = arith.constant 0 : index
    %c0_185 = arith.constant 0 : index
    %544 = vector.load %arg5[%c5, %c0_184, %c0_185] : memref<9x8x4xf32, #tpu.memory_space<vmem>>, vector<1x8x4xf32>
    %545 = vector.shape_cast %544 : vector<1x8x4xf32> to vector<8x4xf32>
    %cst_186 = arith.constant dense<0.000000e+00> : vector<8x128xf32>
    %546 = tpu.matmul %545, %543, %cst_186 {dimension_numbers = #tpu.dot_dimension_numbers<[1], [0], [0], [1], [0, 0, 1, 1], [], []>} : vector<8x4xf32>, vector<4x128xf32>, vector<8x128xf32> -> vector<8x128xf32>
    %547 = arith.addf %461, %546 : vector<8x128xf32>
    %cst_187 = arith.constant 1.000000e+00 : f32
    %548 = vector.broadcast %cst_187 : f32 to vector<1x128xf32>
    %549 = arith.addf %23, %548 : vector<1x128xf32>
    %550 = vector.extract_strided_slice %18 {offsets = [6, 0], sizes = [1, 128], strides = [1, 1]} : vector<18x128xf32> to vector<1x128xf32>
    %551 = arith.addf %549, %550 : vector<1x128xf32>
    %cst_188 = arith.constant -1.000000e+00 : f32
    %552 = vector.broadcast %cst_188 : f32 to vector<1x128xf32>
    %553 = arith.addf %26, %552 : vector<1x128xf32>
    %554 = vector.extract_strided_slice %18 {offsets = [15, 0], sizes = [1, 128], strides = [1, 1]} : vector<18x128xf32> to vector<1x128xf32>
    %555 = arith.addf %553, %554 : vector<1x128xf32>
    %556 = math.floor %551 : vector<1x128xf32>
    %557 = math.floor %555 : vector<1x128xf32>
    %cst_189 = arith.constant 0.000000e+00 : f32
    %cst_190 = arith.constant 7.000000e+00 : f32
    %558 = vector.broadcast %cst_189 : f32 to vector<1x128xf32>
    %559 = arith.maximumf %558, %556 : vector<1x128xf32>
    %560 = vector.broadcast %cst_190 : f32 to vector<1x128xf32>
    %561 = arith.minimumf %560, %559 : vector<1x128xf32>
    %cst_191 = arith.constant 1.000000e+00 : f32
    %562 = vector.broadcast %cst_191 : f32 to vector<1x128xf32>
    %563 = arith.addf %556, %562 : vector<1x128xf32>
    %cst_192 = arith.constant 0.000000e+00 : f32
    %cst_193 = arith.constant 7.000000e+00 : f32
    %564 = vector.broadcast %cst_192 : f32 to vector<1x128xf32>
    %565 = arith.maximumf %564, %563 : vector<1x128xf32>
    %566 = vector.broadcast %cst_193 : f32 to vector<1x128xf32>
    %567 = arith.minimumf %566, %565 : vector<1x128xf32>
    %cst_194 = arith.constant 0.000000e+00 : f32
    %cst_195 = arith.constant 7.000000e+00 : f32
    %568 = vector.broadcast %cst_194 : f32 to vector<1x128xf32>
    %569 = arith.maximumf %568, %557 : vector<1x128xf32>
    %570 = vector.broadcast %cst_195 : f32 to vector<1x128xf32>
    %571 = arith.minimumf %570, %569 : vector<1x128xf32>
    %cst_196 = arith.constant 1.000000e+00 : f32
    %572 = vector.broadcast %cst_196 : f32 to vector<1x128xf32>
    %573 = arith.addf %557, %572 : vector<1x128xf32>
    %cst_197 = arith.constant 0.000000e+00 : f32
    %cst_198 = arith.constant 7.000000e+00 : f32
    %574 = vector.broadcast %cst_197 : f32 to vector<1x128xf32>
    %575 = arith.maximumf %574, %573 : vector<1x128xf32>
    %576 = vector.broadcast %cst_198 : f32 to vector<1x128xf32>
    %577 = arith.minimumf %576, %575 : vector<1x128xf32>
    %cst_199 = arith.constant 0.000000e+00 : f32
    %cst_200 = arith.constant 7.000000e+00 : f32
    %578 = vector.broadcast %cst_199 : f32 to vector<1x128xf32>
    %579 = arith.maximumf %578, %551 : vector<1x128xf32>
    %580 = vector.broadcast %cst_200 : f32 to vector<1x128xf32>
    %581 = arith.minimumf %580, %579 : vector<1x128xf32>
    %cst_201 = arith.constant 0.000000e+00 : f32
    %cst_202 = arith.constant 7.000000e+00 : f32
    %582 = vector.broadcast %cst_201 : f32 to vector<1x128xf32>
    %583 = arith.maximumf %582, %555 : vector<1x128xf32>
    %584 = vector.broadcast %cst_202 : f32 to vector<1x128xf32>
    %585 = arith.minimumf %584, %583 : vector<1x128xf32>
    %586 = arith.subf %561, %581 : vector<1x128xf32>
    %cst_203 = arith.constant 1.000000e+00 : f32
    %587 = vector.broadcast %cst_203 : f32 to vector<1x128xf32>
    %588 = arith.addf %587, %586 : vector<1x128xf32>
    %589 = arith.subf %567, %581 : vector<1x128xf32>
    %cst_204 = arith.constant 1.000000e+00 : f32
    %590 = vector.broadcast %cst_204 : f32 to vector<1x128xf32>
    %591 = arith.subf %590, %589 : vector<1x128xf32>
    %592 = arith.subf %571, %585 : vector<1x128xf32>
    %cst_205 = arith.constant 1.000000e+00 : f32
    %593 = vector.broadcast %cst_205 : f32 to vector<1x128xf32>
    %594 = arith.addf %593, %592 : vector<1x128xf32>
    %595 = arith.subf %577, %585 : vector<1x128xf32>
    %cst_206 = arith.constant 1.000000e+00 : f32
    %596 = vector.broadcast %cst_206 : f32 to vector<1x128xf32>
    %597 = arith.subf %596, %595 : vector<1x128xf32>
    %598 = vector.broadcast %561 : vector<1x128xf32> to vector<8x128xf32>
    %599 = arith.cmpf oeq, %28, %598 : vector<8x128xf32>
    %cst_207 = arith.constant 0.000000e+00 : f32
    %600 = vector.shape_cast %588 : vector<1x128xf32> to vector<1x128xf32>
    %601 = vector.broadcast %600 : vector<1x128xf32> to vector<8x128xf32>
    %602 = vector.broadcast %cst_207 : f32 to vector<8x128xf32>
    %603 = arith.select %599, %601, %602 : vector<8x128xi1>, vector<8x128xf32>
    %604 = vector.broadcast %567 : vector<1x128xf32> to vector<8x128xf32>
    %605 = arith.cmpf oeq, %28, %604 : vector<8x128xf32>
    %cst_208 = arith.constant 0.000000e+00 : f32
    %606 = vector.shape_cast %591 : vector<1x128xf32> to vector<1x128xf32>
    %607 = vector.broadcast %606 : vector<1x128xf32> to vector<8x128xf32>
    %608 = vector.broadcast %cst_208 : f32 to vector<8x128xf32>
    %609 = arith.select %605, %607, %608 : vector<8x128xi1>, vector<8x128xf32>
    %610 = arith.addf %603, %609 : vector<8x128xf32>
    %611 = vector.broadcast %571 : vector<1x128xf32> to vector<8x128xf32>
    %612 = arith.cmpf oeq, %30, %611 : vector<8x128xf32>
    %cst_209 = arith.constant 0.000000e+00 : f32
    %613 = vector.shape_cast %594 : vector<1x128xf32> to vector<1x128xf32>
    %614 = vector.broadcast %613 : vector<1x128xf32> to vector<8x128xf32>
    %615 = vector.broadcast %cst_209 : f32 to vector<8x128xf32>
    %616 = arith.select %612, %614, %615 : vector<8x128xi1>, vector<8x128xf32>
    %617 = vector.broadcast %577 : vector<1x128xf32> to vector<8x128xf32>
    %618 = arith.cmpf oeq, %30, %617 : vector<8x128xf32>
    %cst_210 = arith.constant 0.000000e+00 : f32
    %619 = vector.shape_cast %597 : vector<1x128xf32> to vector<1x128xf32>
    %620 = vector.broadcast %619 : vector<1x128xf32> to vector<8x128xf32>
    %621 = vector.broadcast %cst_210 : f32 to vector<8x128xf32>
    %622 = arith.select %618, %620, %621 : vector<8x128xi1>, vector<8x128xf32>
    %623 = arith.addf %616, %622 : vector<8x128xf32>
    %cst_211 = arith.constant dense<0.000000e+00> : vector<32x128xf32>
    %624 = tpu.matmul %3, %623, %cst_211 {dimension_numbers = #tpu.dot_dimension_numbers<[1], [0], [0], [1], [0, 0, 1, 1], [], []>} : vector<32x8xf32>, vector<8x128xf32>, vector<32x128xf32> -> vector<32x128xf32>
    %625 = vector.shape_cast %624 : vector<32x128xf32> to vector<4x8x128xf32>
    %626 = vector.shape_cast %610 : vector<8x128xf32> to vector<1x8x128xf32>
    %627 = vector.broadcast %626 : vector<1x8x128xf32> to vector<4x8x128xf32>
    %628 = arith.mulf %625, %627 : vector<4x8x128xf32>
    %cst_212 = arith.constant dense<0.000000e+00> : vector<4x128xf32>
    %629 = vector.multi_reduction <add>, %628, %cst_212 [1] : vector<4x8x128xf32> to vector<4x128xf32>
    %c6 = arith.constant 6 : index
    %c0_213 = arith.constant 0 : index
    %c0_214 = arith.constant 0 : index
    %630 = vector.load %arg5[%c6, %c0_213, %c0_214] : memref<9x8x4xf32, #tpu.memory_space<vmem>>, vector<1x8x4xf32>
    %631 = vector.shape_cast %630 : vector<1x8x4xf32> to vector<8x4xf32>
    %cst_215 = arith.constant dense<0.000000e+00> : vector<8x128xf32>
    %632 = tpu.matmul %631, %629, %cst_215 {dimension_numbers = #tpu.dot_dimension_numbers<[1], [0], [0], [1], [0, 0, 1, 1], [], []>} : vector<8x4xf32>, vector<4x128xf32>, vector<8x128xf32> -> vector<8x128xf32>
    %633 = arith.addf %547, %632 : vector<8x128xf32>
    %cst_216 = arith.constant 1.000000e+00 : f32
    %634 = vector.broadcast %cst_216 : f32 to vector<1x128xf32>
    %635 = arith.addf %23, %634 : vector<1x128xf32>
    %636 = vector.extract_strided_slice %18 {offsets = [7, 0], sizes = [1, 128], strides = [1, 1]} : vector<18x128xf32> to vector<1x128xf32>
    %637 = arith.addf %635, %636 : vector<1x128xf32>
    %cst_217 = arith.constant 0.000000e+00 : f32
    %638 = vector.broadcast %cst_217 : f32 to vector<1x128xf32>
    %639 = arith.addf %26, %638 : vector<1x128xf32>
    %640 = vector.extract_strided_slice %18 {offsets = [16, 0], sizes = [1, 128], strides = [1, 1]} : vector<18x128xf32> to vector<1x128xf32>
    %641 = arith.addf %639, %640 : vector<1x128xf32>
    %642 = math.floor %637 : vector<1x128xf32>
    %643 = math.floor %641 : vector<1x128xf32>
    %cst_218 = arith.constant 0.000000e+00 : f32
    %cst_219 = arith.constant 7.000000e+00 : f32
    %644 = vector.broadcast %cst_218 : f32 to vector<1x128xf32>
    %645 = arith.maximumf %644, %642 : vector<1x128xf32>
    %646 = vector.broadcast %cst_219 : f32 to vector<1x128xf32>
    %647 = arith.minimumf %646, %645 : vector<1x128xf32>
    %cst_220 = arith.constant 1.000000e+00 : f32
    %648 = vector.broadcast %cst_220 : f32 to vector<1x128xf32>
    %649 = arith.addf %642, %648 : vector<1x128xf32>
    %cst_221 = arith.constant 0.000000e+00 : f32
    %cst_222 = arith.constant 7.000000e+00 : f32
    %650 = vector.broadcast %cst_221 : f32 to vector<1x128xf32>
    %651 = arith.maximumf %650, %649 : vector<1x128xf32>
    %652 = vector.broadcast %cst_222 : f32 to vector<1x128xf32>
    %653 = arith.minimumf %652, %651 : vector<1x128xf32>
    %cst_223 = arith.constant 0.000000e+00 : f32
    %cst_224 = arith.constant 7.000000e+00 : f32
    %654 = vector.broadcast %cst_223 : f32 to vector<1x128xf32>
    %655 = arith.maximumf %654, %643 : vector<1x128xf32>
    %656 = vector.broadcast %cst_224 : f32 to vector<1x128xf32>
    %657 = arith.minimumf %656, %655 : vector<1x128xf32>
    %cst_225 = arith.constant 1.000000e+00 : f32
    %658 = vector.broadcast %cst_225 : f32 to vector<1x128xf32>
    %659 = arith.addf %643, %658 : vector<1x128xf32>
    %cst_226 = arith.constant 0.000000e+00 : f32
    %cst_227 = arith.constant 7.000000e+00 : f32
    %660 = vector.broadcast %cst_226 : f32 to vector<1x128xf32>
    %661 = arith.maximumf %660, %659 : vector<1x128xf32>
    %662 = vector.broadcast %cst_227 : f32 to vector<1x128xf32>
    %663 = arith.minimumf %662, %661 : vector<1x128xf32>
    %cst_228 = arith.constant 0.000000e+00 : f32
    %cst_229 = arith.constant 7.000000e+00 : f32
    %664 = vector.broadcast %cst_228 : f32 to vector<1x128xf32>
    %665 = arith.maximumf %664, %637 : vector<1x128xf32>
    %666 = vector.broadcast %cst_229 : f32 to vector<1x128xf32>
    %667 = arith.minimumf %666, %665 : vector<1x128xf32>
    %cst_230 = arith.constant 0.000000e+00 : f32
    %cst_231 = arith.constant 7.000000e+00 : f32
    %668 = vector.broadcast %cst_230 : f32 to vector<1x128xf32>
    %669 = arith.maximumf %668, %641 : vector<1x128xf32>
    %670 = vector.broadcast %cst_231 : f32 to vector<1x128xf32>
    %671 = arith.minimumf %670, %669 : vector<1x128xf32>
    %672 = arith.subf %647, %667 : vector<1x128xf32>
    %cst_232 = arith.constant 1.000000e+00 : f32
    %673 = vector.broadcast %cst_232 : f32 to vector<1x128xf32>
    %674 = arith.addf %673, %672 : vector<1x128xf32>
    %675 = arith.subf %653, %667 : vector<1x128xf32>
    %cst_233 = arith.constant 1.000000e+00 : f32
    %676 = vector.broadcast %cst_233 : f32 to vector<1x128xf32>
    %677 = arith.subf %676, %675 : vector<1x128xf32>
    %678 = arith.subf %657, %671 : vector<1x128xf32>
    %cst_234 = arith.constant 1.000000e+00 : f32
    %679 = vector.broadcast %cst_234 : f32 to vector<1x128xf32>
    %680 = arith.addf %679, %678 : vector<1x128xf32>
    %681 = arith.subf %663, %671 : vector<1x128xf32>
    %cst_235 = arith.constant 1.000000e+00 : f32
    %682 = vector.broadcast %cst_235 : f32 to vector<1x128xf32>
    %683 = arith.subf %682, %681 : vector<1x128xf32>
    %684 = vector.broadcast %647 : vector<1x128xf32> to vector<8x128xf32>
    %685 = arith.cmpf oeq, %28, %684 : vector<8x128xf32>
    %cst_236 = arith.constant 0.000000e+00 : f32
    %686 = vector.shape_cast %674 : vector<1x128xf32> to vector<1x128xf32>
    %687 = vector.broadcast %686 : vector<1x128xf32> to vector<8x128xf32>
    %688 = vector.broadcast %cst_236 : f32 to vector<8x128xf32>
    %689 = arith.select %685, %687, %688 : vector<8x128xi1>, vector<8x128xf32>
    %690 = vector.broadcast %653 : vector<1x128xf32> to vector<8x128xf32>
    %691 = arith.cmpf oeq, %28, %690 : vector<8x128xf32>
    %cst_237 = arith.constant 0.000000e+00 : f32
    %692 = vector.shape_cast %677 : vector<1x128xf32> to vector<1x128xf32>
    %693 = vector.broadcast %692 : vector<1x128xf32> to vector<8x128xf32>
    %694 = vector.broadcast %cst_237 : f32 to vector<8x128xf32>
    %695 = arith.select %691, %693, %694 : vector<8x128xi1>, vector<8x128xf32>
    %696 = arith.addf %689, %695 : vector<8x128xf32>
    %697 = vector.broadcast %657 : vector<1x128xf32> to vector<8x128xf32>
    %698 = arith.cmpf oeq, %30, %697 : vector<8x128xf32>
    %cst_238 = arith.constant 0.000000e+00 : f32
    %699 = vector.shape_cast %680 : vector<1x128xf32> to vector<1x128xf32>
    %700 = vector.broadcast %699 : vector<1x128xf32> to vector<8x128xf32>
    %701 = vector.broadcast %cst_238 : f32 to vector<8x128xf32>
    %702 = arith.select %698, %700, %701 : vector<8x128xi1>, vector<8x128xf32>
    %703 = vector.broadcast %663 : vector<1x128xf32> to vector<8x128xf32>
    %704 = arith.cmpf oeq, %30, %703 : vector<8x128xf32>
    %cst_239 = arith.constant 0.000000e+00 : f32
    %705 = vector.shape_cast %683 : vector<1x128xf32> to vector<1x128xf32>
    %706 = vector.broadcast %705 : vector<1x128xf32> to vector<8x128xf32>
    %707 = vector.broadcast %cst_239 : f32 to vector<8x128xf32>
    %708 = arith.select %704, %706, %707 : vector<8x128xi1>, vector<8x128xf32>
    %709 = arith.addf %702, %708 : vector<8x128xf32>
    %cst_240 = arith.constant dense<0.000000e+00> : vector<32x128xf32>
    %710 = tpu.matmul %3, %709, %cst_240 {dimension_numbers = #tpu.dot_dimension_numbers<[1], [0], [0], [1], [0, 0, 1, 1], [], []>} : vector<32x8xf32>, vector<8x128xf32>, vector<32x128xf32> -> vector<32x128xf32>
    %711 = vector.shape_cast %710 : vector<32x128xf32> to vector<4x8x128xf32>
    %712 = vector.shape_cast %696 : vector<8x128xf32> to vector<1x8x128xf32>
    %713 = vector.broadcast %712 : vector<1x8x128xf32> to vector<4x8x128xf32>
    %714 = arith.mulf %711, %713 : vector<4x8x128xf32>
    %cst_241 = arith.constant dense<0.000000e+00> : vector<4x128xf32>
    %715 = vector.multi_reduction <add>, %714, %cst_241 [1] : vector<4x8x128xf32> to vector<4x128xf32>
    %c7 = arith.constant 7 : index
    %c0_242 = arith.constant 0 : index
    %c0_243 = arith.constant 0 : index
    %716 = vector.load %arg5[%c7, %c0_242, %c0_243] : memref<9x8x4xf32, #tpu.memory_space<vmem>>, vector<1x8x4xf32>
    %717 = vector.shape_cast %716 : vector<1x8x4xf32> to vector<8x4xf32>
    %cst_244 = arith.constant dense<0.000000e+00> : vector<8x128xf32>
    %718 = tpu.matmul %717, %715, %cst_244 {dimension_numbers = #tpu.dot_dimension_numbers<[1], [0], [0], [1], [0, 0, 1, 1], [], []>} : vector<8x4xf32>, vector<4x128xf32>, vector<8x128xf32> -> vector<8x128xf32>
    %719 = arith.addf %633, %718 : vector<8x128xf32>
    %cst_245 = arith.constant 1.000000e+00 : f32
    %720 = vector.broadcast %cst_245 : f32 to vector<1x128xf32>
    %721 = arith.addf %23, %720 : vector<1x128xf32>
    %722 = vector.extract_strided_slice %18 {offsets = [8, 0], sizes = [1, 128], strides = [1, 1]} : vector<18x128xf32> to vector<1x128xf32>
    %723 = arith.addf %721, %722 : vector<1x128xf32>
    %cst_246 = arith.constant 1.000000e+00 : f32
    %724 = vector.broadcast %cst_246 : f32 to vector<1x128xf32>
    %725 = arith.addf %26, %724 : vector<1x128xf32>
    %726 = vector.extract_strided_slice %18 {offsets = [17, 0], sizes = [1, 128], strides = [1, 1]} : vector<18x128xf32> to vector<1x128xf32>
    %727 = arith.addf %725, %726 : vector<1x128xf32>
    %728 = math.floor %723 : vector<1x128xf32>
    %729 = math.floor %727 : vector<1x128xf32>
    %cst_247 = arith.constant 0.000000e+00 : f32
    %cst_248 = arith.constant 7.000000e+00 : f32
    %730 = vector.broadcast %cst_247 : f32 to vector<1x128xf32>
    %731 = arith.maximumf %730, %728 : vector<1x128xf32>
    %732 = vector.broadcast %cst_248 : f32 to vector<1x128xf32>
    %733 = arith.minimumf %732, %731 : vector<1x128xf32>
    %cst_249 = arith.constant 1.000000e+00 : f32
    %734 = vector.broadcast %cst_249 : f32 to vector<1x128xf32>
    %735 = arith.addf %728, %734 : vector<1x128xf32>
    %cst_250 = arith.constant 0.000000e+00 : f32
    %cst_251 = arith.constant 7.000000e+00 : f32
    %736 = vector.broadcast %cst_250 : f32 to vector<1x128xf32>
    %737 = arith.maximumf %736, %735 : vector<1x128xf32>
    %738 = vector.broadcast %cst_251 : f32 to vector<1x128xf32>
    %739 = arith.minimumf %738, %737 : vector<1x128xf32>
    %cst_252 = arith.constant 0.000000e+00 : f32
    %cst_253 = arith.constant 7.000000e+00 : f32
    %740 = vector.broadcast %cst_252 : f32 to vector<1x128xf32>
    %741 = arith.maximumf %740, %729 : vector<1x128xf32>
    %742 = vector.broadcast %cst_253 : f32 to vector<1x128xf32>
    %743 = arith.minimumf %742, %741 : vector<1x128xf32>
    %cst_254 = arith.constant 1.000000e+00 : f32
    %744 = vector.broadcast %cst_254 : f32 to vector<1x128xf32>
    %745 = arith.addf %729, %744 : vector<1x128xf32>
    %cst_255 = arith.constant 0.000000e+00 : f32
    %cst_256 = arith.constant 7.000000e+00 : f32
    %746 = vector.broadcast %cst_255 : f32 to vector<1x128xf32>
    %747 = arith.maximumf %746, %745 : vector<1x128xf32>
    %748 = vector.broadcast %cst_256 : f32 to vector<1x128xf32>
    %749 = arith.minimumf %748, %747 : vector<1x128xf32>
    %cst_257 = arith.constant 0.000000e+00 : f32
    %cst_258 = arith.constant 7.000000e+00 : f32
    %750 = vector.broadcast %cst_257 : f32 to vector<1x128xf32>
    %751 = arith.maximumf %750, %723 : vector<1x128xf32>
    %752 = vector.broadcast %cst_258 : f32 to vector<1x128xf32>
    %753 = arith.minimumf %752, %751 : vector<1x128xf32>
    %cst_259 = arith.constant 0.000000e+00 : f32
    %cst_260 = arith.constant 7.000000e+00 : f32
    %754 = vector.broadcast %cst_259 : f32 to vector<1x128xf32>
    %755 = arith.maximumf %754, %727 : vector<1x128xf32>
    %756 = vector.broadcast %cst_260 : f32 to vector<1x128xf32>
    %757 = arith.minimumf %756, %755 : vector<1x128xf32>
    %758 = arith.subf %733, %753 : vector<1x128xf32>
    %cst_261 = arith.constant 1.000000e+00 : f32
    %759 = vector.broadcast %cst_261 : f32 to vector<1x128xf32>
    %760 = arith.addf %759, %758 : vector<1x128xf32>
    %761 = arith.subf %739, %753 : vector<1x128xf32>
    %cst_262 = arith.constant 1.000000e+00 : f32
    %762 = vector.broadcast %cst_262 : f32 to vector<1x128xf32>
    %763 = arith.subf %762, %761 : vector<1x128xf32>
    %764 = arith.subf %743, %757 : vector<1x128xf32>
    %cst_263 = arith.constant 1.000000e+00 : f32
    %765 = vector.broadcast %cst_263 : f32 to vector<1x128xf32>
    %766 = arith.addf %765, %764 : vector<1x128xf32>
    %767 = arith.subf %749, %757 : vector<1x128xf32>
    %cst_264 = arith.constant 1.000000e+00 : f32
    %768 = vector.broadcast %cst_264 : f32 to vector<1x128xf32>
    %769 = arith.subf %768, %767 : vector<1x128xf32>
    %770 = vector.broadcast %733 : vector<1x128xf32> to vector<8x128xf32>
    %771 = arith.cmpf oeq, %28, %770 : vector<8x128xf32>
    %cst_265 = arith.constant 0.000000e+00 : f32
    %772 = vector.shape_cast %760 : vector<1x128xf32> to vector<1x128xf32>
    %773 = vector.broadcast %772 : vector<1x128xf32> to vector<8x128xf32>
    %774 = vector.broadcast %cst_265 : f32 to vector<8x128xf32>
    %775 = arith.select %771, %773, %774 : vector<8x128xi1>, vector<8x128xf32>
    %776 = vector.broadcast %739 : vector<1x128xf32> to vector<8x128xf32>
    %777 = arith.cmpf oeq, %28, %776 : vector<8x128xf32>
    %cst_266 = arith.constant 0.000000e+00 : f32
    %778 = vector.shape_cast %763 : vector<1x128xf32> to vector<1x128xf32>
    %779 = vector.broadcast %778 : vector<1x128xf32> to vector<8x128xf32>
    %780 = vector.broadcast %cst_266 : f32 to vector<8x128xf32>
    %781 = arith.select %777, %779, %780 : vector<8x128xi1>, vector<8x128xf32>
    %782 = arith.addf %775, %781 : vector<8x128xf32>
    %783 = vector.broadcast %743 : vector<1x128xf32> to vector<8x128xf32>
    %784 = arith.cmpf oeq, %30, %783 : vector<8x128xf32>
    %cst_267 = arith.constant 0.000000e+00 : f32
    %785 = vector.shape_cast %766 : vector<1x128xf32> to vector<1x128xf32>
    %786 = vector.broadcast %785 : vector<1x128xf32> to vector<8x128xf32>
    %787 = vector.broadcast %cst_267 : f32 to vector<8x128xf32>
    %788 = arith.select %784, %786, %787 : vector<8x128xi1>, vector<8x128xf32>
    %789 = vector.broadcast %749 : vector<1x128xf32> to vector<8x128xf32>
    %790 = arith.cmpf oeq, %30, %789 : vector<8x128xf32>
    %cst_268 = arith.constant 0.000000e+00 : f32
    %791 = vector.shape_cast %769 : vector<1x128xf32> to vector<1x128xf32>
    %792 = vector.broadcast %791 : vector<1x128xf32> to vector<8x128xf32>
    %793 = vector.broadcast %cst_268 : f32 to vector<8x128xf32>
    %794 = arith.select %790, %792, %793 : vector<8x128xi1>, vector<8x128xf32>
    %795 = arith.addf %788, %794 : vector<8x128xf32>
    %cst_269 = arith.constant dense<0.000000e+00> : vector<32x128xf32>
    %796 = tpu.matmul %3, %795, %cst_269 {dimension_numbers = #tpu.dot_dimension_numbers<[1], [0], [0], [1], [0, 0, 1, 1], [], []>} : vector<32x8xf32>, vector<8x128xf32>, vector<32x128xf32> -> vector<32x128xf32>
    %797 = vector.shape_cast %796 : vector<32x128xf32> to vector<4x8x128xf32>
    %798 = vector.shape_cast %782 : vector<8x128xf32> to vector<1x8x128xf32>
    %799 = vector.broadcast %798 : vector<1x8x128xf32> to vector<4x8x128xf32>
    %800 = arith.mulf %797, %799 : vector<4x8x128xf32>
    %cst_270 = arith.constant dense<0.000000e+00> : vector<4x128xf32>
    %801 = vector.multi_reduction <add>, %800, %cst_270 [1] : vector<4x8x128xf32> to vector<4x128xf32>
    %c8 = arith.constant 8 : index
    %c0_271 = arith.constant 0 : index
    %c0_272 = arith.constant 0 : index
    %802 = vector.load %arg5[%c8, %c0_271, %c0_272] : memref<9x8x4xf32, #tpu.memory_space<vmem>>, vector<1x8x4xf32>
    %803 = vector.shape_cast %802 : vector<1x8x4xf32> to vector<8x4xf32>
    %cst_273 = arith.constant dense<0.000000e+00> : vector<8x128xf32>
    %804 = tpu.matmul %803, %801, %cst_273 {dimension_numbers = #tpu.dot_dimension_numbers<[1], [0], [0], [1], [0, 0, 1, 1], [], []>} : vector<8x4xf32>, vector<4x128xf32>, vector<8x128xf32> -> vector<8x128xf32>
    %805 = arith.addf %719, %804 : vector<8x128xf32>
    %c0_274 = arith.constant 0 : index
    %c0_275 = arith.constant 0 : index
    %806 = vector.load %arg6[%c0_274, %c0_275] : memref<8x1xf32, #tpu.memory_space<vmem>>, vector<8x1xf32>
    %807 = vector.broadcast %806 : vector<8x1xf32> to vector<8x128xf32>
    %808 = arith.mulf %805, %807 : vector<8x128xf32>
    %c0_276 = arith.constant 0 : index
    %c0_277 = arith.constant 0 : index
    %809 = vector.load %arg7[%c0_276, %c0_277] : memref<8x1xf32, #tpu.memory_space<vmem>>, vector<8x1xf32>
    %810 = vector.broadcast %809 : vector<8x1xf32> to vector<8x128xf32>
    %811 = arith.addf %808, %810 : vector<8x128xf32>
    %cst_278 = arith.constant 0.000000e+00 : f32
    %812 = vector.broadcast %cst_278 : f32 to vector<8x128xf32>
    %813 = arith.maximumf %811, %812 : vector<8x128xf32>
    %c0_279 = arith.constant 0 : index
    %c0_280 = arith.constant 0 : index
    %c0_281 = arith.constant 0 : index
    %814 = vector.load %arg8[%c0_279, %c0_280, %c0_281] : memref<1x8x128xf32, #tpu.memory_space<vmem>>, vector<1x8x128xf32>
    %815 = vector.shape_cast %814 : vector<1x8x128xf32> to vector<8x128xf32>
    %816 = vector.shape_cast %813 : vector<8x128xf32> to vector<1x8x128xf32>
    tpu.vector_store %arg8[%c0_279, %c0_280, %c0_281], %816 {strides = array<i32>} : memref<1x8x128xf32, #tpu.memory_space<vmem>>, vector<1x8x128xf32>,
    return
  }
  func.func @transform_0(%arg0: i32) -> (i32, i32, i32) {
    %c0_i32 = arith.constant 0 : i32
    %c0_i32_0 = arith.constant 0 : i32
    %c0_i32_1 = arith.constant 0 : i32
    return %arg0, %c0_i32, %c0_i32_0 : i32, i32, i32
  }
  func.func @transform_1(%arg0: i32) -> (i32, i32, i32) {
    %c0_i32 = arith.constant 0 : i32
    %c0_i32_0 = arith.constant 0 : i32
    %c0_i32_1 = arith.constant 0 : i32
    return %arg0, %c0_i32, %c0_i32_0 : i32, i32, i32
  }
  func.func @transform_2(%arg0: i32) -> (i32, i32) {
    %c0_i32 = arith.constant 0 : i32
    %c0_i32_0 = arith.constant 0 : i32
    %c0_i32_1 = arith.constant 0 : i32
    return %c0_i32, %c0_i32_0 : i32, i32
  }
  func.func @transform_3(%arg0: i32) -> (i32, i32) {
    %c0_i32 = arith.constant 0 : i32
    %c0_i32_0 = arith.constant 0 : i32
    %c0_i32_1 = arith.constant 0 : i32
    return %c0_i32, %c0_i32_0 : i32, i32
  }
  func.func @transform_4(%arg0: i32) -> (i32, i32, i32) {
    %c0_i32 = arith.constant 0 : i32
    %c0_i32_0 = arith.constant 0 : i32
    %c0_i32_1 = arith.constant 0 : i32
    %c0_i32_2 = arith.constant 0 : i32
    return %c0_i32, %c0_i32_0, %c0_i32_1 : i32, i32, i32
  }
  func.func @transform_5(%arg0: i32) -> (i32, i32) {
    %c0_i32 = arith.constant 0 : i32
    %c0_i32_0 = arith.constant 0 : i32
    %c0_i32_1 = arith.constant 0 : i32
    return %c0_i32, %c0_i32_0 : i32, i32
  }
  func.func @transform_6(%arg0: i32) -> (i32, i32) {
    %c0_i32 = arith.constant 0 : i32
    %c0_i32_0 = arith.constant 0 : i32
    %c0_i32_1 = arith.constant 0 : i32
    return %c0_i32, %c0_i32_0 : i32, i32
  }
  func.func @transform_7(%arg0: i32) -> (i32, i32, i32) {
    %c0_i32 = arith.constant 0 : i32
    %c0_i32_0 = arith.constant 0 : i32
    %c0_i32_1 = arith.constant 0 : i32
    return %arg0, %c0_i32, %c0_i32_0 : i32, i32, i32
  }
}

module attributes {stable_mosaic.version = 11 : i64} {
  func.func @_deform_bn_relu_kernel(%arg0: i32, %arg1: memref<1x8x256xf32, #tpu.memory_space<vmem>>, %arg2: memref<1x64x8xf32, #tpu.memory_space<vmem>>, %arg3: memref<18x72xf32, #tpu.memory_space<vmem>>, %arg4: memref<18x1xf32, #tpu.memory_space<vmem>>, %arg5: memref<9x8x8xf32, #tpu.memory_space<vmem>>, %arg6: memref<8x1xf32, #tpu.memory_space<vmem>>, %arg7: memref<8x1xf32, #tpu.memory_space<vmem>>, %arg8: memref<1x8x128xf32, #tpu.memory_space<vmem>>) attributes {dimension_semantics = [#tpu.dimension_semantics<parallel>], iteration_bounds = array<i64: 2>, scalar_prefetch = 0 : i64, scratch_operands = 0 : i64, tpu.core_type = #tpu.core_type<tc>, window_params = [{transform_indices = @transform_0, window_bounds = array<i64: 1, 8, 256>}, {transform_indices = @transform_1, window_bounds = array<i64: 1, 64, 8>}, {pipeline_mode = #tpu.pipeline_mode<synchronous>, transform_indices = @transform_2, window_bounds = array<i64: 18, 72>}, {pipeline_mode = #tpu.pipeline_mode<synchronous>, transform_indices = @transform_3, window_bounds = array<i64: 18, 1>}, {pipeline_mode = #tpu.pipeline_mode<synchronous>, transform_indices = @transform_4, window_bounds = array<i64: 9, 8, 8>}, {pipeline_mode = #tpu.pipeline_mode<synchronous>, transform_indices = @transform_5, window_bounds = array<i64: 8, 1>}, {pipeline_mode = #tpu.pipeline_mode<synchronous>, transform_indices = @transform_6, window_bounds = array<i64: 8, 1>}, {transform_indices = @transform_7, window_bounds = array<i64: 1, 8, 128>}]} {
    %c0 = arith.constant 0 : index
    %c0_0 = arith.constant 0 : index
    %c0_1 = arith.constant 0 : index
    %0 = vector.load %arg1[%c0, %c0_0, %c0_1] : memref<1x8x256xf32, #tpu.memory_space<vmem>>, vector<1x8x256xf32>
    %1 = vector.shape_cast %0 : vector<1x8x256xf32> to vector<8x256xf32>
    %c0_2 = arith.constant 0 : index
    %c0_3 = arith.constant 0 : index
    %c0_4 = arith.constant 0 : index
    %2 = vector.load %arg2[%c0_2, %c0_3, %c0_4] : memref<1x64x8xf32, #tpu.memory_space<vmem>>, vector<1x64x8xf32>
    %3 = vector.shape_cast %2 : vector<1x64x8xf32> to vector<64x8xf32>
    %4 = vector.extract_strided_slice %1 {offsets = [0, 0], sizes = [8, 128], strides = [1, 1]} : vector<8x256xf32> to vector<8x128xf32>
    %5 = vector.extract_strided_slice %1 {offsets = [0, 1], sizes = [8, 128], strides = [1, 1]} : vector<8x256xf32> to vector<8x128xf32>
    %6 = vector.extract_strided_slice %1 {offsets = [0, 2], sizes = [8, 128], strides = [1, 1]} : vector<8x256xf32> to vector<8x128xf32>
    %7 = vector.extract_strided_slice %1 {offsets = [0, 10], sizes = [8, 128], strides = [1, 1]} : vector<8x256xf32> to vector<8x128xf32>
    %8 = vector.extract_strided_slice %1 {offsets = [0, 11], sizes = [8, 128], strides = [1, 1]} : vector<8x256xf32> to vector<8x128xf32>
    %9 = vector.extract_strided_slice %1 {offsets = [0, 12], sizes = [8, 128], strides = [1, 1]} : vector<8x256xf32> to vector<8x128xf32>
    %10 = vector.extract_strided_slice %1 {offsets = [0, 20], sizes = [8, 128], strides = [1, 1]} : vector<8x256xf32> to vector<8x128xf32>
    %11 = vector.extract_strided_slice %1 {offsets = [0, 21], sizes = [8, 128], strides = [1, 1]} : vector<8x256xf32> to vector<8x128xf32>
    %12 = vector.extract_strided_slice %1 {offsets = [0, 22], sizes = [8, 128], strides = [1, 1]} : vector<8x256xf32> to vector<8x128xf32>
    %13 = tpu.concatenate %4, %5, %6, %7, %8, %9, %10, %11, %12 in 0 : vector<8x128xf32>, vector<8x128xf32>, vector<8x128xf32>, vector<8x128xf32>, vector<8x128xf32>, vector<8x128xf32>, vector<8x128xf32>, vector<8x128xf32>, vector<8x128xf32> -> vector<72x128xf32>
    %c0_5 = arith.constant 0 : index
    %c0_6 = arith.constant 0 : index
    %14 = vector.load %arg3[%c0_5, %c0_6] : memref<18x72xf32, #tpu.memory_space<vmem>>, vector<18x72xf32>
    %cst = arith.constant dense<0.000000e+00> : vector<18x128xf32>
    %15 = tpu.matmul %14, %13, %cst {dimension_numbers = #tpu.dot_dimension_numbers<[1], [0], [0], [1], [0, 0, 1, 1], [], []>} : vector<18x72xf32>, vector<72x128xf32>, vector<18x128xf32> -> vector<18x128xf32>
    %c0_7 = arith.constant 0 : index
    %c0_8 = arith.constant 0 : index
    %16 = vector.load %arg4[%c0_7, %c0_8] : memref<18x1xf32, #tpu.memory_space<vmem>>, vector<18x1xf32>
    %17 = vector.broadcast %16 : vector<18x1xf32> to vector<18x128xf32>
    %18 = arith.addf %15, %17 : vector<18x128xf32>
    %19 = tpu.iota {dimensions = array<i32: 1>} : vector<1x128xi32>
    %20 = arith.sitofp %19 : vector<1x128xi32> to vector<1x128xf32>
    %cst_9 = arith.constant 1.000000e+01 : f32
    %21 = vector.broadcast %cst_9 : f32 to vector<1x128xf32>
    %22 = arith.divf %20, %21 : vector<1x128xf32>
    %23 = math.floor %22 : vector<1x128xf32>
    %cst_10 = arith.constant 1.000000e+01 : f32
    %24 = vector.broadcast %cst_10 : f32 to vector<1x128xf32>
    %25 = arith.mulf %23, %24 : vector<1x128xf32>
    %26 = arith.subf %20, %25 : vector<1x128xf32>
    %27 = tpu.iota {dimensions = array<i32: 0>} : vector<8x128xi32>
    %28 = arith.sitofp %27 : vector<8x128xi32> to vector<8x128xf32>
    %29 = tpu.iota {dimensions = array<i32: 0>} : vector<8x128xi32>
    %30 = arith.sitofp %29 : vector<8x128xi32> to vector<8x128xf32>
    %cst_11 = arith.constant 0.000000e+00 : f32
    %31 = vector.broadcast %cst_11 : f32 to vector<8x128xf32>
    %cst_12 = arith.constant -1.000000e+00 : f32
    %32 = vector.broadcast %cst_12 : f32 to vector<1x128xf32>
    %33 = arith.addf %23, %32 : vector<1x128xf32>
    %34 = vector.extract_strided_slice %18 {offsets = [0, 0], sizes = [1, 128], strides = [1, 1]} : vector<18x128xf32> to vector<1x128xf32>
    %35 = arith.addf %33, %34 : vector<1x128xf32>
    %cst_13 = arith.constant -1.000000e+00 : f32
    %36 = vector.broadcast %cst_13 : f32 to vector<1x128xf32>
    %37 = arith.addf %26, %36 : vector<1x128xf32>
    %38 = vector.extract_strided_slice %18 {offsets = [9, 0], sizes = [1, 128], strides = [1, 1]} : vector<18x128xf32> to vector<1x128xf32>
    %39 = arith.addf %37, %38 : vector<1x128xf32>
    %40 = math.floor %35 : vector<1x128xf32>
    %41 = math.floor %39 : vector<1x128xf32>
    %cst_14 = arith.constant 0.000000e+00 : f32
    %cst_15 = arith.constant 7.000000e+00 : f32
    %42 = vector.broadcast %cst_14 : f32 to vector<1x128xf32>
    %43 = arith.maximumf %42, %40 : vector<1x128xf32>
    %44 = vector.broadcast %cst_15 : f32 to vector<1x128xf32>
    %45 = arith.minimumf %44, %43 : vector<1x128xf32>
    %cst_16 = arith.constant 1.000000e+00 : f32
    %46 = vector.broadcast %cst_16 : f32 to vector<1x128xf32>
    %47 = arith.addf %40, %46 : vector<1x128xf32>
    %cst_17 = arith.constant 0.000000e+00 : f32
    %cst_18 = arith.constant 7.000000e+00 : f32
    %48 = vector.broadcast %cst_17 : f32 to vector<1x128xf32>
    %49 = arith.maximumf %48, %47 : vector<1x128xf32>
    %50 = vector.broadcast %cst_18 : f32 to vector<1x128xf32>
    %51 = arith.minimumf %50, %49 : vector<1x128xf32>
    %cst_19 = arith.constant 0.000000e+00 : f32
    %cst_20 = arith.constant 7.000000e+00 : f32
    %52 = vector.broadcast %cst_19 : f32 to vector<1x128xf32>
    %53 = arith.maximumf %52, %41 : vector<1x128xf32>
    %54 = vector.broadcast %cst_20 : f32 to vector<1x128xf32>
    %55 = arith.minimumf %54, %53 : vector<1x128xf32>
    %cst_21 = arith.constant 1.000000e+00 : f32
    %56 = vector.broadcast %cst_21 : f32 to vector<1x128xf32>
    %57 = arith.addf %41, %56 : vector<1x128xf32>
    %cst_22 = arith.constant 0.000000e+00 : f32
    %cst_23 = arith.constant 7.000000e+00 : f32
    %58 = vector.broadcast %cst_22 : f32 to vector<1x128xf32>
    %59 = arith.maximumf %58, %57 : vector<1x128xf32>
    %60 = vector.broadcast %cst_23 : f32 to vector<1x128xf32>
    %61 = arith.minimumf %60, %59 : vector<1x128xf32>
    %cst_24 = arith.constant 0.000000e+00 : f32
    %cst_25 = arith.constant 7.000000e+00 : f32
    %62 = vector.broadcast %cst_24 : f32 to vector<1x128xf32>
    %63 = arith.maximumf %62, %35 : vector<1x128xf32>
    %64 = vector.broadcast %cst_25 : f32 to vector<1x128xf32>
    %65 = arith.minimumf %64, %63 : vector<1x128xf32>
    %cst_26 = arith.constant 0.000000e+00 : f32
    %cst_27 = arith.constant 7.000000e+00 : f32
    %66 = vector.broadcast %cst_26 : f32 to vector<1x128xf32>
    %67 = arith.maximumf %66, %39 : vector<1x128xf32>
    %68 = vector.broadcast %cst_27 : f32 to vector<1x128xf32>
    %69 = arith.minimumf %68, %67 : vector<1x128xf32>
    %70 = arith.subf %45, %65 : vector<1x128xf32>
    %cst_28 = arith.constant 1.000000e+00 : f32
    %71 = vector.broadcast %cst_28 : f32 to vector<1x128xf32>
    %72 = arith.addf %71, %70 : vector<1x128xf32>
    %73 = arith.subf %51, %65 : vector<1x128xf32>
    %cst_29 = arith.constant 1.000000e+00 : f32
    %74 = vector.broadcast %cst_29 : f32 to vector<1x128xf32>
    %75 = arith.subf %74, %73 : vector<1x128xf32>
    %76 = arith.subf %55, %69 : vector<1x128xf32>
    %cst_30 = arith.constant 1.000000e+00 : f32
    %77 = vector.broadcast %cst_30 : f32 to vector<1x128xf32>
    %78 = arith.addf %77, %76 : vector<1x128xf32>
    %79 = arith.subf %61, %69 : vector<1x128xf32>
    %cst_31 = arith.constant 1.000000e+00 : f32
    %80 = vector.broadcast %cst_31 : f32 to vector<1x128xf32>
    %81 = arith.subf %80, %79 : vector<1x128xf32>
    %82 = vector.broadcast %45 : vector<1x128xf32> to vector<8x128xf32>
    %83 = arith.cmpf oeq, %28, %82 : vector<8x128xf32>
    %cst_32 = arith.constant 0.000000e+00 : f32
    %84 = vector.shape_cast %72 : vector<1x128xf32> to vector<1x128xf32>
    %85 = vector.broadcast %84 : vector<1x128xf32> to vector<8x128xf32>
    %86 = vector.broadcast %cst_32 : f32 to vector<8x128xf32>
    %87 = arith.select %83, %85, %86 : vector<8x128xi1>, vector<8x128xf32>
    %88 = vector.broadcast %51 : vector<1x128xf32> to vector<8x128xf32>
    %89 = arith.cmpf oeq, %28, %88 : vector<8x128xf32>
    %cst_33 = arith.constant 0.000000e+00 : f32
    %90 = vector.shape_cast %75 : vector<1x128xf32> to vector<1x128xf32>
    %91 = vector.broadcast %90 : vector<1x128xf32> to vector<8x128xf32>
    %92 = vector.broadcast %cst_33 : f32 to vector<8x128xf32>
    %93 = arith.select %89, %91, %92 : vector<8x128xi1>, vector<8x128xf32>
    %94 = arith.addf %87, %93 : vector<8x128xf32>
    %95 = vector.broadcast %55 : vector<1x128xf32> to vector<8x128xf32>
    %96 = arith.cmpf oeq, %30, %95 : vector<8x128xf32>
    %cst_34 = arith.constant 0.000000e+00 : f32
    %97 = vector.shape_cast %78 : vector<1x128xf32> to vector<1x128xf32>
    %98 = vector.broadcast %97 : vector<1x128xf32> to vector<8x128xf32>
    %99 = vector.broadcast %cst_34 : f32 to vector<8x128xf32>
    %100 = arith.select %96, %98, %99 : vector<8x128xi1>, vector<8x128xf32>
    %101 = vector.broadcast %61 : vector<1x128xf32> to vector<8x128xf32>
    %102 = arith.cmpf oeq, %30, %101 : vector<8x128xf32>
    %cst_35 = arith.constant 0.000000e+00 : f32
    %103 = vector.shape_cast %81 : vector<1x128xf32> to vector<1x128xf32>
    %104 = vector.broadcast %103 : vector<1x128xf32> to vector<8x128xf32>
    %105 = vector.broadcast %cst_35 : f32 to vector<8x128xf32>
    %106 = arith.select %102, %104, %105 : vector<8x128xi1>, vector<8x128xf32>
    %107 = arith.addf %100, %106 : vector<8x128xf32>
    %cst_36 = arith.constant dense<0.000000e+00> : vector<64x128xf32>
    %108 = tpu.matmul %3, %107, %cst_36 {dimension_numbers = #tpu.dot_dimension_numbers<[1], [0], [0], [1], [0, 0, 1, 1], [], []>} : vector<64x8xf32>, vector<8x128xf32>, vector<64x128xf32> -> vector<64x128xf32>
    %109 = vector.shape_cast %108 : vector<64x128xf32> to vector<8x8x128xf32>
    %110 = vector.shape_cast %94 : vector<8x128xf32> to vector<1x8x128xf32>
    %111 = vector.broadcast %110 : vector<1x8x128xf32> to vector<8x8x128xf32>
    %112 = arith.mulf %109, %111 : vector<8x8x128xf32>
    %cst_37 = arith.constant dense<0.000000e+00> : vector<8x128xf32>
    %113 = vector.multi_reduction <add>, %112, %cst_37 [1] : vector<8x8x128xf32> to vector<8x128xf32>
    %c0_38 = arith.constant 0 : index
    %c0_39 = arith.constant 0 : index
    %c0_40 = arith.constant 0 : index
    %114 = vector.load %arg5[%c0_38, %c0_39, %c0_40] : memref<9x8x8xf32, #tpu.memory_space<vmem>>, vector<1x8x8xf32>
    %115 = vector.shape_cast %114 : vector<1x8x8xf32> to vector<8x8xf32>
    %cst_41 = arith.constant dense<0.000000e+00> : vector<8x128xf32>
    %116 = tpu.matmul %115, %113, %cst_41 {dimension_numbers = #tpu.dot_dimension_numbers<[1], [0], [0], [1], [0, 0, 1, 1], [], []>} : vector<8x8xf32>, vector<8x128xf32>, vector<8x128xf32> -> vector<8x128xf32>
    %117 = arith.addf %31, %116 : vector<8x128xf32>
    %cst_42 = arith.constant -1.000000e+00 : f32
    %118 = vector.broadcast %cst_42 : f32 to vector<1x128xf32>
    %119 = arith.addf %23, %118 : vector<1x128xf32>
    %120 = vector.extract_strided_slice %18 {offsets = [1, 0], sizes = [1, 128], strides = [1, 1]} : vector<18x128xf32> to vector<1x128xf32>
    %121 = arith.addf %119, %120 : vector<1x128xf32>
    %cst_43 = arith.constant 0.000000e+00 : f32
    %122 = vector.broadcast %cst_43 : f32 to vector<1x128xf32>
    %123 = arith.addf %26, %122 : vector<1x128xf32>
    %124 = vector.extract_strided_slice %18 {offsets = [10, 0], sizes = [1, 128], strides = [1, 1]} : vector<18x128xf32> to vector<1x128xf32>
    %125 = arith.addf %123, %124 : vector<1x128xf32>
    %126 = math.floor %121 : vector<1x128xf32>
    %127 = math.floor %125 : vector<1x128xf32>
    %cst_44 = arith.constant 0.000000e+00 : f32
    %cst_45 = arith.constant 7.000000e+00 : f32
    %128 = vector.broadcast %cst_44 : f32 to vector<1x128xf32>
    %129 = arith.maximumf %128, %126 : vector<1x128xf32>
    %130 = vector.broadcast %cst_45 : f32 to vector<1x128xf32>
    %131 = arith.minimumf %130, %129 : vector<1x128xf32>
    %cst_46 = arith.constant 1.000000e+00 : f32
    %132 = vector.broadcast %cst_46 : f32 to vector<1x128xf32>
    %133 = arith.addf %126, %132 : vector<1x128xf32>
    %cst_47 = arith.constant 0.000000e+00 : f32
    %cst_48 = arith.constant 7.000000e+00 : f32
    %134 = vector.broadcast %cst_47 : f32 to vector<1x128xf32>
    %135 = arith.maximumf %134, %133 : vector<1x128xf32>
    %136 = vector.broadcast %cst_48 : f32 to vector<1x128xf32>
    %137 = arith.minimumf %136, %135 : vector<1x128xf32>
    %cst_49 = arith.constant 0.000000e+00 : f32
    %cst_50 = arith.constant 7.000000e+00 : f32
    %138 = vector.broadcast %cst_49 : f32 to vector<1x128xf32>
    %139 = arith.maximumf %138, %127 : vector<1x128xf32>
    %140 = vector.broadcast %cst_50 : f32 to vector<1x128xf32>
    %141 = arith.minimumf %140, %139 : vector<1x128xf32>
    %cst_51 = arith.constant 1.000000e+00 : f32
    %142 = vector.broadcast %cst_51 : f32 to vector<1x128xf32>
    %143 = arith.addf %127, %142 : vector<1x128xf32>
    %cst_52 = arith.constant 0.000000e+00 : f32
    %cst_53 = arith.constant 7.000000e+00 : f32
    %144 = vector.broadcast %cst_52 : f32 to vector<1x128xf32>
    %145 = arith.maximumf %144, %143 : vector<1x128xf32>
    %146 = vector.broadcast %cst_53 : f32 to vector<1x128xf32>
    %147 = arith.minimumf %146, %145 : vector<1x128xf32>
    %cst_54 = arith.constant 0.000000e+00 : f32
    %cst_55 = arith.constant 7.000000e+00 : f32
    %148 = vector.broadcast %cst_54 : f32 to vector<1x128xf32>
    %149 = arith.maximumf %148, %121 : vector<1x128xf32>
    %150 = vector.broadcast %cst_55 : f32 to vector<1x128xf32>
    %151 = arith.minimumf %150, %149 : vector<1x128xf32>
    %cst_56 = arith.constant 0.000000e+00 : f32
    %cst_57 = arith.constant 7.000000e+00 : f32
    %152 = vector.broadcast %cst_56 : f32 to vector<1x128xf32>
    %153 = arith.maximumf %152, %125 : vector<1x128xf32>
    %154 = vector.broadcast %cst_57 : f32 to vector<1x128xf32>
    %155 = arith.minimumf %154, %153 : vector<1x128xf32>
    %156 = arith.subf %131, %151 : vector<1x128xf32>
    %cst_58 = arith.constant 1.000000e+00 : f32
    %157 = vector.broadcast %cst_58 : f32 to vector<1x128xf32>
    %158 = arith.addf %157, %156 : vector<1x128xf32>
    %159 = arith.subf %137, %151 : vector<1x128xf32>
    %cst_59 = arith.constant 1.000000e+00 : f32
    %160 = vector.broadcast %cst_59 : f32 to vector<1x128xf32>
    %161 = arith.subf %160, %159 : vector<1x128xf32>
    %162 = arith.subf %141, %155 : vector<1x128xf32>
    %cst_60 = arith.constant 1.000000e+00 : f32
    %163 = vector.broadcast %cst_60 : f32 to vector<1x128xf32>
    %164 = arith.addf %163, %162 : vector<1x128xf32>
    %165 = arith.subf %147, %155 : vector<1x128xf32>
    %cst_61 = arith.constant 1.000000e+00 : f32
    %166 = vector.broadcast %cst_61 : f32 to vector<1x128xf32>
    %167 = arith.subf %166, %165 : vector<1x128xf32>
    %168 = vector.broadcast %131 : vector<1x128xf32> to vector<8x128xf32>
    %169 = arith.cmpf oeq, %28, %168 : vector<8x128xf32>
    %cst_62 = arith.constant 0.000000e+00 : f32
    %170 = vector.shape_cast %158 : vector<1x128xf32> to vector<1x128xf32>
    %171 = vector.broadcast %170 : vector<1x128xf32> to vector<8x128xf32>
    %172 = vector.broadcast %cst_62 : f32 to vector<8x128xf32>
    %173 = arith.select %169, %171, %172 : vector<8x128xi1>, vector<8x128xf32>
    %174 = vector.broadcast %137 : vector<1x128xf32> to vector<8x128xf32>
    %175 = arith.cmpf oeq, %28, %174 : vector<8x128xf32>
    %cst_63 = arith.constant 0.000000e+00 : f32
    %176 = vector.shape_cast %161 : vector<1x128xf32> to vector<1x128xf32>
    %177 = vector.broadcast %176 : vector<1x128xf32> to vector<8x128xf32>
    %178 = vector.broadcast %cst_63 : f32 to vector<8x128xf32>
    %179 = arith.select %175, %177, %178 : vector<8x128xi1>, vector<8x128xf32>
    %180 = arith.addf %173, %179 : vector<8x128xf32>
    %181 = vector.broadcast %141 : vector<1x128xf32> to vector<8x128xf32>
    %182 = arith.cmpf oeq, %30, %181 : vector<8x128xf32>
    %cst_64 = arith.constant 0.000000e+00 : f32
    %183 = vector.shape_cast %164 : vector<1x128xf32> to vector<1x128xf32>
    %184 = vector.broadcast %183 : vector<1x128xf32> to vector<8x128xf32>
    %185 = vector.broadcast %cst_64 : f32 to vector<8x128xf32>
    %186 = arith.select %182, %184, %185 : vector<8x128xi1>, vector<8x128xf32>
    %187 = vector.broadcast %147 : vector<1x128xf32> to vector<8x128xf32>
    %188 = arith.cmpf oeq, %30, %187 : vector<8x128xf32>
    %cst_65 = arith.constant 0.000000e+00 : f32
    %189 = vector.shape_cast %167 : vector<1x128xf32> to vector<1x128xf32>
    %190 = vector.broadcast %189 : vector<1x128xf32> to vector<8x128xf32>
    %191 = vector.broadcast %cst_65 : f32 to vector<8x128xf32>
    %192 = arith.select %188, %190, %191 : vector<8x128xi1>, vector<8x128xf32>
    %193 = arith.addf %186, %192 : vector<8x128xf32>
    %cst_66 = arith.constant dense<0.000000e+00> : vector<64x128xf32>
    %194 = tpu.matmul %3, %193, %cst_66 {dimension_numbers = #tpu.dot_dimension_numbers<[1], [0], [0], [1], [0, 0, 1, 1], [], []>} : vector<64x8xf32>, vector<8x128xf32>, vector<64x128xf32> -> vector<64x128xf32>
    %195 = vector.shape_cast %194 : vector<64x128xf32> to vector<8x8x128xf32>
    %196 = vector.shape_cast %180 : vector<8x128xf32> to vector<1x8x128xf32>
    %197 = vector.broadcast %196 : vector<1x8x128xf32> to vector<8x8x128xf32>
    %198 = arith.mulf %195, %197 : vector<8x8x128xf32>
    %cst_67 = arith.constant dense<0.000000e+00> : vector<8x128xf32>
    %199 = vector.multi_reduction <add>, %198, %cst_67 [1] : vector<8x8x128xf32> to vector<8x128xf32>
    %c1 = arith.constant 1 : index
    %c0_68 = arith.constant 0 : index
    %c0_69 = arith.constant 0 : index
    %200 = vector.load %arg5[%c1, %c0_68, %c0_69] : memref<9x8x8xf32, #tpu.memory_space<vmem>>, vector<1x8x8xf32>
    %201 = vector.shape_cast %200 : vector<1x8x8xf32> to vector<8x8xf32>
    %cst_70 = arith.constant dense<0.000000e+00> : vector<8x128xf32>
    %202 = tpu.matmul %201, %199, %cst_70 {dimension_numbers = #tpu.dot_dimension_numbers<[1], [0], [0], [1], [0, 0, 1, 1], [], []>} : vector<8x8xf32>, vector<8x128xf32>, vector<8x128xf32> -> vector<8x128xf32>
    %203 = arith.addf %117, %202 : vector<8x128xf32>
    %cst_71 = arith.constant -1.000000e+00 : f32
    %204 = vector.broadcast %cst_71 : f32 to vector<1x128xf32>
    %205 = arith.addf %23, %204 : vector<1x128xf32>
    %206 = vector.extract_strided_slice %18 {offsets = [2, 0], sizes = [1, 128], strides = [1, 1]} : vector<18x128xf32> to vector<1x128xf32>
    %207 = arith.addf %205, %206 : vector<1x128xf32>
    %cst_72 = arith.constant 1.000000e+00 : f32
    %208 = vector.broadcast %cst_72 : f32 to vector<1x128xf32>
    %209 = arith.addf %26, %208 : vector<1x128xf32>
    %210 = vector.extract_strided_slice %18 {offsets = [11, 0], sizes = [1, 128], strides = [1, 1]} : vector<18x128xf32> to vector<1x128xf32>
    %211 = arith.addf %209, %210 : vector<1x128xf32>
    %212 = math.floor %207 : vector<1x128xf32>
    %213 = math.floor %211 : vector<1x128xf32>
    %cst_73 = arith.constant 0.000000e+00 : f32
    %cst_74 = arith.constant 7.000000e+00 : f32
    %214 = vector.broadcast %cst_73 : f32 to vector<1x128xf32>
    %215 = arith.maximumf %214, %212 : vector<1x128xf32>
    %216 = vector.broadcast %cst_74 : f32 to vector<1x128xf32>
    %217 = arith.minimumf %216, %215 : vector<1x128xf32>
    %cst_75 = arith.constant 1.000000e+00 : f32
    %218 = vector.broadcast %cst_75 : f32 to vector<1x128xf32>
    %219 = arith.addf %212, %218 : vector<1x128xf32>
    %cst_76 = arith.constant 0.000000e+00 : f32
    %cst_77 = arith.constant 7.000000e+00 : f32
    %220 = vector.broadcast %cst_76 : f32 to vector<1x128xf32>
    %221 = arith.maximumf %220, %219 : vector<1x128xf32>
    %222 = vector.broadcast %cst_77 : f32 to vector<1x128xf32>
    %223 = arith.minimumf %222, %221 : vector<1x128xf32>
    %cst_78 = arith.constant 0.000000e+00 : f32
    %cst_79 = arith.constant 7.000000e+00 : f32
    %224 = vector.broadcast %cst_78 : f32 to vector<1x128xf32>
    %225 = arith.maximumf %224, %213 : vector<1x128xf32>
    %226 = vector.broadcast %cst_79 : f32 to vector<1x128xf32>
    %227 = arith.minimumf %226, %225 : vector<1x128xf32>
    %cst_80 = arith.constant 1.000000e+00 : f32
    %228 = vector.broadcast %cst_80 : f32 to vector<1x128xf32>
    %229 = arith.addf %213, %228 : vector<1x128xf32>
    %cst_81 = arith.constant 0.000000e+00 : f32
    %cst_82 = arith.constant 7.000000e+00 : f32
    %230 = vector.broadcast %cst_81 : f32 to vector<1x128xf32>
    %231 = arith.maximumf %230, %229 : vector<1x128xf32>
    %232 = vector.broadcast %cst_82 : f32 to vector<1x128xf32>
    %233 = arith.minimumf %232, %231 : vector<1x128xf32>
    %cst_83 = arith.constant 0.000000e+00 : f32
    %cst_84 = arith.constant 7.000000e+00 : f32
    %234 = vector.broadcast %cst_83 : f32 to vector<1x128xf32>
    %235 = arith.maximumf %234, %207 : vector<1x128xf32>
    %236 = vector.broadcast %cst_84 : f32 to vector<1x128xf32>
    %237 = arith.minimumf %236, %235 : vector<1x128xf32>
    %cst_85 = arith.constant 0.000000e+00 : f32
    %cst_86 = arith.constant 7.000000e+00 : f32
    %238 = vector.broadcast %cst_85 : f32 to vector<1x128xf32>
    %239 = arith.maximumf %238, %211 : vector<1x128xf32>
    %240 = vector.broadcast %cst_86 : f32 to vector<1x128xf32>
    %241 = arith.minimumf %240, %239 : vector<1x128xf32>
    %242 = arith.subf %217, %237 : vector<1x128xf32>
    %cst_87 = arith.constant 1.000000e+00 : f32
    %243 = vector.broadcast %cst_87 : f32 to vector<1x128xf32>
    %244 = arith.addf %243, %242 : vector<1x128xf32>
    %245 = arith.subf %223, %237 : vector<1x128xf32>
    %cst_88 = arith.constant 1.000000e+00 : f32
    %246 = vector.broadcast %cst_88 : f32 to vector<1x128xf32>
    %247 = arith.subf %246, %245 : vector<1x128xf32>
    %248 = arith.subf %227, %241 : vector<1x128xf32>
    %cst_89 = arith.constant 1.000000e+00 : f32
    %249 = vector.broadcast %cst_89 : f32 to vector<1x128xf32>
    %250 = arith.addf %249, %248 : vector<1x128xf32>
    %251 = arith.subf %233, %241 : vector<1x128xf32>
    %cst_90 = arith.constant 1.000000e+00 : f32
    %252 = vector.broadcast %cst_90 : f32 to vector<1x128xf32>
    %253 = arith.subf %252, %251 : vector<1x128xf32>
    %254 = vector.broadcast %217 : vector<1x128xf32> to vector<8x128xf32>
    %255 = arith.cmpf oeq, %28, %254 : vector<8x128xf32>
    %cst_91 = arith.constant 0.000000e+00 : f32
    %256 = vector.shape_cast %244 : vector<1x128xf32> to vector<1x128xf32>
    %257 = vector.broadcast %256 : vector<1x128xf32> to vector<8x128xf32>
    %258 = vector.broadcast %cst_91 : f32 to vector<8x128xf32>
    %259 = arith.select %255, %257, %258 : vector<8x128xi1>, vector<8x128xf32>
    %260 = vector.broadcast %223 : vector<1x128xf32> to vector<8x128xf32>
    %261 = arith.cmpf oeq, %28, %260 : vector<8x128xf32>
    %cst_92 = arith.constant 0.000000e+00 : f32
    %262 = vector.shape_cast %247 : vector<1x128xf32> to vector<1x128xf32>
    %263 = vector.broadcast %262 : vector<1x128xf32> to vector<8x128xf32>
    %264 = vector.broadcast %cst_92 : f32 to vector<8x128xf32>
    %265 = arith.select %261, %263, %264 : vector<8x128xi1>, vector<8x128xf32>
    %266 = arith.addf %259, %265 : vector<8x128xf32>
    %267 = vector.broadcast %227 : vector<1x128xf32> to vector<8x128xf32>
    %268 = arith.cmpf oeq, %30, %267 : vector<8x128xf32>
    %cst_93 = arith.constant 0.000000e+00 : f32
    %269 = vector.shape_cast %250 : vector<1x128xf32> to vector<1x128xf32>
    %270 = vector.broadcast %269 : vector<1x128xf32> to vector<8x128xf32>
    %271 = vector.broadcast %cst_93 : f32 to vector<8x128xf32>
    %272 = arith.select %268, %270, %271 : vector<8x128xi1>, vector<8x128xf32>
    %273 = vector.broadcast %233 : vector<1x128xf32> to vector<8x128xf32>
    %274 = arith.cmpf oeq, %30, %273 : vector<8x128xf32>
    %cst_94 = arith.constant 0.000000e+00 : f32
    %275 = vector.shape_cast %253 : vector<1x128xf32> to vector<1x128xf32>
    %276 = vector.broadcast %275 : vector<1x128xf32> to vector<8x128xf32>
    %277 = vector.broadcast %cst_94 : f32 to vector<8x128xf32>
    %278 = arith.select %274, %276, %277 : vector<8x128xi1>, vector<8x128xf32>
    %279 = arith.addf %272, %278 : vector<8x128xf32>
    %cst_95 = arith.constant dense<0.000000e+00> : vector<64x128xf32>
    %280 = tpu.matmul %3, %279, %cst_95 {dimension_numbers = #tpu.dot_dimension_numbers<[1], [0], [0], [1], [0, 0, 1, 1], [], []>} : vector<64x8xf32>, vector<8x128xf32>, vector<64x128xf32> -> vector<64x128xf32>
    %281 = vector.shape_cast %280 : vector<64x128xf32> to vector<8x8x128xf32>
    %282 = vector.shape_cast %266 : vector<8x128xf32> to vector<1x8x128xf32>
    %283 = vector.broadcast %282 : vector<1x8x128xf32> to vector<8x8x128xf32>
    %284 = arith.mulf %281, %283 : vector<8x8x128xf32>
    %cst_96 = arith.constant dense<0.000000e+00> : vector<8x128xf32>
    %285 = vector.multi_reduction <add>, %284, %cst_96 [1] : vector<8x8x128xf32> to vector<8x128xf32>
    %c2 = arith.constant 2 : index
    %c0_97 = arith.constant 0 : index
    %c0_98 = arith.constant 0 : index
    %286 = vector.load %arg5[%c2, %c0_97, %c0_98] : memref<9x8x8xf32, #tpu.memory_space<vmem>>, vector<1x8x8xf32>
    %287 = vector.shape_cast %286 : vector<1x8x8xf32> to vector<8x8xf32>
    %cst_99 = arith.constant dense<0.000000e+00> : vector<8x128xf32>
    %288 = tpu.matmul %287, %285, %cst_99 {dimension_numbers = #tpu.dot_dimension_numbers<[1], [0], [0], [1], [0, 0, 1, 1], [], []>} : vector<8x8xf32>, vector<8x128xf32>, vector<8x128xf32> -> vector<8x128xf32>
    %289 = arith.addf %203, %288 : vector<8x128xf32>
    %cst_100 = arith.constant 0.000000e+00 : f32
    %290 = vector.broadcast %cst_100 : f32 to vector<1x128xf32>
    %291 = arith.addf %23, %290 : vector<1x128xf32>
    %292 = vector.extract_strided_slice %18 {offsets = [3, 0], sizes = [1, 128], strides = [1, 1]} : vector<18x128xf32> to vector<1x128xf32>
    %293 = arith.addf %291, %292 : vector<1x128xf32>
    %cst_101 = arith.constant -1.000000e+00 : f32
    %294 = vector.broadcast %cst_101 : f32 to vector<1x128xf32>
    %295 = arith.addf %26, %294 : vector<1x128xf32>
    %296 = vector.extract_strided_slice %18 {offsets = [12, 0], sizes = [1, 128], strides = [1, 1]} : vector<18x128xf32> to vector<1x128xf32>
    %297 = arith.addf %295, %296 : vector<1x128xf32>
    %298 = math.floor %293 : vector<1x128xf32>
    %299 = math.floor %297 : vector<1x128xf32>
    %cst_102 = arith.constant 0.000000e+00 : f32
    %cst_103 = arith.constant 7.000000e+00 : f32
    %300 = vector.broadcast %cst_102 : f32 to vector<1x128xf32>
    %301 = arith.maximumf %300, %298 : vector<1x128xf32>
    %302 = vector.broadcast %cst_103 : f32 to vector<1x128xf32>
    %303 = arith.minimumf %302, %301 : vector<1x128xf32>
    %cst_104 = arith.constant 1.000000e+00 : f32
    %304 = vector.broadcast %cst_104 : f32 to vector<1x128xf32>
    %305 = arith.addf %298, %304 : vector<1x128xf32>
    %cst_105 = arith.constant 0.000000e+00 : f32
    %cst_106 = arith.constant 7.000000e+00 : f32
    %306 = vector.broadcast %cst_105 : f32 to vector<1x128xf32>
    %307 = arith.maximumf %306, %305 : vector<1x128xf32>
    %308 = vector.broadcast %cst_106 : f32 to vector<1x128xf32>
    %309 = arith.minimumf %308, %307 : vector<1x128xf32>
    %cst_107 = arith.constant 0.000000e+00 : f32
    %cst_108 = arith.constant 7.000000e+00 : f32
    %310 = vector.broadcast %cst_107 : f32 to vector<1x128xf32>
    %311 = arith.maximumf %310, %299 : vector<1x128xf32>
    %312 = vector.broadcast %cst_108 : f32 to vector<1x128xf32>
    %313 = arith.minimumf %312, %311 : vector<1x128xf32>
    %cst_109 = arith.constant 1.000000e+00 : f32
    %314 = vector.broadcast %cst_109 : f32 to vector<1x128xf32>
    %315 = arith.addf %299, %314 : vector<1x128xf32>
    %cst_110 = arith.constant 0.000000e+00 : f32
    %cst_111 = arith.constant 7.000000e+00 : f32
    %316 = vector.broadcast %cst_110 : f32 to vector<1x128xf32>
    %317 = arith.maximumf %316, %315 : vector<1x128xf32>
    %318 = vector.broadcast %cst_111 : f32 to vector<1x128xf32>
    %319 = arith.minimumf %318, %317 : vector<1x128xf32>
    %cst_112 = arith.constant 0.000000e+00 : f32
    %cst_113 = arith.constant 7.000000e+00 : f32
    %320 = vector.broadcast %cst_112 : f32 to vector<1x128xf32>
    %321 = arith.maximumf %320, %293 : vector<1x128xf32>
    %322 = vector.broadcast %cst_113 : f32 to vector<1x128xf32>
    %323 = arith.minimumf %322, %321 : vector<1x128xf32>
    %cst_114 = arith.constant 0.000000e+00 : f32
    %cst_115 = arith.constant 7.000000e+00 : f32
    %324 = vector.broadcast %cst_114 : f32 to vector<1x128xf32>
    %325 = arith.maximumf %324, %297 : vector<1x128xf32>
    %326 = vector.broadcast %cst_115 : f32 to vector<1x128xf32>
    %327 = arith.minimumf %326, %325 : vector<1x128xf32>
    %328 = arith.subf %303, %323 : vector<1x128xf32>
    %cst_116 = arith.constant 1.000000e+00 : f32
    %329 = vector.broadcast %cst_116 : f32 to vector<1x128xf32>
    %330 = arith.addf %329, %328 : vector<1x128xf32>
    %331 = arith.subf %309, %323 : vector<1x128xf32>
    %cst_117 = arith.constant 1.000000e+00 : f32
    %332 = vector.broadcast %cst_117 : f32 to vector<1x128xf32>
    %333 = arith.subf %332, %331 : vector<1x128xf32>
    %334 = arith.subf %313, %327 : vector<1x128xf32>
    %cst_118 = arith.constant 1.000000e+00 : f32
    %335 = vector.broadcast %cst_118 : f32 to vector<1x128xf32>
    %336 = arith.addf %335, %334 : vector<1x128xf32>
    %337 = arith.subf %319, %327 : vector<1x128xf32>
    %cst_119 = arith.constant 1.000000e+00 : f32
    %338 = vector.broadcast %cst_119 : f32 to vector<1x128xf32>
    %339 = arith.subf %338, %337 : vector<1x128xf32>
    %340 = vector.broadcast %303 : vector<1x128xf32> to vector<8x128xf32>
    %341 = arith.cmpf oeq, %28, %340 : vector<8x128xf32>
    %cst_120 = arith.constant 0.000000e+00 : f32
    %342 = vector.shape_cast %330 : vector<1x128xf32> to vector<1x128xf32>
    %343 = vector.broadcast %342 : vector<1x128xf32> to vector<8x128xf32>
    %344 = vector.broadcast %cst_120 : f32 to vector<8x128xf32>
    %345 = arith.select %341, %343, %344 : vector<8x128xi1>, vector<8x128xf32>
    %346 = vector.broadcast %309 : vector<1x128xf32> to vector<8x128xf32>
    %347 = arith.cmpf oeq, %28, %346 : vector<8x128xf32>
    %cst_121 = arith.constant 0.000000e+00 : f32
    %348 = vector.shape_cast %333 : vector<1x128xf32> to vector<1x128xf32>
    %349 = vector.broadcast %348 : vector<1x128xf32> to vector<8x128xf32>
    %350 = vector.broadcast %cst_121 : f32 to vector<8x128xf32>
    %351 = arith.select %347, %349, %350 : vector<8x128xi1>, vector<8x128xf32>
    %352 = arith.addf %345, %351 : vector<8x128xf32>
    %353 = vector.broadcast %313 : vector<1x128xf32> to vector<8x128xf32>
    %354 = arith.cmpf oeq, %30, %353 : vector<8x128xf32>
    %cst_122 = arith.constant 0.000000e+00 : f32
    %355 = vector.shape_cast %336 : vector<1x128xf32> to vector<1x128xf32>
    %356 = vector.broadcast %355 : vector<1x128xf32> to vector<8x128xf32>
    %357 = vector.broadcast %cst_122 : f32 to vector<8x128xf32>
    %358 = arith.select %354, %356, %357 : vector<8x128xi1>, vector<8x128xf32>
    %359 = vector.broadcast %319 : vector<1x128xf32> to vector<8x128xf32>
    %360 = arith.cmpf oeq, %30, %359 : vector<8x128xf32>
    %cst_123 = arith.constant 0.000000e+00 : f32
    %361 = vector.shape_cast %339 : vector<1x128xf32> to vector<1x128xf32>
    %362 = vector.broadcast %361 : vector<1x128xf32> to vector<8x128xf32>
    %363 = vector.broadcast %cst_123 : f32 to vector<8x128xf32>
    %364 = arith.select %360, %362, %363 : vector<8x128xi1>, vector<8x128xf32>
    %365 = arith.addf %358, %364 : vector<8x128xf32>
    %cst_124 = arith.constant dense<0.000000e+00> : vector<64x128xf32>
    %366 = tpu.matmul %3, %365, %cst_124 {dimension_numbers = #tpu.dot_dimension_numbers<[1], [0], [0], [1], [0, 0, 1, 1], [], []>} : vector<64x8xf32>, vector<8x128xf32>, vector<64x128xf32> -> vector<64x128xf32>
    %367 = vector.shape_cast %366 : vector<64x128xf32> to vector<8x8x128xf32>
    %368 = vector.shape_cast %352 : vector<8x128xf32> to vector<1x8x128xf32>
    %369 = vector.broadcast %368 : vector<1x8x128xf32> to vector<8x8x128xf32>
    %370 = arith.mulf %367, %369 : vector<8x8x128xf32>
    %cst_125 = arith.constant dense<0.000000e+00> : vector<8x128xf32>
    %371 = vector.multi_reduction <add>, %370, %cst_125 [1] : vector<8x8x128xf32> to vector<8x128xf32>
    %c3 = arith.constant 3 : index
    %c0_126 = arith.constant 0 : index
    %c0_127 = arith.constant 0 : index
    %372 = vector.load %arg5[%c3, %c0_126, %c0_127] : memref<9x8x8xf32, #tpu.memory_space<vmem>>, vector<1x8x8xf32>
    %373 = vector.shape_cast %372 : vector<1x8x8xf32> to vector<8x8xf32>
    %cst_128 = arith.constant dense<0.000000e+00> : vector<8x128xf32>
    %374 = tpu.matmul %373, %371, %cst_128 {dimension_numbers = #tpu.dot_dimension_numbers<[1], [0], [0], [1], [0, 0, 1, 1], [], []>} : vector<8x8xf32>, vector<8x128xf32>, vector<8x128xf32> -> vector<8x128xf32>
    %375 = arith.addf %289, %374 : vector<8x128xf32>
    %cst_129 = arith.constant 0.000000e+00 : f32
    %376 = vector.broadcast %cst_129 : f32 to vector<1x128xf32>
    %377 = arith.addf %23, %376 : vector<1x128xf32>
    %378 = vector.extract_strided_slice %18 {offsets = [4, 0], sizes = [1, 128], strides = [1, 1]} : vector<18x128xf32> to vector<1x128xf32>
    %379 = arith.addf %377, %378 : vector<1x128xf32>
    %cst_130 = arith.constant 0.000000e+00 : f32
    %380 = vector.broadcast %cst_130 : f32 to vector<1x128xf32>
    %381 = arith.addf %26, %380 : vector<1x128xf32>
    %382 = vector.extract_strided_slice %18 {offsets = [13, 0], sizes = [1, 128], strides = [1, 1]} : vector<18x128xf32> to vector<1x128xf32>
    %383 = arith.addf %381, %382 : vector<1x128xf32>
    %384 = math.floor %379 : vector<1x128xf32>
    %385 = math.floor %383 : vector<1x128xf32>
    %cst_131 = arith.constant 0.000000e+00 : f32
    %cst_132 = arith.constant 7.000000e+00 : f32
    %386 = vector.broadcast %cst_131 : f32 to vector<1x128xf32>
    %387 = arith.maximumf %386, %384 : vector<1x128xf32>
    %388 = vector.broadcast %cst_132 : f32 to vector<1x128xf32>
    %389 = arith.minimumf %388, %387 : vector<1x128xf32>
    %cst_133 = arith.constant 1.000000e+00 : f32
    %390 = vector.broadcast %cst_133 : f32 to vector<1x128xf32>
    %391 = arith.addf %384, %390 : vector<1x128xf32>
    %cst_134 = arith.constant 0.000000e+00 : f32
    %cst_135 = arith.constant 7.000000e+00 : f32
    %392 = vector.broadcast %cst_134 : f32 to vector<1x128xf32>
    %393 = arith.maximumf %392, %391 : vector<1x128xf32>
    %394 = vector.broadcast %cst_135 : f32 to vector<1x128xf32>
    %395 = arith.minimumf %394, %393 : vector<1x128xf32>
    %cst_136 = arith.constant 0.000000e+00 : f32
    %cst_137 = arith.constant 7.000000e+00 : f32
    %396 = vector.broadcast %cst_136 : f32 to vector<1x128xf32>
    %397 = arith.maximumf %396, %385 : vector<1x128xf32>
    %398 = vector.broadcast %cst_137 : f32 to vector<1x128xf32>
    %399 = arith.minimumf %398, %397 : vector<1x128xf32>
    %cst_138 = arith.constant 1.000000e+00 : f32
    %400 = vector.broadcast %cst_138 : f32 to vector<1x128xf32>
    %401 = arith.addf %385, %400 : vector<1x128xf32>
    %cst_139 = arith.constant 0.000000e+00 : f32
    %cst_140 = arith.constant 7.000000e+00 : f32
    %402 = vector.broadcast %cst_139 : f32 to vector<1x128xf32>
    %403 = arith.maximumf %402, %401 : vector<1x128xf32>
    %404 = vector.broadcast %cst_140 : f32 to vector<1x128xf32>
    %405 = arith.minimumf %404, %403 : vector<1x128xf32>
    %cst_141 = arith.constant 0.000000e+00 : f32
    %cst_142 = arith.constant 7.000000e+00 : f32
    %406 = vector.broadcast %cst_141 : f32 to vector<1x128xf32>
    %407 = arith.maximumf %406, %379 : vector<1x128xf32>
    %408 = vector.broadcast %cst_142 : f32 to vector<1x128xf32>
    %409 = arith.minimumf %408, %407 : vector<1x128xf32>
    %cst_143 = arith.constant 0.000000e+00 : f32
    %cst_144 = arith.constant 7.000000e+00 : f32
    %410 = vector.broadcast %cst_143 : f32 to vector<1x128xf32>
    %411 = arith.maximumf %410, %383 : vector<1x128xf32>
    %412 = vector.broadcast %cst_144 : f32 to vector<1x128xf32>
    %413 = arith.minimumf %412, %411 : vector<1x128xf32>
    %414 = arith.subf %389, %409 : vector<1x128xf32>
    %cst_145 = arith.constant 1.000000e+00 : f32
    %415 = vector.broadcast %cst_145 : f32 to vector<1x128xf32>
    %416 = arith.addf %415, %414 : vector<1x128xf32>
    %417 = arith.subf %395, %409 : vector<1x128xf32>
    %cst_146 = arith.constant 1.000000e+00 : f32
    %418 = vector.broadcast %cst_146 : f32 to vector<1x128xf32>
    %419 = arith.subf %418, %417 : vector<1x128xf32>
    %420 = arith.subf %399, %413 : vector<1x128xf32>
    %cst_147 = arith.constant 1.000000e+00 : f32
    %421 = vector.broadcast %cst_147 : f32 to vector<1x128xf32>
    %422 = arith.addf %421, %420 : vector<1x128xf32>
    %423 = arith.subf %405, %413 : vector<1x128xf32>
    %cst_148 = arith.constant 1.000000e+00 : f32
    %424 = vector.broadcast %cst_148 : f32 to vector<1x128xf32>
    %425 = arith.subf %424, %423 : vector<1x128xf32>
    %426 = vector.broadcast %389 : vector<1x128xf32> to vector<8x128xf32>
    %427 = arith.cmpf oeq, %28, %426 : vector<8x128xf32>
    %cst_149 = arith.constant 0.000000e+00 : f32
    %428 = vector.shape_cast %416 : vector<1x128xf32> to vector<1x128xf32>
    %429 = vector.broadcast %428 : vector<1x128xf32> to vector<8x128xf32>
    %430 = vector.broadcast %cst_149 : f32 to vector<8x128xf32>
    %431 = arith.select %427, %429, %430 : vector<8x128xi1>, vector<8x128xf32>
    %432 = vector.broadcast %395 : vector<1x128xf32> to vector<8x128xf32>
    %433 = arith.cmpf oeq, %28, %432 : vector<8x128xf32>
    %cst_150 = arith.constant 0.000000e+00 : f32
    %434 = vector.shape_cast %419 : vector<1x128xf32> to vector<1x128xf32>
    %435 = vector.broadcast %434 : vector<1x128xf32> to vector<8x128xf32>
    %436 = vector.broadcast %cst_150 : f32 to vector<8x128xf32>
    %437 = arith.select %433, %435, %436 : vector<8x128xi1>, vector<8x128xf32>
    %438 = arith.addf %431, %437 : vector<8x128xf32>
    %439 = vector.broadcast %399 : vector<1x128xf32> to vector<8x128xf32>
    %440 = arith.cmpf oeq, %30, %439 : vector<8x128xf32>
    %cst_151 = arith.constant 0.000000e+00 : f32
    %441 = vector.shape_cast %422 : vector<1x128xf32> to vector<1x128xf32>
    %442 = vector.broadcast %441 : vector<1x128xf32> to vector<8x128xf32>
    %443 = vector.broadcast %cst_151 : f32 to vector<8x128xf32>
    %444 = arith.select %440, %442, %443 : vector<8x128xi1>, vector<8x128xf32>
    %445 = vector.broadcast %405 : vector<1x128xf32> to vector<8x128xf32>
    %446 = arith.cmpf oeq, %30, %445 : vector<8x128xf32>
    %cst_152 = arith.constant 0.000000e+00 : f32
    %447 = vector.shape_cast %425 : vector<1x128xf32> to vector<1x128xf32>
    %448 = vector.broadcast %447 : vector<1x128xf32> to vector<8x128xf32>
    %449 = vector.broadcast %cst_152 : f32 to vector<8x128xf32>
    %450 = arith.select %446, %448, %449 : vector<8x128xi1>, vector<8x128xf32>
    %451 = arith.addf %444, %450 : vector<8x128xf32>
    %cst_153 = arith.constant dense<0.000000e+00> : vector<64x128xf32>
    %452 = tpu.matmul %3, %451, %cst_153 {dimension_numbers = #tpu.dot_dimension_numbers<[1], [0], [0], [1], [0, 0, 1, 1], [], []>} : vector<64x8xf32>, vector<8x128xf32>, vector<64x128xf32> -> vector<64x128xf32>
    %453 = vector.shape_cast %452 : vector<64x128xf32> to vector<8x8x128xf32>
    %454 = vector.shape_cast %438 : vector<8x128xf32> to vector<1x8x128xf32>
    %455 = vector.broadcast %454 : vector<1x8x128xf32> to vector<8x8x128xf32>
    %456 = arith.mulf %453, %455 : vector<8x8x128xf32>
    %cst_154 = arith.constant dense<0.000000e+00> : vector<8x128xf32>
    %457 = vector.multi_reduction <add>, %456, %cst_154 [1] : vector<8x8x128xf32> to vector<8x128xf32>
    %c4 = arith.constant 4 : index
    %c0_155 = arith.constant 0 : index
    %c0_156 = arith.constant 0 : index
    %458 = vector.load %arg5[%c4, %c0_155, %c0_156] : memref<9x8x8xf32, #tpu.memory_space<vmem>>, vector<1x8x8xf32>
    %459 = vector.shape_cast %458 : vector<1x8x8xf32> to vector<8x8xf32>
    %cst_157 = arith.constant dense<0.000000e+00> : vector<8x128xf32>
    %460 = tpu.matmul %459, %457, %cst_157 {dimension_numbers = #tpu.dot_dimension_numbers<[1], [0], [0], [1], [0, 0, 1, 1], [], []>} : vector<8x8xf32>, vector<8x128xf32>, vector<8x128xf32> -> vector<8x128xf32>
    %461 = arith.addf %375, %460 : vector<8x128xf32>
    %cst_158 = arith.constant 0.000000e+00 : f32
    %462 = vector.broadcast %cst_158 : f32 to vector<1x128xf32>
    %463 = arith.addf %23, %462 : vector<1x128xf32>
    %464 = vector.extract_strided_slice %18 {offsets = [5, 0], sizes = [1, 128], strides = [1, 1]} : vector<18x128xf32> to vector<1x128xf32>
    %465 = arith.addf %463, %464 : vector<1x128xf32>
    %cst_159 = arith.constant 1.000000e+00 : f32
    %466 = vector.broadcast %cst_159 : f32 to vector<1x128xf32>
    %467 = arith.addf %26, %466 : vector<1x128xf32>
    %468 = vector.extract_strided_slice %18 {offsets = [14, 0], sizes = [1, 128], strides = [1, 1]} : vector<18x128xf32> to vector<1x128xf32>
    %469 = arith.addf %467, %468 : vector<1x128xf32>
    %470 = math.floor %465 : vector<1x128xf32>
    %471 = math.floor %469 : vector<1x128xf32>
    %cst_160 = arith.constant 0.000000e+00 : f32
    %cst_161 = arith.constant 7.000000e+00 : f32
    %472 = vector.broadcast %cst_160 : f32 to vector<1x128xf32>
    %473 = arith.maximumf %472, %470 : vector<1x128xf32>
    %474 = vector.broadcast %cst_161 : f32 to vector<1x128xf32>
    %475 = arith.minimumf %474, %473 : vector<1x128xf32>
    %cst_162 = arith.constant 1.000000e+00 : f32
    %476 = vector.broadcast %cst_162 : f32 to vector<1x128xf32>
    %477 = arith.addf %470, %476 : vector<1x128xf32>
    %cst_163 = arith.constant 0.000000e+00 : f32
    %cst_164 = arith.constant 7.000000e+00 : f32
    %478 = vector.broadcast %cst_163 : f32 to vector<1x128xf32>
    %479 = arith.maximumf %478, %477 : vector<1x128xf32>
    %480 = vector.broadcast %cst_164 : f32 to vector<1x128xf32>
    %481 = arith.minimumf %480, %479 : vector<1x128xf32>
    %cst_165 = arith.constant 0.000000e+00 : f32
    %cst_166 = arith.constant 7.000000e+00 : f32
    %482 = vector.broadcast %cst_165 : f32 to vector<1x128xf32>
    %483 = arith.maximumf %482, %471 : vector<1x128xf32>
    %484 = vector.broadcast %cst_166 : f32 to vector<1x128xf32>
    %485 = arith.minimumf %484, %483 : vector<1x128xf32>
    %cst_167 = arith.constant 1.000000e+00 : f32
    %486 = vector.broadcast %cst_167 : f32 to vector<1x128xf32>
    %487 = arith.addf %471, %486 : vector<1x128xf32>
    %cst_168 = arith.constant 0.000000e+00 : f32
    %cst_169 = arith.constant 7.000000e+00 : f32
    %488 = vector.broadcast %cst_168 : f32 to vector<1x128xf32>
    %489 = arith.maximumf %488, %487 : vector<1x128xf32>
    %490 = vector.broadcast %cst_169 : f32 to vector<1x128xf32>
    %491 = arith.minimumf %490, %489 : vector<1x128xf32>
    %cst_170 = arith.constant 0.000000e+00 : f32
    %cst_171 = arith.constant 7.000000e+00 : f32
    %492 = vector.broadcast %cst_170 : f32 to vector<1x128xf32>
    %493 = arith.maximumf %492, %465 : vector<1x128xf32>
    %494 = vector.broadcast %cst_171 : f32 to vector<1x128xf32>
    %495 = arith.minimumf %494, %493 : vector<1x128xf32>
    %cst_172 = arith.constant 0.000000e+00 : f32
    %cst_173 = arith.constant 7.000000e+00 : f32
    %496 = vector.broadcast %cst_172 : f32 to vector<1x128xf32>
    %497 = arith.maximumf %496, %469 : vector<1x128xf32>
    %498 = vector.broadcast %cst_173 : f32 to vector<1x128xf32>
    %499 = arith.minimumf %498, %497 : vector<1x128xf32>
    %500 = arith.subf %475, %495 : vector<1x128xf32>
    %cst_174 = arith.constant 1.000000e+00 : f32
    %501 = vector.broadcast %cst_174 : f32 to vector<1x128xf32>
    %502 = arith.addf %501, %500 : vector<1x128xf32>
    %503 = arith.subf %481, %495 : vector<1x128xf32>
    %cst_175 = arith.constant 1.000000e+00 : f32
    %504 = vector.broadcast %cst_175 : f32 to vector<1x128xf32>
    %505 = arith.subf %504, %503 : vector<1x128xf32>
    %506 = arith.subf %485, %499 : vector<1x128xf32>
    %cst_176 = arith.constant 1.000000e+00 : f32
    %507 = vector.broadcast %cst_176 : f32 to vector<1x128xf32>
    %508 = arith.addf %507, %506 : vector<1x128xf32>
    %509 = arith.subf %491, %499 : vector<1x128xf32>
    %cst_177 = arith.constant 1.000000e+00 : f32
    %510 = vector.broadcast %cst_177 : f32 to vector<1x128xf32>
    %511 = arith.subf %510, %509 : vector<1x128xf32>
    %512 = vector.broadcast %475 : vector<1x128xf32> to vector<8x128xf32>
    %513 = arith.cmpf oeq, %28, %512 : vector<8x128xf32>
    %cst_178 = arith.constant 0.000000e+00 : f32
    %514 = vector.shape_cast %502 : vector<1x128xf32> to vector<1x128xf32>
    %515 = vector.broadcast %514 : vector<1x128xf32> to vector<8x128xf32>
    %516 = vector.broadcast %cst_178 : f32 to vector<8x128xf32>
    %517 = arith.select %513, %515, %516 : vector<8x128xi1>, vector<8x128xf32>
    %518 = vector.broadcast %481 : vector<1x128xf32> to vector<8x128xf32>
    %519 = arith.cmpf oeq, %28, %518 : vector<8x128xf32>
    %cst_179 = arith.constant 0.000000e+00 : f32
    %520 = vector.shape_cast %505 : vector<1x128xf32> to vector<1x128xf32>
    %521 = vector.broadcast %520 : vector<1x128xf32> to vector<8x128xf32>
    %522 = vector.broadcast %cst_179 : f32 to vector<8x128xf32>
    %523 = arith.select %519, %521, %522 : vector<8x128xi1>, vector<8x128xf32>
    %524 = arith.addf %517, %523 : vector<8x128xf32>
    %525 = vector.broadcast %485 : vector<1x128xf32> to vector<8x128xf32>
    %526 = arith.cmpf oeq, %30, %525 : vector<8x128xf32>
    %cst_180 = arith.constant 0.000000e+00 : f32
    %527 = vector.shape_cast %508 : vector<1x128xf32> to vector<1x128xf32>
    %528 = vector.broadcast %527 : vector<1x128xf32> to vector<8x128xf32>
    %529 = vector.broadcast %cst_180 : f32 to vector<8x128xf32>
    %530 = arith.select %526, %528, %529 : vector<8x128xi1>, vector<8x128xf32>
    %531 = vector.broadcast %491 : vector<1x128xf32> to vector<8x128xf32>
    %532 = arith.cmpf oeq, %30, %531 : vector<8x128xf32>
    %cst_181 = arith.constant 0.000000e+00 : f32
    %533 = vector.shape_cast %511 : vector<1x128xf32> to vector<1x128xf32>
    %534 = vector.broadcast %533 : vector<1x128xf32> to vector<8x128xf32>
    %535 = vector.broadcast %cst_181 : f32 to vector<8x128xf32>
    %536 = arith.select %532, %534, %535 : vector<8x128xi1>, vector<8x128xf32>
    %537 = arith.addf %530, %536 : vector<8x128xf32>
    %cst_182 = arith.constant dense<0.000000e+00> : vector<64x128xf32>
    %538 = tpu.matmul %3, %537, %cst_182 {dimension_numbers = #tpu.dot_dimension_numbers<[1], [0], [0], [1], [0, 0, 1, 1], [], []>} : vector<64x8xf32>, vector<8x128xf32>, vector<64x128xf32> -> vector<64x128xf32>
    %539 = vector.shape_cast %538 : vector<64x128xf32> to vector<8x8x128xf32>
    %540 = vector.shape_cast %524 : vector<8x128xf32> to vector<1x8x128xf32>
    %541 = vector.broadcast %540 : vector<1x8x128xf32> to vector<8x8x128xf32>
    %542 = arith.mulf %539, %541 : vector<8x8x128xf32>
    %cst_183 = arith.constant dense<0.000000e+00> : vector<8x128xf32>
    %543 = vector.multi_reduction <add>, %542, %cst_183 [1] : vector<8x8x128xf32> to vector<8x128xf32>
    %c5 = arith.constant 5 : index
    %c0_184 = arith.constant 0 : index
    %c0_185 = arith.constant 0 : index
    %544 = vector.load %arg5[%c5, %c0_184, %c0_185] : memref<9x8x8xf32, #tpu.memory_space<vmem>>, vector<1x8x8xf32>
    %545 = vector.shape_cast %544 : vector<1x8x8xf32> to vector<8x8xf32>
    %cst_186 = arith.constant dense<0.000000e+00> : vector<8x128xf32>
    %546 = tpu.matmul %545, %543, %cst_186 {dimension_numbers = #tpu.dot_dimension_numbers<[1], [0], [0], [1], [0, 0, 1, 1], [], []>} : vector<8x8xf32>, vector<8x128xf32>, vector<8x128xf32> -> vector<8x128xf32>
    %547 = arith.addf %461, %546 : vector<8x128xf32>
    %cst_187 = arith.constant 1.000000e+00 : f32
    %548 = vector.broadcast %cst_187 : f32 to vector<1x128xf32>
    %549 = arith.addf %23, %548 : vector<1x128xf32>
    %550 = vector.extract_strided_slice %18 {offsets = [6, 0], sizes = [1, 128], strides = [1, 1]} : vector<18x128xf32> to vector<1x128xf32>
    %551 = arith.addf %549, %550 : vector<1x128xf32>
    %cst_188 = arith.constant -1.000000e+00 : f32
    %552 = vector.broadcast %cst_188 : f32 to vector<1x128xf32>
    %553 = arith.addf %26, %552 : vector<1x128xf32>
    %554 = vector.extract_strided_slice %18 {offsets = [15, 0], sizes = [1, 128], strides = [1, 1]} : vector<18x128xf32> to vector<1x128xf32>
    %555 = arith.addf %553, %554 : vector<1x128xf32>
    %556 = math.floor %551 : vector<1x128xf32>
    %557 = math.floor %555 : vector<1x128xf32>
    %cst_189 = arith.constant 0.000000e+00 : f32
    %cst_190 = arith.constant 7.000000e+00 : f32
    %558 = vector.broadcast %cst_189 : f32 to vector<1x128xf32>
    %559 = arith.maximumf %558, %556 : vector<1x128xf32>
    %560 = vector.broadcast %cst_190 : f32 to vector<1x128xf32>
    %561 = arith.minimumf %560, %559 : vector<1x128xf32>
    %cst_191 = arith.constant 1.000000e+00 : f32
    %562 = vector.broadcast %cst_191 : f32 to vector<1x128xf32>
    %563 = arith.addf %556, %562 : vector<1x128xf32>
    %cst_192 = arith.constant 0.000000e+00 : f32
    %cst_193 = arith.constant 7.000000e+00 : f32
    %564 = vector.broadcast %cst_192 : f32 to vector<1x128xf32>
    %565 = arith.maximumf %564, %563 : vector<1x128xf32>
    %566 = vector.broadcast %cst_193 : f32 to vector<1x128xf32>
    %567 = arith.minimumf %566, %565 : vector<1x128xf32>
    %cst_194 = arith.constant 0.000000e+00 : f32
    %cst_195 = arith.constant 7.000000e+00 : f32
    %568 = vector.broadcast %cst_194 : f32 to vector<1x128xf32>
    %569 = arith.maximumf %568, %557 : vector<1x128xf32>
    %570 = vector.broadcast %cst_195 : f32 to vector<1x128xf32>
    %571 = arith.minimumf %570, %569 : vector<1x128xf32>
    %cst_196 = arith.constant 1.000000e+00 : f32
    %572 = vector.broadcast %cst_196 : f32 to vector<1x128xf32>
    %573 = arith.addf %557, %572 : vector<1x128xf32>
    %cst_197 = arith.constant 0.000000e+00 : f32
    %cst_198 = arith.constant 7.000000e+00 : f32
    %574 = vector.broadcast %cst_197 : f32 to vector<1x128xf32>
    %575 = arith.maximumf %574, %573 : vector<1x128xf32>
    %576 = vector.broadcast %cst_198 : f32 to vector<1x128xf32>
    %577 = arith.minimumf %576, %575 : vector<1x128xf32>
    %cst_199 = arith.constant 0.000000e+00 : f32
    %cst_200 = arith.constant 7.000000e+00 : f32
    %578 = vector.broadcast %cst_199 : f32 to vector<1x128xf32>
    %579 = arith.maximumf %578, %551 : vector<1x128xf32>
    %580 = vector.broadcast %cst_200 : f32 to vector<1x128xf32>
    %581 = arith.minimumf %580, %579 : vector<1x128xf32>
    %cst_201 = arith.constant 0.000000e+00 : f32
    %cst_202 = arith.constant 7.000000e+00 : f32
    %582 = vector.broadcast %cst_201 : f32 to vector<1x128xf32>
    %583 = arith.maximumf %582, %555 : vector<1x128xf32>
    %584 = vector.broadcast %cst_202 : f32 to vector<1x128xf32>
    %585 = arith.minimumf %584, %583 : vector<1x128xf32>
    %586 = arith.subf %561, %581 : vector<1x128xf32>
    %cst_203 = arith.constant 1.000000e+00 : f32
    %587 = vector.broadcast %cst_203 : f32 to vector<1x128xf32>
    %588 = arith.addf %587, %586 : vector<1x128xf32>
    %589 = arith.subf %567, %581 : vector<1x128xf32>
    %cst_204 = arith.constant 1.000000e+00 : f32
    %590 = vector.broadcast %cst_204 : f32 to vector<1x128xf32>
    %591 = arith.subf %590, %589 : vector<1x128xf32>
    %592 = arith.subf %571, %585 : vector<1x128xf32>
    %cst_205 = arith.constant 1.000000e+00 : f32
    %593 = vector.broadcast %cst_205 : f32 to vector<1x128xf32>
    %594 = arith.addf %593, %592 : vector<1x128xf32>
    %595 = arith.subf %577, %585 : vector<1x128xf32>
    %cst_206 = arith.constant 1.000000e+00 : f32
    %596 = vector.broadcast %cst_206 : f32 to vector<1x128xf32>
    %597 = arith.subf %596, %595 : vector<1x128xf32>
    %598 = vector.broadcast %561 : vector<1x128xf32> to vector<8x128xf32>
    %599 = arith.cmpf oeq, %28, %598 : vector<8x128xf32>
    %cst_207 = arith.constant 0.000000e+00 : f32
    %600 = vector.shape_cast %588 : vector<1x128xf32> to vector<1x128xf32>
    %601 = vector.broadcast %600 : vector<1x128xf32> to vector<8x128xf32>
    %602 = vector.broadcast %cst_207 : f32 to vector<8x128xf32>
    %603 = arith.select %599, %601, %602 : vector<8x128xi1>, vector<8x128xf32>
    %604 = vector.broadcast %567 : vector<1x128xf32> to vector<8x128xf32>
    %605 = arith.cmpf oeq, %28, %604 : vector<8x128xf32>
    %cst_208 = arith.constant 0.000000e+00 : f32
    %606 = vector.shape_cast %591 : vector<1x128xf32> to vector<1x128xf32>
    %607 = vector.broadcast %606 : vector<1x128xf32> to vector<8x128xf32>
    %608 = vector.broadcast %cst_208 : f32 to vector<8x128xf32>
    %609 = arith.select %605, %607, %608 : vector<8x128xi1>, vector<8x128xf32>
    %610 = arith.addf %603, %609 : vector<8x128xf32>
    %611 = vector.broadcast %571 : vector<1x128xf32> to vector<8x128xf32>
    %612 = arith.cmpf oeq, %30, %611 : vector<8x128xf32>
    %cst_209 = arith.constant 0.000000e+00 : f32
    %613 = vector.shape_cast %594 : vector<1x128xf32> to vector<1x128xf32>
    %614 = vector.broadcast %613 : vector<1x128xf32> to vector<8x128xf32>
    %615 = vector.broadcast %cst_209 : f32 to vector<8x128xf32>
    %616 = arith.select %612, %614, %615 : vector<8x128xi1>, vector<8x128xf32>
    %617 = vector.broadcast %577 : vector<1x128xf32> to vector<8x128xf32>
    %618 = arith.cmpf oeq, %30, %617 : vector<8x128xf32>
    %cst_210 = arith.constant 0.000000e+00 : f32
    %619 = vector.shape_cast %597 : vector<1x128xf32> to vector<1x128xf32>
    %620 = vector.broadcast %619 : vector<1x128xf32> to vector<8x128xf32>
    %621 = vector.broadcast %cst_210 : f32 to vector<8x128xf32>
    %622 = arith.select %618, %620, %621 : vector<8x128xi1>, vector<8x128xf32>
    %623 = arith.addf %616, %622 : vector<8x128xf32>
    %cst_211 = arith.constant dense<0.000000e+00> : vector<64x128xf32>
    %624 = tpu.matmul %3, %623, %cst_211 {dimension_numbers = #tpu.dot_dimension_numbers<[1], [0], [0], [1], [0, 0, 1, 1], [], []>} : vector<64x8xf32>, vector<8x128xf32>, vector<64x128xf32> -> vector<64x128xf32>
    %625 = vector.shape_cast %624 : vector<64x128xf32> to vector<8x8x128xf32>
    %626 = vector.shape_cast %610 : vector<8x128xf32> to vector<1x8x128xf32>
    %627 = vector.broadcast %626 : vector<1x8x128xf32> to vector<8x8x128xf32>
    %628 = arith.mulf %625, %627 : vector<8x8x128xf32>
    %cst_212 = arith.constant dense<0.000000e+00> : vector<8x128xf32>
    %629 = vector.multi_reduction <add>, %628, %cst_212 [1] : vector<8x8x128xf32> to vector<8x128xf32>
    %c6 = arith.constant 6 : index
    %c0_213 = arith.constant 0 : index
    %c0_214 = arith.constant 0 : index
    %630 = vector.load %arg5[%c6, %c0_213, %c0_214] : memref<9x8x8xf32, #tpu.memory_space<vmem>>, vector<1x8x8xf32>
    %631 = vector.shape_cast %630 : vector<1x8x8xf32> to vector<8x8xf32>
    %cst_215 = arith.constant dense<0.000000e+00> : vector<8x128xf32>
    %632 = tpu.matmul %631, %629, %cst_215 {dimension_numbers = #tpu.dot_dimension_numbers<[1], [0], [0], [1], [0, 0, 1, 1], [], []>} : vector<8x8xf32>, vector<8x128xf32>, vector<8x128xf32> -> vector<8x128xf32>
    %633 = arith.addf %547, %632 : vector<8x128xf32>
    %cst_216 = arith.constant 1.000000e+00 : f32
    %634 = vector.broadcast %cst_216 : f32 to vector<1x128xf32>
    %635 = arith.addf %23, %634 : vector<1x128xf32>
    %636 = vector.extract_strided_slice %18 {offsets = [7, 0], sizes = [1, 128], strides = [1, 1]} : vector<18x128xf32> to vector<1x128xf32>
    %637 = arith.addf %635, %636 : vector<1x128xf32>
    %cst_217 = arith.constant 0.000000e+00 : f32
    %638 = vector.broadcast %cst_217 : f32 to vector<1x128xf32>
    %639 = arith.addf %26, %638 : vector<1x128xf32>
    %640 = vector.extract_strided_slice %18 {offsets = [16, 0], sizes = [1, 128], strides = [1, 1]} : vector<18x128xf32> to vector<1x128xf32>
    %641 = arith.addf %639, %640 : vector<1x128xf32>
    %642 = math.floor %637 : vector<1x128xf32>
    %643 = math.floor %641 : vector<1x128xf32>
    %cst_218 = arith.constant 0.000000e+00 : f32
    %cst_219 = arith.constant 7.000000e+00 : f32
    %644 = vector.broadcast %cst_218 : f32 to vector<1x128xf32>
    %645 = arith.maximumf %644, %642 : vector<1x128xf32>
    %646 = vector.broadcast %cst_219 : f32 to vector<1x128xf32>
    %647 = arith.minimumf %646, %645 : vector<1x128xf32>
    %cst_220 = arith.constant 1.000000e+00 : f32
    %648 = vector.broadcast %cst_220 : f32 to vector<1x128xf32>
    %649 = arith.addf %642, %648 : vector<1x128xf32>
    %cst_221 = arith.constant 0.000000e+00 : f32
    %cst_222 = arith.constant 7.000000e+00 : f32
    %650 = vector.broadcast %cst_221 : f32 to vector<1x128xf32>
    %651 = arith.maximumf %650, %649 : vector<1x128xf32>
    %652 = vector.broadcast %cst_222 : f32 to vector<1x128xf32>
    %653 = arith.minimumf %652, %651 : vector<1x128xf32>
    %cst_223 = arith.constant 0.000000e+00 : f32
    %cst_224 = arith.constant 7.000000e+00 : f32
    %654 = vector.broadcast %cst_223 : f32 to vector<1x128xf32>
    %655 = arith.maximumf %654, %643 : vector<1x128xf32>
    %656 = vector.broadcast %cst_224 : f32 to vector<1x128xf32>
    %657 = arith.minimumf %656, %655 : vector<1x128xf32>
    %cst_225 = arith.constant 1.000000e+00 : f32
    %658 = vector.broadcast %cst_225 : f32 to vector<1x128xf32>
    %659 = arith.addf %643, %658 : vector<1x128xf32>
    %cst_226 = arith.constant 0.000000e+00 : f32
    %cst_227 = arith.constant 7.000000e+00 : f32
    %660 = vector.broadcast %cst_226 : f32 to vector<1x128xf32>
    %661 = arith.maximumf %660, %659 : vector<1x128xf32>
    %662 = vector.broadcast %cst_227 : f32 to vector<1x128xf32>
    %663 = arith.minimumf %662, %661 : vector<1x128xf32>
    %cst_228 = arith.constant 0.000000e+00 : f32
    %cst_229 = arith.constant 7.000000e+00 : f32
    %664 = vector.broadcast %cst_228 : f32 to vector<1x128xf32>
    %665 = arith.maximumf %664, %637 : vector<1x128xf32>
    %666 = vector.broadcast %cst_229 : f32 to vector<1x128xf32>
    %667 = arith.minimumf %666, %665 : vector<1x128xf32>
    %cst_230 = arith.constant 0.000000e+00 : f32
    %cst_231 = arith.constant 7.000000e+00 : f32
    %668 = vector.broadcast %cst_230 : f32 to vector<1x128xf32>
    %669 = arith.maximumf %668, %641 : vector<1x128xf32>
    %670 = vector.broadcast %cst_231 : f32 to vector<1x128xf32>
    %671 = arith.minimumf %670, %669 : vector<1x128xf32>
    %672 = arith.subf %647, %667 : vector<1x128xf32>
    %cst_232 = arith.constant 1.000000e+00 : f32
    %673 = vector.broadcast %cst_232 : f32 to vector<1x128xf32>
    %674 = arith.addf %673, %672 : vector<1x128xf32>
    %675 = arith.subf %653, %667 : vector<1x128xf32>
    %cst_233 = arith.constant 1.000000e+00 : f32
    %676 = vector.broadcast %cst_233 : f32 to vector<1x128xf32>
    %677 = arith.subf %676, %675 : vector<1x128xf32>
    %678 = arith.subf %657, %671 : vector<1x128xf32>
    %cst_234 = arith.constant 1.000000e+00 : f32
    %679 = vector.broadcast %cst_234 : f32 to vector<1x128xf32>
    %680 = arith.addf %679, %678 : vector<1x128xf32>
    %681 = arith.subf %663, %671 : vector<1x128xf32>
    %cst_235 = arith.constant 1.000000e+00 : f32
    %682 = vector.broadcast %cst_235 : f32 to vector<1x128xf32>
    %683 = arith.subf %682, %681 : vector<1x128xf32>
    %684 = vector.broadcast %647 : vector<1x128xf32> to vector<8x128xf32>
    %685 = arith.cmpf oeq, %28, %684 : vector<8x128xf32>
    %cst_236 = arith.constant 0.000000e+00 : f32
    %686 = vector.shape_cast %674 : vector<1x128xf32> to vector<1x128xf32>
    %687 = vector.broadcast %686 : vector<1x128xf32> to vector<8x128xf32>
    %688 = vector.broadcast %cst_236 : f32 to vector<8x128xf32>
    %689 = arith.select %685, %687, %688 : vector<8x128xi1>, vector<8x128xf32>
    %690 = vector.broadcast %653 : vector<1x128xf32> to vector<8x128xf32>
    %691 = arith.cmpf oeq, %28, %690 : vector<8x128xf32>
    %cst_237 = arith.constant 0.000000e+00 : f32
    %692 = vector.shape_cast %677 : vector<1x128xf32> to vector<1x128xf32>
    %693 = vector.broadcast %692 : vector<1x128xf32> to vector<8x128xf32>
    %694 = vector.broadcast %cst_237 : f32 to vector<8x128xf32>
    %695 = arith.select %691, %693, %694 : vector<8x128xi1>, vector<8x128xf32>
    %696 = arith.addf %689, %695 : vector<8x128xf32>
    %697 = vector.broadcast %657 : vector<1x128xf32> to vector<8x128xf32>
    %698 = arith.cmpf oeq, %30, %697 : vector<8x128xf32>
    %cst_238 = arith.constant 0.000000e+00 : f32
    %699 = vector.shape_cast %680 : vector<1x128xf32> to vector<1x128xf32>
    %700 = vector.broadcast %699 : vector<1x128xf32> to vector<8x128xf32>
    %701 = vector.broadcast %cst_238 : f32 to vector<8x128xf32>
    %702 = arith.select %698, %700, %701 : vector<8x128xi1>, vector<8x128xf32>
    %703 = vector.broadcast %663 : vector<1x128xf32> to vector<8x128xf32>
    %704 = arith.cmpf oeq, %30, %703 : vector<8x128xf32>
    %cst_239 = arith.constant 0.000000e+00 : f32
    %705 = vector.shape_cast %683 : vector<1x128xf32> to vector<1x128xf32>
    %706 = vector.broadcast %705 : vector<1x128xf32> to vector<8x128xf32>
    %707 = vector.broadcast %cst_239 : f32 to vector<8x128xf32>
    %708 = arith.select %704, %706, %707 : vector<8x128xi1>, vector<8x128xf32>
    %709 = arith.addf %702, %708 : vector<8x128xf32>
    %cst_240 = arith.constant dense<0.000000e+00> : vector<64x128xf32>
    %710 = tpu.matmul %3, %709, %cst_240 {dimension_numbers = #tpu.dot_dimension_numbers<[1], [0], [0], [1], [0, 0, 1, 1], [], []>} : vector<64x8xf32>, vector<8x128xf32>, vector<64x128xf32> -> vector<64x128xf32>
    %711 = vector.shape_cast %710 : vector<64x128xf32> to vector<8x8x128xf32>
    %712 = vector.shape_cast %696 : vector<8x128xf32> to vector<1x8x128xf32>
    %713 = vector.broadcast %712 : vector<1x8x128xf32> to vector<8x8x128xf32>
    %714 = arith.mulf %711, %713 : vector<8x8x128xf32>
    %cst_241 = arith.constant dense<0.000000e+00> : vector<8x128xf32>
    %715 = vector.multi_reduction <add>, %714, %cst_241 [1] : vector<8x8x128xf32> to vector<8x128xf32>
    %c7 = arith.constant 7 : index
    %c0_242 = arith.constant 0 : index
    %c0_243 = arith.constant 0 : index
    %716 = vector.load %arg5[%c7, %c0_242, %c0_243] : memref<9x8x8xf32, #tpu.memory_space<vmem>>, vector<1x8x8xf32>
    %717 = vector.shape_cast %716 : vector<1x8x8xf32> to vector<8x8xf32>
    %cst_244 = arith.constant dense<0.000000e+00> : vector<8x128xf32>
    %718 = tpu.matmul %717, %715, %cst_244 {dimension_numbers = #tpu.dot_dimension_numbers<[1], [0], [0], [1], [0, 0, 1, 1], [], []>} : vector<8x8xf32>, vector<8x128xf32>, vector<8x128xf32> -> vector<8x128xf32>
    %719 = arith.addf %633, %718 : vector<8x128xf32>
    %cst_245 = arith.constant 1.000000e+00 : f32
    %720 = vector.broadcast %cst_245 : f32 to vector<1x128xf32>
    %721 = arith.addf %23, %720 : vector<1x128xf32>
    %722 = vector.extract_strided_slice %18 {offsets = [8, 0], sizes = [1, 128], strides = [1, 1]} : vector<18x128xf32> to vector<1x128xf32>
    %723 = arith.addf %721, %722 : vector<1x128xf32>
    %cst_246 = arith.constant 1.000000e+00 : f32
    %724 = vector.broadcast %cst_246 : f32 to vector<1x128xf32>
    %725 = arith.addf %26, %724 : vector<1x128xf32>
    %726 = vector.extract_strided_slice %18 {offsets = [17, 0], sizes = [1, 128], strides = [1, 1]} : vector<18x128xf32> to vector<1x128xf32>
    %727 = arith.addf %725, %726 : vector<1x128xf32>
    %728 = math.floor %723 : vector<1x128xf32>
    %729 = math.floor %727 : vector<1x128xf32>
    %cst_247 = arith.constant 0.000000e+00 : f32
    %cst_248 = arith.constant 7.000000e+00 : f32
    %730 = vector.broadcast %cst_247 : f32 to vector<1x128xf32>
    %731 = arith.maximumf %730, %728 : vector<1x128xf32>
    %732 = vector.broadcast %cst_248 : f32 to vector<1x128xf32>
    %733 = arith.minimumf %732, %731 : vector<1x128xf32>
    %cst_249 = arith.constant 1.000000e+00 : f32
    %734 = vector.broadcast %cst_249 : f32 to vector<1x128xf32>
    %735 = arith.addf %728, %734 : vector<1x128xf32>
    %cst_250 = arith.constant 0.000000e+00 : f32
    %cst_251 = arith.constant 7.000000e+00 : f32
    %736 = vector.broadcast %cst_250 : f32 to vector<1x128xf32>
    %737 = arith.maximumf %736, %735 : vector<1x128xf32>
    %738 = vector.broadcast %cst_251 : f32 to vector<1x128xf32>
    %739 = arith.minimumf %738, %737 : vector<1x128xf32>
    %cst_252 = arith.constant 0.000000e+00 : f32
    %cst_253 = arith.constant 7.000000e+00 : f32
    %740 = vector.broadcast %cst_252 : f32 to vector<1x128xf32>
    %741 = arith.maximumf %740, %729 : vector<1x128xf32>
    %742 = vector.broadcast %cst_253 : f32 to vector<1x128xf32>
    %743 = arith.minimumf %742, %741 : vector<1x128xf32>
    %cst_254 = arith.constant 1.000000e+00 : f32
    %744 = vector.broadcast %cst_254 : f32 to vector<1x128xf32>
    %745 = arith.addf %729, %744 : vector<1x128xf32>
    %cst_255 = arith.constant 0.000000e+00 : f32
    %cst_256 = arith.constant 7.000000e+00 : f32
    %746 = vector.broadcast %cst_255 : f32 to vector<1x128xf32>
    %747 = arith.maximumf %746, %745 : vector<1x128xf32>
    %748 = vector.broadcast %cst_256 : f32 to vector<1x128xf32>
    %749 = arith.minimumf %748, %747 : vector<1x128xf32>
    %cst_257 = arith.constant 0.000000e+00 : f32
    %cst_258 = arith.constant 7.000000e+00 : f32
    %750 = vector.broadcast %cst_257 : f32 to vector<1x128xf32>
    %751 = arith.maximumf %750, %723 : vector<1x128xf32>
    %752 = vector.broadcast %cst_258 : f32 to vector<1x128xf32>
    %753 = arith.minimumf %752, %751 : vector<1x128xf32>
    %cst_259 = arith.constant 0.000000e+00 : f32
    %cst_260 = arith.constant 7.000000e+00 : f32
    %754 = vector.broadcast %cst_259 : f32 to vector<1x128xf32>
    %755 = arith.maximumf %754, %727 : vector<1x128xf32>
    %756 = vector.broadcast %cst_260 : f32 to vector<1x128xf32>
    %757 = arith.minimumf %756, %755 : vector<1x128xf32>
    %758 = arith.subf %733, %753 : vector<1x128xf32>
    %cst_261 = arith.constant 1.000000e+00 : f32
    %759 = vector.broadcast %cst_261 : f32 to vector<1x128xf32>
    %760 = arith.addf %759, %758 : vector<1x128xf32>
    %761 = arith.subf %739, %753 : vector<1x128xf32>
    %cst_262 = arith.constant 1.000000e+00 : f32
    %762 = vector.broadcast %cst_262 : f32 to vector<1x128xf32>
    %763 = arith.subf %762, %761 : vector<1x128xf32>
    %764 = arith.subf %743, %757 : vector<1x128xf32>
    %cst_263 = arith.constant 1.000000e+00 : f32
    %765 = vector.broadcast %cst_263 : f32 to vector<1x128xf32>
    %766 = arith.addf %765, %764 : vector<1x128xf32>
    %767 = arith.subf %749, %757 : vector<1x128xf32>
    %cst_264 = arith.constant 1.000000e+00 : f32
    %768 = vector.broadcast %cst_264 : f32 to vector<1x128xf32>
    %769 = arith.subf %768, %767 : vector<1x128xf32>
    %770 = vector.broadcast %733 : vector<1x128xf32> to vector<8x128xf32>
    %771 = arith.cmpf oeq, %28, %770 : vector<8x128xf32>
    %cst_265 = arith.constant 0.000000e+00 : f32
    %772 = vector.shape_cast %760 : vector<1x128xf32> to vector<1x128xf32>
    %773 = vector.broadcast %772 : vector<1x128xf32> to vector<8x128xf32>
    %774 = vector.broadcast %cst_265 : f32 to vector<8x128xf32>
    %775 = arith.select %771, %773, %774 : vector<8x128xi1>, vector<8x128xf32>
    %776 = vector.broadcast %739 : vector<1x128xf32> to vector<8x128xf32>
    %777 = arith.cmpf oeq, %28, %776 : vector<8x128xf32>
    %cst_266 = arith.constant 0.000000e+00 : f32
    %778 = vector.shape_cast %763 : vector<1x128xf32> to vector<1x128xf32>
    %779 = vector.broadcast %778 : vector<1x128xf32> to vector<8x128xf32>
    %780 = vector.broadcast %cst_266 : f32 to vector<8x128xf32>
    %781 = arith.select %777, %779, %780 : vector<8x128xi1>, vector<8x128xf32>
    %782 = arith.addf %775, %781 : vector<8x128xf32>
    %783 = vector.broadcast %743 : vector<1x128xf32> to vector<8x128xf32>
    %784 = arith.cmpf oeq, %30, %783 : vector<8x128xf32>
    %cst_267 = arith.constant 0.000000e+00 : f32
    %785 = vector.shape_cast %766 : vector<1x128xf32> to vector<1x128xf32>
    %786 = vector.broadcast %785 : vector<1x128xf32> to vector<8x128xf32>
    %787 = vector.broadcast %cst_267 : f32 to vector<8x128xf32>
    %788 = arith.select %784, %786, %787 : vector<8x128xi1>, vector<8x128xf32>
    %789 = vector.broadcast %749 : vector<1x128xf32> to vector<8x128xf32>
    %790 = arith.cmpf oeq, %30, %789 : vector<8x128xf32>
    %cst_268 = arith.constant 0.000000e+00 : f32
    %791 = vector.shape_cast %769 : vector<1x128xf32> to vector<1x128xf32>
    %792 = vector.broadcast %791 : vector<1x128xf32> to vector<8x128xf32>
    %793 = vector.broadcast %cst_268 : f32 to vector<8x128xf32>
    %794 = arith.select %790, %792, %793 : vector<8x128xi1>, vector<8x128xf32>
    %795 = arith.addf %788, %794 : vector<8x128xf32>
    %cst_269 = arith.constant dense<0.000000e+00> : vector<64x128xf32>
    %796 = tpu.matmul %3, %795, %cst_269 {dimension_numbers = #tpu.dot_dimension_numbers<[1], [0], [0], [1], [0, 0, 1, 1], [], []>} : vector<64x8xf32>, vector<8x128xf32>, vector<64x128xf32> -> vector<64x128xf32>
    %797 = vector.shape_cast %796 : vector<64x128xf32> to vector<8x8x128xf32>
    %798 = vector.shape_cast %782 : vector<8x128xf32> to vector<1x8x128xf32>
    %799 = vector.broadcast %798 : vector<1x8x128xf32> to vector<8x8x128xf32>
    %800 = arith.mulf %797, %799 : vector<8x8x128xf32>
    %cst_270 = arith.constant dense<0.000000e+00> : vector<8x128xf32>
    %801 = vector.multi_reduction <add>, %800, %cst_270 [1] : vector<8x8x128xf32> to vector<8x128xf32>
    %c8 = arith.constant 8 : index
    %c0_271 = arith.constant 0 : index
    %c0_272 = arith.constant 0 : index
    %802 = vector.load %arg5[%c8, %c0_271, %c0_272] : memref<9x8x8xf32, #tpu.memory_space<vmem>>, vector<1x8x8xf32>
    %803 = vector.shape_cast %802 : vector<1x8x8xf32> to vector<8x8xf32>
    %cst_273 = arith.constant dense<0.000000e+00> : vector<8x128xf32>
    %804 = tpu.matmul %803, %801, %cst_273 {dimension_numbers = #tpu.dot_dimension_numbers<[1], [0], [0], [1], [0, 0, 1, 1], [], []>} : vector<8x8xf32>, vector<8x128xf32>, vector<8x128xf32> -> vector<8x128xf32>
    %805 = arith.addf %719, %804 : vector<8x128xf32>
    %c0_274 = arith.constant 0 : index
    %c0_275 = arith.constant 0 : index
    %806 = vector.load %arg6[%c0_274, %c0_275] : memref<8x1xf32, #tpu.memory_space<vmem>>, vector<8x1xf32>
    %807 = vector.broadcast %806 : vector<8x1xf32> to vector<8x128xf32>
    %808 = arith.mulf %805, %807 : vector<8x128xf32>
    %c0_276 = arith.constant 0 : index
    %c0_277 = arith.constant 0 : index
    %809 = vector.load %arg7[%c0_276, %c0_277] : memref<8x1xf32, #tpu.memory_space<vmem>>, vector<8x1xf32>
    %810 = vector.broadcast %809 : vector<8x1xf32> to vector<8x128xf32>
    %811 = arith.addf %808, %810 : vector<8x128xf32>
    %cst_278 = arith.constant 0.000000e+00 : f32
    %812 = vector.broadcast %cst_278 : f32 to vector<8x128xf32>
    %813 = arith.maximumf %811, %812 : vector<8x128xf32>
    %c0_279 = arith.constant 0 : index
    %c0_280 = arith.constant 0 : index
    %c0_281 = arith.constant 0 : index
    %814 = vector.load %arg8[%c0_279, %c0_280, %c0_281] : memref<1x8x128xf32, #tpu.memory_space<vmem>>, vector<1x8x128xf32>
    %815 = vector.shape_cast %814 : vector<1x8x128xf32> to vector<8x128xf32>
    %816 = vector.shape_cast %813 : vector<8x128xf32> to vector<1x8x128xf32>
    tpu.vector_store %arg8[%c0_279, %c0_280, %c0_281], %816 {strides = array<i32>} : memref<1x8x128xf32, #tpu.memory_space<vmem>>, vector<1x8x128xf32>,
    return
  }
  func.func @transform_0(%arg0: i32) -> (i32, i32, i32) {
    %c0_i32 = arith.constant 0 : i32
    %c0_i32_0 = arith.constant 0 : i32
    %c0_i32_1 = arith.constant 0 : i32
    return %arg0, %c0_i32, %c0_i32_0 : i32, i32, i32
  }
  func.func @transform_1(%arg0: i32) -> (i32, i32, i32) {
    %c0_i32 = arith.constant 0 : i32
    %c0_i32_0 = arith.constant 0 : i32
    %c0_i32_1 = arith.constant 0 : i32
    return %arg0, %c0_i32, %c0_i32_0 : i32, i32, i32
  }
  func.func @transform_2(%arg0: i32) -> (i32, i32) {
    %c0_i32 = arith.constant 0 : i32
    %c0_i32_0 = arith.constant 0 : i32
    %c0_i32_1 = arith.constant 0 : i32
    return %c0_i32, %c0_i32_0 : i32, i32
  }
  func.func @transform_3(%arg0: i32) -> (i32, i32) {
    %c0_i32 = arith.constant 0 : i32
    %c0_i32_0 = arith.constant 0 : i32
    %c0_i32_1 = arith.constant 0 : i32
    return %c0_i32, %c0_i32_0 : i32, i32
  }
  func.func @transform_4(%arg0: i32) -> (i32, i32, i32) {
    %c0_i32 = arith.constant 0 : i32
    %c0_i32_0 = arith.constant 0 : i32
    %c0_i32_1 = arith.constant 0 : i32
    %c0_i32_2 = arith.constant 0 : i32
    return %c0_i32, %c0_i32_0, %c0_i32_1 : i32, i32, i32
  }
  func.func @transform_5(%arg0: i32) -> (i32, i32) {
    %c0_i32 = arith.constant 0 : i32
    %c0_i32_0 = arith.constant 0 : i32
    %c0_i32_1 = arith.constant 0 : i32
    return %c0_i32, %c0_i32_0 : i32, i32
  }
  func.func @transform_6(%arg0: i32) -> (i32, i32) {
    %c0_i32 = arith.constant 0 : i32
    %c0_i32_0 = arith.constant 0 : i32
    %c0_i32_1 = arith.constant 0 : i32
    return %c0_i32, %c0_i32_0 : i32, i32
  }
  func.func @transform_7(%arg0: i32) -> (i32, i32, i32) {
    %c0_i32 = arith.constant 0 : i32
    %c0_i32_0 = arith.constant 0 : i32
    %c0_i32_1 = arith.constant 0 : i32
    return %arg0, %c0_i32, %c0_i32_0 : i32, i32, i32
  }
}

</mosaic_0001>

<llo_original>
// kernel: deform_down.2
$region0: #{deform_down.2}
  #allocation0 [shape = 'u32[]', space=smem, size = 0x4, offset = 0x4, fixed_abs, tag = 'smem constant byte address 0x4 - core index']
  #allocation1 [shape = 'u32[144,128]{1,0:T(1,128)}', space=vmem, size = 0x12000, scoped, tag = 'internal scratch']
  %s0 = inlined_call_operand.vmem [shape: f32[2,4,256], index: 0, kind: input, shape index: {}]
  %s1 = inlined_call_operand.vmem [shape: f32[2,32,8], index: 1, kind: input, shape index: {}]
  %s2 = inlined_call_operand.vmem [shape: f32[18,36], index: 2, kind: input, shape index: {}]
  %s3 = inlined_call_operand.vmem [shape: f32[18,1], index: 3, kind: input, shape index: {}]
  %s4 = inlined_call_operand.vmem [shape: f32[9,8,4], index: 4, kind: input, shape index: {}]
  %s5 = inlined_call_operand.vmem [shape: f32[8,1], index: 5, kind: input, shape index: {}]
  %s6 = inlined_call_operand.vmem [shape: f32[8,1], index: 6, kind: input, shape index: {}]
  %s7 = inlined_call_operand.vmem [shape: f32[2,8,128], index: 7, kind: output, shape index: {}]
  %s8 = sld [smem:[#allocation0]]
  $region61: #{deform_down.2} parent=0
    _
  %s10 = ssub.s32 1, %s8
  %s11 = scalar_select 0, %s10, %s8
  loop: start=0, step=1, limit=4
  $region2: #{deform_down.2} parent=0 // loop_pre_header
    _
  $region3: #{deform_down.2} parent=0 // loop_header
    %s13 = sphi 0, %s17
    %p14 = scmp.ge.s32.totalorder %s13, 4
    %s23 = sphi 0, %s25
    %s26 = sphi 0, %s23
    %s27 = sphi 0, %s26
    %s43 = sphi 0, %s27
    %s49 = sphi 0, %s51
    %s52 = sphi 0, %s49
    %s53 = sphi 0, %s52
    %s69 = sphi 0, %s53
    %s73 = sphi 0, %s73
    %s75 = sphi 0, %s73
    %s76 = sphi 0, %s75
    %s90 = sphi 0, %s76
    %s94 = sphi 0, %s94
    %s96 = sphi 0, %s94
    %s97 = sphi 0, %s96
    %s111 = sphi 0, %s97
    %s115 = sphi 0, %s115
    %s117 = sphi 0, %s115
    %s118 = sphi 0, %s117
    %s132 = sphi 0, %s118
    %s136 = sphi 0, %s136
    %s138 = sphi 0, %s136
    %s139 = sphi 0, %s138
    %s153 = sphi 0, %s139
    %s157 = sphi 0, %s157
    %s159 = sphi 0, %s157
    %s160 = sphi 0, %s159
    %s174 = sphi 0, %s160
    %s180 = sphi 0, %s182
    %s183 = sphi 0, %s180
    %s184 = sphi 0, %s183
    %s200 = sphi 0, %s184
  $region4: #{deform_down.2} parent=0 // loop_header_branch
    %16 = sbr.rel (%p14) target = $region8
  $region5: #{deform_down.2} parent=0 // loop_body
    %s18 = ssub.s32 %s13, 1
    %s19 = ssub.s32 %s13, 2
    %s20 = sadd.s32 %s13, 1
    %s21 = ssub.s32 %s13, %s20
    %p22 = scmp.eq.s32.totalorder %s21, 0
    %s24 = sadd.s32 %s23, 1
    %s25 = scalar_select %p22, %s23, %s24
    %p28 = pneg %p22
    %p29 = scmp.eq.s32.totalorder %s13, 1
    %p30 = por %p28, %p29
    %p31 = scmp.ne.s32.totalorder %s23, %s26
    %p32 = scmp.eq.s32.totalorder %s13, 0
    %p33 = por %p31, %p32
    %p34 = scmp.ne.s32.totalorder %s23, %s26
    %p35 = scmp.eq.s32.totalorder %s18, 1
    %p36 = por %p34, %p35
    %p37 = scmp.ne.s32.totalorder %s26, %s27
    %p38 = scmp.eq.s32.totalorder %s18, 0
    %p39 = por %p37, %p38
    %p40 = scmp.ne.s32.totalorder %s26, %s27
    %p41 = scmp.eq.s32.totalorder %s19, 1
    %p42 = por %p40, %p41
    %p44 = scmp.ne.s32.totalorder %s27, %s43
    %p45 = scmp.eq.s32.totalorder %s19, 0
    %p46 = por %p44, %p45
    %s47 = ssub.s32 %s13, %s20
    %p48 = scmp.eq.s32.totalorder %s47, 0
    %s50 = sadd.s32 %s49, 1
    %s51 = scalar_select %p48, %s49, %s50
    %p54 = pneg %p48
    %p55 = scmp.eq.s32.totalorder %s13, 1
    %p56 = por %p54, %p55
    %p57 = scmp.ne.s32.totalorder %s49, %s52
    %p58 = scmp.eq.s32.totalorder %s13, 0
    %p59 = por %p57, %p58
    %p60 = scmp.ne.s32.totalorder %s49, %s52
    %p61 = scmp.eq.s32.totalorder %s18, 1
    %p62 = por %p60, %p61
    %p63 = scmp.ne.s32.totalorder %s52, %s53
    %p64 = scmp.eq.s32.totalorder %s18, 0
    %p65 = por %p63, %p64
    %p66 = scmp.ne.s32.totalorder %s52, %s53
    %p67 = scmp.eq.s32.totalorder %s19, 1
    %p68 = por %p66, %p67
    %p70 = scmp.ne.s32.totalorder %s53, %s69
    %p71 = scmp.eq.s32.totalorder %s19, 0
    %p72 = por %p70, %p71
    %s74 = sadd.s32 %s73, 1
    %p77 = scmp.eq.s32.totalorder %s13, 1
    %p78 = scmp.ne.s32.totalorder %s73, %s75
    %p79 = scmp.eq.s32.totalorder %s13, 0
    %p80 = por %p78, %p79
    %p81 = scmp.ne.s32.totalorder %s73, %s75
    %p82 = scmp.eq.s32.totalorder %s18, 1
    %p83 = por %p81, %p82
    %p84 = scmp.ne.s32.totalorder %s75, %s76
    %p85 = scmp.eq.s32.totalorder %s18, 0
    %p86 = por %p84, %p85
    %p87 = scmp.ne.s32.totalorder %s75, %s76
    %p88 = scmp.eq.s32.totalorder %s19, 1
    %p89 = por %p87, %p88
    %p91 = scmp.ne.s32.totalorder %s76, %s90
    %p92 = scmp.eq.s32.totalorder %s19, 0
    %p93 = por %p91, %p92
    %s95 = sadd.s32 %s94, 1
    %p98 = scmp.eq.s32.totalorder %s13, 1
    %p99 = scmp.ne.s32.totalorder %s94, %s96
    %p100 = scmp.eq.s32.totalorder %s13, 0
    %p101 = por %p99, %p100
    %p102 = scmp.ne.s32.totalorder %s94, %s96
    %p103 = scmp.eq.s32.totalorder %s18, 1
    %p104 = por %p102, %p103
    %p105 = scmp.ne.s32.totalorder %s96, %s97
    %p106 = scmp.eq.s32.totalorder %s18, 0
    %p107 = por %p105, %p106
    %p108 = scmp.ne.s32.totalorder %s96, %s97
    %p109 = scmp.eq.s32.totalorder %s19, 1
    %p110 = por %p108, %p109
    %p112 = scmp.ne.s32.totalorder %s97, %s111
    %p113 = scmp.eq.s32.totalorder %s19, 0
    %p114 = por %p112, %p113
    %s116 = sadd.s32 %s115, 1
    %p119 = scmp.eq.s32.totalorder %s13, 1
    %p120 = scmp.ne.s32.totalorder %s115, %s117
    %p121 = scmp.eq.s32.totalorder %s13, 0
    %p122 = por %p120, %p121
    %p123 = scmp.ne.s32.totalorder %s115, %s117
    %p124 = scmp.eq.s32.totalorder %s18, 1
    %p125 = por %p123, %p124
    %p126 = scmp.ne.s32.totalorder %s117, %s118
    %p127 = scmp.eq.s32.totalorder %s18, 0
    %p128 = por %p126, %p127
    %p129 = scmp.ne.s32.totalorder %s117, %s118
    %p130 = scmp.eq.s32.totalorder %s19, 1
    %p131 = por %p129, %p130
    %p133 = scmp.ne.s32.totalorder %s118, %s132
    %p134 = scmp.eq.s32.totalorder %s19, 0
    %p135 = por %p133, %p134
    %s137 = sadd.s32 %s136, 1
    %p140 = scmp.eq.s32.totalorder %s13, 1
    %p141 = scmp.ne.s32.totalorder %s136, %s138
    %p142 = scmp.eq.s32.totalorder %s13, 0
    %p143 = por %p141, %p142
    %p144 = scmp.ne.s32.totalorder %s136, %s138
    %p145 = scmp.eq.s32.totalorder %s18, 1
    %p146 = por %p144, %p145
    %p147 = scmp.ne.s32.totalorder %s138, %s139
    %p148 = scmp.eq.s32.totalorder %s18, 0
    %p149 = por %p147, %p148
    %p150 = scmp.ne.s32.totalorder %s138, %s139
    %p151 = scmp.eq.s32.totalorder %s19, 1
    %p152 = por %p150, %p151
    %p154 = scmp.ne.s32.totalorder %s139, %s153
    %p155 = scmp.eq.s32.totalorder %s19, 0
    %p156 = por %p154, %p155
    %s158 = sadd.s32 %s157, 1
    %p161 = scmp.eq.s32.totalorder %s13, 1
    %p162 = scmp.ne.s32.totalorder %s157, %s159
    %p163 = scmp.eq.s32.totalorder %s13, 0
    %p164 = por %p162, %p163
    %p165 = scmp.ne.s32.totalorder %s157, %s159
    %p166 = scmp.eq.s32.totalorder %s18, 1
    %p167 = por %p165, %p166
    %p168 = scmp.ne.s32.totalorder %s159, %s160
    %p169 = scmp.eq.s32.totalorder %s18, 0
    %p170 = por %p168, %p169
    %p171 = scmp.ne.s32.totalorder %s159, %s160
    %p172 = scmp.eq.s32.totalorder %s19, 1
    %p173 = por %p171, %p172
    %p175 = scmp.ne.s32.totalorder %s160, %s174
    %p176 = scmp.eq.s32.totalorder %s19, 0
    %p177 = por %p175, %p176
    %s178 = ssub.s32 %s13, %s20
    %p179 = scmp.eq.s32.totalorder %s178, 0
    %s181 = sadd.s32 %s180, 1
    %s182 = scalar_select %p179, %s180, %s181
    %p185 = pneg %p179
    %p186 = scmp.eq.s32.totalorder %s13, 1
    %p187 = por %p185, %p186
    %p188 = scmp.ne.s32.totalorder %s180, %s183
    %p189 = scmp.eq.s32.totalorder %s13, 0
    %p190 = por %p188, %p189
    %p191 = scmp.ne.s32.totalorder %s180, %s183
    %p192 = scmp.eq.s32.totalorder %s18, 1
    %p193 = por %p191, %p192
    %p194 = scmp.ne.s32.totalorder %s183, %s184
    %p195 = scmp.eq.s32.totalorder %s18, 0
    %p196 = por %p194, %p195
    %p197 = scmp.ne.s32.totalorder %s183, %s184
    %p198 = scmp.eq.s32.totalorder %s19, 1
    %p199 = por %p197, %p198
    %p201 = scmp.ne.s32.totalorder %s184, %s200
    %p202 = scmp.eq.s32.totalorder %s19, 0
    %p203 = por %p201, %p202
    %p204 = scmp.le.s32.totalorder 1, %s13
    %p205 = scmp.lt.s32.totalorder %s13, 3
    %p206 = pnand %p204, %p205
    %p207 = pneg %p206
    // Predicated region
    $region9: #{deform_down.2} parent=5 // pred_check
      _
    $region10: #{deform_down.2} parent=5 // pred_check_branch
      %209 = sbr.rel (%p206) target = $region12
    $region11: #{deform_down.2} parent=5 // pred_region
      %s210 = ssub.s32 %s13, 1
      // Predicated region
      $region13: #{deform_down.2} parent=11 // pred_check
        %p211 = pneg %p86
      $region14: #{deform_down.2} parent=11 // pred_check_branch
        %213 = sbr.rel (%p211) target = $region16
      $region15: #{deform_down.2} parent=11 // pred_region
        _
      $region16: #{deform_down.2} parent=11 // pred_fallthru
        _
      // Predicated region
      $region17: #{deform_down.2} parent=11 // pred_check
        %p214 = pneg %p107
      $region18: #{deform_down.2} parent=11 // pred_check_branch
        %216 = sbr.rel (%p214) target = $region20
      $region19: #{deform_down.2} parent=11 // pred_region
        _
      $region20: #{deform_down.2} parent=11 // pred_fallthru
        _
      // Predicated region
      $region21: #{deform_down.2} parent=11 // pred_check
        %p217 = pneg %p128
      $region22: #{deform_down.2} parent=11 // pred_check_branch
        %219 = sbr.rel (%p217) target = $region24
      $region23: #{deform_down.2} parent=11 // pred_region
        _
      $region24: #{deform_down.2} parent=11 // pred_fallthru
        _
      // Predicated region
      $region25: #{deform_down.2} parent=11 // pred_check
        %p220 = pneg %p149
      $region26: #{deform_down.2} parent=11 // pred_check_branch
        %222 = sbr.rel (%p220) target = $region28
      $region27: #{deform_down.2} parent=11 // pred_region
        _
      $region28: #{deform_down.2} parent=11 // pred_fallthru
        _
      // Predicated region
      $region29: #{deform_down.2} parent=11 // pred_check
        %p223 = pneg %p170
      $region30: #{deform_down.2} parent=11 // pred_check_branch
        %225 = sbr.rel (%p223) target = $region32
      $region31: #{deform_down.2} parent=11 // pred_region
        _
      $region32: #{deform_down.2} parent=11 // pred_fallthru
        _
    $region12: #{deform_down.2} parent=5 // pred_fallthru
      _
    %p226 = scmp.lt.s32.totalorder %s13, 2
    // Predicated region
    $region33: #{deform_down.2} parent=5 // pred_check
      %p227 = pneg %p226
    $region34: #{deform_down.2} parent=5 // pred_check_branch
      %229 = sbr.rel (%p227) target = $region36
    $region35: #{deform_down.2} parent=5 // pred_region
      // Predicated region
      $region37: #{deform_down.2} parent=35 // pred_check
        %p230 = pneg %p33
      $region38: #{deform_down.2} parent=35 // pred_check_branch
        %232 = sbr.rel (%p230) target = $region40
      $region39: #{deform_down.2} parent=35 // pred_region
        %p233 = scmp.lt.s32.totalorder %s13, 1
        %s234 = scalar_select %p233, %s13, 1
        %s235 = smul.addr %s234, 2
        %s236 = smul.addr %s235, 4
        %s237 = scalar_lea.vmem %s0, %s236
      $region40: #{deform_down.2} parent=35 // pred_fallthru
        _
      // Predicated region
      $region41: #{deform_down.2} parent=35 // pred_check
        %p238 = pneg %p59
      $region42: #{deform_down.2} parent=35 // pred_check_branch
        %240 = sbr.rel (%p238) target = $region44
      $region43: #{deform_down.2} parent=35 // pred_region
        %p241 = scmp.lt.s32.totalorder %s13, 1
        %s242 = scalar_select %p241, %s13, 1
        %s243 = smul.addr %s242, 4
        %s244 = smul.addr %s243, 8
        %s245 = scalar_lea.vmem %s1, %s244
      $region44: #{deform_down.2} parent=35 // pred_fallthru
        _
    $region36: #{deform_down.2} parent=5 // pred_fallthru
      _
    %p246 = scmp.le.s32.totalorder 1, %s13
    %p247 = scmp.lt.s32.totalorder %s13, 3
    %p248 = pnand %p246, %p247
    %p249 = pneg %p248
    // Predicated region
    $region45: #{deform_down.2} parent=5 // pred_check
      _
    $region46: #{deform_down.2} parent=5 // pred_check_branch
      %251 = sbr.rel (%p248) target = $region48
    $region47: #{deform_down.2} parent=5 // pred_region
      %s252 = ssub.s32 %s13, 1
      %p253 = scmp.lt.s32.totalorder %s18, 1
      %s254 = scalar_select %p253, %s18, 1
      %s255 = smul.addr %s254, 2
      %s256 = smul.addr %s255, 4
      %s257 = scalar_lea.vmem %s0, %s256
      %p258 = pneg %p39
      %p259 = pneg %p36
      %p260 = scmp.lt.s32.totalorder %s18, 1
      %s261 = scalar_select %p260, %s18, 1
      %s262 = smul.addr %s261, 4
      %s263 = smul.addr %s262, 8
      %s264 = scalar_lea.vmem %s1, %s263
      %p265 = pneg %p65
      %p266 = pneg %p62
      %p267 = pneg %p86
      %p268 = pneg %p83
      %p269 = pneg %p107
      %p270 = pneg %p104
      %p271 = pneg %p128
      %p272 = pneg %p125
      %p273 = pneg %p149
      %p274 = pneg %p146
      %p275 = pneg %p170
      %p276 = pneg %p167
      %p277 = pneg %p196
      %p278 = pneg %p193
      %p279 = scmp.lt.s32.totalorder %s18, 1
      %s280 = scalar_select %p279, %s18, 1
      %s281 = smul.addr %s280, 8
      %s282 = scalar_lea.vmem %s7, %s281
      %p283 = scmp.lt.s32.totalorder %s18, 1
      %s284 = scalar_select %p283, %s18, 1
      %s285 = smul.addr %s284, 2
      %s286 = smul.addr %s285, 4
      %s287 = scalar_lea.vmem %s0, %s286
      %p288 = scmp.lt.s32.totalorder %s18, 1
      %s289 = scalar_select %p288, %s18, 1
      %s290 = smul.addr %s289, 4
      %s291 = smul.addr %s290, 8
      %s292 = scalar_lea.vmem %s1, %s291
      %p293 = scmp.lt.s32.totalorder %s18, 1
      %s294 = scalar_select %p293, %s18, 1
      %s295 = smul.addr %s294, 8
      %s296 = scalar_lea.vmem %s7, %s295
      %v297 = vld [vmem:[%s287] sm:$0xff]
      %v298 = vld [vmem:[%s292] sm:$0xff]
      %v299 = vld [vmem:[%s292 + $0x8] sm:$0xff]
      %v300 = vld [vmem:[%s292 + $0x10] sm:$0xff]
      %v301 = vld [vmem:[%s292 + $0x18] sm:$0xff]
      %v303 = vcombine.low %v297, %v297
      %304 = vrot.lane.b32.xlu0 %v303, 127
      %v305 = vpop.permute.xlu0 %304
      %306 = vrot.lane.b32.xlu0 %v297, 127
      %v307 = vpop.permute.xlu0 %306
      %vm308 = vcmask 1039360
      %v309 = vsel %vm308, %v305, %v307
      %v311 = vcombine.high %v297, %v297
      %312 = vrot.lane.b32.xlu0 %v297, 126
      %v313 = vpop.permute.xlu0 %312
      %314 = vrot.lane.b32.xlu0 %v311, 126
      %v315 = vpop.permute.xlu0 %314
      %vm316 = vcmask 1031168
      %v317 = vsel %vm316, %v313, %v315
      %319 = vrot.lane.b32.xlu0 %v303, 118
      %v320 = vpop.permute.xlu0 %319
      %321 = vrot.lane.b32.xlu0 %v297, 118
      %v322 = vpop.permute.xlu0 %321
      %vm323 = vcmask 965632
      %v324 = vsel %vm323, %v320, %v322
      %326 = vrot.lane.b32.xlu0 %v297, 117
      %v327 = vpop.permute.xlu0 %326
      %328 = vrot.lane.b32.xlu0 %v311, 117
      %v329 = vpop.permute.xlu0 %328
      %vm330 = vcmask 957440
      %v331 = vsel %vm330, %v327, %v329
      %333 = vrot.lane.b32.xlu0 %v303, 116
      %v334 = vpop.permute.xlu0 %333
      %335 = vrot.lane.b32.xlu0 %v297, 116
      %v336 = vpop.permute.xlu0 %335
      %vm337 = vcmask 949248
      %v338 = vsel %vm337, %v334, %v336
      %340 = vrot.lane.b32.xlu0 %v297, 108
      %v341 = vpop.permute.xlu0 %340
      %342 = vrot.lane.b32.xlu0 %v311, 108
      %v343 = vpop.permute.xlu0 %342
      %vm344 = vcmask 883712
      %v345 = vsel %vm344, %v341, %v343
      %347 = vrot.lane.b32.xlu0 %v303, 107
      %v348 = vpop.permute.xlu0 %347
      %349 = vrot.lane.b32.xlu0 %v297, 107
      %v350 = vpop.permute.xlu0 %349
      %vm351 = vcmask 875520
      %v352 = vsel %vm351, %v348, %v350
      %354 = vrot.lane.b32.xlu0 %v297, 106
      %v355 = vpop.permute.xlu0 %354
      %356 = vrot.lane.b32.xlu0 %v311, 106
      %v357 = vpop.permute.xlu0 %356
      %vm358 = vcmask 867328
      %v359 = vsel %vm358, %v355, %v357
      %vm360 = vcmask 1043456
      %v361 = vsel %vm360, %v297, %v309
      %v362 = vsel %vm360, %v317, %v324
      %v363 = vsel %vm360, %v331, %v338
      %v364 = vsel %vm360, %v345, %v352
      %v365 = vld [vmem:[%s2] sm:$0xff]
      %v366 = vld [vmem:[%s2 + $0x8] sm:$0xff]
      %v367 = vld [vmem:[%s2 + $0x10] sm:$0x3]
      %v368 = vld [vmem:[%s3] sm:$0xff]
      %v369 = vld [vmem:[%s3 + $0x8] sm:$0xff]
      %v370 = vld [vmem:[%s3 + $0x10] sm:$0x3]
      %372 = vset.pattern.permute.xlu0 0
      %373 = vperm.xlu0 %372, %v368
      %v374 = vpop.permute.xlu0 %373
      %377 = vset.pattern.permute.xlu0 0
      %378 = vperm.xlu0 %377, %v369
      %v379 = vpop.permute.xlu0 %378
      %382 = vset.pattern.permute.xlu0 0
      %383 = vperm.xlu0 %382, %v370
      %v384 = vpop.permute.xlu0 %383
      %vm386 = vcmask 293888
      %v388 = vsel %vm386, %v365, 0
      %v391 = vsel %vm386, %v366, 0
      %v394 = vsel %vm386, %v367, 0
      %v396 = vsel %vm360, %v359, 0
      %398 = vmatprep.subr.mxu0 0.0
      %399 = vmatpush1.msra.mxu0 0.0
      %400 = vmatprep.subr.mxu0 0.0
      %401 = vmatpush1.msra.mxu0 0.0
      %402 = vmatprep.subr.mxu0 0.0
      %403 = vmatpush1.msra.mxu0 0.0
      %404 = vmatprep.subr.mxu0 0.0
      %405 = vmatpush1.msra.mxu0 0.0
      %406 = vmatprep.subr.mxu0 0.0
      %407 = vmatpush1.msra.mxu0 0.0
      %408 = vmatprep.subr.mxu0 0.0
      %409 = vmatpush1.msra.mxu0 0.0
      %410 = vmatprep.subr.mxu0 0.0
      %411 = vmatpush1.msra.mxu0 0.0
      %412 = vmatprep.subr.mxu0 0.0
      %413 = vmatpush1.msra.mxu0 0.0
      %414 = vmatprep.subr.mxu0 0.0
      %415 = vmatpush1.msra.mxu0 0.0
      %416 = vmatprep.subr.mxu0 0.0
      %417 = vmatpush1.msra.mxu0 0.0
      %418 = vmatprep.subr.mxu0 0.0
      %419 = vmatpush1.msra.mxu0 0.0
      %420 = vmatprep.subr.mxu0 0.0
      %421 = vmatpush1.msra.mxu0 %v396
      %422 = vmatprep.subr.mxu0 0.0
      %423 = vmatpush1.msra.mxu0 %v364
      %424 = vmatprep.subr.mxu0 0.0
      %425 = vmatpush1.msra.mxu0 %v363
      %426 = vmatprep.subr.mxu0 0.0
      %427 = vmatpush1.msra.mxu0 %v362
      %428 = vmatprep.subr.mxu0 0.0
      %429 = vmatpush1.msra.mxu0 %v361
      %430 = vmatprep.subr.mxu0 0.0
      %431 = vmatpush2.msra.mxu0 0.0
      %432 = vmatprep.subr.mxu0 0.0
      %433 = vmatpush2.msra.mxu0 0.0
      %434 = vmatprep.subr.mxu0 0.0
      %435 = vmatpush2.msra.mxu0 0.0
      %436 = vmatprep.subr.mxu0 0.0
      %437 = vmatpush2.msra.mxu0 0.0
      %438 = vmatprep.subr.mxu0 0.0
      %439 = vmatpush2.msra.mxu0 0.0
      %440 = vmatprep.subr.mxu0 0.0
      %441 = vmatpush2.msra.mxu0 0.0
      %442 = vmatprep.subr.mxu0 0.0
      %443 = vmatpush2.msra.mxu0 0.0
      %444 = vmatprep.subr.mxu0 0.0
      %445 = vmatpush2.msra.mxu0 0.0
      %446 = vmatprep.subr.mxu0 0.0
      %447 = vmatpush2.msra.mxu0 0.0
      %448 = vmatprep.subr.mxu0 0.0
      %449 = vmatpush2.msra.mxu0 0.0
      %450 = vmatprep.subr.mxu0 0.0
      %451 = vmatpush2.msra.mxu0 0.0
      %452 = vmatprep.subr.mxu0 0.0
      %453 = vmatpush2.msra.mxu0 0.0
      %454 = vmatprep.subr.mxu0 0.0
      %455 = vmatpush2.msra.mxu0 0.0
      %456 = vmatprep.subr.mxu0 0.0
      %457 = vmatpush2.msra.mxu0 0.0
      %458 = vmatprep.subr.mxu0 0.0
      %459 = vmatpush2.msra.mxu0 0.0
      %460 = vmatprep.subr.mxu0 0.0
      %461 = vmatpush2.msra.mxu0 0.0
      %462 = vmatprep.mubr.f32.mxu0 0.0
      %463 = vmatmul.mubr.f32.gmra.mxu0 %v388
      %v464 = vpop.f32.mrf.mxu0
      %v465 = vadd.f32 %v374, %v464
      %v466 = vpop.f32.mrf.mxu0
      %467 = vmatprep.mubr.f32.mxu0 0.0
      %468 = vmatmul.mubr.f32.gmra.mxu0 %v391
      %v469 = vpop.f32.mrf.mxu0
      %v470 = vadd.f32 %v379, %v469
      %v471 = vpop.f32.mrf.mxu0
      %472 = vmatprep.mubr.f32.mxu0 0.0
      %473 = vmatmul.mubr.f32.gmra.mxu0 %v394
      %v474 = vpop.f32.mrf.mxu0
      %v475 = vadd.f32 %v384, %v474
      %v476 = vpop.f32.mrf.mxu0
      %477 = vdwg.mxu0
      %v478 = vlaneseq
      %v479 = vand.u32 %v478, 127
      %v480 = vcvt.s32.f32 %v479
      %v481 = vrcp.pop 10.0
      %v482 = vmul.f32 %v480, %v481
      %v483 = vfloor.f32 %v482
      %v484 = vmul.f32 %v483, 10.0
      %v485 = vsub.f32 %v480, %v484
      %v486 = vlaneseq
      %v487 = vshrl.u32 %v486, 7
      %v488 = vcvt.s32.f32 %v487
      %v489 = vadd.f32 %v483, -1.0
      %v490 = vadd.f32 %v489, %v465
      %v491 = vadd.f32 %v485, -1.0
      %v492 = vadd.f32 %v491, %v470
      %v493 = vfloor.f32 %v490
      %v494 = vfloor.f32 %v492
      %v495 = vmax.f32 %v493, 0.0
      %v496 = vmin.f32 %v495, 7.0
      %v497 = vadd.f32 %v493, 1.0
      %v498 = vmax.f32 %v497, 0.0
      %v499 = vmin.f32 %v498, 7.0
      %v500 = vmax.f32 %v494, 0.0
      %v501 = vmin.f32 %v500, 7.0
      %v502 = vadd.f32 %v494, 1.0
      %v503 = vmax.f32 %v502, 0.0
      %v504 = vmin.f32 %v503, 7.0
      %v505 = vmax.f32 %v490, 0.0
      %v506 = vmin.f32 %v505, 7.0
      %v507 = vmax.f32 %v492, 0.0
      %v508 = vmin.f32 %v507, 7.0
      %v509 = vsub.f32 %v496, %v506
      %v510 = vadd.f32 %v509, 1.0
      %v511 = vsub.f32 %v499, %v506
      %v512 = vsub.f32 1.0, %v511
      %v513 = vsub.f32 %v501, %v508
      %v514 = vadd.f32 %v513, 1.0
      %v515 = vsub.f32 %v504, %v508
      %v516 = vsub.f32 1.0, %v515
      %v517 = vlaneseq
      %v518 = vshrl.u32 %v517, 7
      %v519 = vsub.s32 0, %v518
      %v520 = vrot.slane %v496, %v519
      %vm521 = vcmp.eq.f32.partialorder %v488, %v520
      %v522 = vlaneseq
      %v523 = vshrl.u32 %v522, 7
      %v524 = vsub.s32 0, %v523
      %v525 = vrot.slane %v510, %v524
      %v526 = vsel %vm521, %v525, 0.0
      %v527 = vlaneseq
      %v528 = vshrl.u32 %v527, 7
      %v529 = vsub.s32 0, %v528
      %v530 = vrot.slane %v499, %v529
      %vm531 = vcmp.eq.f32.partialorder %v488, %v530
      %v532 = vlaneseq
      %v533 = vshrl.u32 %v532, 7
      %v534 = vsub.s32 0, %v533
      %v535 = vrot.slane %v512, %v534
      %v536 = vsel %vm531, %v535, 0.0
      %v537 = vadd.f32 %v526, %v536
      %v538 = vlaneseq
      %v539 = vshrl.u32 %v538, 7
      %v540 = vsub.s32 1, %v539
      %v541 = vrot.slane %v501, %v540
      %vm542 = vcmp.eq.f32.partialorder %v488, %v541
      %v543 = vlaneseq
      %v544 = vshrl.u32 %v543, 7
      %v545 = vsub.s32 1, %v544
      %v546 = vrot.slane %v514, %v545
      %v547 = vsel %vm542, %v546, 0.0
      %v548 = vlaneseq
      %v549 = vshrl.u32 %v548, 7
      %v550 = vsub.s32 1, %v549
      %v551 = vrot.slane %v504, %v550
      %vm552 = vcmp.eq.f32.partialorder %v488, %v551
      %v553 = vlaneseq
      %v554 = vshrl.u32 %v553, 7
      %v555 = vsub.s32 1, %v554
      %v556 = vrot.slane %v516, %v555
      %v557 = vsel %vm552, %v556, 0.0
      %v558 = vadd.f32 %v547, %v557
      %vm559 = vcmask 64512
      %v561 = vsel %vm559, %v298, 0
      %v564 = vsel %vm559, %v299, 0
      %v567 = vsel %vm559, %v300, 0
      %v570 = vsel %vm559, %v301, 0
      %572 = vmatprep.subr.mxu0 0.0
      %573 = vmatpush1.msra.mxu0 0.0
      %574 = vmatprep.subr.mxu0 0.0
      %575 = vmatpush1.msra.mxu0 0.0
      %576 = vmatprep.subr.mxu0 0.0
      %577 = vmatpush1.msra.mxu0 0.0
      %578 = vmatprep.subr.mxu0 0.0
      %579 = vmatpush1.msra.mxu0 0.0
      %580 = vmatprep.subr.mxu0 0.0
      %581 = vmatpush1.msra.mxu0 0.0
      %582 = vmatprep.subr.mxu0 0.0
      %583 = vmatpush1.msra.mxu0 0.0
      %584 = vmatprep.subr.mxu0 0.0
      %585 = vmatpush1.msra.mxu0 0.0
      %586 = vmatprep.subr.mxu0 0.0
      %587 = vmatpush1.msra.mxu0 0.0
      %588 = vmatprep.subr.mxu0 0.0
      %589 = vmatpush1.msra.mxu0 0.0
      %590 = vmatprep.subr.mxu0 0.0
      %591 = vmatpush1.msra.mxu0 0.0
      %592 = vmatprep.subr.mxu0 0.0
      %593 = vmatpush1.msra.mxu0 0.0
      %594 = vmatprep.subr.mxu0 0.0
      %595 = vmatpush1.msra.mxu0 0.0
      %596 = vmatprep.subr.mxu0 0.0
      %597 = vmatpush1.msra.mxu0 0.0
      %598 = vmatprep.subr.mxu0 0.0
      %599 = vmatpush1.msra.mxu0 0.0
      %600 = vmatprep.subr.mxu0 0.0
      %601 = vmatpush1.msra.mxu0 0.0
      %602 = vmatprep.subr.mxu0 0.0
      %603 = vmatpush1.msra.mxu0 %v558
      %604 = vmatprep.subr.mxu0 0.0
      %605 = vmatpush2.msra.mxu0 0.0
      %606 = vmatprep.subr.mxu0 0.0
      %607 = vmatpush2.msra.mxu0 0.0
      %608 = vmatprep.subr.mxu0 0.0
      %609 = vmatpush2.msra.mxu0 0.0
      %610 = vmatprep.subr.mxu0 0.0
      %611 = vmatpush2.msra.mxu0 0.0
      %612 = vmatprep.subr.mxu0 0.0
      %613 = vmatpush2.msra.mxu0 0.0
      %614 = vmatprep.subr.mxu0 0.0
      %615 = vmatpush2.msra.mxu0 0.0
      %616 = vmatprep.subr.mxu0 0.0
      %617 = vmatpush2.msra.mxu0 0.0
      %618 = vmatprep.subr.mxu0 0.0
      %619 = vmatpush2.msra.mxu0 0.0
      %620 = vmatprep.subr.mxu0 0.0
      %621 = vmatpush2.msra.mxu0 0.0
      %622 = vmatprep.subr.mxu0 0.0
      %623 = vmatpush2.msra.mxu0 0.0
      %624 = vmatprep.subr.mxu0 0.0
      %625 = vmatpush2.msra.mxu0 0.0
      %626 = vmatprep.subr.mxu0 0.0
      %627 = vmatpush2.msra.mxu0 0.0
      %628 = vmatprep.subr.mxu0 0.0
      %629 = vmatpush2.msra.mxu0 0.0
      %630 = vmatprep.subr.mxu0 0.0
      %631 = vmatpush2.msra.mxu0 0.0
      %632 = vmatprep.subr.mxu0 0.0
      %633 = vmatpush2.msra.mxu0 0.0
      %634 = vmatprep.subr.mxu0 0.0
      %635 = vmatpush2.msra.mxu0 0.0
      %636 = vmatprep.mubr.f32.mxu0 0.0
      %637 = vmatmul.mubr.f32.gmra.mxu0 %v561
      %v638 = vpop.f32.mrf.mxu0
      %v639 = vadd.f32 0.0, %v638
      %v640 = vpop.f32.mrf.mxu0
      %641 = vmatprep.mubr.f32.mxu0 0.0
      %642 = vmatmul.mubr.f32.gmra.mxu0 %v564
      %v643 = vpop.f32.mrf.mxu0
      %v644 = vadd.f32 0.0, %v643
      %v645 = vpop.f32.mrf.mxu0
      %646 = vmatprep.mubr.f32.mxu0 0.0
      %647 = vmatmul.mubr.f32.gmra.mxu0 %v567
      %v648 = vpop.f32.mrf.mxu0
      %v649 = vadd.f32 0.0, %v648
      %v650 = vpop.f32.mrf.mxu0
      %651 = vmatprep.mubr.f32.mxu0 0.0
      %652 = vmatmul.mubr.f32.gmra.mxu0 %v570
      %v653 = vpop.f32.mrf.mxu0
      %v654 = vadd.f32 0.0, %v653
      %v655 = vpop.f32.mrf.mxu0
      %656 = vdwg.mxu0
      %v657 = vmul.f32 %v639, %v537
      %v658 = vmul.f32 %v644, %v537
      %v659 = vmul.f32 %v649, %v537
      %v660 = vmul.f32 %v654, %v537
      %v661 = vrot.slane %v657, 4
      %v662 = vadd.f32 %v657, %v661
      %v663 = vrot.slane %v662, 2
      %v664 = vadd.f32 %v662, %v663
      %v665 = vrot.slane %v664, 1
      %v666 = vadd.f32 %v664, %v665
      %v667 = vrot.slane %v658, 4
      %v668 = vadd.f32 %v658, %v667
      %v669 = vrot.slane %v668, 2
      %v670 = vadd.f32 %v668, %v669
      %v671 = vrot.slane %v670, 1
      %v672 = vadd.f32 %v670, %v671
      %v673 = vrot.slane %v659, 4
      %v674 = vadd.f32 %v659, %v673
      %v675 = vrot.slane %v674, 2
      %v676 = vadd.f32 %v674, %v675
      %v677 = vrot.slane %v676, 1
      %v678 = vadd.f32 %v676, %v677
      %v679 = vrot.slane %v660, 4
      %v680 = vadd.f32 %v660, %v679
      %v681 = vrot.slane %v680, 2
      %v682 = vadd.f32 %v680, %v681
      %v683 = vrot.slane %v682, 1
      %v684 = vadd.f32 %v682, %v683
      %v685 = vld [vmem:[%s4] sm:$0xff]
      %v686 = vadd.f32 %v485, 0.0
      %v687 = vadd.f32 %v686, %v470
      %v688 = vfloor.f32 %v687
      %v689 = vmax.f32 %v688, 0.0
      %v690 = vmin.f32 %v689, 7.0
      %v691 = vadd.f32 %v688, 1.0
      %v692 = vmax.f32 %v691, 0.0
      %v693 = vmin.f32 %v692, 7.0
      %v694 = vmax.f32 %v687, 0.0
      %v695 = vmin.f32 %v694, 7.0
      %v696 = vsub.f32 %v690, %v695
      %v697 = vadd.f32 %v696, 1.0
      %v698 = vsub.f32 %v693, %v695
      %v699 = vsub.f32 1.0, %v698
      %v700 = vlaneseq
      %v701 = vshrl.u32 %v700, 7
      %v702 = vsub.s32 1, %v701
      %v703 = vrot.slane %v496, %v702
      %vm704 = vcmp.eq.f32.partialorder %v488, %v703
      %v705 = vlaneseq
      %v706 = vshrl.u32 %v705, 7
      %v707 = vsub.s32 1, %v706
      %v708 = vrot.slane %v510, %v707
      %v709 = vsel %vm704, %v708, 0.0
      %v710 = vlaneseq
      %v711 = vshrl.u32 %v710, 7
      %v712 = vsub.s32 1, %v711
      %v713 = vrot.slane %v499, %v712
      %vm714 = vcmp.eq.f32.partialorder %v488, %v713
      %v715 = vlaneseq
      %v716 = vshrl.u32 %v715, 7
      %v717 = vsub.s32 1, %v716
      %v718 = vrot.slane %v512, %v717
      %v719 = vsel %vm714, %v718, 0.0
      %v720 = vadd.f32 %v709, %v719
      %v721 = vlaneseq
      %v722 = vshrl.u32 %v721, 7
      %v723 = vsub.s32 2, %v722
      %v724 = vrot.slane %v690, %v723
      %vm725 = vcmp.eq.f32.partialorder %v488, %v724
      %v726 = vlaneseq
      %v727 = vshrl.u32 %v726, 7
      %v728 = vsub.s32 2, %v727
      %v729 = vrot.slane %v697, %v728
      %v730 = vsel %vm725, %v729, 0.0
      %v731 = vlaneseq
      %v732 = vshrl.u32 %v731, 7
      %v733 = vsub.s32 2, %v732
      %v734 = vrot.slane %v693, %v733
      %vm735 = vcmp.eq.f32.partialorder %v488, %v734
      %v736 = vlaneseq
      %v737 = vshrl.u32 %v736, 7
      %v738 = vsub.s32 2, %v737
      %v739 = vrot.slane %v699, %v738
      %v740 = vsel %vm735, %v739, 0.0
      %v741 = vadd.f32 %v730, %v740
      %742 = vmatprep.subr.mxu0 0.0
      %743 = vmatpush1.msra.mxu0 0.0
      %744 = vmatprep.subr.mxu0 0.0
      %745 = vmatpush1.msra.mxu0 0.0
      %746 = vmatprep.subr.mxu0 0.0
      %747 = vmatpush1.msra.mxu0 0.0
      %748 = vmatprep.subr.mxu0 0.0
      %749 = vmatpush1.msra.mxu0 0.0
      %750 = vmatprep.subr.mxu0 0.0
      %751 = vmatpush1.msra.mxu0 0.0
      %752 = vmatprep.subr.mxu0 0.0
      %753 = vmatpush1.msra.mxu0 0.0
      %754 = vmatprep.subr.mxu0 0.0
      %755 = vmatpush1.msra.mxu0 0.0
      %756 = vmatprep.subr.mxu0 0.0
      %757 = vmatpush1.msra.mxu0 0.0
      %758 = vmatprep.subr.mxu0 0.0
      %759 = vmatpush1.msra.mxu0 0.0
      %760 = vmatprep.subr.mxu0 0.0
      %761 = vmatpush1.msra.mxu0 0.0
      %762 = vmatprep.subr.mxu0 0.0
      %763 = vmatpush1.msra.mxu0 0.0
      %764 = vmatprep.subr.mxu0 0.0
      %765 = vmatpush1.msra.mxu0 0.0
      %766 = vmatprep.subr.mxu0 0.0
      %767 = vmatpush1.msra.mxu0 0.0
      %768 = vmatprep.subr.mxu0 0.0
      %769 = vmatpush1.msra.mxu0 0.0
      %770 = vmatprep.subr.mxu0 0.0
      %771 = vmatpush1.msra.mxu0 0.0
      %772 = vmatprep.subr.mxu0 0.0
      %773 = vmatpush1.msra.mxu0 %v741
      %774 = vmatprep.subr.mxu0 0.0
      %775 = vmatpush2.msra.mxu0 0.0
      %776 = vmatprep.subr.mxu0 0.0
      %777 = vmatpush2.msra.mxu0 0.0
      %778 = vmatprep.subr.mxu0 0.0
      %779 = vmatpush2.msra.mxu0 0.0
      %780 = vmatprep.subr.mxu0 0.0
      %781 = vmatpush2.msra.mxu0 0.0
      %782 = vmatprep.subr.mxu0 0.0
      %783 = vmatpush2.msra.mxu0 0.0
      %784 = vmatprep.subr.mxu0 0.0
      %785 = vmatpush2.msra.mxu0 0.0
      %786 = vmatprep.subr.mxu0 0.0
      %787 = vmatpush2.msra.mxu0 0.0
      %788 = vmatprep.subr.mxu0 0.0
      %789 = vmatpush2.msra.mxu0 0.0
      %790 = vmatprep.subr.mxu0 0.0
      %791 = vmatpush2.msra.mxu0 0.0
      %792 = vmatprep.subr.mxu0 0.0
      %793 = vmatpush2.msra.mxu0 0.0
      %794 = vmatprep.subr.mxu0 0.0
      %795 = vmatpush2.msra.mxu0 0.0
      %796 = vmatprep.subr.mxu0 0.0
      %797 = vmatpush2.msra.mxu0 0.0
      %798 = vmatprep.subr.mxu0 0.0
      %799 = vmatpush2.msra.mxu0 0.0
      %800 = vmatprep.subr.mxu0 0.0
      %801 = vmatpush2.msra.mxu0 0.0
      %802 = vmatprep.subr.mxu0 0.0
      %803 = vmatpush2.msra.mxu0 0.0
      %804 = vmatprep.subr.mxu0 0.0
      %805 = vmatpush2.msra.mxu0 0.0
      %806 = vmatprep.mubr.f32.mxu0 0.0
      %807 = vmatmul.mubr.f32.gmra.mxu0 %v561
      %v808 = vpop.f32.mrf.mxu0
      %v809 = vadd.f32 0.0, %v808
      %v810 = vpop.f32.mrf.mxu0
      %811 = vmatprep.mubr.f32.mxu0 0.0
      %812 = vmatmul.mubr.f32.gmra.mxu0 %v564
      %v813 = vpop.f32.mrf.mxu0
      %v814 = vadd.f32 0.0, %v813
      %v815 = vpop.f32.mrf.mxu0
      %816 = vmatprep.mubr.f32.mxu0 0.0
      %817 = vmatmul.mubr.f32.gmra.mxu0 %v567
      %v818 = vpop.f32.mrf.mxu0
      %v819 = vadd.f32 0.0, %v818
      %v820 = vpop.f32.mrf.mxu0
      %821 = vmatprep.mubr.f32.mxu0 0.0
      %822 = vmatmul.mubr.f32.gmra.mxu0 %v570
      %v823 = vpop.f32.mrf.mxu0
      %v824 = vadd.f32 0.0, %v823
      %v825 = vpop.f32.mrf.mxu0
      %826 = vdwg.mxu0
      %v827 = vmul.f32 %v809, %v720
      %v828 = vmul.f32 %v814, %v720
      %v829 = vmul.f32 %v819, %v720
      %v830 = vmul.f32 %v824, %v720
      %v831 = vrot.slane %v827, 4
      %v832 = vadd.f32 %v827, %v831
      %v833 = vrot.slane %v832, 2
      %v834 = vadd.f32 %v832, %v833
      %v835 = vrot.slane %v834, 1
      %v836 = vadd.f32 %v834, %v835
      %v837 = vrot.slane %v828, 4
      %v838 = vadd.f32 %v828, %v837
      %v839 = vrot.slane %v838, 2
      %v840 = vadd.f32 %v838, %v839
      %v841 = vrot.slane %v840, 1
      %v842 = vadd.f32 %v840, %v841
      %v843 = vrot.slane %v829, 4
      %v844 = vadd.f32 %v829, %v843
      %v845 = vrot.slane %v844, 2
      %v846 = vadd.f32 %v844, %v845
      %v847 = vrot.slane %v846, 1
      %v848 = vadd.f32 %v846, %v847
      %v849 = vrot.slane %v830, 4
      %v850 = vadd.f32 %v830, %v849
      %v851 = vrot.slane %v850, 2
      %v852 = vadd.f32 %v850, %v851
      %v853 = vrot.slane %v852, 1
      %v854 = vadd.f32 %v852, %v853
      %s855 = scalar_lea.vmem %s4, 8
      %v856 = vld [vmem:[%s855] sm:$0xff]
      %vm861 = vcmask 1041409
      %v862 = vsel %vm861, %v842, %v836
      %vm863 = vcmask 1042434
      %v864 = vsel %vm863, %v848, %v862
      %vm865 = vcmask 1043459
      %v866 = vsel %vm865, %v854, %v864
      %vm867 = vcmask 31744
      %v869 = vsel %vm867, %v856, 0
      %v871 = vsel %vm360, %v866, 0
      %873 = vmatprep.subr.mxu0 0.0
      %874 = vmatpush1.msra.mxu0 0.0
      %875 = vmatprep.subr.mxu0 0.0
      %876 = vmatpush1.msra.mxu0 0.0
      %877 = vmatprep.subr.mxu0 0.0
      %878 = vmatpush1.msra.mxu0 0.0
      %879 = vmatprep.subr.mxu0 0.0
      %880 = vmatpush1.msra.mxu0 0.0
      %881 = vmatprep.subr.mxu0 0.0
      %882 = vmatpush1.msra.mxu0 0.0
      %883 = vmatprep.subr.mxu0 0.0
      %884 = vmatpush1.msra.mxu0 0.0
      %885 = vmatprep.subr.mxu0 0.0
      %886 = vmatpush1.msra.mxu0 0.0
      %887 = vmatprep.subr.mxu0 0.0
      %888 = vmatpush1.msra.mxu0 0.0
      %889 = vmatprep.subr.mxu0 0.0
      %890 = vmatpush1.msra.mxu0 0.0
      %891 = vmatprep.subr.mxu0 0.0
      %892 = vmatpush1.msra.mxu0 0.0
      %893 = vmatprep.subr.mxu0 0.0
      %894 = vmatpush1.msra.mxu0 0.0
      %895 = vmatprep.subr.mxu0 0.0
      %896 = vmatpush1.msra.mxu0 0.0
      %897 = vmatprep.subr.mxu0 0.0
      %898 = vmatpush1.msra.mxu0 0.0
      %899 = vmatprep.subr.mxu0 0.0
      %900 = vmatpush1.msra.mxu0 0.0
      %901 = vmatprep.subr.mxu0 0.0
      %902 = vmatpush1.msra.mxu0 0.0
      %903 = vmatprep.subr.mxu0 0.0
      %904 = vmatpush1.msra.mxu0 %v871
      %905 = vmatprep.subr.mxu0 0.0
      %906 = vmatpush2.msra.mxu0 0.0
      %907 = vmatprep.subr.mxu0 0.0
      %908 = vmatpush2.msra.mxu0 0.0
      %909 = vmatprep.subr.mxu0 0.0
      %910 = vmatpush2.msra.mxu0 0.0
      %911 = vmatprep.subr.mxu0 0.0
      %912 = vmatpush2.msra.mxu0 0.0
      %913 = vmatprep.subr.mxu0 0.0
      %914 = vmatpush2.msra.mxu0 0.0
      %915 = vmatprep.subr.mxu0 0.0
      %916 = vmatpush2.msra.mxu0 0.0
      %917 = vmatprep.subr.mxu0 0.0
      %918 = vmatpush2.msra.mxu0 0.0
      %919 = vmatprep.subr.mxu0 0.0
      %920 = vmatpush2.msra.mxu0 0.0
      %921 = vmatprep.subr.mxu0 0.0
      %922 = vmatpush2.msra.mxu0 0.0
      %923 = vmatprep.subr.mxu0 0.0
      %924 = vmatpush2.msra.mxu0 0.0
      %925 = vmatprep.subr.mxu0 0.0
      %926 = vmatpush2.msra.mxu0 0.0
      %927 = vmatprep.subr.mxu0 0.0
      %928 = vmatpush2.msra.mxu0 0.0
      %929 = vmatprep.subr.mxu0 0.0
      %930 = vmatpush2.msra.mxu0 0.0
      %931 = vmatprep.subr.mxu0 0.0
      %932 = vmatpush2.msra.mxu0 0.0
      %933 = vmatprep.subr.mxu0 0.0
      %934 = vmatpush2.msra.mxu0 0.0
      %935 = vmatprep.subr.mxu0 0.0
      %936 = vmatpush2.msra.mxu0 0.0
      %937 = vmatprep.mubr.f32.mxu0 0.0
      %938 = vmatmul.mubr.f32.gmra.mxu0 %v869
      %v939 = vpop.f32.mrf.mxu0
      %v940 = vadd.f32 0.0, %v939
      %v941 = vpop.f32.mrf.mxu0
      %942 = vdwg.mxu0
      %v947 = vsel %vm861, %v672, %v666
      %v948 = vsel %vm863, %v678, %v947
      %v949 = vsel %vm865, %v684, %v948
      %v951 = vsel %vm867, %v685, 0
      %v953 = vsel %vm360, %v949, 0
      %955 = vmatprep.subr.mxu0 0.0
      %956 = vmatpush1.msra.mxu0 0.0
      %957 = vmatprep.subr.mxu0 0.0
      %958 = vmatpush1.msra.mxu0 0.0
      %959 = vmatprep.subr.mxu0 0.0
      %960 = vmatpush1.msra.mxu0 0.0
      %961 = vmatprep.subr.mxu0 0.0
      %962 = vmatpush1.msra.mxu0 0.0
      %963 = vmatprep.subr.mxu0 0.0
      %964 = vmatpush1.msra.mxu0 0.0
      %965 = vmatprep.subr.mxu0 0.0
      %966 = vmatpush1.msra.mxu0 0.0
      %967 = vmatprep.subr.mxu0 0.0
      %968 = vmatpush1.msra.mxu0 0.0
      %969 = vmatprep.subr.mxu0 0.0
      %970 = vmatpush1.msra.mxu0 0.0
      %971 = vmatprep.subr.mxu0 0.0
      %972 = vmatpush1.msra.mxu0 0.0
      %973 = vmatprep.subr.mxu0 0.0
      %974 = vmatpush1.msra.mxu0 0.0
      %975 = vmatprep.subr.mxu0 0.0
      %976 = vmatpush1.msra.mxu0 0.0
      %977 = vmatprep.subr.mxu0 0.0
      %978 = vmatpush1.msra.mxu0 0.0
      %979 = vmatprep.subr.mxu0 0.0
      %980 = vmatpush1.msra.mxu0 0.0
      %981 = vmatprep.subr.mxu0 0.0
      %982 = vmatpush1.msra.mxu0 0.0
      %983 = vmatprep.subr.mxu0 0.0
      %984 = vmatpush1.msra.mxu0 0.0
      %985 = vmatprep.subr.mxu0 0.0
      %986 = vmatpush1.msra.mxu0 %v953
      %987 = vmatprep.subr.mxu0 0.0
      %988 = vmatpush2.msra.mxu0 0.0
      %989 = vmatprep.subr.mxu0 0.0
      %990 = vmatpush2.msra.mxu0 0.0
      %991 = vmatprep.subr.mxu0 0.0
      %992 = vmatpush2.msra.mxu0 0.0
      %993 = vmatprep.subr.mxu0 0.0
      %994 = vmatpush2.msra.mxu0 0.0
      %995 = vmatprep.subr.mxu0 0.0
      %996 = vmatpush2.msra.mxu0 0.0
      %997 = vmatprep.subr.mxu0 0.0
      %998 = vmatpush2.msra.mxu0 0.0
      %999 = vmatprep.subr.mxu0 0.0
      %1000 = vmatpush2.msra.mxu0 0.0
      %1001 = vmatprep.subr.mxu0 0.0
      %1002 = vmatpush2.msra.mxu0 0.0
      %1003 = vmatprep.subr.mxu0 0.0
      %1004 = vmatpush2.msra.mxu0 0.0
      %1005 = vmatprep.subr.mxu0 0.0
      %1006 = vmatpush2.msra.mxu0 0.0
      %1007 = vmatprep.subr.mxu0 0.0
      %1008 = vmatpush2.msra.mxu0 0.0
      %1009 = vmatprep.subr.mxu0 0.0
      %1010 = vmatpush2.msra.mxu0 0.0
      %1011 = vmatprep.subr.mxu0 0.0
      %1012 = vmatpush2.msra.mxu0 0.0
      %1013 = vmatprep.subr.mxu0 0.0
      %1014 = vmatpush2.msra.mxu0 0.0
      %1015 = vmatprep.subr.mxu0 0.0
      %1016 = vmatpush2.msra.mxu0 0.0
      %1017 = vmatprep.subr.mxu0 0.0
      %1018 = vmatpush2.msra.mxu0 0.0
      %1019 = vmatprep.mubr.f32.mxu0 0.0
      %1020 = vmatmul.mubr.f32.gmra.mxu0 %v951
      %v1021 = vpop.f32.mrf.mxu0
      %v1022 = vadd.f32 %v940, %v1021
      %v1023 = vpop.f32.mrf.mxu0
      %1024 = vdwg.mxu0
      %v1025 = vadd.f32 %v485, 1.0
      %v1026 = vadd.f32 %v1025, %v470
      %v1027 = vfloor.f32 %v1026
      %v1028 = vmax.f32 %v1027, 0.0
      %v1029 = vmin.f32 %v1028, 7.0
      %v1030 = vadd.f32 %v1027, 1.0
      %v1031 = vmax.f32 %v1030, 0.0
      %v1032 = vmin.f32 %v1031, 7.0
      %v1033 = vmax.f32 %v1026, 0.0
      %v1034 = vmin.f32 %v1033, 7.0
      %v1035 = vsub.f32 %v1029, %v1034
      %v1036 = vadd.f32 %v1035, 1.0
      %v1037 = vsub.f32 %v1032, %v1034
      %v1038 = vsub.f32 1.0, %v1037
      %v1039 = vlaneseq
      %v1040 = vshrl.u32 %v1039, 7
      %v1041 = vsub.s32 2, %v1040
      %v1042 = vrot.slane %v496, %v1041
      %vm1043 = vcmp.eq.f32.partialorder %v488, %v1042
      %v1044 = vlaneseq
      %v1045 = vshrl.u32 %v1044, 7
      %v1046 = vsub.s32 2, %v1045
      %v1047 = vrot.slane %v510, %v1046
      %v1048 = vsel %vm1043, %v1047, 0.0
      %v1049 = vlaneseq
      %v1050 = vshrl.u32 %v1049, 7
      %v1051 = vsub.s32 2, %v1050
      %v1052 = vrot.slane %v499, %v1051
      %vm1053 = vcmp.eq.f32.partialorder %v488, %v1052
      %v1054 = vlaneseq
      %v1055 = vshrl.u32 %v1054, 7
      %v1056 = vsub.s32 2, %v1055
      %v1057 = vrot.slane %v512, %v1056
      %v1058 = vsel %vm1053, %v1057, 0.0
      %v1059 = vadd.f32 %v1048, %v1058
      %v1060 = vlaneseq
      %v1061 = vshrl.u32 %v1060, 7
      %v1062 = vsub.s32 3, %v1061
      %v1063 = vrot.slane %v1029, %v1062
      %vm1064 = vcmp.eq.f32.partialorder %v488, %v1063
      %v1065 = vlaneseq
      %v1066 = vshrl.u32 %v1065, 7
      %v1067 = vsub.s32 3, %v1066
      %v1068 = vrot.slane %v1036, %v1067
      %v1069 = vsel %vm1064, %v1068, 0.0
      %v1070 = vlaneseq
      %v1071 = vshrl.u32 %v1070, 7
      %v1072 = vsub.s32 3, %v1071
      %v1073 = vrot.slane %v1032, %v1072
      %vm1074 = vcmp.eq.f32.partialorder %v488, %v1073
      %v1075 = vlaneseq
      %v1076 = vshrl.u32 %v1075, 7
      %v1077 = vsub.s32 3, %v1076
      %v1078 = vrot.slane %v1038, %v1077
      %v1079 = vsel %vm1074, %v1078, 0.0
      %v1080 = vadd.f32 %v1069, %v1079
      %1081 = vmatprep.subr.mxu0 0.0
      %1082 = vmatpush1.msra.mxu0 0.0
      %1083 = vmatprep.subr.mxu0 0.0
      %1084 = vmatpush1.msra.mxu0 0.0
      %1085 = vmatprep.subr.mxu0 0.0
      %1086 = vmatpush1.msra.mxu0 0.0
      %1087 = vmatprep.subr.mxu0 0.0
      %1088 = vmatpush1.msra.mxu0 0.0
      %1089 = vmatprep.subr.mxu0 0.0
      %1090 = vmatpush1.msra.mxu0 0.0
      %1091 = vmatprep.subr.mxu0 0.0
      %1092 = vmatpush1.msra.mxu0 0.0
      %1093 = vmatprep.subr.mxu0 0.0
      %1094 = vmatpush1.msra.mxu0 0.0
      %1095 = vmatprep.subr.mxu0 0.0
      %1096 = vmatpush1.msra.mxu0 0.0
      %1097 = vmatprep.subr.mxu0 0.0
      %1098 = vmatpush1.msra.mxu0 0.0
      %1099 = vmatprep.subr.mxu0 0.0
      %1100 = vmatpush1.msra.mxu0 0.0
      %1101 = vmatprep.subr.mxu0 0.0
      %1102 = vmatpush1.msra.mxu0 0.0
      %1103 = vmatprep.subr.mxu0 0.0
      %1104 = vmatpush1.msra.mxu0 0.0
      %1105 = vmatprep.subr.mxu0 0.0
      %1106 = vmatpush1.msra.mxu0 0.0
      %1107 = vmatprep.subr.mxu0 0.0
      %1108 = vmatpush1.msra.mxu0 0.0
      %1109 = vmatprep.subr.mxu0 0.0
      %1110 = vmatpush1.msra.mxu0 0.0
      %1111 = vmatprep.subr.mxu0 0.0
      %1112 = vmatpush1.msra.mxu0 %v1080
      %1113 = vmatprep.subr.mxu0 0.0
      %1114 = vmatpush2.msra.mxu0 0.0
      %1115 = vmatprep.subr.mxu0 0.0
      %1116 = vmatpush2.msra.mxu0 0.0
      %1117 = vmatprep.subr.mxu0 0.0
      %1118 = vmatpush2.msra.mxu0 0.0
      %1119 = vmatprep.subr.mxu0 0.0
      %1120 = vmatpush2.msra.mxu0 0.0
      %1121 = vmatprep.subr.mxu0 0.0
      %1122 = vmatpush2.msra.mxu0 0.0
      %1123 = vmatprep.subr.mxu0 0.0
      %1124 = vmatpush2.msra.mxu0 0.0
      %1125 = vmatprep.subr.mxu0 0.0
      %1126 = vmatpush2.msra.mxu0 0.0
      %1127 = vmatprep.subr.mxu0 0.0
      %1128 = vmatpush2.msra.mxu0 0.0
      %1129 = vmatprep.subr.mxu0 0.0
      %1130 = vmatpush2.msra.mxu0 0.0
      %1131 = vmatprep.subr.mxu0 0.0
      %1132 = vmatpush2.msra.mxu0 0.0
      %1133 = vmatprep.subr.mxu0 0.0
      %1134 = vmatpush2.msra.mxu0 0.0
      %1135 = vmatprep.subr.mxu0 0.0
      %1136 = vmatpush2.msra.mxu0 0.0
      %1137 = vmatprep.subr.mxu0 0.0
      %1138 = vmatpush2.msra.mxu0 0.0
      %1139 = vmatprep.subr.mxu0 0.0
      %1140 = vmatpush2.msra.mxu0 0.0
      %1141 = vmatprep.subr.mxu0 0.0
      %1142 = vmatpush2.msra.mxu0 0.0
      %1143 = vmatprep.subr.mxu0 0.0
      %1144 = vmatpush2.msra.mxu0 0.0
      %1145 = vmatprep.mubr.f32.mxu0 0.0
      %1146 = vmatmul.mubr.f32.gmra.mxu0 %v561
      %v1147 = vpop.f32.mrf.mxu0
      %v1148 = vadd.f32 0.0, %v1147
      %v1149 = vpop.f32.mrf.mxu0
      %1150 = vmatprep.mubr.f32.mxu0 0.0
      %1151 = vmatmul.mubr.f32.gmra.mxu0 %v564
      %v1152 = vpop.f32.mrf.mxu0
      %v1153 = vadd.f32 0.0, %v1152
      %v1154 = vpop.f32.mrf.mxu0
      %1155 = vmatprep.mubr.f32.mxu0 0.0
      %1156 = vmatmul.mubr.f32.gmra.mxu0 %v567
      %v1157 = vpop.f32.mrf.mxu0
      %v1158 = vadd.f32 0.0, %v1157
      %v1159 = vpop.f32.mrf.mxu0
      %1160 = vmatprep.mubr.f32.mxu0 0.0
      %1161 = vmatmul.mubr.f32.gmra.mxu0 %v570
      %v1162 = vpop.f32.mrf.mxu0
      %v1163 = vadd.f32 0.0, %v1162
      %v1164 = vpop.f32.mrf.mxu0
      %1165 = vdwg.mxu0
      %v1166 = vmul.f32 %v1148, %v1059
      %v1167 = vmul.f32 %v1153, %v1059
      %v1168 = vmul.f32 %v1158, %v1059
      %v1169 = vmul.f32 %v1163, %v1059
      %v1170 = vrot.slane %v1166, 4
      %v1171 = vadd.f32 %v1166, %v1170
      %v1172 = vrot.slane %v1171, 2
      %v1173 = vadd.f32 %v1171, %v1172
      %v1174 = vrot.slane %v1173, 1
      %v1175 = vadd.f32 %v1173, %v1174
      %v1176 = vrot.slane %v1167, 4
      %v1177 = vadd.f32 %v1167, %v1176
      %v1178 = vrot.slane %v1177, 2
      %v1179 = vadd.f32 %v1177, %v1178
      %v1180 = vrot.slane %v1179, 1
      %v1181 = vadd.f32 %v1179, %v1180
      %v1182 = vrot.slane %v1168, 4
      %v1183 = vadd.f32 %v1168, %v1182
      %v1184 = vrot.slane %v1183, 2
      %v1185 = vadd.f32 %v1183, %v1184
      %v1186 = vrot.slane %v1185, 1
      %v1187 = vadd.f32 %v1185, %v1186
      %v1188 = vrot.slane %v1169, 4
      %v1189 = vadd.f32 %v1169, %v1188
      %v1190 = vrot.slane %v1189, 2
      %v1191 = vadd.f32 %v1189, %v1190
      %v1192 = vrot.slane %v1191, 1
      %v1193 = vadd.f32 %v1191, %v1192
      %s1194 = scalar_lea.vmem %s4, 16
      %v1195 = vld [vmem:[%s1194] sm:$0xff]
      %v1200 = vsel %vm861, %v1181, %v1175
      %v1201 = vsel %vm863, %v1187, %v1200
      %v1202 = vsel %vm865, %v1193, %v1201
      %v1204 = vsel %vm867, %v1195, 0
      %v1206 = vsel %vm360, %v1202, 0
      %1208 = vmatprep.subr.mxu0 0.0
      %1209 = vmatpush1.msra.mxu0 0.0
      %1210 = vmatprep.subr.mxu0 0.0
      %1211 = vmatpush1.msra.mxu0 0.0
      %1212 = vmatprep.subr.mxu0 0.0
      %1213 = vmatpush1.msra.mxu0 0.0
      %1214 = vmatprep.subr.mxu0 0.0
      %1215 = vmatpush1.msra.mxu0 0.0
      %1216 = vmatprep.subr.mxu0 0.0
      %1217 = vmatpush1.msra.mxu0 0.0
      %1218 = vmatprep.subr.mxu0 0.0
      %1219 = vmatpush1.msra.mxu0 0.0
      %1220 = vmatprep.subr.mxu0 0.0
      %1221 = vmatpush1.msra.mxu0 0.0
      %1222 = vmatprep.subr.mxu0 0.0
      %1223 = vmatpush1.msra.mxu0 0.0
      %1224 = vmatprep.subr.mxu0 0.0
      %1225 = vmatpush1.msra.mxu0 0.0
      %1226 = vmatprep.subr.mxu0 0.0
      %1227 = vmatpush1.msra.mxu0 0.0
      %1228 = vmatprep.subr.mxu0 0.0
      %1229 = vmatpush1.msra.mxu0 0.0
      %1230 = vmatprep.subr.mxu0 0.0
      %1231 = vmatpush1.msra.mxu0 0.0
      %1232 = vmatprep.subr.mxu0 0.0
      %1233 = vmatpush1.msra.mxu0 0.0
      %1234 = vmatprep.subr.mxu0 0.0
      %1235 = vmatpush1.msra.mxu0 0.0
      %1236 = vmatprep.subr.mxu0 0.0
      %1237 = vmatpush1.msra.mxu0 0.0
      %1238 = vmatprep.subr.mxu0 0.0
      %1239 = vmatpush1.msra.mxu0 %v1206
      %1240 = vmatprep.subr.mxu0 0.0
      %1241 = vmatpush2.msra.mxu0 0.0
      %1242 = vmatprep.subr.mxu0 0.0
      %1243 = vmatpush2.msra.mxu0 0.0
      %1244 = vmatprep.subr.mxu0 0.0
      %1245 = vmatpush2.msra.mxu0 0.0
      %1246 = vmatprep.subr.mxu0 0.0
      %1247 = vmatpush2.msra.mxu0 0.0
      %1248 = vmatprep.subr.mxu0 0.0
      %1249 = vmatpush2.msra.mxu0 0.0
      %1250 = vmatprep.subr.mxu0 0.0
      %1251 = vmatpush2.msra.mxu0 0.0
      %1252 = vmatprep.subr.mxu0 0.0
      %1253 = vmatpush2.msra.mxu0 0.0
      %1254 = vmatprep.subr.mxu0 0.0
      %1255 = vmatpush2.msra.mxu0 0.0
      %1256 = vmatprep.subr.mxu0 0.0
      %1257 = vmatpush2.msra.mxu0 0.0
      %1258 = vmatprep.subr.mxu0 0.0
      %1259 = vmatpush2.msra.mxu0 0.0
      %1260 = vmatprep.subr.mxu0 0.0
      %1261 = vmatpush2.msra.mxu0 0.0
      %1262 = vmatprep.subr.mxu0 0.0
      %1263 = vmatpush2.msra.mxu0 0.0
      %1264 = vmatprep.subr.mxu0 0.0
      %1265 = vmatpush2.msra.mxu0 0.0
      %1266 = vmatprep.subr.mxu0 0.0
      %1267 = vmatpush2.msra.mxu0 0.0
      %1268 = vmatprep.subr.mxu0 0.0
      %1269 = vmatpush2.msra.mxu0 0.0
      %1270 = vmatprep.subr.mxu0 0.0
      %1271 = vmatpush2.msra.mxu0 0.0
      %1272 = vmatprep.mubr.f32.mxu0 0.0
      %1273 = vmatmul.mubr.f32.gmra.mxu0 %v1204
      %v1274 = vpop.f32.mrf.mxu0
      %v1275 = vadd.f32 0.0, %v1274
      %v1276 = vpop.f32.mrf.mxu0
      %1277 = vdwg.mxu0
      %v1278 = vadd.f32 %v1022, %v1275
      %v1279 = vadd.f32 %v483, 0.0
      %v1280 = vadd.f32 %v1279, %v465
      %v1281 = vfloor.f32 %v1280
      %v1282 = vmax.f32 %v1281, 0.0
      %v1283 = vmin.f32 %v1282, 7.0
      %v1284 = vadd.f32 %v1281, 1.0
      %v1285 = vmax.f32 %v1284, 0.0
      %v1286 = vmin.f32 %v1285, 7.0
      %v1287 = vmax.f32 %v1280, 0.0
      %v1288 = vmin.f32 %v1287, 7.0
      %v1289 = vsub.f32 %v1283, %v1288
      %v1290 = vadd.f32 %v1289, 1.0
      %v1291 = vsub.f32 %v1286, %v1288
      %v1292 = vsub.f32 1.0, %v1291
      %v1293 = vlaneseq
      %v1294 = vshrl.u32 %v1293, 7
      %v1295 = vsub.s32 3, %v1294
      %v1296 = vrot.slane %v1283, %v1295
      %vm1297 = vcmp.eq.f32.partialorder %v488, %v1296
      %v1298 = vlaneseq
      %v1299 = vshrl.u32 %v1298, 7
      %v1300 = vsub.s32 3, %v1299
      %v1301 = vrot.slane %v1290, %v1300
      %v1302 = vsel %vm1297, %v1301, 0.0
      %v1303 = vlaneseq
      %v1304 = vshrl.u32 %v1303, 7
      %v1305 = vsub.s32 3, %v1304
      %v1306 = vrot.slane %v1286, %v1305
      %vm1307 = vcmp.eq.f32.partialorder %v488, %v1306
      %v1308 = vlaneseq
      %v1309 = vshrl.u32 %v1308, 7
      %v1310 = vsub.s32 3, %v1309
      %v1311 = vrot.slane %v1292, %v1310
      %v1312 = vsel %vm1307, %v1311, 0.0
      %v1313 = vadd.f32 %v1302, %v1312
      %v1314 = vlaneseq
      %v1315 = vshrl.u32 %v1314, 7
      %v1316 = vsub.s32 4, %v1315
      %v1317 = vrot.slane %v501, %v1316
      %vm1318 = vcmp.eq.f32.partialorder %v488, %v1317
      %v1319 = vlaneseq
      %v1320 = vshrl.u32 %v1319, 7
      %v1321 = vsub.s32 4, %v1320
      %v1322 = vrot.slane %v514, %v1321
      %v1323 = vsel %vm1318, %v1322, 0.0
      %v1324 = vlaneseq
      %v1325 = vshrl.u32 %v1324, 7
      %v1326 = vsub.s32 4, %v1325
      %v1327 = vrot.slane %v504, %v1326
      %vm1328 = vcmp.eq.f32.partialorder %v488, %v1327
      %v1329 = vlaneseq
      %v1330 = vshrl.u32 %v1329, 7
      %v1331 = vsub.s32 4, %v1330
      %v1332 = vrot.slane %v516, %v1331
      %v1333 = vsel %vm1328, %v1332, 0.0
      %v1334 = vadd.f32 %v1323, %v1333
      %1335 = vmatprep.subr.mxu0 0.0
      %1336 = vmatpush1.msra.mxu0 0.0
      %1337 = vmatprep.subr.mxu0 0.0
      %1338 = vmatpush1.msra.mxu0 0.0
      %1339 = vmatprep.subr.mxu0 0.0
      %1340 = vmatpush1.msra.mxu0 0.0
      %1341 = vmatprep.subr.mxu0 0.0
      %1342 = vmatpush1.msra.mxu0 0.0
      %1343 = vmatprep.subr.mxu0 0.0
      %1344 = vmatpush1.msra.mxu0 0.0
      %1345 = vmatprep.subr.mxu0 0.0
      %1346 = vmatpush1.msra.mxu0 0.0
      %1347 = vmatprep.subr.mxu0 0.0
      %1348 = vmatpush1.msra.mxu0 0.0
      %1349 = vmatprep.subr.mxu0 0.0
      %1350 = vmatpush1.msra.mxu0 0.0
      %1351 = vmatprep.subr.mxu0 0.0
      %1352 = vmatpush1.msra.mxu0 0.0
      %1353 = vmatprep.subr.mxu0 0.0
      %1354 = vmatpush1.msra.mxu0 0.0
      %1355 = vmatprep.subr.mxu0 0.0
      %1356 = vmatpush1.msra.mxu0 0.0
      %1357 = vmatprep.subr.mxu0 0.0
      %1358 = vmatpush1.msra.mxu0 0.0
      %1359 = vmatprep.subr.mxu0 0.0
      %1360 = vmatpush1.msra.mxu0 0.0
      %1361 = vmatprep.subr.mxu0 0.0
      %1362 = vmatpush1.msra.mxu0 0.0
      %1363 = vmatprep.subr.mxu0 0.0
      %1364 = vmatpush1.msra.mxu0 0.0
      %1365 = vmatprep.subr.mxu0 0.0
      %1366 = vmatpush1.msra.mxu0 %v1334
      %1367 = vmatprep.subr.mxu0 0.0
      %1368 = vmatpush2.msra.mxu0 0.0
      %1369 = vmatprep.subr.mxu0 0.0
      %1370 = vmatpush2.msra.mxu0 0.0
      %1371 = vmatprep.subr.mxu0 0.0
      %1372 = vmatpush2.msra.mxu0 0.0
      %1373 = vmatprep.subr.mxu0 0.0
      %1374 = vmatpush2.msra.mxu0 0.0
      %1375 = vmatprep.subr.mxu0 0.0
      %1376 = vmatpush2.msra.mxu0 0.0
      %1377 = vmatprep.subr.mxu0 0.0
      %1378 = vmatpush2.msra.mxu0 0.0
      %1379 = vmatprep.subr.mxu0 0.0
      %1380 = vmatpush2.msra.mxu0 0.0
      %1381 = vmatprep.subr.mxu0 0.0
      %1382 = vmatpush2.msra.mxu0 0.0
      %1383 = vmatprep.subr.mxu0 0.0
      %1384 = vmatpush2.msra.mxu0 0.0
      %1385 = vmatprep.subr.mxu0 0.0
      %1386 = vmatpush2.msra.mxu0 0.0
      %1387 = vmatprep.subr.mxu0 0.0
      %1388 = vmatpush2.msra.mxu0 0.0
      %1389 = vmatprep.subr.mxu0 0.0
      %1390 = vmatpush2.msra.mxu0 0.0
      %1391 = vmatprep.subr.mxu0 0.0
      %1392 = vmatpush2.msra.mxu0 0.0
      %1393 = vmatprep.subr.mxu0 0.0
      %1394 = vmatpush2.msra.mxu0 0.0
      %1395 = vmatprep.subr.mxu0 0.0
      %1396 = vmatpush2.msra.mxu0 0.0
      %1397 = vmatprep.subr.mxu0 0.0
      %1398 = vmatpush2.msra.mxu0 0.0
      %1399 = vmatprep.mubr.f32.mxu0 0.0
      %1400 = vmatmul.mubr.f32.gmra.mxu0 %v561
      %v1401 = vpop.f32.mrf.mxu0
      %v1402 = vadd.f32 0.0, %v1401
      %v1403 = vpop.f32.mrf.mxu0
      %1404 = vmatprep.mubr.f32.mxu0 0.0
      %1405 = vmatmul.mubr.f32.gmra.mxu0 %v564
      %v1406 = vpop.f32.mrf.mxu0
      %v1407 = vadd.f32 0.0, %v1406
      %v1408 = vpop.f32.mrf.mxu0
      %1409 = vmatprep.mubr.f32.mxu0 0.0
      %1410 = vmatmul.mubr.f32.gmra.mxu0 %v567
      %v1411 = vpop.f32.mrf.mxu0
      %v1412 = vadd.f32 0.0, %v1411
      %v1413 = vpop.f32.mrf.mxu0
      %1414 = vmatprep.mubr.f32.mxu0 0.0
      %1415 = vmatmul.mubr.f32.gmra.mxu0 %v570
      %v1416 = vpop.f32.mrf.mxu0
      %v1417 = vadd.f32 0.0, %v1416
      %v1418 = vpop.f32.mrf.mxu0
      %1419 = vdwg.mxu0
      %v1420 = vmul.f32 %v1402, %v1313
      %v1421 = vmul.f32 %v1407, %v1313
      %v1422 = vmul.f32 %v1412, %v1313
      %v1423 = vmul.f32 %v1417, %v1313
      %v1424 = vrot.slane %v1420, 4
      %v1425 = vadd.f32 %v1420, %v1424
      %v1426 = vrot.slane %v1425, 2
      %v1427 = vadd.f32 %v1425, %v1426
      %v1428 = vrot.slane %v1427, 1
      %v1429 = vadd.f32 %v1427, %v1428
      %v1430 = vrot.slane %v1421, 4
      %v1431 = vadd.f32 %v1421, %v1430
      %v1432 = vrot.slane %v1431, 2
      %v1433 = vadd.f32 %v1431, %v1432
      %v1434 = vrot.slane %v1433, 1
      %v1435 = vadd.f32 %v1433, %v1434
      %v1436 = vrot.slane %v1422, 4
      %v1437 = vadd.f32 %v1422, %v1436
      %v1438 = vrot.slane %v1437, 2
      %v1439 = vadd.f32 %v1437, %v1438
      %v1440 = vrot.slane %v1439, 1
      %v1441 = vadd.f32 %v1439, %v1440
      %v1442 = vrot.slane %v1423, 4
      %v1443 = vadd.f32 %v1423, %v1442
      %v1444 = vrot.slane %v1443, 2
      %v1445 = vadd.f32 %v1443, %v1444
      %v1446 = vrot.slane %v1445, 1
      %v1447 = vadd.f32 %v1445, %v1446
      %s1448 = scalar_lea.vmem %s4, 24
      %v1449 = vld [vmem:[%s1448] sm:$0xff]
      %v1454 = vsel %vm861, %v1435, %v1429
      %v1455 = vsel %vm863, %v1441, %v1454
      %v1456 = vsel %vm865, %v1447, %v1455
      %v1458 = vsel %vm867, %v1449, 0
      %v1460 = vsel %vm360, %v1456, 0
      %1462 = vmatprep.subr.mxu0 0.0
      %1463 = vmatpush1.msra.mxu0 0.0
      %1464 = vmatprep.subr.mxu0 0.0
      %1465 = vmatpush1.msra.mxu0 0.0
      %1466 = vmatprep.subr.mxu0 0.0
      %1467 = vmatpush1.msra.mxu0 0.0
      %1468 = vmatprep.subr.mxu0 0.0
      %1469 = vmatpush1.msra.mxu0 0.0
      %1470 = vmatprep.subr.mxu0 0.0
      %1471 = vmatpush1.msra.mxu0 0.0
      %1472 = vmatprep.subr.mxu0 0.0
      %1473 = vmatpush1.msra.mxu0 0.0
      %1474 = vmatprep.subr.mxu0 0.0
      %1475 = vmatpush1.msra.mxu0 0.0
      %1476 = vmatprep.subr.mxu0 0.0
      %1477 = vmatpush1.msra.mxu0 0.0
      %1478 = vmatprep.subr.mxu0 0.0
      %1479 = vmatpush1.msra.mxu0 0.0
      %1480 = vmatprep.subr.mxu0 0.0
      %1481 = vmatpush1.msra.mxu0 0.0
      %1482 = vmatprep.subr.mxu0 0.0
      %1483 = vmatpush1.msra.mxu0 0.0
      %1484 = vmatprep.subr.mxu0 0.0
      %1485 = vmatpush1.msra.mxu0 0.0
      %1486 = vmatprep.subr.mxu0 0.0
      %1487 = vmatpush1.msra.mxu0 0.0
      %1488 = vmatprep.subr.mxu0 0.0
      %1489 = vmatpush1.msra.mxu0 0.0
      %1490 = vmatprep.subr.mxu0 0.0
      %1491 = vmatpush1.msra.mxu0 0.0
      %1492 = vmatprep.subr.mxu0 0.0
      %1493 = vmatpush1.msra.mxu0 %v1460
      %1494 = vmatprep.subr.mxu0 0.0
      %1495 = vmatpush2.msra.mxu0 0.0
      %1496 = vmatprep.subr.mxu0 0.0
      %1497 = vmatpush2.msra.mxu0 0.0
      %1498 = vmatprep.subr.mxu0 0.0
      %1499 = vmatpush2.msra.mxu0 0.0
      %1500 = vmatprep.subr.mxu0 0.0
      %1501 = vmatpush2.msra.mxu0 0.0
      %1502 = vmatprep.subr.mxu0 0.0
      %1503 = vmatpush2.msra.mxu0 0.0
      %1504 = vmatprep.subr.mxu0 0.0
      %1505 = vmatpush2.msra.mxu0 0.0
      %1506 = vmatprep.subr.mxu0 0.0
      %1507 = vmatpush2.msra.mxu0 0.0
      %1508 = vmatprep.subr.mxu0 0.0
      %1509 = vmatpush2.msra.mxu0 0.0
      %1510 = vmatprep.subr.mxu0 0.0
      %1511 = vmatpush2.msra.mxu0 0.0
      %1512 = vmatprep.subr.mxu0 0.0
      %1513 = vmatpush2.msra.mxu0 0.0
      %1514 = vmatprep.subr.mxu0 0.0
      %1515 = vmatpush2.msra.mxu0 0.0
      %1516 = vmatprep.subr.mxu0 0.0
      %1517 = vmatpush2.msra.mxu0 0.0
      %1518 = vmatprep.subr.mxu0 0.0
      %1519 = vmatpush2.msra.mxu0 0.0
      %1520 = vmatprep.subr.mxu0 0.0
      %1521 = vmatpush2.msra.mxu0 0.0
      %1522 = vmatprep.subr.mxu0 0.0
      %1523 = vmatpush2.msra.mxu0 0.0
      %1524 = vmatprep.subr.mxu0 0.0
      %1525 = vmatpush2.msra.mxu0 0.0
      %1526 = vmatprep.mubr.f32.mxu0 0.0
      %1527 = vmatmul.mubr.f32.gmra.mxu0 %v1458
      %v1528 = vpop.f32.mrf.mxu0
      %v1529 = vadd.f32 0.0, %v1528
      %v1530 = vpop.f32.mrf.mxu0
      %1531 = vdwg.mxu0
      %v1532 = vadd.f32 %v1278, %v1529
      %v1533 = vlaneseq
      %v1534 = vshrl.u32 %v1533, 7
      %v1535 = vsub.s32 4, %v1534
      %v1536 = vrot.slane %v1283, %v1535
      %vm1537 = vcmp.eq.f32.partialorder %v488, %v1536
      %v1538 = vlaneseq
      %v1539 = vshrl.u32 %v1538, 7
      %v1540 = vsub.s32 4, %v1539
      %v1541 = vrot.slane %v1290, %v1540
      %v1542 = vsel %vm1537, %v1541, 0.0
      %v1543 = vlaneseq
      %v1544 = vshrl.u32 %v1543, 7
      %v1545 = vsub.s32 4, %v1544
      %v1546 = vrot.slane %v1286, %v1545
      %vm1547 = vcmp.eq.f32.partialorder %v488, %v1546
      %v1548 = vlaneseq
      %v1549 = vshrl.u32 %v1548, 7
      %v1550 = vsub.s32 4, %v1549
      %v1551 = vrot.slane %v1292, %v1550
      %v1552 = vsel %vm1547, %v1551, 0.0
      %v1553 = vadd.f32 %v1542, %v1552
      %v1554 = vlaneseq
      %v1555 = vshrl.u32 %v1554, 7
      %v1556 = vsub.s32 5, %v1555
      %v1557 = vrot.slane %v690, %v1556
      %vm1558 = vcmp.eq.f32.partialorder %v488, %v1557
      %v1559 = vlaneseq
      %v1560 = vshrl.u32 %v1559, 7
      %v1561 = vsub.s32 5, %v1560
      %v1562 = vrot.slane %v697, %v1561
      %v1563 = vsel %vm1558, %v1562, 0.0
      %v1564 = vlaneseq
      %v1565 = vshrl.u32 %v1564, 7
      %v1566 = vsub.s32 5, %v1565
      %v1567 = vrot.slane %v693, %v1566
      %vm1568 = vcmp.eq.f32.partialorder %v488, %v1567
      %v1569 = vlaneseq
      %v1570 = vshrl.u32 %v1569, 7
      %v1571 = vsub.s32 5, %v1570
      %v1572 = vrot.slane %v699, %v1571
      %v1573 = vsel %vm1568, %v1572, 0.0
      %v1574 = vadd.f32 %v1563, %v1573
      %1575 = vmatprep.subr.mxu0 0.0
      %1576 = vmatpush1.msra.mxu0 0.0
      %1577 = vmatprep.subr.mxu0 0.0
      %1578 = vmatpush1.msra.mxu0 0.0
      %1579 = vmatprep.subr.mxu0 0.0
      %1580 = vmatpush1.msra.mxu0 0.0
      %1581 = vmatprep.subr.mxu0 0.0
      %1582 = vmatpush1.msra.mxu0 0.0
      %1583 = vmatprep.subr.mxu0 0.0
      %1584 = vmatpush1.msra.mxu0 0.0
      %1585 = vmatprep.subr.mxu0 0.0
      %1586 = vmatpush1.msra.mxu0 0.0
      %1587 = vmatprep.subr.mxu0 0.0
      %1588 = vmatpush1.msra.mxu0 0.0
      %1589 = vmatprep.subr.mxu0 0.0
      %1590 = vmatpush1.msra.mxu0 0.0
      %1591 = vmatprep.subr.mxu0 0.0
      %1592 = vmatpush1.msra.mxu0 0.0
      %1593 = vmatprep.subr.mxu0 0.0
      %1594 = vmatpush1.msra.mxu0 0.0
      %1595 = vmatprep.subr.mxu0 0.0
      %1596 = vmatpush1.msra.mxu0 0.0
      %1597 = vmatprep.subr.mxu0 0.0
      %1598 = vmatpush1.msra.mxu0 0.0
      %1599 = vmatprep.subr.mxu0 0.0
      %1600 = vmatpush1.msra.mxu0 0.0
      %1601 = vmatprep.subr.mxu0 0.0
      %1602 = vmatpush1.msra.mxu0 0.0
      %1603 = vmatprep.subr.mxu0 0.0
      %1604 = vmatpush1.msra.mxu0 0.0
      %1605 = vmatprep.subr.mxu0 0.0
      %1606 = vmatpush1.msra.mxu0 %v1574
      %1607 = vmatprep.subr.mxu0 0.0
      %1608 = vmatpush2.msra.mxu0 0.0
      %1609 = vmatprep.subr.mxu0 0.0
      %1610 = vmatpush2.msra.mxu0 0.0
      %1611 = vmatprep.subr.mxu0 0.0
      %1612 = vmatpush2.msra.mxu0 0.0
      %1613 = vmatprep.subr.mxu0 0.0
      %1614 = vmatpush2.msra.mxu0 0.0
      %1615 = vmatprep.subr.mxu0 0.0
      %1616 = vmatpush2.msra.mxu0 0.0
      %1617 = vmatprep.subr.mxu0 0.0
      %1618 = vmatpush2.msra.mxu0 0.0
      %1619 = vmatprep.subr.mxu0 0.0
      %1620 = vmatpush2.msra.mxu0 0.0
      %1621 = vmatprep.subr.mxu0 0.0
      %1622 = vmatpush2.msra.mxu0 0.0
      %1623 = vmatprep.subr.mxu0 0.0
      %1624 = vmatpush2.msra.mxu0 0.0
      %1625 = vmatprep.subr.mxu0 0.0
      %1626 = vmatpush2.msra.mxu0 0.0
      %1627 = vmatprep.subr.mxu0 0.0
      %1628 = vmatpush2.msra.mxu0 0.0
      %1629 = vmatprep.subr.mxu0 0.0
      %1630 = vmatpush2.msra.mxu0 0.0
      %1631 = vmatprep.subr.mxu0 0.0
      %1632 = vmatpush2.msra.mxu0 0.0
      %1633 = vmatprep.subr.mxu0 0.0
      %1634 = vmatpush2.msra.mxu0 0.0
      %1635 = vmatprep.subr.mxu0 0.0
      %1636 = vmatpush2.msra.mxu0 0.0
      %1637 = vmatprep.subr.mxu0 0.0
      %1638 = vmatpush2.msra.mxu0 0.0
      %1639 = vmatprep.mubr.f32.mxu0 0.0
      %1640 = vmatmul.mubr.f32.gmra.mxu0 %v561
      %v1641 = vpop.f32.mrf.mxu0
      %v1642 = vadd.f32 0.0, %v1641
      %v1643 = vpop.f32.mrf.mxu0
      %1644 = vmatprep.mubr.f32.mxu0 0.0
      %1645 = vmatmul.mubr.f32.gmra.mxu0 %v564
      %v1646 = vpop.f32.mrf.mxu0
      %v1647 = vadd.f32 0.0, %v1646
      %v1648 = vpop.f32.mrf.mxu0
      %1649 = vmatprep.mubr.f32.mxu0 0.0
      %1650 = vmatmul.mubr.f32.gmra.mxu0 %v567
      %v1651 = vpop.f32.mrf.mxu0
      %v1652 = vadd.f32 0.0, %v1651
      %v1653 = vpop.f32.mrf.mxu0
      %1654 = vmatprep.mubr.f32.mxu0 0.0
      %1655 = vmatmul.mubr.f32.gmra.mxu0 %v570
      %v1656 = vpop.f32.mrf.mxu0
      %v1657 = vadd.f32 0.0, %v1656
      %v1658 = vpop.f32.mrf.mxu0
      %1659 = vdwg.mxu0
      %v1660 = vmul.f32 %v1642, %v1553
      %v1661 = vmul.f32 %v1647, %v1553
      %v1662 = vmul.f32 %v1652, %v1553
      %v1663 = vmul.f32 %v1657, %v1553
      %v1664 = vrot.slane %v1660, 4
      %v1665 = vadd.f32 %v1660, %v1664
      %v1666 = vrot.slane %v1665, 2
      %v1667 = vadd.f32 %v1665, %v1666
      %v1668 = vrot.slane %v1667, 1
      %v1669 = vadd.f32 %v1667, %v1668
      %v1670 = vrot.slane %v1661, 4
      %v1671 = vadd.f32 %v1661, %v1670
      %v1672 = vrot.slane %v1671, 2
      %v1673 = vadd.f32 %v1671, %v1672
      %v1674 = vrot.slane %v1673, 1
      %v1675 = vadd.f32 %v1673, %v1674
      %v1676 = vrot.slane %v1662, 4
      %v1677 = vadd.f32 %v1662, %v1676
      %v1678 = vrot.slane %v1677, 2
      %v1679 = vadd.f32 %v1677, %v1678
      %v1680 = vrot.slane %v1679, 1
      %v1681 = vadd.f32 %v1679, %v1680
      %v1682 = vrot.slane %v1663, 4
      %v1683 = vadd.f32 %v1663, %v1682
      %v1684 = vrot.slane %v1683, 2
      %v1685 = vadd.f32 %v1683, %v1684
      %v1686 = vrot.slane %v1685, 1
      %v1687 = vadd.f32 %v1685, %v1686
      %s1688 = scalar_lea.vmem %s4, 32
      %v1689 = vld [vmem:[%s1688] sm:$0xff]
      %v1694 = vsel %vm861, %v1675, %v1669
      %v1695 = vsel %vm863, %v1681, %v1694
      %v1696 = vsel %vm865, %v1687, %v1695
      %v1698 = vsel %vm867, %v1689, 0
      %v1700 = vsel %vm360, %v1696, 0
      %1702 = vmatprep.subr.mxu0 0.0
      %1703 = vmatpush1.msra.mxu0 0.0
      %1704 = vmatprep.subr.mxu0 0.0
      %1705 = vmatpush1.msra.mxu0 0.0
      %1706 = vmatprep.subr.mxu0 0.0
      %1707 = vmatpush1.msra.mxu0 0.0
      %1708 = vmatprep.subr.mxu0 0.0
      %1709 = vmatpush1.msra.mxu0 0.0
      %1710 = vmatprep.subr.mxu0 0.0
      %1711 = vmatpush1.msra.mxu0 0.0
      %1712 = vmatprep.subr.mxu0 0.0
      %1713 = vmatpush1.msra.mxu0 0.0
      %1714 = vmatprep.subr.mxu0 0.0
      %1715 = vmatpush1.msra.mxu0 0.0
      %1716 = vmatprep.subr.mxu0 0.0
      %1717 = vmatpush1.msra.mxu0 0.0
      %1718 = vmatprep.subr.mxu0 0.0
      %1719 = vmatpush1.msra.mxu0 0.0
      %1720 = vmatprep.subr.mxu0 0.0
      %1721 = vmatpush1.msra.mxu0 0.0
      %1722 = vmatprep.subr.mxu0 0.0
      %1723 = vmatpush1.msra.mxu0 0.0
      %1724 = vmatprep.subr.mxu0 0.0
      %1725 = vmatpush1.msra.mxu0 0.0
      %1726 = vmatprep.subr.mxu0 0.0
      %1727 = vmatpush1.msra.mxu0 0.0
      %1728 = vmatprep.subr.mxu0 0.0
      %1729 = vmatpush1.msra.mxu0 0.0
      %1730 = vmatprep.subr.mxu0 0.0
      %1731 = vmatpush1.msra.mxu0 0.0
      %1732 = vmatprep.subr.mxu0 0.0
      %1733 = vmatpush1.msra.mxu0 %v1700
      %1734 = vmatprep.subr.mxu0 0.0
      %1735 = vmatpush2.msra.mxu0 0.0
      %1736 = vmatprep.subr.mxu0 0.0
      %1737 = vmatpush2.msra.mxu0 0.0
      %1738 = vmatprep.subr.mxu0 0.0
      %1739 = vmatpush2.msra.mxu0 0.0
      %1740 = vmatprep.subr.mxu0 0.0
      %1741 = vmatpush2.msra.mxu0 0.0
      %1742 = vmatprep.subr.mxu0 0.0
      %1743 = vmatpush2.msra.mxu0 0.0
      %1744 = vmatprep.subr.mxu0 0.0
      %1745 = vmatpush2.msra.mxu0 0.0
      %1746 = vmatprep.subr.mxu0 0.0
      %1747 = vmatpush2.msra.mxu0 0.0
      %1748 = vmatprep.subr.mxu0 0.0
      %1749 = vmatpush2.msra.mxu0 0.0
      %1750 = vmatprep.subr.mxu0 0.0
      %1751 = vmatpush2.msra.mxu0 0.0
      %1752 = vmatprep.subr.mxu0 0.0
      %1753 = vmatpush2.msra.mxu0 0.0
      %1754 = vmatprep.subr.mxu0 0.0
      %1755 = vmatpush2.msra.mxu0 0.0
      %1756 = vmatprep.subr.mxu0 0.0
      %1757 = vmatpush2.msra.mxu0 0.0
      %1758 = vmatprep.subr.mxu0 0.0
      %1759 = vmatpush2.msra.mxu0 0.0
      %1760 = vmatprep.subr.mxu0 0.0
      %1761 = vmatpush2.msra.mxu0 0.0
      %1762 = vmatprep.subr.mxu0 0.0
      %1763 = vmatpush2.msra.mxu0 0.0
      %1764 = vmatprep.subr.mxu0 0.0
      %1765 = vmatpush2.msra.mxu0 0.0
      %1766 = vmatprep.mubr.f32.mxu0 0.0
      %1767 = vmatmul.mubr.f32.gmra.mxu0 %v1698
      %v1768 = vpop.f32.mrf.mxu0
      %v1769 = vadd.f32 0.0, %v1768
      %v1770 = vpop.f32.mrf.mxu0
      %1771 = vdwg.mxu0
      %v1772 = vadd.f32 %v1532, %v1769
      %v1773 = vlaneseq
      %v1774 = vshrl.u32 %v1773, 7
      %v1775 = vsub.s32 5, %v1774
      %v1776 = vrot.slane %v1283, %v1775
      %vm1777 = vcmp.eq.f32.partialorder %v488, %v1776
      %v1778 = vlaneseq
      %v1779 = vshrl.u32 %v1778, 7
      %v1780 = vsub.s32 5, %v1779
      %v1781 = vrot.slane %v1290, %v1780
      %v1782 = vsel %vm1777, %v1781, 0.0
      %v1783 = vlaneseq
      %v1784 = vshrl.u32 %v1783, 7
      %v1785 = vsub.s32 5, %v1784
      %v1786 = vrot.slane %v1286, %v1785
      %vm1787 = vcmp.eq.f32.partialorder %v488, %v1786
      %v1788 = vlaneseq
      %v1789 = vshrl.u32 %v1788, 7
      %v1790 = vsub.s32 5, %v1789
      %v1791 = vrot.slane %v1292, %v1790
      %v1792 = vsel %vm1787, %v1791, 0.0
      %v1793 = vadd.f32 %v1782, %v1792
      %v1794 = vlaneseq
      %v1795 = vshrl.u32 %v1794, 7
      %v1796 = vsub.s32 6, %v1795
      %v1797 = vrot.slane %v1029, %v1796
      %vm1798 = vcmp.eq.f32.partialorder %v488, %v1797
      %v1799 = vlaneseq
      %v1800 = vshrl.u32 %v1799, 7
      %v1801 = vsub.s32 6, %v1800
      %v1802 = vrot.slane %v1036, %v1801
      %v1803 = vsel %vm1798, %v1802, 0.0
      %v1804 = vlaneseq
      %v1805 = vshrl.u32 %v1804, 7
      %v1806 = vsub.s32 6, %v1805
      %v1807 = vrot.slane %v1032, %v1806
      %vm1808 = vcmp.eq.f32.partialorder %v488, %v1807
      %v1809 = vlaneseq
      %v1810 = vshrl.u32 %v1809, 7
      %v1811 = vsub.s32 6, %v1810
      %v1812 = vrot.slane %v1038, %v1811
      %v1813 = vsel %vm1808, %v1812, 0.0
      %v1814 = vadd.f32 %v1803, %v1813
      %1815 = vmatprep.subr.mxu0 0.0
      %1816 = vmatpush1.msra.mxu0 0.0
      %1817 = vmatprep.subr.mxu0 0.0
      %1818 = vmatpush1.msra.mxu0 0.0
      %1819 = vmatprep.subr.mxu0 0.0
      %1820 = vmatpush1.msra.mxu0 0.0
      %1821 = vmatprep.subr.mxu0 0.0
      %1822 = vmatpush1.msra.mxu0 0.0
      %1823 = vmatprep.subr.mxu0 0.0
      %1824 = vmatpush1.msra.mxu0 0.0
      %1825 = vmatprep.subr.mxu0 0.0
      %1826 = vmatpush1.msra.mxu0 0.0
      %1827 = vmatprep.subr.mxu0 0.0
      %1828 = vmatpush1.msra.mxu0 0.0
      %1829 = vmatprep.subr.mxu0 0.0
      %1830 = vmatpush1.msra.mxu0 0.0
      %1831 = vmatprep.subr.mxu0 0.0
      %1832 = vmatpush1.msra.mxu0 0.0
      %1833 = vmatprep.subr.mxu0 0.0
      %1834 = vmatpush1.msra.mxu0 0.0
      %1835 = vmatprep.subr.mxu0 0.0
      %1836 = vmatpush1.msra.mxu0 0.0
      %1837 = vmatprep.subr.mxu0 0.0
      %1838 = vmatpush1.msra.mxu0 0.0
      %1839 = vmatprep.subr.mxu0 0.0
      %1840 = vmatpush1.msra.mxu0 0.0
      %1841 = vmatprep.subr.mxu0 0.0
      %1842 = vmatpush1.msra.mxu0 0.0
      %1843 = vmatprep.subr.mxu0 0.0
      %1844 = vmatpush1.msra.mxu0 0.0
      %1845 = vmatprep.subr.mxu0 0.0
      %1846 = vmatpush1.msra.mxu0 %v1814
      %1847 = vmatprep.subr.mxu0 0.0
      %1848 = vmatpush2.msra.mxu0 0.0
      %1849 = vmatprep.subr.mxu0 0.0
      %1850 = vmatpush2.msra.mxu0 0.0
      %1851 = vmatprep.subr.mxu0 0.0
      %1852 = vmatpush2.msra.mxu0 0.0
      %1853 = vmatprep.subr.mxu0 0.0
      %1854 = vmatpush2.msra.mxu0 0.0
      %1855 = vmatprep.subr.mxu0 0.0
      %1856 = vmatpush2.msra.mxu0 0.0
      %1857 = vmatprep.subr.mxu0 0.0
      %1858 = vmatpush2.msra.mxu0 0.0
      %1859 = vmatprep.subr.mxu0 0.0
      %1860 = vmatpush2.msra.mxu0 0.0
      %1861 = vmatprep.subr.mxu0 0.0
      %1862 = vmatpush2.msra.mxu0 0.0
      %1863 = vmatprep.subr.mxu0 0.0
      %1864 = vmatpush2.msra.mxu0 0.0
      %1865 = vmatprep.subr.mxu0 0.0
      %1866 = vmatpush2.msra.mxu0 0.0
      %1867 = vmatprep.subr.mxu0 0.0
      %1868 = vmatpush2.msra.mxu0 0.0
      %1869 = vmatprep.subr.mxu0 0.0
      %1870 = vmatpush2.msra.mxu0 0.0
      %1871 = vmatprep.subr.mxu0 0.0
      %1872 = vmatpush2.msra.mxu0 0.0
      %1873 = vmatprep.subr.mxu0 0.0
      %1874 = vmatpush2.msra.mxu0 0.0
      %1875 = vmatprep.subr.mxu0 0.0
      %1876 = vmatpush2.msra.mxu0 0.0
      %1877 = vmatprep.subr.mxu0 0.0
      %1878 = vmatpush2.msra.mxu0 0.0
      %1879 = vmatprep.mubr.f32.mxu0 0.0
      %1880 = vmatmul.mubr.f32.gmra.mxu0 %v561
      %v1881 = vpop.f32.mrf.mxu0
      %v1882 = vadd.f32 0.0, %v1881
      %v1883 = vpop.f32.mrf.mxu0
      %1884 = vmatprep.mubr.f32.mxu0 0.0
      %1885 = vmatmul.mubr.f32.gmra.mxu0 %v564
      %v1886 = vpop.f32.mrf.mxu0
      %v1887 = vadd.f32 0.0, %v1886
      %v1888 = vpop.f32.mrf.mxu0
      %1889 = vmatprep.mubr.f32.mxu0 0.0
      %1890 = vmatmul.mubr.f32.gmra.mxu0 %v567
      %v1891 = vpop.f32.mrf.mxu0
      %v1892 = vadd.f32 0.0, %v1891
      %v1893 = vpop.f32.mrf.mxu0
      %1894 = vmatprep.mubr.f32.mxu0 0.0
      %1895 = vmatmul.mubr.f32.gmra.mxu0 %v570
      %v1896 = vpop.f32.mrf.mxu0
      %v1897 = vadd.f32 0.0, %v1896
      %v1898 = vpop.f32.mrf.mxu0
      %1899 = vdwg.mxu0
      %v1900 = vmul.f32 %v1882, %v1793
      %v1901 = vmul.f32 %v1887, %v1793
      %v1902 = vmul.f32 %v1892, %v1793
      %v1903 = vmul.f32 %v1897, %v1793
      %v1904 = vrot.slane %v1900, 4
      %v1905 = vadd.f32 %v1900, %v1904
      %v1906 = vrot.slane %v1905, 2
      %v1907 = vadd.f32 %v1905, %v1906
      %v1908 = vrot.slane %v1907, 1
      %v1909 = vadd.f32 %v1907, %v1908
      %v1910 = vrot.slane %v1901, 4
      %v1911 = vadd.f32 %v1901, %v1910
      %v1912 = vrot.slane %v1911, 2
      %v1913 = vadd.f32 %v1911, %v1912
      %v1914 = vrot.slane %v1913, 1
      %v1915 = vadd.f32 %v1913, %v1914
      %v1916 = vrot.slane %v1902, 4
      %v1917 = vadd.f32 %v1902, %v1916
      %v1918 = vrot.slane %v1917, 2
      %v1919 = vadd.f32 %v1917, %v1918
      %v1920 = vrot.slane %v1919, 1
      %v1921 = vadd.f32 %v1919, %v1920
      %v1922 = vrot.slane %v1903, 4
      %v1923 = vadd.f32 %v1903, %v1922
      %v1924 = vrot.slane %v1923, 2
      %v1925 = vadd.f32 %v1923, %v1924
      %v1926 = vrot.slane %v1925, 1
      %v1927 = vadd.f32 %v1925, %v1926
      %s1928 = scalar_lea.vmem %s4, 40
      %v1929 = vld [vmem:[%s1928] sm:$0xff]
      %v1934 = vsel %vm861, %v1915, %v1909
      %v1935 = vsel %vm863, %v1921, %v1934
      %v1936 = vsel %vm865, %v1927, %v1935
      %v1938 = vsel %vm867, %v1929, 0
      %v1940 = vsel %vm360, %v1936, 0
      %1942 = vmatprep.subr.mxu0 0.0
      %1943 = vmatpush1.msra.mxu0 0.0
      %1944 = vmatprep.subr.mxu0 0.0
      %1945 = vmatpush1.msra.mxu0 0.0
      %1946 = vmatprep.subr.mxu0 0.0
      %1947 = vmatpush1.msra.mxu0 0.0
      %1948 = vmatprep.subr.mxu0 0.0
      %1949 = vmatpush1.msra.mxu0 0.0
      %1950 = vmatprep.subr.mxu0 0.0
      %1951 = vmatpush1.msra.mxu0 0.0
      %1952 = vmatprep.subr.mxu0 0.0
      %1953 = vmatpush1.msra.mxu0 0.0
      %1954 = vmatprep.subr.mxu0 0.0
      %1955 = vmatpush1.msra.mxu0 0.0
      %1956 = vmatprep.subr.mxu0 0.0
      %1957 = vmatpush1.msra.mxu0 0.0
      %1958 = vmatprep.subr.mxu0 0.0
      %1959 = vmatpush1.msra.mxu0 0.0
      %1960 = vmatprep.subr.mxu0 0.0
      %1961 = vmatpush1.msra.mxu0 0.0
      %1962 = vmatprep.subr.mxu0 0.0
      %1963 = vmatpush1.msra.mxu0 0.0
      %1964 = vmatprep.subr.mxu0 0.0
      %1965 = vmatpush1.msra.mxu0 0.0
      %1966 = vmatprep.subr.mxu0 0.0
      %1967 = vmatpush1.msra.mxu0 0.0
      %1968 = vmatprep.subr.mxu0 0.0
      %1969 = vmatpush1.msra.mxu0 0.0
      %1970 = vmatprep.subr.mxu0 0.0
      %1971 = vmatpush1.msra.mxu0 0.0
      %1972 = vmatprep.subr.mxu0 0.0
      %1973 = vmatpush1.msra.mxu0 %v1940
      %1974 = vmatprep.subr.mxu0 0.0
      %1975 = vmatpush2.msra.mxu0 0.0
      %1976 = vmatprep.subr.mxu0 0.0
      %1977 = vmatpush2.msra.mxu0 0.0
      %1978 = vmatprep.subr.mxu0 0.0
      %1979 = vmatpush2.msra.mxu0 0.0
      %1980 = vmatprep.subr.mxu0 0.0
      %1981 = vmatpush2.msra.mxu0 0.0
      %1982 = vmatprep.subr.mxu0 0.0
      %1983 = vmatpush2.msra.mxu0 0.0
      %1984 = vmatprep.subr.mxu0 0.0
      %1985 = vmatpush2.msra.mxu0 0.0
      %1986 = vmatprep.subr.mxu0 0.0
      %1987 = vmatpush2.msra.mxu0 0.0
      %1988 = vmatprep.subr.mxu0 0.0
      %1989 = vmatpush2.msra.mxu0 0.0
      %1990 = vmatprep.subr.mxu0 0.0
      %1991 = vmatpush2.msra.mxu0 0.0
      %1992 = vmatprep.subr.mxu0 0.0
      %1993 = vmatpush2.msra.mxu0 0.0
      %1994 = vmatprep.subr.mxu0 0.0
      %1995 = vmatpush2.msra.mxu0 0.0
      %1996 = vmatprep.subr.mxu0 0.0
      %1997 = vmatpush2.msra.mxu0 0.0
      %1998 = vmatprep.subr.mxu0 0.0
      %1999 = vmatpush2.msra.mxu0 0.0
      %2000 = vmatprep.subr.mxu0 0.0
      %2001 = vmatpush2.msra.mxu0 0.0
      %2002 = vmatprep.subr.mxu0 0.0
      %2003 = vmatpush2.msra.mxu0 0.0
      %2004 = vmatprep.subr.mxu0 0.0
      %2005 = vmatpush2.msra.mxu0 0.0
      %2006 = vmatprep.mubr.f32.mxu0 0.0
      %2007 = vmatmul.mubr.f32.gmra.mxu0 %v1938
      %v2008 = vpop.f32.mrf.mxu0
      %v2009 = vadd.f32 0.0, %v2008
      %v2010 = vpop.f32.mrf.mxu0
      %2011 = vdwg.mxu0
      %v2012 = vadd.f32 %v1772, %v2009
      %v2013 = vadd.f32 %v483, 1.0
      %v2014 = vadd.f32 %v2013, %v465
      %v2015 = vfloor.f32 %v2014
      %v2016 = vmax.f32 %v2015, 0.0
      %v2017 = vmin.f32 %v2016, 7.0
      %v2018 = vadd.f32 %v2015, 1.0
      %v2019 = vmax.f32 %v2018, 0.0
      %v2020 = vmin.f32 %v2019, 7.0
      %v2021 = vmax.f32 %v2014, 0.0
      %v2022 = vmin.f32 %v2021, 7.0
      %v2023 = vsub.f32 %v2017, %v2022
      %v2024 = vadd.f32 %v2023, 1.0
      %v2025 = vsub.f32 %v2020, %v2022
      %v2026 = vsub.f32 1.0, %v2025
      %v2027 = vlaneseq
      %v2028 = vshrl.u32 %v2027, 7
      %v2029 = vsub.s32 6, %v2028
      %v2030 = vrot.slane %v2017, %v2029
      %vm2031 = vcmp.eq.f32.partialorder %v488, %v2030
      %v2032 = vlaneseq
      %v2033 = vshrl.u32 %v2032, 7
      %v2034 = vsub.s32 6, %v2033
      %v2035 = vrot.slane %v2024, %v2034
      %v2036 = vsel %vm2031, %v2035, 0.0
      %v2037 = vlaneseq
      %v2038 = vshrl.u32 %v2037, 7
      %v2039 = vsub.s32 6, %v2038
      %v2040 = vrot.slane %v2020, %v2039
      %vm2041 = vcmp.eq.f32.partialorder %v488, %v2040
      %v2042 = vlaneseq
      %v2043 = vshrl.u32 %v2042, 7
      %v2044 = vsub.s32 6, %v2043
      %v2045 = vrot.slane %v2026, %v2044
      %v2046 = vsel %vm2041, %v2045, 0.0
      %v2047 = vadd.f32 %v2036, %v2046
      %v2048 = vlaneseq
      %v2049 = vshrl.u32 %v2048, 7
      %v2050 = vsub.s32 7, %v2049
      %v2051 = vrot.slane %v501, %v2050
      %vm2052 = vcmp.eq.f32.partialorder %v488, %v2051
      %v2053 = vlaneseq
      %v2054 = vshrl.u32 %v2053, 7
      %v2055 = vsub.s32 7, %v2054
      %v2056 = vrot.slane %v514, %v2055
      %v2057 = vsel %vm2052, %v2056, 0.0
      %v2058 = vlaneseq
      %v2059 = vshrl.u32 %v2058, 7
      %v2060 = vsub.s32 7, %v2059
      %v2061 = vrot.slane %v504, %v2060
      %vm2062 = vcmp.eq.f32.partialorder %v488, %v2061
      %v2063 = vlaneseq
      %v2064 = vshrl.u32 %v2063, 7
      %v2065 = vsub.s32 7, %v2064
      %v2066 = vrot.slane %v516, %v2065
      %v2067 = vsel %vm2062, %v2066, 0.0
      %v2068 = vadd.f32 %v2057, %v2067
      %2069 = vmatprep.subr.mxu0 0.0
      %2070 = vmatpush1.msra.mxu0 0.0
      %2071 = vmatprep.subr.mxu0 0.0
      %2072 = vmatpush1.msra.mxu0 0.0
      %2073 = vmatprep.subr.mxu0 0.0
      %2074 = vmatpush1.msra.mxu0 0.0
      %2075 = vmatprep.subr.mxu0 0.0
      %2076 = vmatpush1.msra.mxu0 0.0
      %2077 = vmatprep.subr.mxu0 0.0
      %2078 = vmatpush1.msra.mxu0 0.0
      %2079 = vmatprep.subr.mxu0 0.0
      %2080 = vmatpush1.msra.mxu0 0.0
      %2081 = vmatprep.subr.mxu0 0.0
      %2082 = vmatpush1.msra.mxu0 0.0
      %2083 = vmatprep.subr.mxu0 0.0
      %2084 = vmatpush1.msra.mxu0 0.0
      %2085 = vmatprep.subr.mxu0 0.0
      %2086 = vmatpush1.msra.mxu0 0.0
      %2087 = vmatprep.subr.mxu0 0.0
      %2088 = vmatpush1.msra.mxu0 0.0
      %2089 = vmatprep.subr.mxu0 0.0
      %2090 = vmatpush1.msra.mxu0 0.0
      %2091 = vmatprep.subr.mxu0 0.0
      %2092 = vmatpush1.msra.mxu0 0.0
      %2093 = vmatprep.subr.mxu0 0.0
      %2094 = vmatpush1.msra.mxu0 0.0
      %2095 = vmatprep.subr.mxu0 0.0
      %2096 = vmatpush1.msra.mxu0 0.0
      %2097 = vmatprep.subr.mxu0 0.0
      %2098 = vmatpush1.msra.mxu0 0.0
      %2099 = vmatprep.subr.mxu0 0.0
      %2100 = vmatpush1.msra.mxu0 %v2068
      %2101 = vmatprep.subr.mxu0 0.0
      %2102 = vmatpush2.msra.mxu0 0.0
      %2103 = vmatprep.subr.mxu0 0.0
      %2104 = vmatpush2.msra.mxu0 0.0
      %2105 = vmatprep.subr.mxu0 0.0
      %2106 = vmatpush2.msra.mxu0 0.0
      %2107 = vmatprep.subr.mxu0 0.0
      %2108 = vmatpush2.msra.mxu0 0.0
      %2109 = vmatprep.subr.mxu0 0.0
      %2110 = vmatpush2.msra.mxu0 0.0
      %2111 = vmatprep.subr.mxu0 0.0
      %2112 = vmatpush2.msra.mxu0 0.0
      %2113 = vmatprep.subr.mxu0 0.0
      %2114 = vmatpush2.msra.mxu0 0.0
      %2115 = vmatprep.subr.mxu0 0.0
      %2116 = vmatpush2.msra.mxu0 0.0
      %2117 = vmatprep.subr.mxu0 0.0
      %2118 = vmatpush2.msra.mxu0 0.0
      %2119 = vmatprep.subr.mxu0 0.0
      %2120 = vmatpush2.msra.mxu0 0.0
      %2121 = vmatprep.subr.mxu0 0.0
      %2122 = vmatpush2.msra.mxu0 0.0
      %2123 = vmatprep.subr.mxu0 0.0
      %2124 = vmatpush2.msra.mxu0 0.0
      %2125 = vmatprep.subr.mxu0 0.0
      %2126 = vmatpush2.msra.mxu0 0.0
      %2127 = vmatprep.subr.mxu0 0.0
      %2128 = vmatpush2.msra.mxu0 0.0
      %2129 = vmatprep.subr.mxu0 0.0
      %2130 = vmatpush2.msra.mxu0 0.0
      %2131 = vmatprep.subr.mxu0 0.0
      %2132 = vmatpush2.msra.mxu0 0.0
      %2133 = vmatprep.mubr.f32.mxu0 0.0
      %2134 = vmatmul.mubr.f32.gmra.mxu0 %v561
      %v2135 = vpop.f32.mrf.mxu0
      %v2136 = vadd.f32 0.0, %v2135
      %v2137 = vpop.f32.mrf.mxu0
      %2138 = vmatprep.mubr.f32.mxu0 0.0
      %2139 = vmatmul.mubr.f32.gmra.mxu0 %v564
      %v2140 = vpop.f32.mrf.mxu0
      %v2141 = vadd.f32 0.0, %v2140
      %v2142 = vpop.f32.mrf.mxu0
      %2143 = vmatprep.mubr.f32.mxu0 0.0
      %2144 = vmatmul.mubr.f32.gmra.mxu0 %v567
      %v2145 = vpop.f32.mrf.mxu0
      %v2146 = vadd.f32 0.0, %v2145
      %v2147 = vpop.f32.mrf.mxu0
      %2148 = vmatprep.mubr.f32.mxu0 0.0
      %2149 = vmatmul.mubr.f32.gmra.mxu0 %v570
      %v2150 = vpop.f32.mrf.mxu0
      %v2151 = vadd.f32 0.0, %v2150
      %v2152 = vpop.f32.mrf.mxu0
      %2153 = vdwg.mxu0
      %v2154 = vmul.f32 %v2136, %v2047
      %v2155 = vmul.f32 %v2141, %v2047
      %v2156 = vmul.f32 %v2146, %v2047
      %v2157 = vmul.f32 %v2151, %v2047
      %v2158 = vrot.slane %v2154, 4
      %v2159 = vadd.f32 %v2154, %v2158
      %v2160 = vrot.slane %v2159, 2
      %v2161 = vadd.f32 %v2159, %v2160
      %v2162 = vrot.slane %v2161, 1
      %v2163 = vadd.f32 %v2161, %v2162
      %v2164 = vrot.slane %v2155, 4
      %v2165 = vadd.f32 %v2155, %v2164
      %v2166 = vrot.slane %v2165, 2
      %v2167 = vadd.f32 %v2165, %v2166
      %v2168 = vrot.slane %v2167, 1
      %v2169 = vadd.f32 %v2167, %v2168
      %v2170 = vrot.slane %v2156, 4
      %v2171 = vadd.f32 %v2156, %v2170
      %v2172 = vrot.slane %v2171, 2
      %v2173 = vadd.f32 %v2171, %v2172
      %v2174 = vrot.slane %v2173, 1
      %v2175 = vadd.f32 %v2173, %v2174
      %v2176 = vrot.slane %v2157, 4
      %v2177 = vadd.f32 %v2157, %v2176
      %v2178 = vrot.slane %v2177, 2
      %v2179 = vadd.f32 %v2177, %v2178
      %v2180 = vrot.slane %v2179, 1
      %v2181 = vadd.f32 %v2179, %v2180
      %s2182 = scalar_lea.vmem %s4, 48
      %v2183 = vld [vmem:[%s2182] sm:$0xff]
      %v2188 = vsel %vm861, %v2169, %v2163
      %v2189 = vsel %vm863, %v2175, %v2188
      %v2190 = vsel %vm865, %v2181, %v2189
      %v2192 = vsel %vm867, %v2183, 0
      %v2194 = vsel %vm360, %v2190, 0
      %2196 = vmatprep.subr.mxu0 0.0
      %2197 = vmatpush1.msra.mxu0 0.0
      %2198 = vmatprep.subr.mxu0 0.0
      %2199 = vmatpush1.msra.mxu0 0.0
      %2200 = vmatprep.subr.mxu0 0.0
      %2201 = vmatpush1.msra.mxu0 0.0
      %2202 = vmatprep.subr.mxu0 0.0
      %2203 = vmatpush1.msra.mxu0 0.0
      %2204 = vmatprep.subr.mxu0 0.0
      %2205 = vmatpush1.msra.mxu0 0.0
      %2206 = vmatprep.subr.mxu0 0.0
      %2207 = vmatpush1.msra.mxu0 0.0
      %2208 = vmatprep.subr.mxu0 0.0
      %2209 = vmatpush1.msra.mxu0 0.0
      %2210 = vmatprep.subr.mxu0 0.0
      %2211 = vmatpush1.msra.mxu0 0.0
      %2212 = vmatprep.subr.mxu0 0.0
      %2213 = vmatpush1.msra.mxu0 0.0
      %2214 = vmatprep.subr.mxu0 0.0
      %2215 = vmatpush1.msra.mxu0 0.0
      %2216 = vmatprep.subr.mxu0 0.0
      %2217 = vmatpush1.msra.mxu0 0.0
      %2218 = vmatprep.subr.mxu0 0.0
      %2219 = vmatpush1.msra.mxu0 0.0
      %2220 = vmatprep.subr.mxu0 0.0
      %2221 = vmatpush1.msra.mxu0 0.0
      %2222 = vmatprep.subr.mxu0 0.0
      %2223 = vmatpush1.msra.mxu0 0.0
      %2224 = vmatprep.subr.mxu0 0.0
      %2225 = vmatpush1.msra.mxu0 0.0
      %2226 = vmatprep.subr.mxu0 0.0
      %2227 = vmatpush1.msra.mxu0 %v2194
      %2228 = vmatprep.subr.mxu0 0.0
      %2229 = vmatpush2.msra.mxu0 0.0
      %2230 = vmatprep.subr.mxu0 0.0
      %2231 = vmatpush2.msra.mxu0 0.0
      %2232 = vmatprep.subr.mxu0 0.0
      %2233 = vmatpush2.msra.mxu0 0.0
      %2234 = vmatprep.subr.mxu0 0.0
      %2235 = vmatpush2.msra.mxu0 0.0
      %2236 = vmatprep.subr.mxu0 0.0
      %2237 = vmatpush2.msra.mxu0 0.0
      %2238 = vmatprep.subr.mxu0 0.0
      %2239 = vmatpush2.msra.mxu0 0.0
      %2240 = vmatprep.subr.mxu0 0.0
      %2241 = vmatpush2.msra.mxu0 0.0
      %2242 = vmatprep.subr.mxu0 0.0
      %2243 = vmatpush2.msra.mxu0 0.0
      %2244 = vmatprep.subr.mxu0 0.0
      %2245 = vmatpush2.msra.mxu0 0.0
      %2246 = vmatprep.subr.mxu0 0.0
      %2247 = vmatpush2.msra.mxu0 0.0
      %2248 = vmatprep.subr.mxu0 0.0
      %2249 = vmatpush2.msra.mxu0 0.0
      %2250 = vmatprep.subr.mxu0 0.0
      %2251 = vmatpush2.msra.mxu0 0.0
      %2252 = vmatprep.subr.mxu0 0.0
      %2253 = vmatpush2.msra.mxu0 0.0
      %2254 = vmatprep.subr.mxu0 0.0
      %2255 = vmatpush2.msra.mxu0 0.0
      %2256 = vmatprep.subr.mxu0 0.0
      %2257 = vmatpush2.msra.mxu0 0.0
      %2258 = vmatprep.subr.mxu0 0.0
      %2259 = vmatpush2.msra.mxu0 0.0
      %2260 = vmatprep.mubr.f32.mxu0 0.0
      %2261 = vmatmul.mubr.f32.gmra.mxu0 %v2192
      %v2262 = vpop.f32.mrf.mxu0
      %v2263 = vadd.f32 0.0, %v2262
      %v2264 = vpop.f32.mrf.mxu0
      %2265 = vdwg.mxu0
      %v2266 = vadd.f32 %v2012, %v2263
      %v2267 = vadd.f32 %v686, %v475
      %v2268 = vfloor.f32 %v2267
      %v2269 = vmax.f32 %v2268, 0.0
      %v2270 = vmin.f32 %v2269, 7.0
      %v2271 = vadd.f32 %v2268, 1.0
      %v2272 = vmax.f32 %v2271, 0.0
      %v2273 = vmin.f32 %v2272, 7.0
      %v2274 = vmax.f32 %v2267, 0.0
      %v2275 = vmin.f32 %v2274, 7.0
      %v2276 = vsub.f32 %v2270, %v2275
      %v2277 = vadd.f32 %v2276, 1.0
      %v2278 = vsub.f32 %v2273, %v2275
      %v2279 = vsub.f32 1.0, %v2278
      %v2280 = vlaneseq
      %v2281 = vshrl.u32 %v2280, 7
      %v2282 = vsub.s32 7, %v2281
      %v2283 = vrot.slane %v2017, %v2282
      %vm2284 = vcmp.eq.f32.partialorder %v488, %v2283
      %v2285 = vlaneseq
      %v2286 = vshrl.u32 %v2285, 7
      %v2287 = vsub.s32 7, %v2286
      %v2288 = vrot.slane %v2024, %v2287
      %v2289 = vsel %vm2284, %v2288, 0.0
      %v2290 = vlaneseq
      %v2291 = vshrl.u32 %v2290, 7
      %v2292 = vsub.s32 7, %v2291
      %v2293 = vrot.slane %v2020, %v2292
      %vm2294 = vcmp.eq.f32.partialorder %v488, %v2293
      %v2295 = vlaneseq
      %v2296 = vshrl.u32 %v2295, 7
      %v2297 = vsub.s32 7, %v2296
      %v2298 = vrot.slane %v2026, %v2297
      %v2299 = vsel %vm2294, %v2298, 0.0
      %v2300 = vadd.f32 %v2289, %v2299
      %v2301 = vlaneseq
      %v2302 = vshrl.u32 %v2301, 7
      %v2303 = vsub.s32 0, %v2302
      %v2304 = vrot.slane %v2270, %v2303
      %vm2305 = vcmp.eq.f32.partialorder %v488, %v2304
      %v2306 = vlaneseq
      %v2307 = vshrl.u32 %v2306, 7
      %v2308 = vsub.s32 0, %v2307
      %v2309 = vrot.slane %v2277, %v2308
      %v2310 = vsel %vm2305, %v2309, 0.0
      %v2311 = vlaneseq
      %v2312 = vshrl.u32 %v2311, 7
      %v2313 = vsub.s32 0, %v2312
      %v2314 = vrot.slane %v2273, %v2313
      %vm2315 = vcmp.eq.f32.partialorder %v488, %v2314
      %v2316 = vlaneseq
      %v2317 = vshrl.u32 %v2316, 7
      %v2318 = vsub.s32 0, %v2317
      %v2319 = vrot.slane %v2279, %v2318
      %v2320 = vsel %vm2315, %v2319, 0.0
      %v2321 = vadd.f32 %v2310, %v2320
      %2322 = vmatprep.subr.mxu0 0.0
      %2323 = vmatpush1.msra.mxu0 0.0
      %2324 = vmatprep.subr.mxu0 0.0
      %2325 = vmatpush1.msra.mxu0 0.0
      %2326 = vmatprep.subr.mxu0 0.0
      %2327 = vmatpush1.msra.mxu0 0.0
      %2328 = vmatprep.subr.mxu0 0.0
      %2329 = vmatpush1.msra.mxu0 0.0
      %2330 = vmatprep.subr.mxu0 0.0
      %2331 = vmatpush1.msra.mxu0 0.0
      %2332 = vmatprep.subr.mxu0 0.0
      %2333 = vmatpush1.msra.mxu0 0.0
      %2334 = vmatprep.subr.mxu0 0.0
      %2335 = vmatpush1.msra.mxu0 0.0
      %2336 = vmatprep.subr.mxu0 0.0
      %2337 = vmatpush1.msra.mxu0 0.0
      %2338 = vmatprep.subr.mxu0 0.0
      %2339 = vmatpush1.msra.mxu0 0.0
      %2340 = vmatprep.subr.mxu0 0.0
      %2341 = vmatpush1.msra.mxu0 0.0
      %2342 = vmatprep.subr.mxu0 0.0
      %2343 = vmatpush1.msra.mxu0 0.0
      %2344 = vmatprep.subr.mxu0 0.0
      %2345 = vmatpush1.msra.mxu0 0.0
      %2346 = vmatprep.subr.mxu0 0.0
      %2347 = vmatpush1.msra.mxu0 0.0
      %2348 = vmatprep.subr.mxu0 0.0
      %2349 = vmatpush1.msra.mxu0 0.0
      %2350 = vmatprep.subr.mxu0 0.0
      %2351 = vmatpush1.msra.mxu0 0.0
      %2352 = vmatprep.subr.mxu0 0.0
      %2353 = vmatpush1.msra.mxu0 %v2321
      %2354 = vmatprep.subr.mxu0 0.0
      %2355 = vmatpush2.msra.mxu0 0.0
      %2356 = vmatprep.subr.mxu0 0.0
      %2357 = vmatpush2.msra.mxu0 0.0
      %2358 = vmatprep.subr.mxu0 0.0
      %2359 = vmatpush2.msra.mxu0 0.0
      %2360 = vmatprep.subr.mxu0 0.0
      %2361 = vmatpush2.msra.mxu0 0.0
      %2362 = vmatprep.subr.mxu0 0.0
      %2363 = vmatpush2.msra.mxu0 0.0
      %2364 = vmatprep.subr.mxu0 0.0
      %2365 = vmatpush2.msra.mxu0 0.0
      %2366 = vmatprep.subr.mxu0 0.0
      %2367 = vmatpush2.msra.mxu0 0.0
      %2368 = vmatprep.subr.mxu0 0.0
      %2369 = vmatpush2.msra.mxu0 0.0
      %2370 = vmatprep.subr.mxu0 0.0
      %2371 = vmatpush2.msra.mxu0 0.0
      %2372 = vmatprep.subr.mxu0 0.0
      %2373 = vmatpush2.msra.mxu0 0.0
      %2374 = vmatprep.subr.mxu0 0.0
      %2375 = vmatpush2.msra.mxu0 0.0
      %2376 = vmatprep.subr.mxu0 0.0
      %2377 = vmatpush2.msra.mxu0 0.0
      %2378 = vmatprep.subr.mxu0 0.0
      %2379 = vmatpush2.msra.mxu0 0.0
      %2380 = vmatprep.subr.mxu0 0.0
      %2381 = vmatpush2.msra.mxu0 0.0
      %2382 = vmatprep.subr.mxu0 0.0
      %2383 = vmatpush2.msra.mxu0 0.0
      %2384 = vmatprep.subr.mxu0 0.0
      %2385 = vmatpush2.msra.mxu0 0.0
      %2386 = vmatprep.mubr.f32.mxu0 0.0
      %2387 = vmatmul.mubr.f32.gmra.mxu0 %v561
      %v2388 = vpop.f32.mrf.mxu0
      %v2389 = vadd.f32 0.0, %v2388
      %v2390 = vpop.f32.mrf.mxu0
      %2391 = vmatprep.mubr.f32.mxu0 0.0
      %2392 = vmatmul.mubr.f32.gmra.mxu0 %v564
      %v2393 = vpop.f32.mrf.mxu0
      %v2394 = vadd.f32 0.0, %v2393
      %v2395 = vpop.f32.mrf.mxu0
      %2396 = vmatprep.mubr.f32.mxu0 0.0
      %2397 = vmatmul.mubr.f32.gmra.mxu0 %v567
      %v2398 = vpop.f32.mrf.mxu0
      %v2399 = vadd.f32 0.0, %v2398
      %v2400 = vpop.f32.mrf.mxu0
      %2401 = vmatprep.mubr.f32.mxu0 0.0
      %2402 = vmatmul.mubr.f32.gmra.mxu0 %v570
      %v2403 = vpop.f32.mrf.mxu0
      %v2404 = vadd.f32 0.0, %v2403
      %v2405 = vpop.f32.mrf.mxu0
      %2406 = vdwg.mxu0
      %v2407 = vmul.f32 %v2389, %v2300
      %v2408 = vmul.f32 %v2394, %v2300
      %v2409 = vmul.f32 %v2399, %v2300
      %v2410 = vmul.f32 %v2404, %v2300
      %v2411 = vrot.slane %v2407, 4
      %v2412 = vadd.f32 %v2407, %v2411
      %v2413 = vrot.slane %v2412, 2
      %v2414 = vadd.f32 %v2412, %v2413
      %v2415 = vrot.slane %v2414, 1
      %v2416 = vadd.f32 %v2414, %v2415
      %v2417 = vrot.slane %v2408, 4
      %v2418 = vadd.f32 %v2408, %v2417
      %v2419 = vrot.slane %v2418, 2
      %v2420 = vadd.f32 %v2418, %v2419
      %v2421 = vrot.slane %v2420, 1
      %v2422 = vadd.f32 %v2420, %v2421
      %v2423 = vrot.slane %v2409, 4
      %v2424 = vadd.f32 %v2409, %v2423
      %v2425 = vrot.slane %v2424, 2
      %v2426 = vadd.f32 %v2424, %v2425
      %v2427 = vrot.slane %v2426, 1
      %v2428 = vadd.f32 %v2426, %v2427
      %v2429 = vrot.slane %v2410, 4
      %v2430 = vadd.f32 %v2410, %v2429
      %v2431 = vrot.slane %v2430, 2
      %v2432 = vadd.f32 %v2430, %v2431
      %v2433 = vrot.slane %v2432, 1
      %v2434 = vadd.f32 %v2432, %v2433
      %s2435 = scalar_lea.vmem %s4, 56
      %v2436 = vld [vmem:[%s2435] sm:$0xff]
      %v2441 = vsel %vm861, %v2422, %v2416
      %v2442 = vsel %vm863, %v2428, %v2441
      %v2443 = vsel %vm865, %v2434, %v2442
      %v2445 = vsel %vm867, %v2436, 0
      %v2447 = vsel %vm360, %v2443, 0
      %2449 = vmatprep.subr.mxu0 0.0
      %2450 = vmatpush1.msra.mxu0 0.0
      %2451 = vmatprep.subr.mxu0 0.0
      %2452 = vmatpush1.msra.mxu0 0.0
      %2453 = vmatprep.subr.mxu0 0.0
      %2454 = vmatpush1.msra.mxu0 0.0
      %2455 = vmatprep.subr.mxu0 0.0
      %2456 = vmatpush1.msra.mxu0 0.0
      %2457 = vmatprep.subr.mxu0 0.0
      %2458 = vmatpush1.msra.mxu0 0.0
      %2459 = vmatprep.subr.mxu0 0.0
      %2460 = vmatpush1.msra.mxu0 0.0
      %2461 = vmatprep.subr.mxu0 0.0
      %2462 = vmatpush1.msra.mxu0 0.0
      %2463 = vmatprep.subr.mxu0 0.0
      %2464 = vmatpush1.msra.mxu0 0.0
      %2465 = vmatprep.subr.mxu0 0.0
      %2466 = vmatpush1.msra.mxu0 0.0
      %2467 = vmatprep.subr.mxu0 0.0
      %2468 = vmatpush1.msra.mxu0 0.0
      %2469 = vmatprep.subr.mxu0 0.0
      %2470 = vmatpush1.msra.mxu0 0.0
      %2471 = vmatprep.subr.mxu0 0.0
      %2472 = vmatpush1.msra.mxu0 0.0
      %2473 = vmatprep.subr.mxu0 0.0
      %2474 = vmatpush1.msra.mxu0 0.0
      %2475 = vmatprep.subr.mxu0 0.0
      %2476 = vmatpush1.msra.mxu0 0.0
      %2477 = vmatprep.subr.mxu0 0.0
      %2478 = vmatpush1.msra.mxu0 0.0
      %2479 = vmatprep.subr.mxu0 0.0
      %2480 = vmatpush1.msra.mxu0 %v2447
      %2481 = vmatprep.subr.mxu0 0.0
      %2482 = vmatpush2.msra.mxu0 0.0
      %2483 = vmatprep.subr.mxu0 0.0
      %2484 = vmatpush2.msra.mxu0 0.0
      %2485 = vmatprep.subr.mxu0 0.0
      %2486 = vmatpush2.msra.mxu0 0.0
      %2487 = vmatprep.subr.mxu0 0.0
      %2488 = vmatpush2.msra.mxu0 0.0
      %2489 = vmatprep.subr.mxu0 0.0
      %2490 = vmatpush2.msra.mxu0 0.0
      %2491 = vmatprep.subr.mxu0 0.0
      %2492 = vmatpush2.msra.mxu0 0.0
      %2493 = vmatprep.subr.mxu0 0.0
      %2494 = vmatpush2.msra.mxu0 0.0
      %2495 = vmatprep.subr.mxu0 0.0
      %2496 = vmatpush2.msra.mxu0 0.0
      %2497 = vmatprep.subr.mxu0 0.0
      %2498 = vmatpush2.msra.mxu0 0.0
      %2499 = vmatprep.subr.mxu0 0.0
      %2500 = vmatpush2.msra.mxu0 0.0
      %2501 = vmatprep.subr.mxu0 0.0
      %2502 = vmatpush2.msra.mxu0 0.0
      %2503 = vmatprep.subr.mxu0 0.0
      %2504 = vmatpush2.msra.mxu0 0.0
      %2505 = vmatprep.subr.mxu0 0.0
      %2506 = vmatpush2.msra.mxu0 0.0
      %2507 = vmatprep.subr.mxu0 0.0
      %2508 = vmatpush2.msra.mxu0 0.0
      %2509 = vmatprep.subr.mxu0 0.0
      %2510 = vmatpush2.msra.mxu0 0.0
      %2511 = vmatprep.subr.mxu0 0.0
      %2512 = vmatpush2.msra.mxu0 0.0
      %2513 = vmatprep.mubr.f32.mxu0 0.0
      %2514 = vmatmul.mubr.f32.gmra.mxu0 %v2445
      %v2515 = vpop.f32.mrf.mxu0
      %v2516 = vadd.f32 0.0, %v2515
      %v2517 = vpop.f32.mrf.mxu0
      %2518 = vdwg.mxu0
      %v2519 = vadd.f32 %v2266, %v2516
      %v2520 = vadd.f32 %v2013, %v470
      %v2521 = vadd.f32 %v1025, %v475
      %v2522 = vfloor.f32 %v2520
      %v2523 = vfloor.f32 %v2521
      %v2524 = vmax.f32 %v2522, 0.0
      %v2525 = vmin.f32 %v2524, 7.0
      %v2526 = vadd.f32 %v2522, 1.0
      %v2527 = vmax.f32 %v2526, 0.0
      %v2528 = vmin.f32 %v2527, 7.0
      %v2529 = vmax.f32 %v2523, 0.0
      %v2530 = vmin.f32 %v2529, 7.0
      %v2531 = vadd.f32 %v2523, 1.0
      %v2532 = vmax.f32 %v2531, 0.0
      %v2533 = vmin.f32 %v2532, 7.0
      %v2534 = vmax.f32 %v2520, 0.0
      %v2535 = vmin.f32 %v2534, 7.0
      %v2536 = vmax.f32 %v2521, 0.0
      %v2537 = vmin.f32 %v2536, 7.0
      %v2538 = vsub.f32 %v2525, %v2535
      %v2539 = vadd.f32 %v2538, 1.0
      %v2540 = vsub.f32 %v2528, %v2535
      %v2541 = vsub.f32 1.0, %v2540
      %v2542 = vsub.f32 %v2530, %v2537
      %v2543 = vadd.f32 %v2542, 1.0
      %v2544 = vsub.f32 %v2533, %v2537
      %v2545 = vsub.f32 1.0, %v2544
      %v2546 = vlaneseq
      %v2547 = vshrl.u32 %v2546, 7
      %v2548 = vsub.s32 0, %v2547
      %v2549 = vrot.slane %v2525, %v2548
      %vm2550 = vcmp.eq.f32.partialorder %v488, %v2549
      %v2551 = vlaneseq
      %v2552 = vshrl.u32 %v2551, 7
      %v2553 = vsub.s32 0, %v2552
      %v2554 = vrot.slane %v2539, %v2553
      %v2555 = vsel %vm2550, %v2554, 0.0
      %v2556 = vlaneseq
      %v2557 = vshrl.u32 %v2556, 7
      %v2558 = vsub.s32 0, %v2557
      %v2559 = vrot.slane %v2528, %v2558
      %vm2560 = vcmp.eq.f32.partialorder %v488, %v2559
      %v2561 = vlaneseq
      %v2562 = vshrl.u32 %v2561, 7
      %v2563 = vsub.s32 0, %v2562
      %v2564 = vrot.slane %v2541, %v2563
      %v2565 = vsel %vm2560, %v2564, 0.0
      %v2566 = vadd.f32 %v2555, %v2565
      %v2567 = vlaneseq
      %v2568 = vshrl.u32 %v2567, 7
      %v2569 = vsub.s32 1, %v2568
      %v2570 = vrot.slane %v2530, %v2569
      %vm2571 = vcmp.eq.f32.partialorder %v488, %v2570
      %v2572 = vlaneseq
      %v2573 = vshrl.u32 %v2572, 7
      %v2574 = vsub.s32 1, %v2573
      %v2575 = vrot.slane %v2543, %v2574
      %v2576 = vsel %vm2571, %v2575, 0.0
      %v2577 = vlaneseq
      %v2578 = vshrl.u32 %v2577, 7
      %v2579 = vsub.s32 1, %v2578
      %v2580 = vrot.slane %v2533, %v2579
      %vm2581 = vcmp.eq.f32.partialorder %v488, %v2580
      %v2582 = vlaneseq
      %v2583 = vshrl.u32 %v2582, 7
      %v2584 = vsub.s32 1, %v2583
      %v2585 = vrot.slane %v2545, %v2584
      %v2586 = vsel %vm2581, %v2585, 0.0
      %v2587 = vadd.f32 %v2576, %v2586
      %2588 = vmatprep.subr.mxu0 0.0
      %2589 = vmatpush1.msra.mxu0 0.0
      %2590 = vmatprep.subr.mxu0 0.0
      %2591 = vmatpush1.msra.mxu0 0.0
      %2592 = vmatprep.subr.mxu0 0.0
      %2593 = vmatpush1.msra.mxu0 0.0
      %2594 = vmatprep.subr.mxu0 0.0
      %2595 = vmatpush1.msra.mxu0 0.0
      %2596 = vmatprep.subr.mxu0 0.0
      %2597 = vmatpush1.msra.mxu0 0.0
      %2598 = vmatprep.subr.mxu0 0.0
      %2599 = vmatpush1.msra.mxu0 0.0
      %2600 = vmatprep.subr.mxu0 0.0
      %2601 = vmatpush1.msra.mxu0 0.0
      %2602 = vmatprep.subr.mxu0 0.0
      %2603 = vmatpush1.msra.mxu0 0.0
      %2604 = vmatprep.subr.mxu0 0.0
      %2605 = vmatpush1.msra.mxu0 0.0
      %2606 = vmatprep.subr.mxu0 0.0
      %2607 = vmatpush1.msra.mxu0 0.0
      %2608 = vmatprep.subr.mxu0 0.0
      %2609 = vmatpush1.msra.mxu0 0.0
      %2610 = vmatprep.subr.mxu0 0.0
      %2611 = vmatpush1.msra.mxu0 0.0
      %2612 = vmatprep.subr.mxu0 0.0
      %2613 = vmatpush1.msra.mxu0 0.0
      %2614 = vmatprep.subr.mxu0 0.0
      %2615 = vmatpush1.msra.mxu0 0.0
      %2616 = vmatprep.subr.mxu0 0.0
      %2617 = vmatpush1.msra.mxu0 0.0
      %2618 = vmatprep.subr.mxu0 0.0
      %2619 = vmatpush1.msra.mxu0 %v2587
      %2620 = vmatprep.subr.mxu0 0.0
      %2621 = vmatpush2.msra.mxu0 0.0
      %2622 = vmatprep.subr.mxu0 0.0
      %2623 = vmatpush2.msra.mxu0 0.0
      %2624 = vmatprep.subr.mxu0 0.0
      %2625 = vmatpush2.msra.mxu0 0.0
      %2626 = vmatprep.subr.mxu0 0.0
      %2627 = vmatpush2.msra.mxu0 0.0
      %2628 = vmatprep.subr.mxu0 0.0
      %2629 = vmatpush2.msra.mxu0 0.0
      %2630 = vmatprep.subr.mxu0 0.0
      %2631 = vmatpush2.msra.mxu0 0.0
      %2632 = vmatprep.subr.mxu0 0.0
      %2633 = vmatpush2.msra.mxu0 0.0
      %2634 = vmatprep.subr.mxu0 0.0
      %2635 = vmatpush2.msra.mxu0 0.0
      %2636 = vmatprep.subr.mxu0 0.0
      %2637 = vmatpush2.msra.mxu0 0.0
      %2638 = vmatprep.subr.mxu0 0.0
      %2639 = vmatpush2.msra.mxu0 0.0
      %2640 = vmatprep.subr.mxu0 0.0
      %2641 = vmatpush2.msra.mxu0 0.0
      %2642 = vmatprep.subr.mxu0 0.0
      %2643 = vmatpush2.msra.mxu0 0.0
      %2644 = vmatprep.subr.mxu0 0.0
      %2645 = vmatpush2.msra.mxu0 0.0
      %2646 = vmatprep.subr.mxu0 0.0
      %2647 = vmatpush2.msra.mxu0 0.0
      %2648 = vmatprep.subr.mxu0 0.0
      %2649 = vmatpush2.msra.mxu0 0.0
      %2650 = vmatprep.subr.mxu0 0.0
      %2651 = vmatpush2.msra.mxu0 0.0
      %2652 = vmatprep.mubr.f32.mxu0 0.0
      %2653 = vmatmul.mubr.f32.gmra.mxu0 %v561
      %v2654 = vpop.f32.mrf.mxu0
      %v2655 = vadd.f32 0.0, %v2654
      %v2656 = vpop.f32.mrf.mxu0
      %2657 = vmatprep.mubr.f32.mxu0 0.0
      %2658 = vmatmul.mubr.f32.gmra.mxu0 %v564
      %v2659 = vpop.f32.mrf.mxu0
      %v2660 = vadd.f32 0.0, %v2659
      %v2661 = vpop.f32.mrf.mxu0
      %2662 = vmatprep.mubr.f32.mxu0 0.0
      %2663 = vmatmul.mubr.f32.gmra.mxu0 %v567
      %v2664 = vpop.f32.mrf.mxu0
      %v2665 = vadd.f32 0.0, %v2664
      %v2666 = vpop.f32.mrf.mxu0
      %2667 = vmatprep.mubr.f32.mxu0 0.0
      %2668 = vmatmul.mubr.f32.gmra.mxu0 %v570
      %v2669 = vpop.f32.mrf.mxu0
      %v2670 = vadd.f32 0.0, %v2669
      %v2671 = vpop.f32.mrf.mxu0
      %2672 = vdwg.mxu0
      %v2673 = vmul.f32 %v2655, %v2566
      %v2674 = vmul.f32 %v2660, %v2566
      %v2675 = vmul.f32 %v2665, %v2566
      %v2676 = vmul.f32 %v2670, %v2566
      %v2677 = vrot.slane %v2673, 4
      %v2678 = vadd.f32 %v2673, %v2677
      %v2679 = vrot.slane %v2678, 2
      %v2680 = vadd.f32 %v2678, %v2679
      %v2681 = vrot.slane %v2680, 1
      %v2682 = vadd.f32 %v2680, %v2681
      %v2683 = vrot.slane %v2674, 4
      %v2684 = vadd.f32 %v2674, %v2683
      %v2685 = vrot.slane %v2684, 2
      %v2686 = vadd.f32 %v2684, %v2685
      %v2687 = vrot.slane %v2686, 1
      %v2688 = vadd.f32 %v2686, %v2687
      %v2689 = vrot.slane %v2675, 4
      %v2690 = vadd.f32 %v2675, %v2689
      %v2691 = vrot.slane %v2690, 2
      %v2692 = vadd.f32 %v2690, %v2691
      %v2693 = vrot.slane %v2692, 1
      %v2694 = vadd.f32 %v2692, %v2693
      %v2695 = vrot.slane %v2676, 4
      %v2696 = vadd.f32 %v2676, %v2695
      %v2697 = vrot.slane %v2696, 2
      %v2698 = vadd.f32 %v2696, %v2697
      %v2699 = vrot.slane %v2698, 1
      %v2700 = vadd.f32 %v2698, %v2699
      %s2701 = scalar_lea.vmem %s4, 64
      %v2702 = vld [vmem:[%s2701] sm:$0xff]
      %v2707 = vsel %vm861, %v2688, %v2682
      %v2708 = vsel %vm863, %v2694, %v2707
      %v2709 = vsel %vm865, %v2700, %v2708
      %v2711 = vsel %vm867, %v2702, 0
      %v2713 = vsel %vm360, %v2709, 0
      %2715 = vmatprep.subr.mxu0 0.0
      %2716 = vmatpush1.msra.mxu0 0.0
      %2717 = vmatprep.subr.mxu0 0.0
      %2718 = vmatpush1.msra.mxu0 0.0
      %2719 = vmatprep.subr.mxu0 0.0
      %2720 = vmatpush1.msra.mxu0 0.0
      %2721 = vmatprep.subr.mxu0 0.0
      %2722 = vmatpush1.msra.mxu0 0.0
      %2723 = vmatprep.subr.mxu0 0.0
      %2724 = vmatpush1.msra.mxu0 0.0
      %2725 = vmatprep.subr.mxu0 0.0
      %2726 = vmatpush1.msra.mxu0 0.0
      %2727 = vmatprep.subr.mxu0 0.0
      %2728 = vmatpush1.msra.mxu0 0.0
      %2729 = vmatprep.subr.mxu0 0.0
      %2730 = vmatpush1.msra.mxu0 0.0
      %2731 = vmatprep.subr.mxu0 0.0
      %2732 = vmatpush1.msra.mxu0 0.0
      %2733 = vmatprep.subr.mxu0 0.0
      %2734 = vmatpush1.msra.mxu0 0.0
      %2735 = vmatprep.subr.mxu0 0.0
      %2736 = vmatpush1.msra.mxu0 0.0
      %2737 = vmatprep.subr.mxu0 0.0
      %2738 = vmatpush1.msra.mxu0 0.0
      %2739 = vmatprep.subr.mxu0 0.0
      %2740 = vmatpush1.msra.mxu0 0.0
      %2741 = vmatprep.subr.mxu0 0.0
      %2742 = vmatpush1.msra.mxu0 0.0
      %2743 = vmatprep.subr.mxu0 0.0
      %2744 = vmatpush1.msra.mxu0 0.0
      %2745 = vmatprep.subr.mxu0 0.0
      %2746 = vmatpush1.msra.mxu0 %v2713
      %2747 = vmatprep.subr.mxu0 0.0
      %2748 = vmatpush2.msra.mxu0 0.0
      %2749 = vmatprep.subr.mxu0 0.0
      %2750 = vmatpush2.msra.mxu0 0.0
      %2751 = vmatprep.subr.mxu0 0.0
      %2752 = vmatpush2.msra.mxu0 0.0
      %2753 = vmatprep.subr.mxu0 0.0
      %2754 = vmatpush2.msra.mxu0 0.0
      %2755 = vmatprep.subr.mxu0 0.0
      %2756 = vmatpush2.msra.mxu0 0.0
      %2757 = vmatprep.subr.mxu0 0.0
      %2758 = vmatpush2.msra.mxu0 0.0
      %2759 = vmatprep.subr.mxu0 0.0
      %2760 = vmatpush2.msra.mxu0 0.0
      %2761 = vmatprep.subr.mxu0 0.0
      %2762 = vmatpush2.msra.mxu0 0.0
      %2763 = vmatprep.subr.mxu0 0.0
      %2764 = vmatpush2.msra.mxu0 0.0
      %2765 = vmatprep.subr.mxu0 0.0
      %2766 = vmatpush2.msra.mxu0 0.0
      %2767 = vmatprep.subr.mxu0 0.0
      %2768 = vmatpush2.msra.mxu0 0.0
      %2769 = vmatprep.subr.mxu0 0.0
      %2770 = vmatpush2.msra.mxu0 0.0
      %2771 = vmatprep.subr.mxu0 0.0
      %2772 = vmatpush2.msra.mxu0 0.0
      %2773 = vmatprep.subr.mxu0 0.0
      %2774 = vmatpush2.msra.mxu0 0.0
      %2775 = vmatprep.subr.mxu0 0.0
      %2776 = vmatpush2.msra.mxu0 0.0
      %2777 = vmatprep.subr.mxu0 0.0
      %2778 = vmatpush2.msra.mxu0 0.0
      %2779 = vmatprep.mubr.f32.mxu0 0.0
      %2780 = vmatmul.mubr.f32.gmra.mxu0 %v2711
      %v2781 = vpop.f32.mrf.mxu0
      %v2782 = vadd.f32 0.0, %v2781
      %v2783 = vpop.f32.mrf.mxu0
      %2784 = vdwg.mxu0
      %v2785 = vadd.f32 %v2519, %v2782
      %v2786 = vld [vmem:[%s5] sm:$0xff]
      %2788 = vset.pattern.permute.xlu0 0
      %2789 = vperm.xlu0 %2788, %v2786
      %v2790 = vpop.permute.xlu0 %2789
      %v2792 = vmul.f32 %v2785, %v2790
      %v2793 = vld [vmem:[%s6] sm:$0xff]
      %2795 = vset.pattern.permute.xlu0 0
      %2796 = vperm.xlu0 %2795, %v2793
      %v2797 = vpop.permute.xlu0 %2796
      %v2799 = vadd.f32 %v2792, %v2797
      %v2800 = vmax.f32 %v2799, 0.0
      %2801 = vst [vmem:[%s296] sm:$0xff] %v2800
      %p2802 = scmp.lt.s32.totalorder %s18, 1
      %s2803 = scalar_select %p2802, %s18, 1
      %s2804 = smul.addr %s2803, 8
      %s2805 = scalar_lea.vmem %s7, %s2804
      // Predicated region
      $region49: #{deform_down.2} parent=47 // pred_check
        %p2806 = pneg %p193
      $region50: #{deform_down.2} parent=47 // pred_check_branch
        %2808 = sbr.rel (%p2806) target = $region52
      $region51: #{deform_down.2} parent=47 // pred_region
        _
      $region52: #{deform_down.2} parent=47 // pred_fallthru
        _
    $region48: #{deform_down.2} parent=5 // pred_fallthru
      _
    %p2809 = scmp.le.s32.totalorder 2, %s13
    // Predicated region
    $region53: #{deform_down.2} parent=5 // pred_check
      %p2810 = pneg %p2809
    $region54: #{deform_down.2} parent=5 // pred_check_branch
      %2812 = sbr.rel (%p2810) target = $region56
    $region55: #{deform_down.2} parent=5 // pred_region
      %s2813 = ssub.s32 %s13, 2
      // Predicated region
      $region57: #{deform_down.2} parent=55 // pred_check
        %p2814 = pneg %p199
      $region58: #{deform_down.2} parent=55 // pred_check_branch
        %2816 = sbr.rel (%p2814) target = $region60
      $region59: #{deform_down.2} parent=55 // pred_region
        %p2817 = scmp.lt.s32.totalorder %s19, 1
        %s2818 = scalar_select %p2817, %s19, 1
        %s2819 = smul.addr %s2818, 8
        %s2820 = scalar_lea.vmem %s7, %s2819
      $region60: #{deform_down.2} parent=55 // pred_fallthru
        _
    $region56: #{deform_down.2} parent=5 // pred_fallthru
      _
  $region6: #{deform_down.2} parent=0 // loop_footer
    %s17 = sadd.s32 1, %s13
  $region7: #{deform_down.2} parent=0 // loop_footer_branch
    %12 = sbr.rel target = $region3
  $region8: #{deform_down.2} parent=0 // loop_exit
    _

// kernel: deform_down.3
$region0: #{deform_down.3}
  #allocation0 [shape = 'u32[]', space=smem, size = 0x4, offset = 0x4, fixed_abs, tag = 'smem constant byte address 0x4 - core index']
  #allocation1 [shape = 'u32[144,128]{1,0:T(1,128)}', space=vmem, size = 0x12000, scoped, tag = 'internal scratch']
  %s0 = inlined_call_operand.vmem [shape: f32[2,8,256], index: 0, kind: input, shape index: {}]
  %s1 = inlined_call_operand.vmem [shape: f32[2,64,8], index: 1, kind: input, shape index: {}]
  %s2 = inlined_call_operand.vmem [shape: f32[18,72], index: 2, kind: input, shape index: {}]
  %s3 = inlined_call_operand.vmem [shape: f32[18,1], index: 3, kind: input, shape index: {}]
  %s4 = inlined_call_operand.vmem [shape: f32[9,8,8], index: 4, kind: input, shape index: {}]
  %s5 = inlined_call_operand.vmem [shape: f32[8,1], index: 5, kind: input, shape index: {}]
  %s6 = inlined_call_operand.vmem [shape: f32[8,1], index: 6, kind: input, shape index: {}]
  %s7 = inlined_call_operand.vmem [shape: f32[2,8,128], index: 7, kind: output, shape index: {}]
  %s8 = sld [smem:[#allocation0]]
  $region61: #{deform_down.3} parent=0
    _
  %s10 = ssub.s32 1, %s8
  %s11 = scalar_select 0, %s10, %s8
  loop: start=0, step=1, limit=4
  $region2: #{deform_down.3} parent=0 // loop_pre_header
    _
  $region3: #{deform_down.3} parent=0 // loop_header
    %s13 = sphi 0, %s17
    %p14 = scmp.ge.s32.totalorder %s13, 4
    %s23 = sphi 0, %s25
    %s26 = sphi 0, %s23
    %s27 = sphi 0, %s26
    %s43 = sphi 0, %s27
    %s49 = sphi 0, %s51
    %s52 = sphi 0, %s49
    %s53 = sphi 0, %s52
    %s69 = sphi 0, %s53
    %s73 = sphi 0, %s73
    %s75 = sphi 0, %s73
    %s76 = sphi 0, %s75
    %s90 = sphi 0, %s76
    %s94 = sphi 0, %s94
    %s96 = sphi 0, %s94
    %s97 = sphi 0, %s96
    %s111 = sphi 0, %s97
    %s115 = sphi 0, %s115
    %s117 = sphi 0, %s115
    %s118 = sphi 0, %s117
    %s132 = sphi 0, %s118
    %s136 = sphi 0, %s136
    %s138 = sphi 0, %s136
    %s139 = sphi 0, %s138
    %s153 = sphi 0, %s139
    %s157 = sphi 0, %s157
    %s159 = sphi 0, %s157
    %s160 = sphi 0, %s159
    %s174 = sphi 0, %s160
    %s180 = sphi 0, %s182
    %s183 = sphi 0, %s180
    %s184 = sphi 0, %s183
    %s200 = sphi 0, %s184
  $region4: #{deform_down.3} parent=0 // loop_header_branch
    %16 = sbr.rel (%p14) target = $region8
  $region5: #{deform_down.3} parent=0 // loop_body
    %s18 = ssub.s32 %s13, 1
    %s19 = ssub.s32 %s13, 2
    %s20 = sadd.s32 %s13, 1
    %s21 = ssub.s32 %s13, %s20
    %p22 = scmp.eq.s32.totalorder %s21, 0
    %s24 = sadd.s32 %s23, 1
    %s25 = scalar_select %p22, %s23, %s24
    %p28 = pneg %p22
    %p29 = scmp.eq.s32.totalorder %s13, 1
    %p30 = por %p28, %p29
    %p31 = scmp.ne.s32.totalorder %s23, %s26
    %p32 = scmp.eq.s32.totalorder %s13, 0
    %p33 = por %p31, %p32
    %p34 = scmp.ne.s32.totalorder %s23, %s26
    %p35 = scmp.eq.s32.totalorder %s18, 1
    %p36 = por %p34, %p35
    %p37 = scmp.ne.s32.totalorder %s26, %s27
    %p38 = scmp.eq.s32.totalorder %s18, 0
    %p39 = por %p37, %p38
    %p40 = scmp.ne.s32.totalorder %s26, %s27
    %p41 = scmp.eq.s32.totalorder %s19, 1
    %p42 = por %p40, %p41
    %p44 = scmp.ne.s32.totalorder %s27, %s43
    %p45 = scmp.eq.s32.totalorder %s19, 0
    %p46 = por %p44, %p45
    %s47 = ssub.s32 %s13, %s20
    %p48 = scmp.eq.s32.totalorder %s47, 0
    %s50 = sadd.s32 %s49, 1
    %s51 = scalar_select %p48, %s49, %s50
    %p54 = pneg %p48
    %p55 = scmp.eq.s32.totalorder %s13, 1
    %p56 = por %p54, %p55
    %p57 = scmp.ne.s32.totalorder %s49, %s52
    %p58 = scmp.eq.s32.totalorder %s13, 0
    %p59 = por %p57, %p58
    %p60 = scmp.ne.s32.totalorder %s49, %s52
    %p61 = scmp.eq.s32.totalorder %s18, 1
    %p62 = por %p60, %p61
    %p63 = scmp.ne.s32.totalorder %s52, %s53
    %p64 = scmp.eq.s32.totalorder %s18, 0
    %p65 = por %p63, %p64
    %p66 = scmp.ne.s32.totalorder %s52, %s53
    %p67 = scmp.eq.s32.totalorder %s19, 1
    %p68 = por %p66, %p67
    %p70 = scmp.ne.s32.totalorder %s53, %s69
    %p71 = scmp.eq.s32.totalorder %s19, 0
    %p72 = por %p70, %p71
    %s74 = sadd.s32 %s73, 1
    %p77 = scmp.eq.s32.totalorder %s13, 1
    %p78 = scmp.ne.s32.totalorder %s73, %s75
    %p79 = scmp.eq.s32.totalorder %s13, 0
    %p80 = por %p78, %p79
    %p81 = scmp.ne.s32.totalorder %s73, %s75
    %p82 = scmp.eq.s32.totalorder %s18, 1
    %p83 = por %p81, %p82
    %p84 = scmp.ne.s32.totalorder %s75, %s76
    %p85 = scmp.eq.s32.totalorder %s18, 0
    %p86 = por %p84, %p85
    %p87 = scmp.ne.s32.totalorder %s75, %s76
    %p88 = scmp.eq.s32.totalorder %s19, 1
    %p89 = por %p87, %p88
    %p91 = scmp.ne.s32.totalorder %s76, %s90
    %p92 = scmp.eq.s32.totalorder %s19, 0
    %p93 = por %p91, %p92
    %s95 = sadd.s32 %s94, 1
    %p98 = scmp.eq.s32.totalorder %s13, 1
    %p99 = scmp.ne.s32.totalorder %s94, %s96
    %p100 = scmp.eq.s32.totalorder %s13, 0
    %p101 = por %p99, %p100
    %p102 = scmp.ne.s32.totalorder %s94, %s96
    %p103 = scmp.eq.s32.totalorder %s18, 1
    %p104 = por %p102, %p103
    %p105 = scmp.ne.s32.totalorder %s96, %s97
    %p106 = scmp.eq.s32.totalorder %s18, 0
    %p107 = por %p105, %p106
    %p108 = scmp.ne.s32.totalorder %s96, %s97
    %p109 = scmp.eq.s32.totalorder %s19, 1
    %p110 = por %p108, %p109
    %p112 = scmp.ne.s32.totalorder %s97, %s111
    %p113 = scmp.eq.s32.totalorder %s19, 0
    %p114 = por %p112, %p113
    %s116 = sadd.s32 %s115, 1
    %p119 = scmp.eq.s32.totalorder %s13, 1
    %p120 = scmp.ne.s32.totalorder %s115, %s117
    %p121 = scmp.eq.s32.totalorder %s13, 0
    %p122 = por %p120, %p121
    %p123 = scmp.ne.s32.totalorder %s115, %s117
    %p124 = scmp.eq.s32.totalorder %s18, 1
    %p125 = por %p123, %p124
    %p126 = scmp.ne.s32.totalorder %s117, %s118
    %p127 = scmp.eq.s32.totalorder %s18, 0
    %p128 = por %p126, %p127
    %p129 = scmp.ne.s32.totalorder %s117, %s118
    %p130 = scmp.eq.s32.totalorder %s19, 1
    %p131 = por %p129, %p130
    %p133 = scmp.ne.s32.totalorder %s118, %s132
    %p134 = scmp.eq.s32.totalorder %s19, 0
    %p135 = por %p133, %p134
    %s137 = sadd.s32 %s136, 1
    %p140 = scmp.eq.s32.totalorder %s13, 1
    %p141 = scmp.ne.s32.totalorder %s136, %s138
    %p142 = scmp.eq.s32.totalorder %s13, 0
    %p143 = por %p141, %p142
    %p144 = scmp.ne.s32.totalorder %s136, %s138
    %p145 = scmp.eq.s32.totalorder %s18, 1
    %p146 = por %p144, %p145
    %p147 = scmp.ne.s32.totalorder %s138, %s139
    %p148 = scmp.eq.s32.totalorder %s18, 0
    %p149 = por %p147, %p148
    %p150 = scmp.ne.s32.totalorder %s138, %s139
    %p151 = scmp.eq.s32.totalorder %s19, 1
    %p152 = por %p150, %p151
    %p154 = scmp.ne.s32.totalorder %s139, %s153
    %p155 = scmp.eq.s32.totalorder %s19, 0
    %p156 = por %p154, %p155
    %s158 = sadd.s32 %s157, 1
    %p161 = scmp.eq.s32.totalorder %s13, 1
    %p162 = scmp.ne.s32.totalorder %s157, %s159
    %p163 = scmp.eq.s32.totalorder %s13, 0
    %p164 = por %p162, %p163
    %p165 = scmp.ne.s32.totalorder %s157, %s159
    %p166 = scmp.eq.s32.totalorder %s18, 1
    %p167 = por %p165, %p166
    %p168 = scmp.ne.s32.totalorder %s159, %s160
    %p169 = scmp.eq.s32.totalorder %s18, 0
    %p170 = por %p168, %p169
    %p171 = scmp.ne.s32.totalorder %s159, %s160
    %p172 = scmp.eq.s32.totalorder %s19, 1
    %p173 = por %p171, %p172
    %p175 = scmp.ne.s32.totalorder %s160, %s174
    %p176 = scmp.eq.s32.totalorder %s19, 0
    %p177 = por %p175, %p176
    %s178 = ssub.s32 %s13, %s20
    %p179 = scmp.eq.s32.totalorder %s178, 0
    %s181 = sadd.s32 %s180, 1
    %s182 = scalar_select %p179, %s180, %s181
    %p185 = pneg %p179
    %p186 = scmp.eq.s32.totalorder %s13, 1
    %p187 = por %p185, %p186
    %p188 = scmp.ne.s32.totalorder %s180, %s183
    %p189 = scmp.eq.s32.totalorder %s13, 0
    %p190 = por %p188, %p189
    %p191 = scmp.ne.s32.totalorder %s180, %s183
    %p192 = scmp.eq.s32.totalorder %s18, 1
    %p193 = por %p191, %p192
    %p194 = scmp.ne.s32.totalorder %s183, %s184
    %p195 = scmp.eq.s32.totalorder %s18, 0
    %p196 = por %p194, %p195
    %p197 = scmp.ne.s32.totalorder %s183, %s184
    %p198 = scmp.eq.s32.totalorder %s19, 1
    %p199 = por %p197, %p198
    %p201 = scmp.ne.s32.totalorder %s184, %s200
    %p202 = scmp.eq.s32.totalorder %s19, 0
    %p203 = por %p201, %p202
    %p204 = scmp.le.s32.totalorder 1, %s13
    %p205 = scmp.lt.s32.totalorder %s13, 3
    %p206 = pnand %p204, %p205
    %p207 = pneg %p206
    // Predicated region
    $region9: #{deform_down.3} parent=5 // pred_check
      _
    $region10: #{deform_down.3} parent=5 // pred_check_branch
      %209 = sbr.rel (%p206) target = $region12
    $region11: #{deform_down.3} parent=5 // pred_region
      %s210 = ssub.s32 %s13, 1
      // Predicated region
      $region13: #{deform_down.3} parent=11 // pred_check
        %p211 = pneg %p86
      $region14: #{deform_down.3} parent=11 // pred_check_branch
        %213 = sbr.rel (%p211) target = $region16
      $region15: #{deform_down.3} parent=11 // pred_region
        _
      $region16: #{deform_down.3} parent=11 // pred_fallthru
        _
      // Predicated region
      $region17: #{deform_down.3} parent=11 // pred_check
        %p214 = pneg %p107
      $region18: #{deform_down.3} parent=11 // pred_check_branch
        %216 = sbr.rel (%p214) target = $region20
      $region19: #{deform_down.3} parent=11 // pred_region
        _
      $region20: #{deform_down.3} parent=11 // pred_fallthru
        _
      // Predicated region
      $region21: #{deform_down.3} parent=11 // pred_check
        %p217 = pneg %p128
      $region22: #{deform_down.3} parent=11 // pred_check_branch
        %219 = sbr.rel (%p217) target = $region24
      $region23: #{deform_down.3} parent=11 // pred_region
        _
      $region24: #{deform_down.3} parent=11 // pred_fallthru
        _
      // Predicated region
      $region25: #{deform_down.3} parent=11 // pred_check
        %p220 = pneg %p149
      $region26: #{deform_down.3} parent=11 // pred_check_branch
        %222 = sbr.rel (%p220) target = $region28
      $region27: #{deform_down.3} parent=11 // pred_region
        _
      $region28: #{deform_down.3} parent=11 // pred_fallthru
        _
      // Predicated region
      $region29: #{deform_down.3} parent=11 // pred_check
        %p223 = pneg %p170
      $region30: #{deform_down.3} parent=11 // pred_check_branch
        %225 = sbr.rel (%p223) target = $region32
      $region31: #{deform_down.3} parent=11 // pred_region
        _
      $region32: #{deform_down.3} parent=11 // pred_fallthru
        _
    $region12: #{deform_down.3} parent=5 // pred_fallthru
      _
    %p226 = scmp.lt.s32.totalorder %s13, 2
    // Predicated region
    $region33: #{deform_down.3} parent=5 // pred_check
      %p227 = pneg %p226
    $region34: #{deform_down.3} parent=5 // pred_check_branch
      %229 = sbr.rel (%p227) target = $region36
    $region35: #{deform_down.3} parent=5 // pred_region
      // Predicated region
      $region37: #{deform_down.3} parent=35 // pred_check
        %p230 = pneg %p33
      $region38: #{deform_down.3} parent=35 // pred_check_branch
        %232 = sbr.rel (%p230) target = $region40
      $region39: #{deform_down.3} parent=35 // pred_region
        %p233 = scmp.lt.s32.totalorder %s13, 1
        %s234 = scalar_select %p233, %s13, 1
        %s235 = smul.addr %s234, 2
        %s236 = smul.addr %s235, 8
        %s237 = scalar_lea.vmem %s0, %s236
      $region40: #{deform_down.3} parent=35 // pred_fallthru
        _
      // Predicated region
      $region41: #{deform_down.3} parent=35 // pred_check
        %p238 = pneg %p59
      $region42: #{deform_down.3} parent=35 // pred_check_branch
        %240 = sbr.rel (%p238) target = $region44
      $region43: #{deform_down.3} parent=35 // pred_region
        %p241 = scmp.lt.s32.totalorder %s13, 1
        %s242 = scalar_select %p241, %s13, 1
        %s243 = smul.addr %s242, 8
        %s244 = smul.addr %s243, 8
        %s245 = scalar_lea.vmem %s1, %s244
      $region44: #{deform_down.3} parent=35 // pred_fallthru
        _
    $region36: #{deform_down.3} parent=5 // pred_fallthru
      _
    %p246 = scmp.le.s32.totalorder 1, %s13
    %p247 = scmp.lt.s32.totalorder %s13, 3
    %p248 = pnand %p246, %p247
    %p249 = pneg %p248
    // Predicated region
    $region45: #{deform_down.3} parent=5 // pred_check
      _
    $region46: #{deform_down.3} parent=5 // pred_check_branch
      %251 = sbr.rel (%p248) target = $region48
    $region47: #{deform_down.3} parent=5 // pred_region
      %s252 = ssub.s32 %s13, 1
      %p253 = scmp.lt.s32.totalorder %s18, 1
      %s254 = scalar_select %p253, %s18, 1
      %s255 = smul.addr %s254, 2
      %s256 = smul.addr %s255, 8
      %s257 = scalar_lea.vmem %s0, %s256
      %p258 = pneg %p39
      %p259 = pneg %p36
      %p260 = scmp.lt.s32.totalorder %s18, 1
      %s261 = scalar_select %p260, %s18, 1
      %s262 = smul.addr %s261, 8
      %s263 = smul.addr %s262, 8
      %s264 = scalar_lea.vmem %s1, %s263
      %p265 = pneg %p65
      %p266 = pneg %p62
      %p267 = pneg %p86
      %p268 = pneg %p83
      %p269 = pneg %p107
      %p270 = pneg %p104
      %p271 = pneg %p128
      %p272 = pneg %p125
      %p273 = pneg %p149
      %p274 = pneg %p146
      %p275 = pneg %p170
      %p276 = pneg %p167
      %p277 = pneg %p196
      %p278 = pneg %p193
      %p279 = scmp.lt.s32.totalorder %s18, 1
      %s280 = scalar_select %p279, %s18, 1
      %s281 = smul.addr %s280, 8
      %s282 = scalar_lea.vmem %s7, %s281
      %p283 = scmp.lt.s32.totalorder %s18, 1
      %s284 = scalar_select %p283, %s18, 1
      %s285 = smul.addr %s284, 2
      %s286 = smul.addr %s285, 8
      %s287 = scalar_lea.vmem %s0, %s286
      %p288 = scmp.lt.s32.totalorder %s18, 1
      %s289 = scalar_select %p288, %s18, 1
      %s290 = smul.addr %s289, 8
      %s291 = smul.addr %s290, 8
      %s292 = scalar_lea.vmem %s1, %s291
      %p293 = scmp.lt.s32.totalorder %s18, 1
      %s294 = scalar_select %p293, %s18, 1
      %s295 = smul.addr %s294, 8
      %s296 = scalar_lea.vmem %s7, %s295
      %v297 = vld [vmem:[%s287] sm:$0xff]
      %v298 = vld [vmem:[%s287 + $0x8] sm:$0xff]
      %v299 = vld [vmem:[%s292] sm:$0xff]
      %v300 = vld [vmem:[%s292 + $0x8] sm:$0xff]
      %v301 = vld [vmem:[%s292 + $0x10] sm:$0xff]
      %v302 = vld [vmem:[%s292 + $0x18] sm:$0xff]
      %v303 = vld [vmem:[%s292 + $0x20] sm:$0xff]
      %v304 = vld [vmem:[%s292 + $0x28] sm:$0xff]
      %v305 = vld [vmem:[%s292 + $0x30] sm:$0xff]
      %v306 = vld [vmem:[%s292 + $0x38] sm:$0xff]
      %309 = vrot.lane.b32.xlu0 %v297, 127
      %v310 = vpop.permute.xlu0 %309
      %311 = vrot.lane.b32.xlu0 %v298, 127
      %v312 = vpop.permute.xlu0 %311
      %vm313 = vcmask 1039360
      %v314 = vsel %vm313, %v310, %v312
      %316 = vrot.lane.b32.xlu0 %v297, 126
      %v317 = vpop.permute.xlu0 %316
      %318 = vrot.lane.b32.xlu0 %v298, 126
      %v319 = vpop.permute.xlu0 %318
      %vm320 = vcmask 1031168
      %v321 = vsel %vm320, %v317, %v319
      %323 = vrot.lane.b32.xlu0 %v297, 118
      %v324 = vpop.permute.xlu0 %323
      %325 = vrot.lane.b32.xlu0 %v298, 118
      %v326 = vpop.permute.xlu0 %325
      %vm327 = vcmask 965632
      %v328 = vsel %vm327, %v324, %v326
      %330 = vrot.lane.b32.xlu0 %v297, 117
      %v331 = vpop.permute.xlu0 %330
      %332 = vrot.lane.b32.xlu0 %v298, 117
      %v333 = vpop.permute.xlu0 %332
      %vm334 = vcmask 957440
      %v335 = vsel %vm334, %v331, %v333
      %337 = vrot.lane.b32.xlu0 %v297, 116
      %v338 = vpop.permute.xlu0 %337
      %339 = vrot.lane.b32.xlu0 %v298, 116
      %v340 = vpop.permute.xlu0 %339
      %vm341 = vcmask 949248
      %v342 = vsel %vm341, %v338, %v340
      %344 = vrot.lane.b32.xlu0 %v297, 108
      %v345 = vpop.permute.xlu0 %344
      %346 = vrot.lane.b32.xlu0 %v298, 108
      %v347 = vpop.permute.xlu0 %346
      %vm348 = vcmask 883712
      %v349 = vsel %vm348, %v345, %v347
      %351 = vrot.lane.b32.xlu0 %v297, 107
      %v352 = vpop.permute.xlu0 %351
      %353 = vrot.lane.b32.xlu0 %v298, 107
      %v354 = vpop.permute.xlu0 %353
      %vm355 = vcmask 875520
      %v356 = vsel %vm355, %v352, %v354
      %358 = vrot.lane.b32.xlu0 %v297, 106
      %v359 = vpop.permute.xlu0 %358
      %360 = vrot.lane.b32.xlu0 %v298, 106
      %v361 = vpop.permute.xlu0 %360
      %vm362 = vcmask 867328
      %v363 = vsel %vm362, %v359, %v361
      %v365 = vld [vmem:[%s2] sm:$0xff]
      %v366 = vld [vmem:[%s2 + $0x8] sm:$0xff]
      %v367 = vld [vmem:[%s2 + $0x10] sm:$0x3]
      %v368 = vld [vmem:[%s3] sm:$0xff]
      %v369 = vld [vmem:[%s3 + $0x8] sm:$0xff]
      %v370 = vld [vmem:[%s3 + $0x10] sm:$0x3]
      %372 = vset.pattern.permute.xlu0 0
      %373 = vperm.xlu0 %372, %v368
      %v374 = vpop.permute.xlu0 %373
      %377 = vset.pattern.permute.xlu0 0
      %378 = vperm.xlu0 %377, %v369
      %v379 = vpop.permute.xlu0 %378
      %382 = vset.pattern.permute.xlu0 0
      %383 = vperm.xlu0 %382, %v370
      %v384 = vpop.permute.xlu0 %383
      %vm386 = vcmask 588800
      %v388 = vsel %vm386, %v365, 0
      %v391 = vsel %vm386, %v366, 0
      %v394 = vsel %vm386, %v367, 0
      %396 = vmatprep.subr.mxu0 0.0
      %397 = vmatpush1.msra.mxu0 0.0
      %398 = vmatprep.subr.mxu0 0.0
      %399 = vmatpush1.msra.mxu0 0.0
      %400 = vmatprep.subr.mxu0 0.0
      %401 = vmatpush1.msra.mxu0 0.0
      %402 = vmatprep.subr.mxu0 0.0
      %403 = vmatpush1.msra.mxu0 0.0
      %404 = vmatprep.subr.mxu0 0.0
      %405 = vmatpush1.msra.mxu0 0.0
      %406 = vmatprep.subr.mxu0 0.0
      %407 = vmatpush1.msra.mxu0 0.0
      %408 = vmatprep.subr.mxu0 0.0
      %409 = vmatpush1.msra.mxu0 0.0
      %410 = vmatprep.subr.mxu0 0.0
      %411 = vmatpush1.msra.mxu0 %v363
      %412 = vmatprep.subr.mxu0 0.0
      %413 = vmatpush1.msra.mxu0 %v356
      %414 = vmatprep.subr.mxu0 0.0
      %415 = vmatpush1.msra.mxu0 %v349
      %416 = vmatprep.subr.mxu0 0.0
      %417 = vmatpush1.msra.mxu0 %v342
      %418 = vmatprep.subr.mxu0 0.0
      %419 = vmatpush1.msra.mxu0 %v335
      %420 = vmatprep.subr.mxu0 0.0
      %421 = vmatpush1.msra.mxu0 %v328
      %422 = vmatprep.subr.mxu0 0.0
      %423 = vmatpush1.msra.mxu0 %v321
      %424 = vmatprep.subr.mxu0 0.0
      %425 = vmatpush1.msra.mxu0 %v314
      %426 = vmatprep.subr.mxu0 0.0
      %427 = vmatpush1.msra.mxu0 %v297
      %428 = vmatprep.subr.mxu0 0.0
      %429 = vmatpush2.msra.mxu0 0.0
      %430 = vmatprep.subr.mxu0 0.0
      %431 = vmatpush2.msra.mxu0 0.0
      %432 = vmatprep.subr.mxu0 0.0
      %433 = vmatpush2.msra.mxu0 0.0
      %434 = vmatprep.subr.mxu0 0.0
      %435 = vmatpush2.msra.mxu0 0.0
      %436 = vmatprep.subr.mxu0 0.0
      %437 = vmatpush2.msra.mxu0 0.0
      %438 = vmatprep.subr.mxu0 0.0
      %439 = vmatpush2.msra.mxu0 0.0
      %440 = vmatprep.subr.mxu0 0.0
      %441 = vmatpush2.msra.mxu0 0.0
      %442 = vmatprep.subr.mxu0 0.0
      %443 = vmatpush2.msra.mxu0 0.0
      %444 = vmatprep.subr.mxu0 0.0
      %445 = vmatpush2.msra.mxu0 0.0
      %446 = vmatprep.subr.mxu0 0.0
      %447 = vmatpush2.msra.mxu0 0.0
      %448 = vmatprep.subr.mxu0 0.0
      %449 = vmatpush2.msra.mxu0 0.0
      %450 = vmatprep.subr.mxu0 0.0
      %451 = vmatpush2.msra.mxu0 0.0
      %452 = vmatprep.subr.mxu0 0.0
      %453 = vmatpush2.msra.mxu0 0.0
      %454 = vmatprep.subr.mxu0 0.0
      %455 = vmatpush2.msra.mxu0 0.0
      %456 = vmatprep.subr.mxu0 0.0
      %457 = vmatpush2.msra.mxu0 0.0
      %458 = vmatprep.subr.mxu0 0.0
      %459 = vmatpush2.msra.mxu0 0.0
      %460 = vmatprep.mubr.f32.mxu0 0.0
      %461 = vmatmul.mubr.f32.gmra.mxu0 %v388
      %v462 = vpop.f32.mrf.mxu0
      %v463 = vadd.f32 %v374, %v462
      %v464 = vpop.f32.mrf.mxu0
      %465 = vmatprep.mubr.f32.mxu0 0.0
      %466 = vmatmul.mubr.f32.gmra.mxu0 %v391
      %v467 = vpop.f32.mrf.mxu0
      %v468 = vadd.f32 %v379, %v467
      %v469 = vpop.f32.mrf.mxu0
      %470 = vmatprep.mubr.f32.mxu0 0.0
      %471 = vmatmul.mubr.f32.gmra.mxu0 %v394
      %v472 = vpop.f32.mrf.mxu0
      %v473 = vadd.f32 %v384, %v472
      %v474 = vpop.f32.mrf.mxu0
      %475 = vdwg.mxu0
      %v476 = vlaneseq
      %v477 = vand.u32 %v476, 127
      %v478 = vcvt.s32.f32 %v477
      %v479 = vrcp.pop 10.0
      %v480 = vmul.f32 %v478, %v479
      %v481 = vfloor.f32 %v480
      %v482 = vmul.f32 %v481, 10.0
      %v483 = vsub.f32 %v478, %v482
      %v484 = vlaneseq
      %v485 = vshrl.u32 %v484, 7
      %v486 = vcvt.s32.f32 %v485
      %v487 = vadd.f32 %v481, -1.0
      %v488 = vadd.f32 %v487, %v463
      %v489 = vadd.f32 %v483, -1.0
      %v490 = vadd.f32 %v489, %v468
      %v491 = vfloor.f32 %v488
      %v492 = vfloor.f32 %v490
      %v493 = vmax.f32 %v491, 0.0
      %v494 = vmin.f32 %v493, 7.0
      %v495 = vadd.f32 %v491, 1.0
      %v496 = vmax.f32 %v495, 0.0
      %v497 = vmin.f32 %v496, 7.0
      %v498 = vmax.f32 %v492, 0.0
      %v499 = vmin.f32 %v498, 7.0
      %v500 = vadd.f32 %v492, 1.0
      %v501 = vmax.f32 %v500, 0.0
      %v502 = vmin.f32 %v501, 7.0
      %v503 = vmax.f32 %v488, 0.0
      %v504 = vmin.f32 %v503, 7.0
      %v505 = vmax.f32 %v490, 0.0
      %v506 = vmin.f32 %v505, 7.0
      %v507 = vsub.f32 %v494, %v504
      %v508 = vadd.f32 %v507, 1.0
      %v509 = vsub.f32 %v497, %v504
      %v510 = vsub.f32 1.0, %v509
      %v511 = vsub.f32 %v499, %v506
      %v512 = vadd.f32 %v511, 1.0
      %v513 = vsub.f32 %v502, %v506
      %v514 = vsub.f32 1.0, %v513
      %v515 = vlaneseq
      %v516 = vshrl.u32 %v515, 7
      %v517 = vsub.s32 0, %v516
      %v518 = vrot.slane %v494, %v517
      %vm519 = vcmp.eq.f32.partialorder %v486, %v518
      %v520 = vlaneseq
      %v521 = vshrl.u32 %v520, 7
      %v522 = vsub.s32 0, %v521
      %v523 = vrot.slane %v508, %v522
      %v524 = vsel %vm519, %v523, 0.0
      %v525 = vlaneseq
      %v526 = vshrl.u32 %v525, 7
      %v527 = vsub.s32 0, %v526
      %v528 = vrot.slane %v497, %v527
      %vm529 = vcmp.eq.f32.partialorder %v486, %v528
      %v530 = vlaneseq
      %v531 = vshrl.u32 %v530, 7
      %v532 = vsub.s32 0, %v531
      %v533 = vrot.slane %v510, %v532
      %v534 = vsel %vm529, %v533, 0.0
      %v535 = vadd.f32 %v524, %v534
      %v536 = vlaneseq
      %v537 = vshrl.u32 %v536, 7
      %v538 = vsub.s32 1, %v537
      %v539 = vrot.slane %v499, %v538
      %vm540 = vcmp.eq.f32.partialorder %v486, %v539
      %v541 = vlaneseq
      %v542 = vshrl.u32 %v541, 7
      %v543 = vsub.s32 1, %v542
      %v544 = vrot.slane %v512, %v543
      %v545 = vsel %vm540, %v544, 0.0
      %v546 = vlaneseq
      %v547 = vshrl.u32 %v546, 7
      %v548 = vsub.s32 1, %v547
      %v549 = vrot.slane %v502, %v548
      %vm550 = vcmp.eq.f32.partialorder %v486, %v549
      %v551 = vlaneseq
      %v552 = vshrl.u32 %v551, 7
      %v553 = vsub.s32 1, %v552
      %v554 = vrot.slane %v514, %v553
      %v555 = vsel %vm550, %v554, 0.0
      %v556 = vadd.f32 %v545, %v555
      %vm557 = vcmask 64512
      %v559 = vsel %vm557, %v299, 0
      %v562 = vsel %vm557, %v300, 0
      %v565 = vsel %vm557, %v301, 0
      %v568 = vsel %vm557, %v302, 0
      %v571 = vsel %vm557, %v303, 0
      %v574 = vsel %vm557, %v304, 0
      %v577 = vsel %vm557, %v305, 0
      %v580 = vsel %vm557, %v306, 0
      %582 = vmatprep.subr.mxu0 0.0
      %583 = vmatpush1.msra.mxu0 0.0
      %584 = vmatprep.subr.mxu0 0.0
      %585 = vmatpush1.msra.mxu0 0.0
      %586 = vmatprep.subr.mxu0 0.0
      %587 = vmatpush1.msra.mxu0 0.0
      %588 = vmatprep.subr.mxu0 0.0
      %589 = vmatpush1.msra.mxu0 0.0
      %590 = vmatprep.subr.mxu0 0.0
      %591 = vmatpush1.msra.mxu0 0.0
      %592 = vmatprep.subr.mxu0 0.0
      %593 = vmatpush1.msra.mxu0 0.0
      %594 = vmatprep.subr.mxu0 0.0
      %595 = vmatpush1.msra.mxu0 0.0
      %596 = vmatprep.subr.mxu0 0.0
      %597 = vmatpush1.msra.mxu0 0.0
      %598 = vmatprep.subr.mxu0 0.0
      %599 = vmatpush1.msra.mxu0 0.0
      %600 = vmatprep.subr.mxu0 0.0
      %601 = vmatpush1.msra.mxu0 0.0
      %602 = vmatprep.subr.mxu0 0.0
      %603 = vmatpush1.msra.mxu0 0.0
      %604 = vmatprep.subr.mxu0 0.0
      %605 = vmatpush1.msra.mxu0 0.0
      %606 = vmatprep.subr.mxu0 0.0
      %607 = vmatpush1.msra.mxu0 0.0
      %608 = vmatprep.subr.mxu0 0.0
      %609 = vmatpush1.msra.mxu0 0.0
      %610 = vmatprep.subr.mxu0 0.0
      %611 = vmatpush1.msra.mxu0 0.0
      %612 = vmatprep.subr.mxu0 0.0
      %613 = vmatpush1.msra.mxu0 %v556
      %614 = vmatprep.subr.mxu0 0.0
      %615 = vmatpush2.msra.mxu0 0.0
      %616 = vmatprep.subr.mxu0 0.0
      %617 = vmatpush2.msra.mxu0 0.0
      %618 = vmatprep.subr.mxu0 0.0
      %619 = vmatpush2.msra.mxu0 0.0
      %620 = vmatprep.subr.mxu0 0.0
      %621 = vmatpush2.msra.mxu0 0.0
      %622 = vmatprep.subr.mxu0 0.0
      %623 = vmatpush2.msra.mxu0 0.0
      %624 = vmatprep.subr.mxu0 0.0
      %625 = vmatpush2.msra.mxu0 0.0
      %626 = vmatprep.subr.mxu0 0.0
      %627 = vmatpush2.msra.mxu0 0.0
      %628 = vmatprep.subr.mxu0 0.0
      %629 = vmatpush2.msra.mxu0 0.0
      %630 = vmatprep.subr.mxu0 0.0
      %631 = vmatpush2.msra.mxu0 0.0
      %632 = vmatprep.subr.mxu0 0.0
      %633 = vmatpush2.msra.mxu0 0.0
      %634 = vmatprep.subr.mxu0 0.0
      %635 = vmatpush2.msra.mxu0 0.0
      %636 = vmatprep.subr.mxu0 0.0
      %637 = vmatpush2.msra.mxu0 0.0
      %638 = vmatprep.subr.mxu0 0.0
      %639 = vmatpush2.msra.mxu0 0.0
      %640 = vmatprep.subr.mxu0 0.0
      %641 = vmatpush2.msra.mxu0 0.0
      %642 = vmatprep.subr.mxu0 0.0
      %643 = vmatpush2.msra.mxu0 0.0
      %644 = vmatprep.subr.mxu0 0.0
      %645 = vmatpush2.msra.mxu0 0.0
      %646 = vmatprep.mubr.f32.mxu0 0.0
      %647 = vmatmul.mubr.f32.gmra.mxu0 %v559
      %v648 = vpop.f32.mrf.mxu0
      %v649 = vadd.f32 0.0, %v648
      %v650 = vpop.f32.mrf.mxu0
      %651 = vmatprep.mubr.f32.mxu0 0.0
      %652 = vmatmul.mubr.f32.gmra.mxu0 %v562
      %v653 = vpop.f32.mrf.mxu0
      %v654 = vadd.f32 0.0, %v653
      %v655 = vpop.f32.mrf.mxu0
      %656 = vmatprep.mubr.f32.mxu0 0.0
      %657 = vmatmul.mubr.f32.gmra.mxu0 %v565
      %v658 = vpop.f32.mrf.mxu0
      %v659 = vadd.f32 0.0, %v658
      %v660 = vpop.f32.mrf.mxu0
      %661 = vmatprep.mubr.f32.mxu0 0.0
      %662 = vmatmul.mubr.f32.gmra.mxu0 %v568
      %v663 = vpop.f32.mrf.mxu0
      %v664 = vadd.f32 0.0, %v663
      %v665 = vpop.f32.mrf.mxu0
      %666 = vmatprep.mubr.f32.mxu0 0.0
      %667 = vmatmul.mubr.f32.gmra.mxu0 %v571
      %v668 = vpop.f32.mrf.mxu0
      %v669 = vadd.f32 0.0, %v668
      %v670 = vpop.f32.mrf.mxu0
      %671 = vmatprep.mubr.f32.mxu0 0.0
      %672 = vmatmul.mubr.f32.gmra.mxu0 %v574
      %v673 = vpop.f32.mrf.mxu0
      %v674 = vadd.f32 0.0, %v673
      %v675 = vpop.f32.mrf.mxu0
      %676 = vmatprep.mubr.f32.mxu0 0.0
      %677 = vmatmul.mubr.f32.gmra.mxu0 %v577
      %v678 = vpop.f32.mrf.mxu0
      %v679 = vadd.f32 0.0, %v678
      %v680 = vpop.f32.mrf.mxu0
      %681 = vmatprep.mubr.f32.mxu0 0.0
      %682 = vmatmul.mubr.f32.gmra.mxu0 %v580
      %v683 = vpop.f32.mrf.mxu0
      %v684 = vadd.f32 0.0, %v683
      %v685 = vpop.f32.mrf.mxu0
      %686 = vdwg.mxu0
      %v687 = vmul.f32 %v649, %v535
      %v688 = vmul.f32 %v654, %v535
      %v689 = vmul.f32 %v659, %v535
      %v690 = vmul.f32 %v664, %v535
      %v691 = vmul.f32 %v669, %v535
      %v692 = vmul.f32 %v674, %v535
      %v693 = vmul.f32 %v679, %v535
      %v694 = vmul.f32 %v684, %v535
      %v695 = vrot.slane %v687, 4
      %v696 = vadd.f32 %v687, %v695
      %v697 = vrot.slane %v696, 2
      %v698 = vadd.f32 %v696, %v697
      %v699 = vrot.slane %v698, 1
      %v700 = vadd.f32 %v698, %v699
      %v701 = vrot.slane %v688, 4
      %v702 = vadd.f32 %v688, %v701
      %v703 = vrot.slane %v702, 2
      %v704 = vadd.f32 %v702, %v703
      %v705 = vrot.slane %v704, 1
      %v706 = vadd.f32 %v704, %v705
      %v707 = vrot.slane %v689, 4
      %v708 = vadd.f32 %v689, %v707
      %v709 = vrot.slane %v708, 2
      %v710 = vadd.f32 %v708, %v709
      %v711 = vrot.slane %v710, 1
      %v712 = vadd.f32 %v710, %v711
      %v713 = vrot.slane %v690, 4
      %v714 = vadd.f32 %v690, %v713
      %v715 = vrot.slane %v714, 2
      %v716 = vadd.f32 %v714, %v715
      %v717 = vrot.slane %v716, 1
      %v718 = vadd.f32 %v716, %v717
      %v719 = vrot.slane %v691, 4
      %v720 = vadd.f32 %v691, %v719
      %v721 = vrot.slane %v720, 2
      %v722 = vadd.f32 %v720, %v721
      %v723 = vrot.slane %v722, 1
      %v724 = vadd.f32 %v722, %v723
      %v725 = vrot.slane %v692, 4
      %v726 = vadd.f32 %v692, %v725
      %v727 = vrot.slane %v726, 2
      %v728 = vadd.f32 %v726, %v727
      %v729 = vrot.slane %v728, 1
      %v730 = vadd.f32 %v728, %v729
      %v731 = vrot.slane %v693, 4
      %v732 = vadd.f32 %v693, %v731
      %v733 = vrot.slane %v732, 2
      %v734 = vadd.f32 %v732, %v733
      %v735 = vrot.slane %v734, 1
      %v736 = vadd.f32 %v734, %v735
      %v737 = vrot.slane %v694, 4
      %v738 = vadd.f32 %v694, %v737
      %v739 = vrot.slane %v738, 2
      %v740 = vadd.f32 %v738, %v739
      %v741 = vrot.slane %v740, 1
      %v742 = vadd.f32 %v740, %v741
      %v743 = vld [vmem:[%s4] sm:$0xff]
      %v744 = vadd.f32 %v483, 0.0
      %v745 = vadd.f32 %v744, %v468
      %v746 = vfloor.f32 %v745
      %v747 = vmax.f32 %v746, 0.0
      %v748 = vmin.f32 %v747, 7.0
      %v749 = vadd.f32 %v746, 1.0
      %v750 = vmax.f32 %v749, 0.0
      %v751 = vmin.f32 %v750, 7.0
      %v752 = vmax.f32 %v745, 0.0
      %v753 = vmin.f32 %v752, 7.0
      %v754 = vsub.f32 %v748, %v753
      %v755 = vadd.f32 %v754, 1.0
      %v756 = vsub.f32 %v751, %v753
      %v757 = vsub.f32 1.0, %v756
      %v758 = vlaneseq
      %v759 = vshrl.u32 %v758, 7
      %v760 = vsub.s32 1, %v759
      %v761 = vrot.slane %v494, %v760
      %vm762 = vcmp.eq.f32.partialorder %v486, %v761
      %v763 = vlaneseq
      %v764 = vshrl.u32 %v763, 7
      %v765 = vsub.s32 1, %v764
      %v766 = vrot.slane %v508, %v765
      %v767 = vsel %vm762, %v766, 0.0
      %v768 = vlaneseq
      %v769 = vshrl.u32 %v768, 7
      %v770 = vsub.s32 1, %v769
      %v771 = vrot.slane %v497, %v770
      %vm772 = vcmp.eq.f32.partialorder %v486, %v771
      %v773 = vlaneseq
      %v774 = vshrl.u32 %v773, 7
      %v775 = vsub.s32 1, %v774
      %v776 = vrot.slane %v510, %v775
      %v777 = vsel %vm772, %v776, 0.0
      %v778 = vadd.f32 %v767, %v777
      %v779 = vlaneseq
      %v780 = vshrl.u32 %v779, 7
      %v781 = vsub.s32 2, %v780
      %v782 = vrot.slane %v748, %v781
      %vm783 = vcmp.eq.f32.partialorder %v486, %v782
      %v784 = vlaneseq
      %v785 = vshrl.u32 %v784, 7
      %v786 = vsub.s32 2, %v785
      %v787 = vrot.slane %v755, %v786
      %v788 = vsel %vm783, %v787, 0.0
      %v789 = vlaneseq
      %v790 = vshrl.u32 %v789, 7
      %v791 = vsub.s32 2, %v790
      %v792 = vrot.slane %v751, %v791
      %vm793 = vcmp.eq.f32.partialorder %v486, %v792
      %v794 = vlaneseq
      %v795 = vshrl.u32 %v794, 7
      %v796 = vsub.s32 2, %v795
      %v797 = vrot.slane %v757, %v796
      %v798 = vsel %vm793, %v797, 0.0
      %v799 = vadd.f32 %v788, %v798
      %800 = vmatprep.subr.mxu0 0.0
      %801 = vmatpush1.msra.mxu0 0.0
      %802 = vmatprep.subr.mxu0 0.0
      %803 = vmatpush1.msra.mxu0 0.0
      %804 = vmatprep.subr.mxu0 0.0
      %805 = vmatpush1.msra.mxu0 0.0
      %806 = vmatprep.subr.mxu0 0.0
      %807 = vmatpush1.msra.mxu0 0.0
      %808 = vmatprep.subr.mxu0 0.0
      %809 = vmatpush1.msra.mxu0 0.0
      %810 = vmatprep.subr.mxu0 0.0
      %811 = vmatpush1.msra.mxu0 0.0
      %812 = vmatprep.subr.mxu0 0.0
      %813 = vmatpush1.msra.mxu0 0.0
      %814 = vmatprep.subr.mxu0 0.0
      %815 = vmatpush1.msra.mxu0 0.0
      %816 = vmatprep.subr.mxu0 0.0
      %817 = vmatpush1.msra.mxu0 0.0
      %818 = vmatprep.subr.mxu0 0.0
      %819 = vmatpush1.msra.mxu0 0.0
      %820 = vmatprep.subr.mxu0 0.0
      %821 = vmatpush1.msra.mxu0 0.0
      %822 = vmatprep.subr.mxu0 0.0
      %823 = vmatpush1.msra.mxu0 0.0
      %824 = vmatprep.subr.mxu0 0.0
      %825 = vmatpush1.msra.mxu0 0.0
      %826 = vmatprep.subr.mxu0 0.0
      %827 = vmatpush1.msra.mxu0 0.0
      %828 = vmatprep.subr.mxu0 0.0
      %829 = vmatpush1.msra.mxu0 0.0
      %830 = vmatprep.subr.mxu0 0.0
      %831 = vmatpush1.msra.mxu0 %v799
      %832 = vmatprep.subr.mxu0 0.0
      %833 = vmatpush2.msra.mxu0 0.0
      %834 = vmatprep.subr.mxu0 0.0
      %835 = vmatpush2.msra.mxu0 0.0
      %836 = vmatprep.subr.mxu0 0.0
      %837 = vmatpush2.msra.mxu0 0.0
      %838 = vmatprep.subr.mxu0 0.0
      %839 = vmatpush2.msra.mxu0 0.0
      %840 = vmatprep.subr.mxu0 0.0
      %841 = vmatpush2.msra.mxu0 0.0
      %842 = vmatprep.subr.mxu0 0.0
      %843 = vmatpush2.msra.mxu0 0.0
      %844 = vmatprep.subr.mxu0 0.0
      %845 = vmatpush2.msra.mxu0 0.0
      %846 = vmatprep.subr.mxu0 0.0
      %847 = vmatpush2.msra.mxu0 0.0
      %848 = vmatprep.subr.mxu0 0.0
      %849 = vmatpush2.msra.mxu0 0.0
      %850 = vmatprep.subr.mxu0 0.0
      %851 = vmatpush2.msra.mxu0 0.0
      %852 = vmatprep.subr.mxu0 0.0
      %853 = vmatpush2.msra.mxu0 0.0
      %854 = vmatprep.subr.mxu0 0.0
      %855 = vmatpush2.msra.mxu0 0.0
      %856 = vmatprep.subr.mxu0 0.0
      %857 = vmatpush2.msra.mxu0 0.0
      %858 = vmatprep.subr.mxu0 0.0
      %859 = vmatpush2.msra.mxu0 0.0
      %860 = vmatprep.subr.mxu0 0.0
      %861 = vmatpush2.msra.mxu0 0.0
      %862 = vmatprep.subr.mxu0 0.0
      %863 = vmatpush2.msra.mxu0 0.0
      %864 = vmatprep.mubr.f32.mxu0 0.0
      %865 = vmatmul.mubr.f32.gmra.mxu0 %v559
      %v866 = vpop.f32.mrf.mxu0
      %v867 = vadd.f32 0.0, %v866
      %v868 = vpop.f32.mrf.mxu0
      %869 = vmatprep.mubr.f32.mxu0 0.0
      %870 = vmatmul.mubr.f32.gmra.mxu0 %v562
      %v871 = vpop.f32.mrf.mxu0
      %v872 = vadd.f32 0.0, %v871
      %v873 = vpop.f32.mrf.mxu0
      %874 = vmatprep.mubr.f32.mxu0 0.0
      %875 = vmatmul.mubr.f32.gmra.mxu0 %v565
      %v876 = vpop.f32.mrf.mxu0
      %v877 = vadd.f32 0.0, %v876
      %v878 = vpop.f32.mrf.mxu0
      %879 = vmatprep.mubr.f32.mxu0 0.0
      %880 = vmatmul.mubr.f32.gmra.mxu0 %v568
      %v881 = vpop.f32.mrf.mxu0
      %v882 = vadd.f32 0.0, %v881
      %v883 = vpop.f32.mrf.mxu0
      %884 = vmatprep.mubr.f32.mxu0 0.0
      %885 = vmatmul.mubr.f32.gmra.mxu0 %v571
      %v886 = vpop.f32.mrf.mxu0
      %v887 = vadd.f32 0.0, %v886
      %v888 = vpop.f32.mrf.mxu0
      %889 = vmatprep.mubr.f32.mxu0 0.0
      %890 = vmatmul.mubr.f32.gmra.mxu0 %v574
      %v891 = vpop.f32.mrf.mxu0
      %v892 = vadd.f32 0.0, %v891
      %v893 = vpop.f32.mrf.mxu0
      %894 = vmatprep.mubr.f32.mxu0 0.0
      %895 = vmatmul.mubr.f32.gmra.mxu0 %v577
      %v896 = vpop.f32.mrf.mxu0
      %v897 = vadd.f32 0.0, %v896
      %v898 = vpop.f32.mrf.mxu0
      %899 = vmatprep.mubr.f32.mxu0 0.0
      %900 = vmatmul.mubr.f32.gmra.mxu0 %v580
      %v901 = vpop.f32.mrf.mxu0
      %v902 = vadd.f32 0.0, %v901
      %v903 = vpop.f32.mrf.mxu0
      %904 = vdwg.mxu0
      %v905 = vmul.f32 %v867, %v778
      %v906 = vmul.f32 %v872, %v778
      %v907 = vmul.f32 %v877, %v778
      %v908 = vmul.f32 %v882, %v778
      %v909 = vmul.f32 %v887, %v778
      %v910 = vmul.f32 %v892, %v778
      %v911 = vmul.f32 %v897, %v778
      %v912 = vmul.f32 %v902, %v778
      %v913 = vrot.slane %v905, 4
      %v914 = vadd.f32 %v905, %v913
      %v915 = vrot.slane %v914, 2
      %v916 = vadd.f32 %v914, %v915
      %v917 = vrot.slane %v916, 1
      %v918 = vadd.f32 %v916, %v917
      %v919 = vrot.slane %v906, 4
      %v920 = vadd.f32 %v906, %v919
      %v921 = vrot.slane %v920, 2
      %v922 = vadd.f32 %v920, %v921
      %v923 = vrot.slane %v922, 1
      %v924 = vadd.f32 %v922, %v923
      %v925 = vrot.slane %v907, 4
      %v926 = vadd.f32 %v907, %v925
      %v927 = vrot.slane %v926, 2
      %v928 = vadd.f32 %v926, %v927
      %v929 = vrot.slane %v928, 1
      %v930 = vadd.f32 %v928, %v929
      %v931 = vrot.slane %v908, 4
      %v932 = vadd.f32 %v908, %v931
      %v933 = vrot.slane %v932, 2
      %v934 = vadd.f32 %v932, %v933
      %v935 = vrot.slane %v934, 1
      %v936 = vadd.f32 %v934, %v935
      %v937 = vrot.slane %v909, 4
      %v938 = vadd.f32 %v909, %v937
      %v939 = vrot.slane %v938, 2
      %v940 = vadd.f32 %v938, %v939
      %v941 = vrot.slane %v940, 1
      %v942 = vadd.f32 %v940, %v941
      %v943 = vrot.slane %v910, 4
      %v944 = vadd.f32 %v910, %v943
      %v945 = vrot.slane %v944, 2
      %v946 = vadd.f32 %v944, %v945
      %v947 = vrot.slane %v946, 1
      %v948 = vadd.f32 %v946, %v947
      %v949 = vrot.slane %v911, 4
      %v950 = vadd.f32 %v911, %v949
      %v951 = vrot.slane %v950, 2
      %v952 = vadd.f32 %v950, %v951
      %v953 = vrot.slane %v952, 1
      %v954 = vadd.f32 %v952, %v953
      %v955 = vrot.slane %v912, 4
      %v956 = vadd.f32 %v912, %v955
      %v957 = vrot.slane %v956, 2
      %v958 = vadd.f32 %v956, %v957
      %v959 = vrot.slane %v958, 1
      %v960 = vadd.f32 %v958, %v959
      %s961 = scalar_lea.vmem %s4, 8
      %v962 = vld [vmem:[%s961] sm:$0xff]
      %vm971 = vcmask 1041409
      %v972 = vsel %vm971, %v924, %v918
      %vm973 = vcmask 1042434
      %v974 = vsel %vm973, %v930, %v972
      %vm975 = vcmask 1043459
      %v976 = vsel %vm975, %v936, %v974
      %vm977 = vcmask 1044484
      %v978 = vsel %vm977, %v942, %v976
      %vm979 = vcmask 1045509
      %v980 = vsel %vm979, %v948, %v978
      %vm981 = vcmask 1046534
      %v982 = vsel %vm981, %v954, %v980
      %vm983 = vcmask 1047559
      %v984 = vsel %vm983, %v960, %v982
      %v987 = vsel %vm557, %v962, 0
      %989 = vmatprep.subr.mxu0 0.0
      %990 = vmatpush1.msra.mxu0 0.0
      %991 = vmatprep.subr.mxu0 0.0
      %992 = vmatpush1.msra.mxu0 0.0
      %993 = vmatprep.subr.mxu0 0.0
      %994 = vmatpush1.msra.mxu0 0.0
      %995 = vmatprep.subr.mxu0 0.0
      %996 = vmatpush1.msra.mxu0 0.0
      %997 = vmatprep.subr.mxu0 0.0
      %998 = vmatpush1.msra.mxu0 0.0
      %999 = vmatprep.subr.mxu0 0.0
      %1000 = vmatpush1.msra.mxu0 0.0
      %1001 = vmatprep.subr.mxu0 0.0
      %1002 = vmatpush1.msra.mxu0 0.0
      %1003 = vmatprep.subr.mxu0 0.0
      %1004 = vmatpush1.msra.mxu0 0.0
      %1005 = vmatprep.subr.mxu0 0.0
      %1006 = vmatpush1.msra.mxu0 0.0
      %1007 = vmatprep.subr.mxu0 0.0
      %1008 = vmatpush1.msra.mxu0 0.0
      %1009 = vmatprep.subr.mxu0 0.0
      %1010 = vmatpush1.msra.mxu0 0.0
      %1011 = vmatprep.subr.mxu0 0.0
      %1012 = vmatpush1.msra.mxu0 0.0
      %1013 = vmatprep.subr.mxu0 0.0
      %1014 = vmatpush1.msra.mxu0 0.0
      %1015 = vmatprep.subr.mxu0 0.0
      %1016 = vmatpush1.msra.mxu0 0.0
      %1017 = vmatprep.subr.mxu0 0.0
      %1018 = vmatpush1.msra.mxu0 0.0
      %1019 = vmatprep.subr.mxu0 0.0
      %1020 = vmatpush1.msra.mxu0 %v984
      %1021 = vmatprep.subr.mxu0 0.0
      %1022 = vmatpush2.msra.mxu0 0.0
      %1023 = vmatprep.subr.mxu0 0.0
      %1024 = vmatpush2.msra.mxu0 0.0
      %1025 = vmatprep.subr.mxu0 0.0
      %1026 = vmatpush2.msra.mxu0 0.0
      %1027 = vmatprep.subr.mxu0 0.0
      %1028 = vmatpush2.msra.mxu0 0.0
      %1029 = vmatprep.subr.mxu0 0.0
      %1030 = vmatpush2.msra.mxu0 0.0
      %1031 = vmatprep.subr.mxu0 0.0
      %1032 = vmatpush2.msra.mxu0 0.0
      %1033 = vmatprep.subr.mxu0 0.0
      %1034 = vmatpush2.msra.mxu0 0.0
      %1035 = vmatprep.subr.mxu0 0.0
      %1036 = vmatpush2.msra.mxu0 0.0
      %1037 = vmatprep.subr.mxu0 0.0
      %1038 = vmatpush2.msra.mxu0 0.0
      %1039 = vmatprep.subr.mxu0 0.0
      %1040 = vmatpush2.msra.mxu0 0.0
      %1041 = vmatprep.subr.mxu0 0.0
      %1042 = vmatpush2.msra.mxu0 0.0
      %1043 = vmatprep.subr.mxu0 0.0
      %1044 = vmatpush2.msra.mxu0 0.0
      %1045 = vmatprep.subr.mxu0 0.0
      %1046 = vmatpush2.msra.mxu0 0.0
      %1047 = vmatprep.subr.mxu0 0.0
      %1048 = vmatpush2.msra.mxu0 0.0
      %1049 = vmatprep.subr.mxu0 0.0
      %1050 = vmatpush2.msra.mxu0 0.0
      %1051 = vmatprep.subr.mxu0 0.0
      %1052 = vmatpush2.msra.mxu0 0.0
      %1053 = vmatprep.mubr.f32.mxu0 0.0
      %1054 = vmatmul.mubr.f32.gmra.mxu0 %v987
      %v1055 = vpop.f32.mrf.mxu0
      %v1056 = vadd.f32 0.0, %v1055
      %v1057 = vpop.f32.mrf.mxu0
      %1058 = vdwg.mxu0
      %v1067 = vsel %vm971, %v706, %v700
      %v1068 = vsel %vm973, %v712, %v1067
      %v1069 = vsel %vm975, %v718, %v1068
      %v1070 = vsel %vm977, %v724, %v1069
      %v1071 = vsel %vm979, %v730, %v1070
      %v1072 = vsel %vm981, %v736, %v1071
      %v1073 = vsel %vm983, %v742, %v1072
      %v1076 = vsel %vm557, %v743, 0
      %1078 = vmatprep.subr.mxu0 0.0
      %1079 = vmatpush1.msra.mxu0 0.0
      %1080 = vmatprep.subr.mxu0 0.0
      %1081 = vmatpush1.msra.mxu0 0.0
      %1082 = vmatprep.subr.mxu0 0.0
      %1083 = vmatpush1.msra.mxu0 0.0
      %1084 = vmatprep.subr.mxu0 0.0
      %1085 = vmatpush1.msra.mxu0 0.0
      %1086 = vmatprep.subr.mxu0 0.0
      %1087 = vmatpush1.msra.mxu0 0.0
      %1088 = vmatprep.subr.mxu0 0.0
      %1089 = vmatpush1.msra.mxu0 0.0
      %1090 = vmatprep.subr.mxu0 0.0
      %1091 = vmatpush1.msra.mxu0 0.0
      %1092 = vmatprep.subr.mxu0 0.0
      %1093 = vmatpush1.msra.mxu0 0.0
      %1094 = vmatprep.subr.mxu0 0.0
      %1095 = vmatpush1.msra.mxu0 0.0
      %1096 = vmatprep.subr.mxu0 0.0
      %1097 = vmatpush1.msra.mxu0 0.0
      %1098 = vmatprep.subr.mxu0 0.0
      %1099 = vmatpush1.msra.mxu0 0.0
      %1100 = vmatprep.subr.mxu0 0.0
      %1101 = vmatpush1.msra.mxu0 0.0
      %1102 = vmatprep.subr.mxu0 0.0
      %1103 = vmatpush1.msra.mxu0 0.0
      %1104 = vmatprep.subr.mxu0 0.0
      %1105 = vmatpush1.msra.mxu0 0.0
      %1106 = vmatprep.subr.mxu0 0.0
      %1107 = vmatpush1.msra.mxu0 0.0
      %1108 = vmatprep.subr.mxu0 0.0
      %1109 = vmatpush1.msra.mxu0 %v1073
      %1110 = vmatprep.subr.mxu0 0.0
      %1111 = vmatpush2.msra.mxu0 0.0
      %1112 = vmatprep.subr.mxu0 0.0
      %1113 = vmatpush2.msra.mxu0 0.0
      %1114 = vmatprep.subr.mxu0 0.0
      %1115 = vmatpush2.msra.mxu0 0.0
      %1116 = vmatprep.subr.mxu0 0.0
      %1117 = vmatpush2.msra.mxu0 0.0
      %1118 = vmatprep.subr.mxu0 0.0
      %1119 = vmatpush2.msra.mxu0 0.0
      %1120 = vmatprep.subr.mxu0 0.0
      %1121 = vmatpush2.msra.mxu0 0.0
      %1122 = vmatprep.subr.mxu0 0.0
      %1123 = vmatpush2.msra.mxu0 0.0
      %1124 = vmatprep.subr.mxu0 0.0
      %1125 = vmatpush2.msra.mxu0 0.0
      %1126 = vmatprep.subr.mxu0 0.0
      %1127 = vmatpush2.msra.mxu0 0.0
      %1128 = vmatprep.subr.mxu0 0.0
      %1129 = vmatpush2.msra.mxu0 0.0
      %1130 = vmatprep.subr.mxu0 0.0
      %1131 = vmatpush2.msra.mxu0 0.0
      %1132 = vmatprep.subr.mxu0 0.0
      %1133 = vmatpush2.msra.mxu0 0.0
      %1134 = vmatprep.subr.mxu0 0.0
      %1135 = vmatpush2.msra.mxu0 0.0
      %1136 = vmatprep.subr.mxu0 0.0
      %1137 = vmatpush2.msra.mxu0 0.0
      %1138 = vmatprep.subr.mxu0 0.0
      %1139 = vmatpush2.msra.mxu0 0.0
      %1140 = vmatprep.subr.mxu0 0.0
      %1141 = vmatpush2.msra.mxu0 0.0
      %1142 = vmatprep.mubr.f32.mxu0 0.0
      %1143 = vmatmul.mubr.f32.gmra.mxu0 %v1076
      %v1144 = vpop.f32.mrf.mxu0
      %v1145 = vadd.f32 %v1056, %v1144
      %v1146 = vpop.f32.mrf.mxu0
      %1147 = vdwg.mxu0
      %v1148 = vadd.f32 %v483, 1.0
      %v1149 = vadd.f32 %v1148, %v468
      %v1150 = vfloor.f32 %v1149
      %v1151 = vmax.f32 %v1150, 0.0
      %v1152 = vmin.f32 %v1151, 7.0
      %v1153 = vadd.f32 %v1150, 1.0
      %v1154 = vmax.f32 %v1153, 0.0
      %v1155 = vmin.f32 %v1154, 7.0
      %v1156 = vmax.f32 %v1149, 0.0
      %v1157 = vmin.f32 %v1156, 7.0
      %v1158 = vsub.f32 %v1152, %v1157
      %v1159 = vadd.f32 %v1158, 1.0
      %v1160 = vsub.f32 %v1155, %v1157
      %v1161 = vsub.f32 1.0, %v1160
      %v1162 = vlaneseq
      %v1163 = vshrl.u32 %v1162, 7
      %v1164 = vsub.s32 2, %v1163
      %v1165 = vrot.slane %v494, %v1164
      %vm1166 = vcmp.eq.f32.partialorder %v486, %v1165
      %v1167 = vlaneseq
      %v1168 = vshrl.u32 %v1167, 7
      %v1169 = vsub.s32 2, %v1168
      %v1170 = vrot.slane %v508, %v1169
      %v1171 = vsel %vm1166, %v1170, 0.0
      %v1172 = vlaneseq
      %v1173 = vshrl.u32 %v1172, 7
      %v1174 = vsub.s32 2, %v1173
      %v1175 = vrot.slane %v497, %v1174
      %vm1176 = vcmp.eq.f32.partialorder %v486, %v1175
      %v1177 = vlaneseq
      %v1178 = vshrl.u32 %v1177, 7
      %v1179 = vsub.s32 2, %v1178
      %v1180 = vrot.slane %v510, %v1179
      %v1181 = vsel %vm1176, %v1180, 0.0
      %v1182 = vadd.f32 %v1171, %v1181
      %v1183 = vlaneseq
      %v1184 = vshrl.u32 %v1183, 7
      %v1185 = vsub.s32 3, %v1184
      %v1186 = vrot.slane %v1152, %v1185
      %vm1187 = vcmp.eq.f32.partialorder %v486, %v1186
      %v1188 = vlaneseq
      %v1189 = vshrl.u32 %v1188, 7
      %v1190 = vsub.s32 3, %v1189
      %v1191 = vrot.slane %v1159, %v1190
      %v1192 = vsel %vm1187, %v1191, 0.0
      %v1193 = vlaneseq
      %v1194 = vshrl.u32 %v1193, 7
      %v1195 = vsub.s32 3, %v1194
      %v1196 = vrot.slane %v1155, %v1195
      %vm1197 = vcmp.eq.f32.partialorder %v486, %v1196
      %v1198 = vlaneseq
      %v1199 = vshrl.u32 %v1198, 7
      %v1200 = vsub.s32 3, %v1199
      %v1201 = vrot.slane %v1161, %v1200
      %v1202 = vsel %vm1197, %v1201, 0.0
      %v1203 = vadd.f32 %v1192, %v1202
      %1204 = vmatprep.subr.mxu0 0.0
      %1205 = vmatpush1.msra.mxu0 0.0
      %1206 = vmatprep.subr.mxu0 0.0
      %1207 = vmatpush1.msra.mxu0 0.0
      %1208 = vmatprep.subr.mxu0 0.0
      %1209 = vmatpush1.msra.mxu0 0.0
      %1210 = vmatprep.subr.mxu0 0.0
      %1211 = vmatpush1.msra.mxu0 0.0
      %1212 = vmatprep.subr.mxu0 0.0
      %1213 = vmatpush1.msra.mxu0 0.0
      %1214 = vmatprep.subr.mxu0 0.0
      %1215 = vmatpush1.msra.mxu0 0.0
      %1216 = vmatprep.subr.mxu0 0.0
      %1217 = vmatpush1.msra.mxu0 0.0
      %1218 = vmatprep.subr.mxu0 0.0
      %1219 = vmatpush1.msra.mxu0 0.0
      %1220 = vmatprep.subr.mxu0 0.0
      %1221 = vmatpush1.msra.mxu0 0.0
      %1222 = vmatprep.subr.mxu0 0.0
      %1223 = vmatpush1.msra.mxu0 0.0
      %1224 = vmatprep.subr.mxu0 0.0
      %1225 = vmatpush1.msra.mxu0 0.0
      %1226 = vmatprep.subr.mxu0 0.0
      %1227 = vmatpush1.msra.mxu0 0.0
      %1228 = vmatprep.subr.mxu0 0.0
      %1229 = vmatpush1.msra.mxu0 0.0
      %1230 = vmatprep.subr.mxu0 0.0
      %1231 = vmatpush1.msra.mxu0 0.0
      %1232 = vmatprep.subr.mxu0 0.0
      %1233 = vmatpush1.msra.mxu0 0.0
      %1234 = vmatprep.subr.mxu0 0.0
      %1235 = vmatpush1.msra.mxu0 %v1203
      %1236 = vmatprep.subr.mxu0 0.0
      %1237 = vmatpush2.msra.mxu0 0.0
      %1238 = vmatprep.subr.mxu0 0.0
      %1239 = vmatpush2.msra.mxu0 0.0
      %1240 = vmatprep.subr.mxu0 0.0
      %1241 = vmatpush2.msra.mxu0 0.0
      %1242 = vmatprep.subr.mxu0 0.0
      %1243 = vmatpush2.msra.mxu0 0.0
      %1244 = vmatprep.subr.mxu0 0.0
      %1245 = vmatpush2.msra.mxu0 0.0
      %1246 = vmatprep.subr.mxu0 0.0
      %1247 = vmatpush2.msra.mxu0 0.0
      %1248 = vmatprep.subr.mxu0 0.0
      %1249 = vmatpush2.msra.mxu0 0.0
      %1250 = vmatprep.subr.mxu0 0.0
      %1251 = vmatpush2.msra.mxu0 0.0
      %1252 = vmatprep.subr.mxu0 0.0
      %1253 = vmatpush2.msra.mxu0 0.0
      %1254 = vmatprep.subr.mxu0 0.0
      %1255 = vmatpush2.msra.mxu0 0.0
      %1256 = vmatprep.subr.mxu0 0.0
      %1257 = vmatpush2.msra.mxu0 0.0
      %1258 = vmatprep.subr.mxu0 0.0
      %1259 = vmatpush2.msra.mxu0 0.0
      %1260 = vmatprep.subr.mxu0 0.0
      %1261 = vmatpush2.msra.mxu0 0.0
      %1262 = vmatprep.subr.mxu0 0.0
      %1263 = vmatpush2.msra.mxu0 0.0
      %1264 = vmatprep.subr.mxu0 0.0
      %1265 = vmatpush2.msra.mxu0 0.0
      %1266 = vmatprep.subr.mxu0 0.0
      %1267 = vmatpush2.msra.mxu0 0.0
      %1268 = vmatprep.mubr.f32.mxu0 0.0
      %1269 = vmatmul.mubr.f32.gmra.mxu0 %v559
      %v1270 = vpop.f32.mrf.mxu0
      %v1271 = vadd.f32 0.0, %v1270
      %v1272 = vpop.f32.mrf.mxu0
      %1273 = vmatprep.mubr.f32.mxu0 0.0
      %1274 = vmatmul.mubr.f32.gmra.mxu0 %v562
      %v1275 = vpop.f32.mrf.mxu0
      %v1276 = vadd.f32 0.0, %v1275
      %v1277 = vpop.f32.mrf.mxu0
      %1278 = vmatprep.mubr.f32.mxu0 0.0
      %1279 = vmatmul.mubr.f32.gmra.mxu0 %v565
      %v1280 = vpop.f32.mrf.mxu0
      %v1281 = vadd.f32 0.0, %v1280
      %v1282 = vpop.f32.mrf.mxu0
      %1283 = vmatprep.mubr.f32.mxu0 0.0
      %1284 = vmatmul.mubr.f32.gmra.mxu0 %v568
      %v1285 = vpop.f32.mrf.mxu0
      %v1286 = vadd.f32 0.0, %v1285
      %v1287 = vpop.f32.mrf.mxu0
      %1288 = vmatprep.mubr.f32.mxu0 0.0
      %1289 = vmatmul.mubr.f32.gmra.mxu0 %v571
      %v1290 = vpop.f32.mrf.mxu0
      %v1291 = vadd.f32 0.0, %v1290
      %v1292 = vpop.f32.mrf.mxu0
      %1293 = vmatprep.mubr.f32.mxu0 0.0
      %1294 = vmatmul.mubr.f32.gmra.mxu0 %v574
      %v1295 = vpop.f32.mrf.mxu0
      %v1296 = vadd.f32 0.0, %v1295
      %v1297 = vpop.f32.mrf.mxu0
      %1298 = vmatprep.mubr.f32.mxu0 0.0
      %1299 = vmatmul.mubr.f32.gmra.mxu0 %v577
      %v1300 = vpop.f32.mrf.mxu0
      %v1301 = vadd.f32 0.0, %v1300
      %v1302 = vpop.f32.mrf.mxu0
      %1303 = vmatprep.mubr.f32.mxu0 0.0
      %1304 = vmatmul.mubr.f32.gmra.mxu0 %v580
      %v1305 = vpop.f32.mrf.mxu0
      %v1306 = vadd.f32 0.0, %v1305
      %v1307 = vpop.f32.mrf.mxu0
      %1308 = vdwg.mxu0
      %v1309 = vmul.f32 %v1271, %v1182
      %v1310 = vmul.f32 %v1276, %v1182
      %v1311 = vmul.f32 %v1281, %v1182
      %v1312 = vmul.f32 %v1286, %v1182
      %v1313 = vmul.f32 %v1291, %v1182
      %v1314 = vmul.f32 %v1296, %v1182
      %v1315 = vmul.f32 %v1301, %v1182
      %v1316 = vmul.f32 %v1306, %v1182
      %v1317 = vrot.slane %v1309, 4
      %v1318 = vadd.f32 %v1309, %v1317
      %v1319 = vrot.slane %v1318, 2
      %v1320 = vadd.f32 %v1318, %v1319
      %v1321 = vrot.slane %v1320, 1
      %v1322 = vadd.f32 %v1320, %v1321
      %v1323 = vrot.slane %v1310, 4
      %v1324 = vadd.f32 %v1310, %v1323
      %v1325 = vrot.slane %v1324, 2
      %v1326 = vadd.f32 %v1324, %v1325
      %v1327 = vrot.slane %v1326, 1
      %v1328 = vadd.f32 %v1326, %v1327
      %v1329 = vrot.slane %v1311, 4
      %v1330 = vadd.f32 %v1311, %v1329
      %v1331 = vrot.slane %v1330, 2
      %v1332 = vadd.f32 %v1330, %v1331
      %v1333 = vrot.slane %v1332, 1
      %v1334 = vadd.f32 %v1332, %v1333
      %v1335 = vrot.slane %v1312, 4
      %v1336 = vadd.f32 %v1312, %v1335
      %v1337 = vrot.slane %v1336, 2
      %v1338 = vadd.f32 %v1336, %v1337
      %v1339 = vrot.slane %v1338, 1
      %v1340 = vadd.f32 %v1338, %v1339
      %v1341 = vrot.slane %v1313, 4
      %v1342 = vadd.f32 %v1313, %v1341
      %v1343 = vrot.slane %v1342, 2
      %v1344 = vadd.f32 %v1342, %v1343
      %v1345 = vrot.slane %v1344, 1
      %v1346 = vadd.f32 %v1344, %v1345
      %v1347 = vrot.slane %v1314, 4
      %v1348 = vadd.f32 %v1314, %v1347
      %v1349 = vrot.slane %v1348, 2
      %v1350 = vadd.f32 %v1348, %v1349
      %v1351 = vrot.slane %v1350, 1
      %v1352 = vadd.f32 %v1350, %v1351
      %v1353 = vrot.slane %v1315, 4
      %v1354 = vadd.f32 %v1315, %v1353
      %v1355 = vrot.slane %v1354, 2
      %v1356 = vadd.f32 %v1354, %v1355
      %v1357 = vrot.slane %v1356, 1
      %v1358 = vadd.f32 %v1356, %v1357
      %v1359 = vrot.slane %v1316, 4
      %v1360 = vadd.f32 %v1316, %v1359
      %v1361 = vrot.slane %v1360, 2
      %v1362 = vadd.f32 %v1360, %v1361
      %v1363 = vrot.slane %v1362, 1
      %v1364 = vadd.f32 %v1362, %v1363
      %s1365 = scalar_lea.vmem %s4, 16
      %v1366 = vld [vmem:[%s1365] sm:$0xff]
      %v1375 = vsel %vm971, %v1328, %v1322
      %v1376 = vsel %vm973, %v1334, %v1375
      %v1377 = vsel %vm975, %v1340, %v1376
      %v1378 = vsel %vm977, %v1346, %v1377
      %v1379 = vsel %vm979, %v1352, %v1378
      %v1380 = vsel %vm981, %v1358, %v1379
      %v1381 = vsel %vm983, %v1364, %v1380
      %v1384 = vsel %vm557, %v1366, 0
      %1386 = vmatprep.subr.mxu0 0.0
      %1387 = vmatpush1.msra.mxu0 0.0
      %1388 = vmatprep.subr.mxu0 0.0
      %1389 = vmatpush1.msra.mxu0 0.0
      %1390 = vmatprep.subr.mxu0 0.0
      %1391 = vmatpush1.msra.mxu0 0.0
      %1392 = vmatprep.subr.mxu0 0.0
      %1393 = vmatpush1.msra.mxu0 0.0
      %1394 = vmatprep.subr.mxu0 0.0
      %1395 = vmatpush1.msra.mxu0 0.0
      %1396 = vmatprep.subr.mxu0 0.0
      %1397 = vmatpush1.msra.mxu0 0.0
      %1398 = vmatprep.subr.mxu0 0.0
      %1399 = vmatpush1.msra.mxu0 0.0
      %1400 = vmatprep.subr.mxu0 0.0
      %1401 = vmatpush1.msra.mxu0 0.0
      %1402 = vmatprep.subr.mxu0 0.0
      %1403 = vmatpush1.msra.mxu0 0.0
      %1404 = vmatprep.subr.mxu0 0.0
      %1405 = vmatpush1.msra.mxu0 0.0
      %1406 = vmatprep.subr.mxu0 0.0
      %1407 = vmatpush1.msra.mxu0 0.0
      %1408 = vmatprep.subr.mxu0 0.0
      %1409 = vmatpush1.msra.mxu0 0.0
      %1410 = vmatprep.subr.mxu0 0.0
      %1411 = vmatpush1.msra.mxu0 0.0
      %1412 = vmatprep.subr.mxu0 0.0
      %1413 = vmatpush1.msra.mxu0 0.0
      %1414 = vmatprep.subr.mxu0 0.0
      %1415 = vmatpush1.msra.mxu0 0.0
      %1416 = vmatprep.subr.mxu0 0.0
      %1417 = vmatpush1.msra.mxu0 %v1381
      %1418 = vmatprep.subr.mxu0 0.0
      %1419 = vmatpush2.msra.mxu0 0.0
      %1420 = vmatprep.subr.mxu0 0.0
      %1421 = vmatpush2.msra.mxu0 0.0
      %1422 = vmatprep.subr.mxu0 0.0
      %1423 = vmatpush2.msra.mxu0 0.0
      %1424 = vmatprep.subr.mxu0 0.0
      %1425 = vmatpush2.msra.mxu0 0.0
      %1426 = vmatprep.subr.mxu0 0.0
      %1427 = vmatpush2.msra.mxu0 0.0
      %1428 = vmatprep.subr.mxu0 0.0
      %1429 = vmatpush2.msra.mxu0 0.0
      %1430 = vmatprep.subr.mxu0 0.0
      %1431 = vmatpush2.msra.mxu0 0.0
      %1432 = vmatprep.subr.mxu0 0.0
      %1433 = vmatpush2.msra.mxu0 0.0
      %1434 = vmatprep.subr.mxu0 0.0
      %1435 = vmatpush2.msra.mxu0 0.0
      %1436 = vmatprep.subr.mxu0 0.0
      %1437 = vmatpush2.msra.mxu0 0.0
      %1438 = vmatprep.subr.mxu0 0.0
      %1439 = vmatpush2.msra.mxu0 0.0
      %1440 = vmatprep.subr.mxu0 0.0
      %1441 = vmatpush2.msra.mxu0 0.0
      %1442 = vmatprep.subr.mxu0 0.0
      %1443 = vmatpush2.msra.mxu0 0.0
      %1444 = vmatprep.subr.mxu0 0.0
      %1445 = vmatpush2.msra.mxu0 0.0
      %1446 = vmatprep.subr.mxu0 0.0
      %1447 = vmatpush2.msra.mxu0 0.0
      %1448 = vmatprep.subr.mxu0 0.0
      %1449 = vmatpush2.msra.mxu0 0.0
      %1450 = vmatprep.mubr.f32.mxu0 0.0
      %1451 = vmatmul.mubr.f32.gmra.mxu0 %v1384
      %v1452 = vpop.f32.mrf.mxu0
      %v1453 = vadd.f32 0.0, %v1452
      %v1454 = vpop.f32.mrf.mxu0
      %1455 = vdwg.mxu0
      %v1456 = vadd.f32 %v1145, %v1453
      %v1457 = vadd.f32 %v481, 0.0
      %v1458 = vadd.f32 %v1457, %v463
      %v1459 = vfloor.f32 %v1458
      %v1460 = vmax.f32 %v1459, 0.0
      %v1461 = vmin.f32 %v1460, 7.0
      %v1462 = vadd.f32 %v1459, 1.0
      %v1463 = vmax.f32 %v1462, 0.0
      %v1464 = vmin.f32 %v1463, 7.0
      %v1465 = vmax.f32 %v1458, 0.0
      %v1466 = vmin.f32 %v1465, 7.0
      %v1467 = vsub.f32 %v1461, %v1466
      %v1468 = vadd.f32 %v1467, 1.0
      %v1469 = vsub.f32 %v1464, %v1466
      %v1470 = vsub.f32 1.0, %v1469
      %v1471 = vlaneseq
      %v1472 = vshrl.u32 %v1471, 7
      %v1473 = vsub.s32 3, %v1472
      %v1474 = vrot.slane %v1461, %v1473
      %vm1475 = vcmp.eq.f32.partialorder %v486, %v1474
      %v1476 = vlaneseq
      %v1477 = vshrl.u32 %v1476, 7
      %v1478 = vsub.s32 3, %v1477
      %v1479 = vrot.slane %v1468, %v1478
      %v1480 = vsel %vm1475, %v1479, 0.0
      %v1481 = vlaneseq
      %v1482 = vshrl.u32 %v1481, 7
      %v1483 = vsub.s32 3, %v1482
      %v1484 = vrot.slane %v1464, %v1483
      %vm1485 = vcmp.eq.f32.partialorder %v486, %v1484
      %v1486 = vlaneseq
      %v1487 = vshrl.u32 %v1486, 7
      %v1488 = vsub.s32 3, %v1487
      %v1489 = vrot.slane %v1470, %v1488
      %v1490 = vsel %vm1485, %v1489, 0.0
      %v1491 = vadd.f32 %v1480, %v1490
      %v1492 = vlaneseq
      %v1493 = vshrl.u32 %v1492, 7
      %v1494 = vsub.s32 4, %v1493
      %v1495 = vrot.slane %v499, %v1494
      %vm1496 = vcmp.eq.f32.partialorder %v486, %v1495
      %v1497 = vlaneseq
      %v1498 = vshrl.u32 %v1497, 7
      %v1499 = vsub.s32 4, %v1498
      %v1500 = vrot.slane %v512, %v1499
      %v1501 = vsel %vm1496, %v1500, 0.0
      %v1502 = vlaneseq
      %v1503 = vshrl.u32 %v1502, 7
      %v1504 = vsub.s32 4, %v1503
      %v1505 = vrot.slane %v502, %v1504
      %vm1506 = vcmp.eq.f32.partialorder %v486, %v1505
      %v1507 = vlaneseq
      %v1508 = vshrl.u32 %v1507, 7
      %v1509 = vsub.s32 4, %v1508
      %v1510 = vrot.slane %v514, %v1509
      %v1511 = vsel %vm1506, %v1510, 0.0
      %v1512 = vadd.f32 %v1501, %v1511
      %1513 = vmatprep.subr.mxu0 0.0
      %1514 = vmatpush1.msra.mxu0 0.0
      %1515 = vmatprep.subr.mxu0 0.0
      %1516 = vmatpush1.msra.mxu0 0.0
      %1517 = vmatprep.subr.mxu0 0.0
      %1518 = vmatpush1.msra.mxu0 0.0
      %1519 = vmatprep.subr.mxu0 0.0
      %1520 = vmatpush1.msra.mxu0 0.0
      %1521 = vmatprep.subr.mxu0 0.0
      %1522 = vmatpush1.msra.mxu0 0.0
      %1523 = vmatprep.subr.mxu0 0.0
      %1524 = vmatpush1.msra.mxu0 0.0
      %1525 = vmatprep.subr.mxu0 0.0
      %1526 = vmatpush1.msra.mxu0 0.0
      %1527 = vmatprep.subr.mxu0 0.0
      %1528 = vmatpush1.msra.mxu0 0.0
      %1529 = vmatprep.subr.mxu0 0.0
      %1530 = vmatpush1.msra.mxu0 0.0
      %1531 = vmatprep.subr.mxu0 0.0
      %1532 = vmatpush1.msra.mxu0 0.0
      %1533 = vmatprep.subr.mxu0 0.0
      %1534 = vmatpush1.msra.mxu0 0.0
      %1535 = vmatprep.subr.mxu0 0.0
      %1536 = vmatpush1.msra.mxu0 0.0
      %1537 = vmatprep.subr.mxu0 0.0
      %1538 = vmatpush1.msra.mxu0 0.0
      %1539 = vmatprep.subr.mxu0 0.0
      %1540 = vmatpush1.msra.mxu0 0.0
      %1541 = vmatprep.subr.mxu0 0.0
      %1542 = vmatpush1.msra.mxu0 0.0
      %1543 = vmatprep.subr.mxu0 0.0
      %1544 = vmatpush1.msra.mxu0 %v1512
      %1545 = vmatprep.subr.mxu0 0.0
      %1546 = vmatpush2.msra.mxu0 0.0
      %1547 = vmatprep.subr.mxu0 0.0
      %1548 = vmatpush2.msra.mxu0 0.0
      %1549 = vmatprep.subr.mxu0 0.0
      %1550 = vmatpush2.msra.mxu0 0.0
      %1551 = vmatprep.subr.mxu0 0.0
      %1552 = vmatpush2.msra.mxu0 0.0
      %1553 = vmatprep.subr.mxu0 0.0
      %1554 = vmatpush2.msra.mxu0 0.0
      %1555 = vmatprep.subr.mxu0 0.0
      %1556 = vmatpush2.msra.mxu0 0.0
      %1557 = vmatprep.subr.mxu0 0.0
      %1558 = vmatpush2.msra.mxu0 0.0
      %1559 = vmatprep.subr.mxu0 0.0
      %1560 = vmatpush2.msra.mxu0 0.0
      %1561 = vmatprep.subr.mxu0 0.0
      %1562 = vmatpush2.msra.mxu0 0.0
      %1563 = vmatprep.subr.mxu0 0.0
      %1564 = vmatpush2.msra.mxu0 0.0
      %1565 = vmatprep.subr.mxu0 0.0
      %1566 = vmatpush2.msra.mxu0 0.0
      %1567 = vmatprep.subr.mxu0 0.0
      %1568 = vmatpush2.msra.mxu0 0.0
      %1569 = vmatprep.subr.mxu0 0.0
      %1570 = vmatpush2.msra.mxu0 0.0
      %1571 = vmatprep.subr.mxu0 0.0
      %1572 = vmatpush2.msra.mxu0 0.0
      %1573 = vmatprep.subr.mxu0 0.0
      %1574 = vmatpush2.msra.mxu0 0.0
      %1575 = vmatprep.subr.mxu0 0.0
      %1576 = vmatpush2.msra.mxu0 0.0
      %1577 = vmatprep.mubr.f32.mxu0 0.0
      %1578 = vmatmul.mubr.f32.gmra.mxu0 %v559
      %v1579 = vpop.f32.mrf.mxu0
      %v1580 = vadd.f32 0.0, %v1579
      %v1581 = vpop.f32.mrf.mxu0
      %1582 = vmatprep.mubr.f32.mxu0 0.0
      %1583 = vmatmul.mubr.f32.gmra.mxu0 %v562
      %v1584 = vpop.f32.mrf.mxu0
      %v1585 = vadd.f32 0.0, %v1584
      %v1586 = vpop.f32.mrf.mxu0
      %1587 = vmatprep.mubr.f32.mxu0 0.0
      %1588 = vmatmul.mubr.f32.gmra.mxu0 %v565
      %v1589 = vpop.f32.mrf.mxu0
      %v1590 = vadd.f32 0.0, %v1589
      %v1591 = vpop.f32.mrf.mxu0
      %1592 = vmatprep.mubr.f32.mxu0 0.0
      %1593 = vmatmul.mubr.f32.gmra.mxu0 %v568
      %v1594 = vpop.f32.mrf.mxu0
      %v1595 = vadd.f32 0.0, %v1594
      %v1596 = vpop.f32.mrf.mxu0
      %1597 = vmatprep.mubr.f32.mxu0 0.0
      %1598 = vmatmul.mubr.f32.gmra.mxu0 %v571
      %v1599 = vpop.f32.mrf.mxu0
      %v1600 = vadd.f32 0.0, %v1599
      %v1601 = vpop.f32.mrf.mxu0
      %1602 = vmatprep.mubr.f32.mxu0 0.0
      %1603 = vmatmul.mubr.f32.gmra.mxu0 %v574
      %v1604 = vpop.f32.mrf.mxu0
      %v1605 = vadd.f32 0.0, %v1604
      %v1606 = vpop.f32.mrf.mxu0
      %1607 = vmatprep.mubr.f32.mxu0 0.0
      %1608 = vmatmul.mubr.f32.gmra.mxu0 %v577
      %v1609 = vpop.f32.mrf.mxu0
      %v1610 = vadd.f32 0.0, %v1609
      %v1611 = vpop.f32.mrf.mxu0
      %1612 = vmatprep.mubr.f32.mxu0 0.0
      %1613 = vmatmul.mubr.f32.gmra.mxu0 %v580
      %v1614 = vpop.f32.mrf.mxu0
      %v1615 = vadd.f32 0.0, %v1614
      %v1616 = vpop.f32.mrf.mxu0
      %1617 = vdwg.mxu0
      %v1618 = vmul.f32 %v1580, %v1491
      %v1619 = vmul.f32 %v1585, %v1491
      %v1620 = vmul.f32 %v1590, %v1491
      %v1621 = vmul.f32 %v1595, %v1491
      %v1622 = vmul.f32 %v1600, %v1491
      %v1623 = vmul.f32 %v1605, %v1491
      %v1624 = vmul.f32 %v1610, %v1491
      %v1625 = vmul.f32 %v1615, %v1491
      %v1626 = vrot.slane %v1618, 4
      %v1627 = vadd.f32 %v1618, %v1626
      %v1628 = vrot.slane %v1627, 2
      %v1629 = vadd.f32 %v1627, %v1628
      %v1630 = vrot.slane %v1629, 1
      %v1631 = vadd.f32 %v1629, %v1630
      %v1632 = vrot.slane %v1619, 4
      %v1633 = vadd.f32 %v1619, %v1632
      %v1634 = vrot.slane %v1633, 2
      %v1635 = vadd.f32 %v1633, %v1634
      %v1636 = vrot.slane %v1635, 1
      %v1637 = vadd.f32 %v1635, %v1636
      %v1638 = vrot.slane %v1620, 4
      %v1639 = vadd.f32 %v1620, %v1638
      %v1640 = vrot.slane %v1639, 2
      %v1641 = vadd.f32 %v1639, %v1640
      %v1642 = vrot.slane %v1641, 1
      %v1643 = vadd.f32 %v1641, %v1642
      %v1644 = vrot.slane %v1621, 4
      %v1645 = vadd.f32 %v1621, %v1644
      %v1646 = vrot.slane %v1645, 2
      %v1647 = vadd.f32 %v1645, %v1646
      %v1648 = vrot.slane %v1647, 1
      %v1649 = vadd.f32 %v1647, %v1648
      %v1650 = vrot.slane %v1622, 4
      %v1651 = vadd.f32 %v1622, %v1650
      %v1652 = vrot.slane %v1651, 2
      %v1653 = vadd.f32 %v1651, %v1652
      %v1654 = vrot.slane %v1653, 1
      %v1655 = vadd.f32 %v1653, %v1654
      %v1656 = vrot.slane %v1623, 4
      %v1657 = vadd.f32 %v1623, %v1656
      %v1658 = vrot.slane %v1657, 2
      %v1659 = vadd.f32 %v1657, %v1658
      %v1660 = vrot.slane %v1659, 1
      %v1661 = vadd.f32 %v1659, %v1660
      %v1662 = vrot.slane %v1624, 4
      %v1663 = vadd.f32 %v1624, %v1662
      %v1664 = vrot.slane %v1663, 2
      %v1665 = vadd.f32 %v1663, %v1664
      %v1666 = vrot.slane %v1665, 1
      %v1667 = vadd.f32 %v1665, %v1666
      %v1668 = vrot.slane %v1625, 4
      %v1669 = vadd.f32 %v1625, %v1668
      %v1670 = vrot.slane %v1669, 2
      %v1671 = vadd.f32 %v1669, %v1670
      %v1672 = vrot.slane %v1671, 1
      %v1673 = vadd.f32 %v1671, %v1672
      %s1674 = scalar_lea.vmem %s4, 24
      %v1675 = vld [vmem:[%s1674] sm:$0xff]
      %v1684 = vsel %vm971, %v1637, %v1631
      %v1685 = vsel %vm973, %v1643, %v1684
      %v1686 = vsel %vm975, %v1649, %v1685
      %v1687 = vsel %vm977, %v1655, %v1686
      %v1688 = vsel %vm979, %v1661, %v1687
      %v1689 = vsel %vm981, %v1667, %v1688
      %v1690 = vsel %vm983, %v1673, %v1689
      %v1693 = vsel %vm557, %v1675, 0
      %1695 = vmatprep.subr.mxu0 0.0
      %1696 = vmatpush1.msra.mxu0 0.0
      %1697 = vmatprep.subr.mxu0 0.0
      %1698 = vmatpush1.msra.mxu0 0.0
      %1699 = vmatprep.subr.mxu0 0.0
      %1700 = vmatpush1.msra.mxu0 0.0
      %1701 = vmatprep.subr.mxu0 0.0
      %1702 = vmatpush1.msra.mxu0 0.0
      %1703 = vmatprep.subr.mxu0 0.0
      %1704 = vmatpush1.msra.mxu0 0.0
      %1705 = vmatprep.subr.mxu0 0.0
      %1706 = vmatpush1.msra.mxu0 0.0
      %1707 = vmatprep.subr.mxu0 0.0
      %1708 = vmatpush1.msra.mxu0 0.0
      %1709 = vmatprep.subr.mxu0 0.0
      %1710 = vmatpush1.msra.mxu0 0.0
      %1711 = vmatprep.subr.mxu0 0.0
      %1712 = vmatpush1.msra.mxu0 0.0
      %1713 = vmatprep.subr.mxu0 0.0
      %1714 = vmatpush1.msra.mxu0 0.0
      %1715 = vmatprep.subr.mxu0 0.0
      %1716 = vmatpush1.msra.mxu0 0.0
      %1717 = vmatprep.subr.mxu0 0.0
      %1718 = vmatpush1.msra.mxu0 0.0
      %1719 = vmatprep.subr.mxu0 0.0
      %1720 = vmatpush1.msra.mxu0 0.0
      %1721 = vmatprep.subr.mxu0 0.0
      %1722 = vmatpush1.msra.mxu0 0.0
      %1723 = vmatprep.subr.mxu0 0.0
      %1724 = vmatpush1.msra.mxu0 0.0
      %1725 = vmatprep.subr.mxu0 0.0
      %1726 = vmatpush1.msra.mxu0 %v1690
      %1727 = vmatprep.subr.mxu0 0.0
      %1728 = vmatpush2.msra.mxu0 0.0
      %1729 = vmatprep.subr.mxu0 0.0
      %1730 = vmatpush2.msra.mxu0 0.0
      %1731 = vmatprep.subr.mxu0 0.0
      %1732 = vmatpush2.msra.mxu0 0.0
      %1733 = vmatprep.subr.mxu0 0.0
      %1734 = vmatpush2.msra.mxu0 0.0
      %1735 = vmatprep.subr.mxu0 0.0
      %1736 = vmatpush2.msra.mxu0 0.0
      %1737 = vmatprep.subr.mxu0 0.0
      %1738 = vmatpush2.msra.mxu0 0.0
      %1739 = vmatprep.subr.mxu0 0.0
      %1740 = vmatpush2.msra.mxu0 0.0
      %1741 = vmatprep.subr.mxu0 0.0
      %1742 = vmatpush2.msra.mxu0 0.0
      %1743 = vmatprep.subr.mxu0 0.0
      %1744 = vmatpush2.msra.mxu0 0.0
      %1745 = vmatprep.subr.mxu0 0.0
      %1746 = vmatpush2.msra.mxu0 0.0
      %1747 = vmatprep.subr.mxu0 0.0
      %1748 = vmatpush2.msra.mxu0 0.0
      %1749 = vmatprep.subr.mxu0 0.0
      %1750 = vmatpush2.msra.mxu0 0.0
      %1751 = vmatprep.subr.mxu0 0.0
      %1752 = vmatpush2.msra.mxu0 0.0
      %1753 = vmatprep.subr.mxu0 0.0
      %1754 = vmatpush2.msra.mxu0 0.0
      %1755 = vmatprep.subr.mxu0 0.0
      %1756 = vmatpush2.msra.mxu0 0.0
      %1757 = vmatprep.subr.mxu0 0.0
      %1758 = vmatpush2.msra.mxu0 0.0
      %1759 = vmatprep.mubr.f32.mxu0 0.0
      %1760 = vmatmul.mubr.f32.gmra.mxu0 %v1693
      %v1761 = vpop.f32.mrf.mxu0
      %v1762 = vadd.f32 0.0, %v1761
      %v1763 = vpop.f32.mrf.mxu0
      %1764 = vdwg.mxu0
      %v1765 = vadd.f32 %v1456, %v1762
      %v1766 = vlaneseq
      %v1767 = vshrl.u32 %v1766, 7
      %v1768 = vsub.s32 4, %v1767
      %v1769 = vrot.slane %v1461, %v1768
      %vm1770 = vcmp.eq.f32.partialorder %v486, %v1769
      %v1771 = vlaneseq
      %v1772 = vshrl.u32 %v1771, 7
      %v1773 = vsub.s32 4, %v1772
      %v1774 = vrot.slane %v1468, %v1773
      %v1775 = vsel %vm1770, %v1774, 0.0
      %v1776 = vlaneseq
      %v1777 = vshrl.u32 %v1776, 7
      %v1778 = vsub.s32 4, %v1777
      %v1779 = vrot.slane %v1464, %v1778
      %vm1780 = vcmp.eq.f32.partialorder %v486, %v1779
      %v1781 = vlaneseq
      %v1782 = vshrl.u32 %v1781, 7
      %v1783 = vsub.s32 4, %v1782
      %v1784 = vrot.slane %v1470, %v1783
      %v1785 = vsel %vm1780, %v1784, 0.0
      %v1786 = vadd.f32 %v1775, %v1785
      %v1787 = vlaneseq
      %v1788 = vshrl.u32 %v1787, 7
      %v1789 = vsub.s32 5, %v1788
      %v1790 = vrot.slane %v748, %v1789
      %vm1791 = vcmp.eq.f32.partialorder %v486, %v1790
      %v1792 = vlaneseq
      %v1793 = vshrl.u32 %v1792, 7
      %v1794 = vsub.s32 5, %v1793
      %v1795 = vrot.slane %v755, %v1794
      %v1796 = vsel %vm1791, %v1795, 0.0
      %v1797 = vlaneseq
      %v1798 = vshrl.u32 %v1797, 7
      %v1799 = vsub.s32 5, %v1798
      %v1800 = vrot.slane %v751, %v1799
      %vm1801 = vcmp.eq.f32.partialorder %v486, %v1800
      %v1802 = vlaneseq
      %v1803 = vshrl.u32 %v1802, 7
      %v1804 = vsub.s32 5, %v1803
      %v1805 = vrot.slane %v757, %v1804
      %v1806 = vsel %vm1801, %v1805, 0.0
      %v1807 = vadd.f32 %v1796, %v1806
      %1808 = vmatprep.subr.mxu0 0.0
      %1809 = vmatpush1.msra.mxu0 0.0
      %1810 = vmatprep.subr.mxu0 0.0
      %1811 = vmatpush1.msra.mxu0 0.0
      %1812 = vmatprep.subr.mxu0 0.0
      %1813 = vmatpush1.msra.mxu0 0.0
      %1814 = vmatprep.subr.mxu0 0.0
      %1815 = vmatpush1.msra.mxu0 0.0
      %1816 = vmatprep.subr.mxu0 0.0
      %1817 = vmatpush1.msra.mxu0 0.0
      %1818 = vmatprep.subr.mxu0 0.0
      %1819 = vmatpush1.msra.mxu0 0.0
      %1820 = vmatprep.subr.mxu0 0.0
      %1821 = vmatpush1.msra.mxu0 0.0
      %1822 = vmatprep.subr.mxu0 0.0
      %1823 = vmatpush1.msra.mxu0 0.0
      %1824 = vmatprep.subr.mxu0 0.0
      %1825 = vmatpush1.msra.mxu0 0.0
      %1826 = vmatprep.subr.mxu0 0.0
      %1827 = vmatpush1.msra.mxu0 0.0
      %1828 = vmatprep.subr.mxu0 0.0
      %1829 = vmatpush1.msra.mxu0 0.0
      %1830 = vmatprep.subr.mxu0 0.0
      %1831 = vmatpush1.msra.mxu0 0.0
      %1832 = vmatprep.subr.mxu0 0.0
      %1833 = vmatpush1.msra.mxu0 0.0
      %1834 = vmatprep.subr.mxu0 0.0
      %1835 = vmatpush1.msra.mxu0 0.0
      %1836 = vmatprep.subr.mxu0 0.0
      %1837 = vmatpush1.msra.mxu0 0.0
      %1838 = vmatprep.subr.mxu0 0.0
      %1839 = vmatpush1.msra.mxu0 %v1807
      %1840 = vmatprep.subr.mxu0 0.0
      %1841 = vmatpush2.msra.mxu0 0.0
      %1842 = vmatprep.subr.mxu0 0.0
      %1843 = vmatpush2.msra.mxu0 0.0
      %1844 = vmatprep.subr.mxu0 0.0
      %1845 = vmatpush2.msra.mxu0 0.0
      %1846 = vmatprep.subr.mxu0 0.0
      %1847 = vmatpush2.msra.mxu0 0.0
      %1848 = vmatprep.subr.mxu0 0.0
      %1849 = vmatpush2.msra.mxu0 0.0
      %1850 = vmatprep.subr.mxu0 0.0
      %1851 = vmatpush2.msra.mxu0 0.0
      %1852 = vmatprep.subr.mxu0 0.0
      %1853 = vmatpush2.msra.mxu0 0.0
      %1854 = vmatprep.subr.mxu0 0.0
      %1855 = vmatpush2.msra.mxu0 0.0
      %1856 = vmatprep.subr.mxu0 0.0
      %1857 = vmatpush2.msra.mxu0 0.0
      %1858 = vmatprep.subr.mxu0 0.0
      %1859 = vmatpush2.msra.mxu0 0.0
      %1860 = vmatprep.subr.mxu0 0.0
      %1861 = vmatpush2.msra.mxu0 0.0
      %1862 = vmatprep.subr.mxu0 0.0
      %1863 = vmatpush2.msra.mxu0 0.0
      %1864 = vmatprep.subr.mxu0 0.0
      %1865 = vmatpush2.msra.mxu0 0.0
      %1866 = vmatprep.subr.mxu0 0.0
      %1867 = vmatpush2.msra.mxu0 0.0
      %1868 = vmatprep.subr.mxu0 0.0
      %1869 = vmatpush2.msra.mxu0 0.0
      %1870 = vmatprep.subr.mxu0 0.0
      %1871 = vmatpush2.msra.mxu0 0.0
      %1872 = vmatprep.mubr.f32.mxu0 0.0
      %1873 = vmatmul.mubr.f32.gmra.mxu0 %v559
      %v1874 = vpop.f32.mrf.mxu0
      %v1875 = vadd.f32 0.0, %v1874
      %v1876 = vpop.f32.mrf.mxu0
      %1877 = vmatprep.mubr.f32.mxu0 0.0
      %1878 = vmatmul.mubr.f32.gmra.mxu0 %v562
      %v1879 = vpop.f32.mrf.mxu0
      %v1880 = vadd.f32 0.0, %v1879
      %v1881 = vpop.f32.mrf.mxu0
      %1882 = vmatprep.mubr.f32.mxu0 0.0
      %1883 = vmatmul.mubr.f32.gmra.mxu0 %v565
      %v1884 = vpop.f32.mrf.mxu0
      %v1885 = vadd.f32 0.0, %v1884
      %v1886 = vpop.f32.mrf.mxu0
      %1887 = vmatprep.mubr.f32.mxu0 0.0
      %1888 = vmatmul.mubr.f32.gmra.mxu0 %v568
      %v1889 = vpop.f32.mrf.mxu0
      %v1890 = vadd.f32 0.0, %v1889
      %v1891 = vpop.f32.mrf.mxu0
      %1892 = vmatprep.mubr.f32.mxu0 0.0
      %1893 = vmatmul.mubr.f32.gmra.mxu0 %v571
      %v1894 = vpop.f32.mrf.mxu0
      %v1895 = vadd.f32 0.0, %v1894
      %v1896 = vpop.f32.mrf.mxu0
      %1897 = vmatprep.mubr.f32.mxu0 0.0
      %1898 = vmatmul.mubr.f32.gmra.mxu0 %v574
      %v1899 = vpop.f32.mrf.mxu0
      %v1900 = vadd.f32 0.0, %v1899
      %v1901 = vpop.f32.mrf.mxu0
      %1902 = vmatprep.mubr.f32.mxu0 0.0
      %1903 = vmatmul.mubr.f32.gmra.mxu0 %v577
      %v1904 = vpop.f32.mrf.mxu0
      %v1905 = vadd.f32 0.0, %v1904
      %v1906 = vpop.f32.mrf.mxu0
      %1907 = vmatprep.mubr.f32.mxu0 0.0
      %1908 = vmatmul.mubr.f32.gmra.mxu0 %v580
      %v1909 = vpop.f32.mrf.mxu0
      %v1910 = vadd.f32 0.0, %v1909
      %v1911 = vpop.f32.mrf.mxu0
      %1912 = vdwg.mxu0
      %v1913 = vmul.f32 %v1875, %v1786
      %v1914 = vmul.f32 %v1880, %v1786
      %v1915 = vmul.f32 %v1885, %v1786
      %v1916 = vmul.f32 %v1890, %v1786
      %v1917 = vmul.f32 %v1895, %v1786
      %v1918 = vmul.f32 %v1900, %v1786
      %v1919 = vmul.f32 %v1905, %v1786
      %v1920 = vmul.f32 %v1910, %v1786
      %v1921 = vrot.slane %v1913, 4
      %v1922 = vadd.f32 %v1913, %v1921
      %v1923 = vrot.slane %v1922, 2
      %v1924 = vadd.f32 %v1922, %v1923
      %v1925 = vrot.slane %v1924, 1
      %v1926 = vadd.f32 %v1924, %v1925
      %v1927 = vrot.slane %v1914, 4
      %v1928 = vadd.f32 %v1914, %v1927
      %v1929 = vrot.slane %v1928, 2
      %v1930 = vadd.f32 %v1928, %v1929
      %v1931 = vrot.slane %v1930, 1
      %v1932 = vadd.f32 %v1930, %v1931
      %v1933 = vrot.slane %v1915, 4
      %v1934 = vadd.f32 %v1915, %v1933
      %v1935 = vrot.slane %v1934, 2
      %v1936 = vadd.f32 %v1934, %v1935
      %v1937 = vrot.slane %v1936, 1
      %v1938 = vadd.f32 %v1936, %v1937
      %v1939 = vrot.slane %v1916, 4
      %v1940 = vadd.f32 %v1916, %v1939
      %v1941 = vrot.slane %v1940, 2
      %v1942 = vadd.f32 %v1940, %v1941
      %v1943 = vrot.slane %v1942, 1
      %v1944 = vadd.f32 %v1942, %v1943
      %v1945 = vrot.slane %v1917, 4
      %v1946 = vadd.f32 %v1917, %v1945
      %v1947 = vrot.slane %v1946, 2
      %v1948 = vadd.f32 %v1946, %v1947
      %v1949 = vrot.slane %v1948, 1
      %v1950 = vadd.f32 %v1948, %v1949
      %v1951 = vrot.slane %v1918, 4
      %v1952 = vadd.f32 %v1918, %v1951
      %v1953 = vrot.slane %v1952, 2
      %v1954 = vadd.f32 %v1952, %v1953
      %v1955 = vrot.slane %v1954, 1
      %v1956 = vadd.f32 %v1954, %v1955
      %v1957 = vrot.slane %v1919, 4
      %v1958 = vadd.f32 %v1919, %v1957
      %v1959 = vrot.slane %v1958, 2
      %v1960 = vadd.f32 %v1958, %v1959
      %v1961 = vrot.slane %v1960, 1
      %v1962 = vadd.f32 %v1960, %v1961
      %v1963 = vrot.slane %v1920, 4
      %v1964 = vadd.f32 %v1920, %v1963
      %v1965 = vrot.slane %v1964, 2
      %v1966 = vadd.f32 %v1964, %v1965
      %v1967 = vrot.slane %v1966, 1
      %v1968 = vadd.f32 %v1966, %v1967
      %s1969 = scalar_lea.vmem %s4, 32
      %v1970 = vld [vmem:[%s1969] sm:$0xff]
      %v1979 = vsel %vm971, %v1932, %v1926
      %v1980 = vsel %vm973, %v1938, %v1979
      %v1981 = vsel %vm975, %v1944, %v1980
      %v1982 = vsel %vm977, %v1950, %v1981
      %v1983 = vsel %vm979, %v1956, %v1982
      %v1984 = vsel %vm981, %v1962, %v1983
      %v1985 = vsel %vm983, %v1968, %v1984
      %v1988 = vsel %vm557, %v1970, 0
      %1990 = vmatprep.subr.mxu0 0.0
      %1991 = vmatpush1.msra.mxu0 0.0
      %1992 = vmatprep.subr.mxu0 0.0
      %1993 = vmatpush1.msra.mxu0 0.0
      %1994 = vmatprep.subr.mxu0 0.0
      %1995 = vmatpush1.msra.mxu0 0.0
      %1996 = vmatprep.subr.mxu0 0.0
      %1997 = vmatpush1.msra.mxu0 0.0
      %1998 = vmatprep.subr.mxu0 0.0
      %1999 = vmatpush1.msra.mxu0 0.0
      %2000 = vmatprep.subr.mxu0 0.0
      %2001 = vmatpush1.msra.mxu0 0.0
      %2002 = vmatprep.subr.mxu0 0.0
      %2003 = vmatpush1.msra.mxu0 0.0
      %2004 = vmatprep.subr.mxu0 0.0
      %2005 = vmatpush1.msra.mxu0 0.0
      %2006 = vmatprep.subr.mxu0 0.0
      %2007 = vmatpush1.msra.mxu0 0.0
      %2008 = vmatprep.subr.mxu0 0.0
      %2009 = vmatpush1.msra.mxu0 0.0
      %2010 = vmatprep.subr.mxu0 0.0
      %2011 = vmatpush1.msra.mxu0 0.0
      %2012 = vmatprep.subr.mxu0 0.0
      %2013 = vmatpush1.msra.mxu0 0.0
      %2014 = vmatprep.subr.mxu0 0.0
      %2015 = vmatpush1.msra.mxu0 0.0
      %2016 = vmatprep.subr.mxu0 0.0
      %2017 = vmatpush1.msra.mxu0 0.0
      %2018 = vmatprep.subr.mxu0 0.0
      %2019 = vmatpush1.msra.mxu0 0.0
      %2020 = vmatprep.subr.mxu0 0.0
      %2021 = vmatpush1.msra.mxu0 %v1985
      %2022 = vmatprep.subr.mxu0 0.0
      %2023 = vmatpush2.msra.mxu0 0.0
      %2024 = vmatprep.subr.mxu0 0.0
      %2025 = vmatpush2.msra.mxu0 0.0
      %2026 = vmatprep.subr.mxu0 0.0
      %2027 = vmatpush2.msra.mxu0 0.0
      %2028 = vmatprep.subr.mxu0 0.0
      %2029 = vmatpush2.msra.mxu0 0.0
      %2030 = vmatprep.subr.mxu0 0.0
      %2031 = vmatpush2.msra.mxu0 0.0
      %2032 = vmatprep.subr.mxu0 0.0
      %2033 = vmatpush2.msra.mxu0 0.0
      %2034 = vmatprep.subr.mxu0 0.0
      %2035 = vmatpush2.msra.mxu0 0.0
      %2036 = vmatprep.subr.mxu0 0.0
      %2037 = vmatpush2.msra.mxu0 0.0
      %2038 = vmatprep.subr.mxu0 0.0
      %2039 = vmatpush2.msra.mxu0 0.0
      %2040 = vmatprep.subr.mxu0 0.0
      %2041 = vmatpush2.msra.mxu0 0.0
      %2042 = vmatprep.subr.mxu0 0.0
      %2043 = vmatpush2.msra.mxu0 0.0
      %2044 = vmatprep.subr.mxu0 0.0
      %2045 = vmatpush2.msra.mxu0 0.0
      %2046 = vmatprep.subr.mxu0 0.0
      %2047 = vmatpush2.msra.mxu0 0.0
      %2048 = vmatprep.subr.mxu0 0.0
      %2049 = vmatpush2.msra.mxu0 0.0
      %2050 = vmatprep.subr.mxu0 0.0
      %2051 = vmatpush2.msra.mxu0 0.0
      %2052 = vmatprep.subr.mxu0 0.0
      %2053 = vmatpush2.msra.mxu0 0.0
      %2054 = vmatprep.mubr.f32.mxu0 0.0
      %2055 = vmatmul.mubr.f32.gmra.mxu0 %v1988
      %v2056 = vpop.f32.mrf.mxu0
      %v2057 = vadd.f32 0.0, %v2056
      %v2058 = vpop.f32.mrf.mxu0
      %2059 = vdwg.mxu0
      %v2060 = vadd.f32 %v1765, %v2057
      %v2061 = vlaneseq
      %v2062 = vshrl.u32 %v2061, 7
      %v2063 = vsub.s32 5, %v2062
      %v2064 = vrot.slane %v1461, %v2063
      %vm2065 = vcmp.eq.f32.partialorder %v486, %v2064
      %v2066 = vlaneseq
      %v2067 = vshrl.u32 %v2066, 7
      %v2068 = vsub.s32 5, %v2067
      %v2069 = vrot.slane %v1468, %v2068
      %v2070 = vsel %vm2065, %v2069, 0.0
      %v2071 = vlaneseq
      %v2072 = vshrl.u32 %v2071, 7
      %v2073 = vsub.s32 5, %v2072
      %v2074 = vrot.slane %v1464, %v2073
      %vm2075 = vcmp.eq.f32.partialorder %v486, %v2074
      %v2076 = vlaneseq
      %v2077 = vshrl.u32 %v2076, 7
      %v2078 = vsub.s32 5, %v2077
      %v2079 = vrot.slane %v1470, %v2078
      %v2080 = vsel %vm2075, %v2079, 0.0
      %v2081 = vadd.f32 %v2070, %v2080
      %v2082 = vlaneseq
      %v2083 = vshrl.u32 %v2082, 7
      %v2084 = vsub.s32 6, %v2083
      %v2085 = vrot.slane %v1152, %v2084
      %vm2086 = vcmp.eq.f32.partialorder %v486, %v2085
      %v2087 = vlaneseq
      %v2088 = vshrl.u32 %v2087, 7
      %v2089 = vsub.s32 6, %v2088
      %v2090 = vrot.slane %v1159, %v2089
      %v2091 = vsel %vm2086, %v2090, 0.0
      %v2092 = vlaneseq
      %v2093 = vshrl.u32 %v2092, 7
      %v2094 = vsub.s32 6, %v2093
      %v2095 = vrot.slane %v1155, %v2094
      %vm2096 = vcmp.eq.f32.partialorder %v486, %v2095
      %v2097 = vlaneseq
      %v2098 = vshrl.u32 %v2097, 7
      %v2099 = vsub.s32 6, %v2098
      %v2100 = vrot.slane %v1161, %v2099
      %v2101 = vsel %vm2096, %v2100, 0.0
      %v2102 = vadd.f32 %v2091, %v2101
      %2103 = vmatprep.subr.mxu0 0.0
      %2104 = vmatpush1.msra.mxu0 0.0
      %2105 = vmatprep.subr.mxu0 0.0
      %2106 = vmatpush1.msra.mxu0 0.0
      %2107 = vmatprep.subr.mxu0 0.0
      %2108 = vmatpush1.msra.mxu0 0.0
      %2109 = vmatprep.subr.mxu0 0.0
      %2110 = vmatpush1.msra.mxu0 0.0
      %2111 = vmatprep.subr.mxu0 0.0
      %2112 = vmatpush1.msra.mxu0 0.0
      %2113 = vmatprep.subr.mxu0 0.0
      %2114 = vmatpush1.msra.mxu0 0.0
      %2115 = vmatprep.subr.mxu0 0.0
      %2116 = vmatpush1.msra.mxu0 0.0
      %2117 = vmatprep.subr.mxu0 0.0
      %2118 = vmatpush1.msra.mxu0 0.0
      %2119 = vmatprep.subr.mxu0 0.0
      %2120 = vmatpush1.msra.mxu0 0.0
      %2121 = vmatprep.subr.mxu0 0.0
      %2122 = vmatpush1.msra.mxu0 0.0
      %2123 = vmatprep.subr.mxu0 0.0
      %2124 = vmatpush1.msra.mxu0 0.0
      %2125 = vmatprep.subr.mxu0 0.0
      %2126 = vmatpush1.msra.mxu0 0.0
      %2127 = vmatprep.subr.mxu0 0.0
      %2128 = vmatpush1.msra.mxu0 0.0
      %2129 = vmatprep.subr.mxu0 0.0
      %2130 = vmatpush1.msra.mxu0 0.0
      %2131 = vmatprep.subr.mxu0 0.0
      %2132 = vmatpush1.msra.mxu0 0.0
      %2133 = vmatprep.subr.mxu0 0.0
      %2134 = vmatpush1.msra.mxu0 %v2102
      %2135 = vmatprep.subr.mxu0 0.0
      %2136 = vmatpush2.msra.mxu0 0.0
      %2137 = vmatprep.subr.mxu0 0.0
      %2138 = vmatpush2.msra.mxu0 0.0
      %2139 = vmatprep.subr.mxu0 0.0
      %2140 = vmatpush2.msra.mxu0 0.0
      %2141 = vmatprep.subr.mxu0 0.0
      %2142 = vmatpush2.msra.mxu0 0.0
      %2143 = vmatprep.subr.mxu0 0.0
      %2144 = vmatpush2.msra.mxu0 0.0
      %2145 = vmatprep.subr.mxu0 0.0
      %2146 = vmatpush2.msra.mxu0 0.0
      %2147 = vmatprep.subr.mxu0 0.0
      %2148 = vmatpush2.msra.mxu0 0.0
      %2149 = vmatprep.subr.mxu0 0.0
      %2150 = vmatpush2.msra.mxu0 0.0
      %2151 = vmatprep.subr.mxu0 0.0
      %2152 = vmatpush2.msra.mxu0 0.0
      %2153 = vmatprep.subr.mxu0 0.0
      %2154 = vmatpush2.msra.mxu0 0.0
      %2155 = vmatprep.subr.mxu0 0.0
      %2156 = vmatpush2.msra.mxu0 0.0
      %2157 = vmatprep.subr.mxu0 0.0
      %2158 = vmatpush2.msra.mxu0 0.0
      %2159 = vmatprep.subr.mxu0 0.0
      %2160 = vmatpush2.msra.mxu0 0.0
      %2161 = vmatprep.subr.mxu0 0.0
      %2162 = vmatpush2.msra.mxu0 0.0
      %2163 = vmatprep.subr.mxu0 0.0
      %2164 = vmatpush2.msra.mxu0 0.0
      %2165 = vmatprep.subr.mxu0 0.0
      %2166 = vmatpush2.msra.mxu0 0.0
      %2167 = vmatprep.mubr.f32.mxu0 0.0
      %2168 = vmatmul.mubr.f32.gmra.mxu0 %v559
      %v2169 = vpop.f32.mrf.mxu0
      %v2170 = vadd.f32 0.0, %v2169
      %v2171 = vpop.f32.mrf.mxu0
      %2172 = vmatprep.mubr.f32.mxu0 0.0
      %2173 = vmatmul.mubr.f32.gmra.mxu0 %v562
      %v2174 = vpop.f32.mrf.mxu0
      %v2175 = vadd.f32 0.0, %v2174
      %v2176 = vpop.f32.mrf.mxu0
      %2177 = vmatprep.mubr.f32.mxu0 0.0
      %2178 = vmatmul.mubr.f32.gmra.mxu0 %v565
      %v2179 = vpop.f32.mrf.mxu0
      %v2180 = vadd.f32 0.0, %v2179
      %v2181 = vpop.f32.mrf.mxu0
      %2182 = vmatprep.mubr.f32.mxu0 0.0
      %2183 = vmatmul.mubr.f32.gmra.mxu0 %v568
      %v2184 = vpop.f32.mrf.mxu0
      %v2185 = vadd.f32 0.0, %v2184
      %v2186 = vpop.f32.mrf.mxu0
      %2187 = vmatprep.mubr.f32.mxu0 0.0
      %2188 = vmatmul.mubr.f32.gmra.mxu0 %v571
      %v2189 = vpop.f32.mrf.mxu0
      %v2190 = vadd.f32 0.0, %v2189
      %v2191 = vpop.f32.mrf.mxu0
      %2192 = vmatprep.mubr.f32.mxu0 0.0
      %2193 = vmatmul.mubr.f32.gmra.mxu0 %v574
      %v2194 = vpop.f32.mrf.mxu0
      %v2195 = vadd.f32 0.0, %v2194
      %v2196 = vpop.f32.mrf.mxu0
      %2197 = vmatprep.mubr.f32.mxu0 0.0
      %2198 = vmatmul.mubr.f32.gmra.mxu0 %v577
      %v2199 = vpop.f32.mrf.mxu0
      %v2200 = vadd.f32 0.0, %v2199
      %v2201 = vpop.f32.mrf.mxu0
      %2202 = vmatprep.mubr.f32.mxu0 0.0
      %2203 = vmatmul.mubr.f32.gmra.mxu0 %v580
      %v2204 = vpop.f32.mrf.mxu0
      %v2205 = vadd.f32 0.0, %v2204
      %v2206 = vpop.f32.mrf.mxu0
      %2207 = vdwg.mxu0
      %v2208 = vmul.f32 %v2170, %v2081
      %v2209 = vmul.f32 %v2175, %v2081
      %v2210 = vmul.f32 %v2180, %v2081
      %v2211 = vmul.f32 %v2185, %v2081
      %v2212 = vmul.f32 %v2190, %v2081
      %v2213 = vmul.f32 %v2195, %v2081
      %v2214 = vmul.f32 %v2200, %v2081
      %v2215 = vmul.f32 %v2205, %v2081
      %v2216 = vrot.slane %v2208, 4
      %v2217 = vadd.f32 %v2208, %v2216
      %v2218 = vrot.slane %v2217, 2
      %v2219 = vadd.f32 %v2217, %v2218
      %v2220 = vrot.slane %v2219, 1
      %v2221 = vadd.f32 %v2219, %v2220
      %v2222 = vrot.slane %v2209, 4
      %v2223 = vadd.f32 %v2209, %v2222
      %v2224 = vrot.slane %v2223, 2
      %v2225 = vadd.f32 %v2223, %v2224
      %v2226 = vrot.slane %v2225, 1
      %v2227 = vadd.f32 %v2225, %v2226
      %v2228 = vrot.slane %v2210, 4
      %v2229 = vadd.f32 %v2210, %v2228
      %v2230 = vrot.slane %v2229, 2
      %v2231 = vadd.f32 %v2229, %v2230
      %v2232 = vrot.slane %v2231, 1
      %v2233 = vadd.f32 %v2231, %v2232
      %v2234 = vrot.slane %v2211, 4
      %v2235 = vadd.f32 %v2211, %v2234
      %v2236 = vrot.slane %v2235, 2
      %v2237 = vadd.f32 %v2235, %v2236
      %v2238 = vrot.slane %v2237, 1
      %v2239 = vadd.f32 %v2237, %v2238
      %v2240 = vrot.slane %v2212, 4
      %v2241 = vadd.f32 %v2212, %v2240
      %v2242 = vrot.slane %v2241, 2
      %v2243 = vadd.f32 %v2241, %v2242
      %v2244 = vrot.slane %v2243, 1
      %v2245 = vadd.f32 %v2243, %v2244
      %v2246 = vrot.slane %v2213, 4
      %v2247 = vadd.f32 %v2213, %v2246
      %v2248 = vrot.slane %v2247, 2
      %v2249 = vadd.f32 %v2247, %v2248
      %v2250 = vrot.slane %v2249, 1
      %v2251 = vadd.f32 %v2249, %v2250
      %v2252 = vrot.slane %v2214, 4
      %v2253 = vadd.f32 %v2214, %v2252
      %v2254 = vrot.slane %v2253, 2
      %v2255 = vadd.f32 %v2253, %v2254
      %v2256 = vrot.slane %v2255, 1
      %v2257 = vadd.f32 %v2255, %v2256
      %v2258 = vrot.slane %v2215, 4
      %v2259 = vadd.f32 %v2215, %v2258
      %v2260 = vrot.slane %v2259, 2
      %v2261 = vadd.f32 %v2259, %v2260
      %v2262 = vrot.slane %v2261, 1
      %v2263 = vadd.f32 %v2261, %v2262
      %s2264 = scalar_lea.vmem %s4, 40
      %v2265 = vld [vmem:[%s2264] sm:$0xff]
      %v2274 = vsel %vm971, %v2227, %v2221
      %v2275 = vsel %vm973, %v2233, %v2274
      %v2276 = vsel %vm975, %v2239, %v2275
      %v2277 = vsel %vm977, %v2245, %v2276
      %v2278 = vsel %vm979, %v2251, %v2277
      %v2279 = vsel %vm981, %v2257, %v2278
      %v2280 = vsel %vm983, %v2263, %v2279
      %v2283 = vsel %vm557, %v2265, 0
      %2285 = vmatprep.subr.mxu0 0.0
      %2286 = vmatpush1.msra.mxu0 0.0
      %2287 = vmatprep.subr.mxu0 0.0
      %2288 = vmatpush1.msra.mxu0 0.0
      %2289 = vmatprep.subr.mxu0 0.0
      %2290 = vmatpush1.msra.mxu0 0.0
      %2291 = vmatprep.subr.mxu0 0.0
      %2292 = vmatpush1.msra.mxu0 0.0
      %2293 = vmatprep.subr.mxu0 0.0
      %2294 = vmatpush1.msra.mxu0 0.0
      %2295 = vmatprep.subr.mxu0 0.0
      %2296 = vmatpush1.msra.mxu0 0.0
      %2297 = vmatprep.subr.mxu0 0.0
      %2298 = vmatpush1.msra.mxu0 0.0
      %2299 = vmatprep.subr.mxu0 0.0
      %2300 = vmatpush1.msra.mxu0 0.0
      %2301 = vmatprep.subr.mxu0 0.0
      %2302 = vmatpush1.msra.mxu0 0.0
      %2303 = vmatprep.subr.mxu0 0.0
      %2304 = vmatpush1.msra.mxu0 0.0
      %2305 = vmatprep.subr.mxu0 0.0
      %2306 = vmatpush1.msra.mxu0 0.0
      %2307 = vmatprep.subr.mxu0 0.0
      %2308 = vmatpush1.msra.mxu0 0.0
      %2309 = vmatprep.subr.mxu0 0.0
      %2310 = vmatpush1.msra.mxu0 0.0
      %2311 = vmatprep.subr.mxu0 0.0
      %2312 = vmatpush1.msra.mxu0 0.0
      %2313 = vmatprep.subr.mxu0 0.0
      %2314 = vmatpush1.msra.mxu0 0.0
      %2315 = vmatprep.subr.mxu0 0.0
      %2316 = vmatpush1.msra.mxu0 %v2280
      %2317 = vmatprep.subr.mxu0 0.0
      %2318 = vmatpush2.msra.mxu0 0.0
      %2319 = vmatprep.subr.mxu0 0.0
      %2320 = vmatpush2.msra.mxu0 0.0
      %2321 = vmatprep.subr.mxu0 0.0
      %2322 = vmatpush2.msra.mxu0 0.0
      %2323 = vmatprep.subr.mxu0 0.0
      %2324 = vmatpush2.msra.mxu0 0.0
      %2325 = vmatprep.subr.mxu0 0.0
      %2326 = vmatpush2.msra.mxu0 0.0
      %2327 = vmatprep.subr.mxu0 0.0
      %2328 = vmatpush2.msra.mxu0 0.0
      %2329 = vmatprep.subr.mxu0 0.0
      %2330 = vmatpush2.msra.mxu0 0.0
      %2331 = vmatprep.subr.mxu0 0.0
      %2332 = vmatpush2.msra.mxu0 0.0
      %2333 = vmatprep.subr.mxu0 0.0
      %2334 = vmatpush2.msra.mxu0 0.0
      %2335 = vmatprep.subr.mxu0 0.0
      %2336 = vmatpush2.msra.mxu0 0.0
      %2337 = vmatprep.subr.mxu0 0.0
      %2338 = vmatpush2.msra.mxu0 0.0
      %2339 = vmatprep.subr.mxu0 0.0
      %2340 = vmatpush2.msra.mxu0 0.0
      %2341 = vmatprep.subr.mxu0 0.0
      %2342 = vmatpush2.msra.mxu0 0.0
      %2343 = vmatprep.subr.mxu0 0.0
      %2344 = vmatpush2.msra.mxu0 0.0
      %2345 = vmatprep.subr.mxu0 0.0
      %2346 = vmatpush2.msra.mxu0 0.0
      %2347 = vmatprep.subr.mxu0 0.0
      %2348 = vmatpush2.msra.mxu0 0.0
      %2349 = vmatprep.mubr.f32.mxu0 0.0
      %2350 = vmatmul.mubr.f32.gmra.mxu0 %v2283
      %v2351 = vpop.f32.mrf.mxu0
      %v2352 = vadd.f32 0.0, %v2351
      %v2353 = vpop.f32.mrf.mxu0
      %2354 = vdwg.mxu0
      %v2355 = vadd.f32 %v2060, %v2352
      %v2356 = vadd.f32 %v481, 1.0
      %v2357 = vadd.f32 %v2356, %v463
      %v2358 = vfloor.f32 %v2357
      %v2359 = vmax.f32 %v2358, 0.0
      %v2360 = vmin.f32 %v2359, 7.0
      %v2361 = vadd.f32 %v2358, 1.0
      %v2362 = vmax.f32 %v2361, 0.0
      %v2363 = vmin.f32 %v2362, 7.0
      %v2364 = vmax.f32 %v2357, 0.0
      %v2365 = vmin.f32 %v2364, 7.0
      %v2366 = vsub.f32 %v2360, %v2365
      %v2367 = vadd.f32 %v2366, 1.0
      %v2368 = vsub.f32 %v2363, %v2365
      %v2369 = vsub.f32 1.0, %v2368
      %v2370 = vlaneseq
      %v2371 = vshrl.u32 %v2370, 7
      %v2372 = vsub.s32 6, %v2371
      %v2373 = vrot.slane %v2360, %v2372
      %vm2374 = vcmp.eq.f32.partialorder %v486, %v2373
      %v2375 = vlaneseq
      %v2376 = vshrl.u32 %v2375, 7
      %v2377 = vsub.s32 6, %v2376
      %v2378 = vrot.slane %v2367, %v2377
      %v2379 = vsel %vm2374, %v2378, 0.0
      %v2380 = vlaneseq
      %v2381 = vshrl.u32 %v2380, 7
      %v2382 = vsub.s32 6, %v2381
      %v2383 = vrot.slane %v2363, %v2382
      %vm2384 = vcmp.eq.f32.partialorder %v486, %v2383
      %v2385 = vlaneseq
      %v2386 = vshrl.u32 %v2385, 7
      %v2387 = vsub.s32 6, %v2386
      %v2388 = vrot.slane %v2369, %v2387
      %v2389 = vsel %vm2384, %v2388, 0.0
      %v2390 = vadd.f32 %v2379, %v2389
      %v2391 = vlaneseq
      %v2392 = vshrl.u32 %v2391, 7
      %v2393 = vsub.s32 7, %v2392
      %v2394 = vrot.slane %v499, %v2393
      %vm2395 = vcmp.eq.f32.partialorder %v486, %v2394
      %v2396 = vlaneseq
      %v2397 = vshrl.u32 %v2396, 7
      %v2398 = vsub.s32 7, %v2397
      %v2399 = vrot.slane %v512, %v2398
      %v2400 = vsel %vm2395, %v2399, 0.0
      %v2401 = vlaneseq
      %v2402 = vshrl.u32 %v2401, 7
      %v2403 = vsub.s32 7, %v2402
      %v2404 = vrot.slane %v502, %v2403
      %vm2405 = vcmp.eq.f32.partialorder %v486, %v2404
      %v2406 = vlaneseq
      %v2407 = vshrl.u32 %v2406, 7
      %v2408 = vsub.s32 7, %v2407
      %v2409 = vrot.slane %v514, %v2408
      %v2410 = vsel %vm2405, %v2409, 0.0
      %v2411 = vadd.f32 %v2400, %v2410
      %2412 = vmatprep.subr.mxu0 0.0
      %2413 = vmatpush1.msra.mxu0 0.0
      %2414 = vmatprep.subr.mxu0 0.0
      %2415 = vmatpush1.msra.mxu0 0.0
      %2416 = vmatprep.subr.mxu0 0.0
      %2417 = vmatpush1.msra.mxu0 0.0
      %2418 = vmatprep.subr.mxu0 0.0
      %2419 = vmatpush1.msra.mxu0 0.0
      %2420 = vmatprep.subr.mxu0 0.0
      %2421 = vmatpush1.msra.mxu0 0.0
      %2422 = vmatprep.subr.mxu0 0.0
      %2423 = vmatpush1.msra.mxu0 0.0
      %2424 = vmatprep.subr.mxu0 0.0
      %2425 = vmatpush1.msra.mxu0 0.0
      %2426 = vmatprep.subr.mxu0 0.0
      %2427 = vmatpush1.msra.mxu0 0.0
      %2428 = vmatprep.subr.mxu0 0.0
      %2429 = vmatpush1.msra.mxu0 0.0
      %2430 = vmatprep.subr.mxu0 0.0
      %2431 = vmatpush1.msra.mxu0 0.0
      %2432 = vmatprep.subr.mxu0 0.0
      %2433 = vmatpush1.msra.mxu0 0.0
      %2434 = vmatprep.subr.mxu0 0.0
      %2435 = vmatpush1.msra.mxu0 0.0
      %2436 = vmatprep.subr.mxu0 0.0
      %2437 = vmatpush1.msra.mxu0 0.0
      %2438 = vmatprep.subr.mxu0 0.0
      %2439 = vmatpush1.msra.mxu0 0.0
      %2440 = vmatprep.subr.mxu0 0.0
      %2441 = vmatpush1.msra.mxu0 0.0
      %2442 = vmatprep.subr.mxu0 0.0
      %2443 = vmatpush1.msra.mxu0 %v2411
      %2444 = vmatprep.subr.mxu0 0.0
      %2445 = vmatpush2.msra.mxu0 0.0
      %2446 = vmatprep.subr.mxu0 0.0
      %2447 = vmatpush2.msra.mxu0 0.0
      %2448 = vmatprep.subr.mxu0 0.0
      %2449 = vmatpush2.msra.mxu0 0.0
      %2450 = vmatprep.subr.mxu0 0.0
      %2451 = vmatpush2.msra.mxu0 0.0
      %2452 = vmatprep.subr.mxu0 0.0
      %2453 = vmatpush2.msra.mxu0 0.0
      %2454 = vmatprep.subr.mxu0 0.0
      %2455 = vmatpush2.msra.mxu0 0.0
      %2456 = vmatprep.subr.mxu0 0.0
      %2457 = vmatpush2.msra.mxu0 0.0
      %2458 = vmatprep.subr.mxu0 0.0
      %2459 = vmatpush2.msra.mxu0 0.0
      %2460 = vmatprep.subr.mxu0 0.0
      %2461 = vmatpush2.msra.mxu0 0.0
      %2462 = vmatprep.subr.mxu0 0.0
      %2463 = vmatpush2.msra.mxu0 0.0
      %2464 = vmatprep.subr.mxu0 0.0
      %2465 = vmatpush2.msra.mxu0 0.0
      %2466 = vmatprep.subr.mxu0 0.0
      %2467 = vmatpush2.msra.mxu0 0.0
      %2468 = vmatprep.subr.mxu0 0.0
      %2469 = vmatpush2.msra.mxu0 0.0
      %2470 = vmatprep.subr.mxu0 0.0
      %2471 = vmatpush2.msra.mxu0 0.0
      %2472 = vmatprep.subr.mxu0 0.0
      %2473 = vmatpush2.msra.mxu0 0.0
      %2474 = vmatprep.subr.mxu0 0.0
      %2475 = vmatpush2.msra.mxu0 0.0
      %2476 = vmatprep.mubr.f32.mxu0 0.0
      %2477 = vmatmul.mubr.f32.gmra.mxu0 %v559
      %v2478 = vpop.f32.mrf.mxu0
      %v2479 = vadd.f32 0.0, %v2478
      %v2480 = vpop.f32.mrf.mxu0
      %2481 = vmatprep.mubr.f32.mxu0 0.0
      %2482 = vmatmul.mubr.f32.gmra.mxu0 %v562
      %v2483 = vpop.f32.mrf.mxu0
      %v2484 = vadd.f32 0.0, %v2483
      %v2485 = vpop.f32.mrf.mxu0
      %2486 = vmatprep.mubr.f32.mxu0 0.0
      %2487 = vmatmul.mubr.f32.gmra.mxu0 %v565
      %v2488 = vpop.f32.mrf.mxu0
      %v2489 = vadd.f32 0.0, %v2488
      %v2490 = vpop.f32.mrf.mxu0
      %2491 = vmatprep.mubr.f32.mxu0 0.0
      %2492 = vmatmul.mubr.f32.gmra.mxu0 %v568
      %v2493 = vpop.f32.mrf.mxu0
      %v2494 = vadd.f32 0.0, %v2493
      %v2495 = vpop.f32.mrf.mxu0
      %2496 = vmatprep.mubr.f32.mxu0 0.0
      %2497 = vmatmul.mubr.f32.gmra.mxu0 %v571
      %v2498 = vpop.f32.mrf.mxu0
      %v2499 = vadd.f32 0.0, %v2498
      %v2500 = vpop.f32.mrf.mxu0
      %2501 = vmatprep.mubr.f32.mxu0 0.0
      %2502 = vmatmul.mubr.f32.gmra.mxu0 %v574
      %v2503 = vpop.f32.mrf.mxu0
      %v2504 = vadd.f32 0.0, %v2503
      %v2505 = vpop.f32.mrf.mxu0
      %2506 = vmatprep.mubr.f32.mxu0 0.0
      %2507 = vmatmul.mubr.f32.gmra.mxu0 %v577
      %v2508 = vpop.f32.mrf.mxu0
      %v2509 = vadd.f32 0.0, %v2508
      %v2510 = vpop.f32.mrf.mxu0
      %2511 = vmatprep.mubr.f32.mxu0 0.0
      %2512 = vmatmul.mubr.f32.gmra.mxu0 %v580
      %v2513 = vpop.f32.mrf.mxu0
      %v2514 = vadd.f32 0.0, %v2513
      %v2515 = vpop.f32.mrf.mxu0
      %2516 = vdwg.mxu0
      %v2517 = vmul.f32 %v2479, %v2390
      %v2518 = vmul.f32 %v2484, %v2390
      %v2519 = vmul.f32 %v2489, %v2390
      %v2520 = vmul.f32 %v2494, %v2390
      %v2521 = vmul.f32 %v2499, %v2390
      %v2522 = vmul.f32 %v2504, %v2390
      %v2523 = vmul.f32 %v2509, %v2390
      %v2524 = vmul.f32 %v2514, %v2390
      %v2525 = vrot.slane %v2517, 4
      %v2526 = vadd.f32 %v2517, %v2525
      %v2527 = vrot.slane %v2526, 2
      %v2528 = vadd.f32 %v2526, %v2527
      %v2529 = vrot.slane %v2528, 1
      %v2530 = vadd.f32 %v2528, %v2529
      %v2531 = vrot.slane %v2518, 4
      %v2532 = vadd.f32 %v2518, %v2531
      %v2533 = vrot.slane %v2532, 2
      %v2534 = vadd.f32 %v2532, %v2533
      %v2535 = vrot.slane %v2534, 1
      %v2536 = vadd.f32 %v2534, %v2535
      %v2537 = vrot.slane %v2519, 4
      %v2538 = vadd.f32 %v2519, %v2537
      %v2539 = vrot.slane %v2538, 2
      %v2540 = vadd.f32 %v2538, %v2539
      %v2541 = vrot.slane %v2540, 1
      %v2542 = vadd.f32 %v2540, %v2541
      %v2543 = vrot.slane %v2520, 4
      %v2544 = vadd.f32 %v2520, %v2543
      %v2545 = vrot.slane %v2544, 2
      %v2546 = vadd.f32 %v2544, %v2545
      %v2547 = vrot.slane %v2546, 1
      %v2548 = vadd.f32 %v2546, %v2547
      %v2549 = vrot.slane %v2521, 4
      %v2550 = vadd.f32 %v2521, %v2549
      %v2551 = vrot.slane %v2550, 2
      %v2552 = vadd.f32 %v2550, %v2551
      %v2553 = vrot.slane %v2552, 1
      %v2554 = vadd.f32 %v2552, %v2553
      %v2555 = vrot.slane %v2522, 4
      %v2556 = vadd.f32 %v2522, %v2555
      %v2557 = vrot.slane %v2556, 2
      %v2558 = vadd.f32 %v2556, %v2557
      %v2559 = vrot.slane %v2558, 1
      %v2560 = vadd.f32 %v2558, %v2559
      %v2561 = vrot.slane %v2523, 4
      %v2562 = vadd.f32 %v2523, %v2561
      %v2563 = vrot.slane %v2562, 2
      %v2564 = vadd.f32 %v2562, %v2563
      %v2565 = vrot.slane %v2564, 1
      %v2566 = vadd.f32 %v2564, %v2565
      %v2567 = vrot.slane %v2524, 4
      %v2568 = vadd.f32 %v2524, %v2567
      %v2569 = vrot.slane %v2568, 2
      %v2570 = vadd.f32 %v2568, %v2569
      %v2571 = vrot.slane %v2570, 1
      %v2572 = vadd.f32 %v2570, %v2571
      %s2573 = scalar_lea.vmem %s4, 48
      %v2574 = vld [vmem:[%s2573] sm:$0xff]
      %v2583 = vsel %vm971, %v2536, %v2530
      %v2584 = vsel %vm973, %v2542, %v2583
      %v2585 = vsel %vm975, %v2548, %v2584
      %v2586 = vsel %vm977, %v2554, %v2585
      %v2587 = vsel %vm979, %v2560, %v2586
      %v2588 = vsel %vm981, %v2566, %v2587
      %v2589 = vsel %vm983, %v2572, %v2588
      %v2592 = vsel %vm557, %v2574, 0
      %2594 = vmatprep.subr.mxu0 0.0
      %2595 = vmatpush1.msra.mxu0 0.0
      %2596 = vmatprep.subr.mxu0 0.0
      %2597 = vmatpush1.msra.mxu0 0.0
      %2598 = vmatprep.subr.mxu0 0.0
      %2599 = vmatpush1.msra.mxu0 0.0
      %2600 = vmatprep.subr.mxu0 0.0
      %2601 = vmatpush1.msra.mxu0 0.0
      %2602 = vmatprep.subr.mxu0 0.0
      %2603 = vmatpush1.msra.mxu0 0.0
      %2604 = vmatprep.subr.mxu0 0.0
      %2605 = vmatpush1.msra.mxu0 0.0
      %2606 = vmatprep.subr.mxu0 0.0
      %2607 = vmatpush1.msra.mxu0 0.0
      %2608 = vmatprep.subr.mxu0 0.0
      %2609 = vmatpush1.msra.mxu0 0.0
      %2610 = vmatprep.subr.mxu0 0.0
      %2611 = vmatpush1.msra.mxu0 0.0
      %2612 = vmatprep.subr.mxu0 0.0
      %2613 = vmatpush1.msra.mxu0 0.0
      %2614 = vmatprep.subr.mxu0 0.0
      %2615 = vmatpush1.msra.mxu0 0.0
      %2616 = vmatprep.subr.mxu0 0.0
      %2617 = vmatpush1.msra.mxu0 0.0
      %2618 = vmatprep.subr.mxu0 0.0
      %2619 = vmatpush1.msra.mxu0 0.0
      %2620 = vmatprep.subr.mxu0 0.0
      %2621 = vmatpush1.msra.mxu0 0.0
      %2622 = vmatprep.subr.mxu0 0.0
      %2623 = vmatpush1.msra.mxu0 0.0
      %2624 = vmatprep.subr.mxu0 0.0
      %2625 = vmatpush1.msra.mxu0 %v2589
      %2626 = vmatprep.subr.mxu0 0.0
      %2627 = vmatpush2.msra.mxu0 0.0
      %2628 = vmatprep.subr.mxu0 0.0
      %2629 = vmatpush2.msra.mxu0 0.0
      %2630 = vmatprep.subr.mxu0 0.0
      %2631 = vmatpush2.msra.mxu0 0.0
      %2632 = vmatprep.subr.mxu0 0.0
      %2633 = vmatpush2.msra.mxu0 0.0
      %2634 = vmatprep.subr.mxu0 0.0
      %2635 = vmatpush2.msra.mxu0 0.0
      %2636 = vmatprep.subr.mxu0 0.0
      %2637 = vmatpush2.msra.mxu0 0.0
      %2638 = vmatprep.subr.mxu0 0.0
      %2639 = vmatpush2.msra.mxu0 0.0
      %2640 = vmatprep.subr.mxu0 0.0
      %2641 = vmatpush2.msra.mxu0 0.0
      %2642 = vmatprep.subr.mxu0 0.0
      %2643 = vmatpush2.msra.mxu0 0.0
      %2644 = vmatprep.subr.mxu0 0.0
      %2645 = vmatpush2.msra.mxu0 0.0
      %2646 = vmatprep.subr.mxu0 0.0
      %2647 = vmatpush2.msra.mxu0 0.0
      %2648 = vmatprep.subr.mxu0 0.0
      %2649 = vmatpush2.msra.mxu0 0.0
      %2650 = vmatprep.subr.mxu0 0.0
      %2651 = vmatpush2.msra.mxu0 0.0
      %2652 = vmatprep.subr.mxu0 0.0
      %2653 = vmatpush2.msra.mxu0 0.0
      %2654 = vmatprep.subr.mxu0 0.0
      %2655 = vmatpush2.msra.mxu0 0.0
      %2656 = vmatprep.subr.mxu0 0.0
      %2657 = vmatpush2.msra.mxu0 0.0
      %2658 = vmatprep.mubr.f32.mxu0 0.0
      %2659 = vmatmul.mubr.f32.gmra.mxu0 %v2592
      %v2660 = vpop.f32.mrf.mxu0
      %v2661 = vadd.f32 0.0, %v2660
      %v2662 = vpop.f32.mrf.mxu0
      %2663 = vdwg.mxu0
      %v2664 = vadd.f32 %v2355, %v2661
      %v2665 = vadd.f32 %v744, %v473
      %v2666 = vfloor.f32 %v2665
      %v2667 = vmax.f32 %v2666, 0.0
      %v2668 = vmin.f32 %v2667, 7.0
      %v2669 = vadd.f32 %v2666, 1.0
      %v2670 = vmax.f32 %v2669, 0.0
      %v2671 = vmin.f32 %v2670, 7.0
      %v2672 = vmax.f32 %v2665, 0.0
      %v2673 = vmin.f32 %v2672, 7.0
      %v2674 = vsub.f32 %v2668, %v2673
      %v2675 = vadd.f32 %v2674, 1.0
      %v2676 = vsub.f32 %v2671, %v2673
      %v2677 = vsub.f32 1.0, %v2676
      %v2678 = vlaneseq
      %v2679 = vshrl.u32 %v2678, 7
      %v2680 = vsub.s32 7, %v2679
      %v2681 = vrot.slane %v2360, %v2680
      %vm2682 = vcmp.eq.f32.partialorder %v486, %v2681
      %v2683 = vlaneseq
      %v2684 = vshrl.u32 %v2683, 7
      %v2685 = vsub.s32 7, %v2684
      %v2686 = vrot.slane %v2367, %v2685
      %v2687 = vsel %vm2682, %v2686, 0.0
      %v2688 = vlaneseq
      %v2689 = vshrl.u32 %v2688, 7
      %v2690 = vsub.s32 7, %v2689
      %v2691 = vrot.slane %v2363, %v2690
      %vm2692 = vcmp.eq.f32.partialorder %v486, %v2691
      %v2693 = vlaneseq
      %v2694 = vshrl.u32 %v2693, 7
      %v2695 = vsub.s32 7, %v2694
      %v2696 = vrot.slane %v2369, %v2695
      %v2697 = vsel %vm2692, %v2696, 0.0
      %v2698 = vadd.f32 %v2687, %v2697
      %v2699 = vlaneseq
      %v2700 = vshrl.u32 %v2699, 7
      %v2701 = vsub.s32 0, %v2700
      %v2702 = vrot.slane %v2668, %v2701
      %vm2703 = vcmp.eq.f32.partialorder %v486, %v2702
      %v2704 = vlaneseq
      %v2705 = vshrl.u32 %v2704, 7
      %v2706 = vsub.s32 0, %v2705
      %v2707 = vrot.slane %v2675, %v2706
      %v2708 = vsel %vm2703, %v2707, 0.0
      %v2709 = vlaneseq
      %v2710 = vshrl.u32 %v2709, 7
      %v2711 = vsub.s32 0, %v2710
      %v2712 = vrot.slane %v2671, %v2711
      %vm2713 = vcmp.eq.f32.partialorder %v486, %v2712
      %v2714 = vlaneseq
      %v2715 = vshrl.u32 %v2714, 7
      %v2716 = vsub.s32 0, %v2715
      %v2717 = vrot.slane %v2677, %v2716
      %v2718 = vsel %vm2713, %v2717, 0.0
      %v2719 = vadd.f32 %v2708, %v2718
      %2720 = vmatprep.subr.mxu0 0.0
      %2721 = vmatpush1.msra.mxu0 0.0
      %2722 = vmatprep.subr.mxu0 0.0
      %2723 = vmatpush1.msra.mxu0 0.0
      %2724 = vmatprep.subr.mxu0 0.0
      %2725 = vmatpush1.msra.mxu0 0.0
      %2726 = vmatprep.subr.mxu0 0.0
      %2727 = vmatpush1.msra.mxu0 0.0
      %2728 = vmatprep.subr.mxu0 0.0
      %2729 = vmatpush1.msra.mxu0 0.0
      %2730 = vmatprep.subr.mxu0 0.0
      %2731 = vmatpush1.msra.mxu0 0.0
      %2732 = vmatprep.subr.mxu0 0.0
      %2733 = vmatpush1.msra.mxu0 0.0
      %2734 = vmatprep.subr.mxu0 0.0
      %2735 = vmatpush1.msra.mxu0 0.0
      %2736 = vmatprep.subr.mxu0 0.0
      %2737 = vmatpush1.msra.mxu0 0.0
      %2738 = vmatprep.subr.mxu0 0.0
      %2739 = vmatpush1.msra.mxu0 0.0
      %2740 = vmatprep.subr.mxu0 0.0
      %2741 = vmatpush1.msra.mxu0 0.0
      %2742 = vmatprep.subr.mxu0 0.0
      %2743 = vmatpush1.msra.mxu0 0.0
      %2744 = vmatprep.subr.mxu0 0.0
      %2745 = vmatpush1.msra.mxu0 0.0
      %2746 = vmatprep.subr.mxu0 0.0
      %2747 = vmatpush1.msra.mxu0 0.0
      %2748 = vmatprep.subr.mxu0 0.0
      %2749 = vmatpush1.msra.mxu0 0.0
      %2750 = vmatprep.subr.mxu0 0.0
      %2751 = vmatpush1.msra.mxu0 %v2719
      %2752 = vmatprep.subr.mxu0 0.0
      %2753 = vmatpush2.msra.mxu0 0.0
      %2754 = vmatprep.subr.mxu0 0.0
      %2755 = vmatpush2.msra.mxu0 0.0
      %2756 = vmatprep.subr.mxu0 0.0
      %2757 = vmatpush2.msra.mxu0 0.0
      %2758 = vmatprep.subr.mxu0 0.0
      %2759 = vmatpush2.msra.mxu0 0.0
      %2760 = vmatprep.subr.mxu0 0.0
      %2761 = vmatpush2.msra.mxu0 0.0
      %2762 = vmatprep.subr.mxu0 0.0
      %2763 = vmatpush2.msra.mxu0 0.0
      %2764 = vmatprep.subr.mxu0 0.0
      %2765 = vmatpush2.msra.mxu0 0.0
      %2766 = vmatprep.subr.mxu0 0.0
      %2767 = vmatpush2.msra.mxu0 0.0
      %2768 = vmatprep.subr.mxu0 0.0
      %2769 = vmatpush2.msra.mxu0 0.0
      %2770 = vmatprep.subr.mxu0 0.0
      %2771 = vmatpush2.msra.mxu0 0.0
      %2772 = vmatprep.subr.mxu0 0.0
      %2773 = vmatpush2.msra.mxu0 0.0
      %2774 = vmatprep.subr.mxu0 0.0
      %2775 = vmatpush2.msra.mxu0 0.0
      %2776 = vmatprep.subr.mxu0 0.0
      %2777 = vmatpush2.msra.mxu0 0.0
      %2778 = vmatprep.subr.mxu0 0.0
      %2779 = vmatpush2.msra.mxu0 0.0
      %2780 = vmatprep.subr.mxu0 0.0
      %2781 = vmatpush2.msra.mxu0 0.0
      %2782 = vmatprep.subr.mxu0 0.0
      %2783 = vmatpush2.msra.mxu0 0.0
      %2784 = vmatprep.mubr.f32.mxu0 0.0
      %2785 = vmatmul.mubr.f32.gmra.mxu0 %v559
      %v2786 = vpop.f32.mrf.mxu0
      %v2787 = vadd.f32 0.0, %v2786
      %v2788 = vpop.f32.mrf.mxu0
      %2789 = vmatprep.mubr.f32.mxu0 0.0
      %2790 = vmatmul.mubr.f32.gmra.mxu0 %v562
      %v2791 = vpop.f32.mrf.mxu0
      %v2792 = vadd.f32 0.0, %v2791
      %v2793 = vpop.f32.mrf.mxu0
      %2794 = vmatprep.mubr.f32.mxu0 0.0
      %2795 = vmatmul.mubr.f32.gmra.mxu0 %v565
      %v2796 = vpop.f32.mrf.mxu0
      %v2797 = vadd.f32 0.0, %v2796
      %v2798 = vpop.f32.mrf.mxu0
      %2799 = vmatprep.mubr.f32.mxu0 0.0
      %2800 = vmatmul.mubr.f32.gmra.mxu0 %v568
      %v2801 = vpop.f32.mrf.mxu0
      %v2802 = vadd.f32 0.0, %v2801
      %v2803 = vpop.f32.mrf.mxu0
      %2804 = vmatprep.mubr.f32.mxu0 0.0
      %2805 = vmatmul.mubr.f32.gmra.mxu0 %v571
      %v2806 = vpop.f32.mrf.mxu0
      %v2807 = vadd.f32 0.0, %v2806
      %v2808 = vpop.f32.mrf.mxu0
      %2809 = vmatprep.mubr.f32.mxu0 0.0
      %2810 = vmatmul.mubr.f32.gmra.mxu0 %v574
      %v2811 = vpop.f32.mrf.mxu0
      %v2812 = vadd.f32 0.0, %v2811
      %v2813 = vpop.f32.mrf.mxu0
      %2814 = vmatprep.mubr.f32.mxu0 0.0
      %2815 = vmatmul.mubr.f32.gmra.mxu0 %v577
      %v2816 = vpop.f32.mrf.mxu0
      %v2817 = vadd.f32 0.0, %v2816
      %v2818 = vpop.f32.mrf.mxu0
      %2819 = vmatprep.mubr.f32.mxu0 0.0
      %2820 = vmatmul.mubr.f32.gmra.mxu0 %v580
      %v2821 = vpop.f32.mrf.mxu0
      %v2822 = vadd.f32 0.0, %v2821
      %v2823 = vpop.f32.mrf.mxu0
      %2824 = vdwg.mxu0
      %v2825 = vmul.f32 %v2787, %v2698
      %v2826 = vmul.f32 %v2792, %v2698
      %v2827 = vmul.f32 %v2797, %v2698
      %v2828 = vmul.f32 %v2802, %v2698
      %v2829 = vmul.f32 %v2807, %v2698
      %v2830 = vmul.f32 %v2812, %v2698
      %v2831 = vmul.f32 %v2817, %v2698
      %v2832 = vmul.f32 %v2822, %v2698
      %v2833 = vrot.slane %v2825, 4
      %v2834 = vadd.f32 %v2825, %v2833
      %v2835 = vrot.slane %v2834, 2
      %v2836 = vadd.f32 %v2834, %v2835
      %v2837 = vrot.slane %v2836, 1
      %v2838 = vadd.f32 %v2836, %v2837
      %v2839 = vrot.slane %v2826, 4
      %v2840 = vadd.f32 %v2826, %v2839
      %v2841 = vrot.slane %v2840, 2
      %v2842 = vadd.f32 %v2840, %v2841
      %v2843 = vrot.slane %v2842, 1
      %v2844 = vadd.f32 %v2842, %v2843
      %v2845 = vrot.slane %v2827, 4
      %v2846 = vadd.f32 %v2827, %v2845
      %v2847 = vrot.slane %v2846, 2
      %v2848 = vadd.f32 %v2846, %v2847
      %v2849 = vrot.slane %v2848, 1
      %v2850 = vadd.f32 %v2848, %v2849
      %v2851 = vrot.slane %v2828, 4
      %v2852 = vadd.f32 %v2828, %v2851
      %v2853 = vrot.slane %v2852, 2
      %v2854 = vadd.f32 %v2852, %v2853
      %v2855 = vrot.slane %v2854, 1
      %v2856 = vadd.f32 %v2854, %v2855
      %v2857 = vrot.slane %v2829, 4
      %v2858 = vadd.f32 %v2829, %v2857
      %v2859 = vrot.slane %v2858, 2
      %v2860 = vadd.f32 %v2858, %v2859
      %v2861 = vrot.slane %v2860, 1
      %v2862 = vadd.f32 %v2860, %v2861
      %v2863 = vrot.slane %v2830, 4
      %v2864 = vadd.f32 %v2830, %v2863
      %v2865 = vrot.slane %v2864, 2
      %v2866 = vadd.f32 %v2864, %v2865
      %v2867 = vrot.slane %v2866, 1
      %v2868 = vadd.f32 %v2866, %v2867
      %v2869 = vrot.slane %v2831, 4
      %v2870 = vadd.f32 %v2831, %v2869
      %v2871 = vrot.slane %v2870, 2
      %v2872 = vadd.f32 %v2870, %v2871
      %v2873 = vrot.slane %v2872, 1
      %v2874 = vadd.f32 %v2872, %v2873
      %v2875 = vrot.slane %v2832, 4
      %v2876 = vadd.f32 %v2832, %v2875
      %v2877 = vrot.slane %v2876, 2
      %v2878 = vadd.f32 %v2876, %v2877
      %v2879 = vrot.slane %v2878, 1
      %v2880 = vadd.f32 %v2878, %v2879
      %s2881 = scalar_lea.vmem %s4, 56
      %v2882 = vld [vmem:[%s2881] sm:$0xff]
      %v2891 = vsel %vm971, %v2844, %v2838
      %v2892 = vsel %vm973, %v2850, %v2891
      %v2893 = vsel %vm975, %v2856, %v2892
      %v2894 = vsel %vm977, %v2862, %v2893
      %v2895 = vsel %vm979, %v2868, %v2894
      %v2896 = vsel %vm981, %v2874, %v2895
      %v2897 = vsel %vm983, %v2880, %v2896
      %v2900 = vsel %vm557, %v2882, 0
      %2902 = vmatprep.subr.mxu0 0.0
      %2903 = vmatpush1.msra.mxu0 0.0
      %2904 = vmatprep.subr.mxu0 0.0
      %2905 = vmatpush1.msra.mxu0 0.0
      %2906 = vmatprep.subr.mxu0 0.0
      %2907 = vmatpush1.msra.mxu0 0.0
      %2908 = vmatprep.subr.mxu0 0.0
      %2909 = vmatpush1.msra.mxu0 0.0
      %2910 = vmatprep.subr.mxu0 0.0
      %2911 = vmatpush1.msra.mxu0 0.0
      %2912 = vmatprep.subr.mxu0 0.0
      %2913 = vmatpush1.msra.mxu0 0.0
      %2914 = vmatprep.subr.mxu0 0.0
      %2915 = vmatpush1.msra.mxu0 0.0
      %2916 = vmatprep.subr.mxu0 0.0
      %2917 = vmatpush1.msra.mxu0 0.0
      %2918 = vmatprep.subr.mxu0 0.0
      %2919 = vmatpush1.msra.mxu0 0.0
      %2920 = vmatprep.subr.mxu0 0.0
      %2921 = vmatpush1.msra.mxu0 0.0
      %2922 = vmatprep.subr.mxu0 0.0
      %2923 = vmatpush1.msra.mxu0 0.0
      %2924 = vmatprep.subr.mxu0 0.0
      %2925 = vmatpush1.msra.mxu0 0.0
      %2926 = vmatprep.subr.mxu0 0.0
      %2927 = vmatpush1.msra.mxu0 0.0
      %2928 = vmatprep.subr.mxu0 0.0
      %2929 = vmatpush1.msra.mxu0 0.0
      %2930 = vmatprep.subr.mxu0 0.0
      %2931 = vmatpush1.msra.mxu0 0.0
      %2932 = vmatprep.subr.mxu0 0.0
      %2933 = vmatpush1.msra.mxu0 %v2897
      %2934 = vmatprep.subr.mxu0 0.0
      %2935 = vmatpush2.msra.mxu0 0.0
      %2936 = vmatprep.subr.mxu0 0.0
      %2937 = vmatpush2.msra.mxu0 0.0
      %2938 = vmatprep.subr.mxu0 0.0
      %2939 = vmatpush2.msra.mxu0 0.0
      %2940 = vmatprep.subr.mxu0 0.0
      %2941 = vmatpush2.msra.mxu0 0.0
      %2942 = vmatprep.subr.mxu0 0.0
      %2943 = vmatpush2.msra.mxu0 0.0
      %2944 = vmatprep.subr.mxu0 0.0
      %2945 = vmatpush2.msra.mxu0 0.0
      %2946 = vmatprep.subr.mxu0 0.0
      %2947 = vmatpush2.msra.mxu0 0.0
      %2948 = vmatprep.subr.mxu0 0.0
      %2949 = vmatpush2.msra.mxu0 0.0
      %2950 = vmatprep.subr.mxu0 0.0
      %2951 = vmatpush2.msra.mxu0 0.0
      %2952 = vmatprep.subr.mxu0 0.0
      %2953 = vmatpush2.msra.mxu0 0.0
      %2954 = vmatprep.subr.mxu0 0.0
      %2955 = vmatpush2.msra.mxu0 0.0
      %2956 = vmatprep.subr.mxu0 0.0
      %2957 = vmatpush2.msra.mxu0 0.0
      %2958 = vmatprep.subr.mxu0 0.0
      %2959 = vmatpush2.msra.mxu0 0.0
      %2960 = vmatprep.subr.mxu0 0.0
      %2961 = vmatpush2.msra.mxu0 0.0
      %2962 = vmatprep.subr.mxu0 0.0
      %2963 = vmatpush2.msra.mxu0 0.0
      %2964 = vmatprep.subr.mxu0 0.0
      %2965 = vmatpush2.msra.mxu0 0.0
      %2966 = vmatprep.mubr.f32.mxu0 0.0
      %2967 = vmatmul.mubr.f32.gmra.mxu0 %v2900
      %v2968 = vpop.f32.mrf.mxu0
      %v2969 = vadd.f32 0.0, %v2968
      %v2970 = vpop.f32.mrf.mxu0
      %2971 = vdwg.mxu0
      %v2972 = vadd.f32 %v2664, %v2969
      %v2973 = vadd.f32 %v2356, %v468
      %v2974 = vadd.f32 %v1148, %v473
      %v2975 = vfloor.f32 %v2973
      %v2976 = vfloor.f32 %v2974
      %v2977 = vmax.f32 %v2975, 0.0
      %v2978 = vmin.f32 %v2977, 7.0
      %v2979 = vadd.f32 %v2975, 1.0
      %v2980 = vmax.f32 %v2979, 0.0
      %v2981 = vmin.f32 %v2980, 7.0
      %v2982 = vmax.f32 %v2976, 0.0
      %v2983 = vmin.f32 %v2982, 7.0
      %v2984 = vadd.f32 %v2976, 1.0
      %v2985 = vmax.f32 %v2984, 0.0
      %v2986 = vmin.f32 %v2985, 7.0
      %v2987 = vmax.f32 %v2973, 0.0
      %v2988 = vmin.f32 %v2987, 7.0
      %v2989 = vmax.f32 %v2974, 0.0
      %v2990 = vmin.f32 %v2989, 7.0
      %v2991 = vsub.f32 %v2978, %v2988
      %v2992 = vadd.f32 %v2991, 1.0
      %v2993 = vsub.f32 %v2981, %v2988
      %v2994 = vsub.f32 1.0, %v2993
      %v2995 = vsub.f32 %v2983, %v2990
      %v2996 = vadd.f32 %v2995, 1.0
      %v2997 = vsub.f32 %v2986, %v2990
      %v2998 = vsub.f32 1.0, %v2997
      %v2999 = vlaneseq
      %v3000 = vshrl.u32 %v2999, 7
      %v3001 = vsub.s32 0, %v3000
      %v3002 = vrot.slane %v2978, %v3001
      %vm3003 = vcmp.eq.f32.partialorder %v486, %v3002
      %v3004 = vlaneseq
      %v3005 = vshrl.u32 %v3004, 7
      %v3006 = vsub.s32 0, %v3005
      %v3007 = vrot.slane %v2992, %v3006
      %v3008 = vsel %vm3003, %v3007, 0.0
      %v3009 = vlaneseq
      %v3010 = vshrl.u32 %v3009, 7
      %v3011 = vsub.s32 0, %v3010
      %v3012 = vrot.slane %v2981, %v3011
      %vm3013 = vcmp.eq.f32.partialorder %v486, %v3012
      %v3014 = vlaneseq
      %v3015 = vshrl.u32 %v3014, 7
      %v3016 = vsub.s32 0, %v3015
      %v3017 = vrot.slane %v2994, %v3016
      %v3018 = vsel %vm3013, %v3017, 0.0
      %v3019 = vadd.f32 %v3008, %v3018
      %v3020 = vlaneseq
      %v3021 = vshrl.u32 %v3020, 7
      %v3022 = vsub.s32 1, %v3021
      %v3023 = vrot.slane %v2983, %v3022
      %vm3024 = vcmp.eq.f32.partialorder %v486, %v3023
      %v3025 = vlaneseq
      %v3026 = vshrl.u32 %v3025, 7
      %v3027 = vsub.s32 1, %v3026
      %v3028 = vrot.slane %v2996, %v3027
      %v3029 = vsel %vm3024, %v3028, 0.0
      %v3030 = vlaneseq
      %v3031 = vshrl.u32 %v3030, 7
      %v3032 = vsub.s32 1, %v3031
      %v3033 = vrot.slane %v2986, %v3032
      %vm3034 = vcmp.eq.f32.partialorder %v486, %v3033
      %v3035 = vlaneseq
      %v3036 = vshrl.u32 %v3035, 7
      %v3037 = vsub.s32 1, %v3036
      %v3038 = vrot.slane %v2998, %v3037
      %v3039 = vsel %vm3034, %v3038, 0.0
      %v3040 = vadd.f32 %v3029, %v3039
      %3041 = vmatprep.subr.mxu0 0.0
      %3042 = vmatpush1.msra.mxu0 0.0
      %3043 = vmatprep.subr.mxu0 0.0
      %3044 = vmatpush1.msra.mxu0 0.0
      %3045 = vmatprep.subr.mxu0 0.0
      %3046 = vmatpush1.msra.mxu0 0.0
      %3047 = vmatprep.subr.mxu0 0.0
      %3048 = vmatpush1.msra.mxu0 0.0
      %3049 = vmatprep.subr.mxu0 0.0
      %3050 = vmatpush1.msra.mxu0 0.0
      %3051 = vmatprep.subr.mxu0 0.0
      %3052 = vmatpush1.msra.mxu0 0.0
      %3053 = vmatprep.subr.mxu0 0.0
      %3054 = vmatpush1.msra.mxu0 0.0
      %3055 = vmatprep.subr.mxu0 0.0
      %3056 = vmatpush1.msra.mxu0 0.0
      %3057 = vmatprep.subr.mxu0 0.0
      %3058 = vmatpush1.msra.mxu0 0.0
      %3059 = vmatprep.subr.mxu0 0.0
      %3060 = vmatpush1.msra.mxu0 0.0
      %3061 = vmatprep.subr.mxu0 0.0
      %3062 = vmatpush1.msra.mxu0 0.0
      %3063 = vmatprep.subr.mxu0 0.0
      %3064 = vmatpush1.msra.mxu0 0.0
      %3065 = vmatprep.subr.mxu0 0.0
      %3066 = vmatpush1.msra.mxu0 0.0
      %3067 = vmatprep.subr.mxu0 0.0
      %3068 = vmatpush1.msra.mxu0 0.0
      %3069 = vmatprep.subr.mxu0 0.0
      %3070 = vmatpush1.msra.mxu0 0.0
      %3071 = vmatprep.subr.mxu0 0.0
      %3072 = vmatpush1.msra.mxu0 %v3040
      %3073 = vmatprep.subr.mxu0 0.0
      %3074 = vmatpush2.msra.mxu0 0.0
      %3075 = vmatprep.subr.mxu0 0.0
      %3076 = vmatpush2.msra.mxu0 0.0
      %3077 = vmatprep.subr.mxu0 0.0
      %3078 = vmatpush2.msra.mxu0 0.0
      %3079 = vmatprep.subr.mxu0 0.0
      %3080 = vmatpush2.msra.mxu0 0.0
      %3081 = vmatprep.subr.mxu0 0.0
      %3082 = vmatpush2.msra.mxu0 0.0
      %3083 = vmatprep.subr.mxu0 0.0
      %3084 = vmatpush2.msra.mxu0 0.0
      %3085 = vmatprep.subr.mxu0 0.0
      %3086 = vmatpush2.msra.mxu0 0.0
      %3087 = vmatprep.subr.mxu0 0.0
      %3088 = vmatpush2.msra.mxu0 0.0
      %3089 = vmatprep.subr.mxu0 0.0
      %3090 = vmatpush2.msra.mxu0 0.0
      %3091 = vmatprep.subr.mxu0 0.0
      %3092 = vmatpush2.msra.mxu0 0.0
      %3093 = vmatprep.subr.mxu0 0.0
      %3094 = vmatpush2.msra.mxu0 0.0
      %3095 = vmatprep.subr.mxu0 0.0
      %3096 = vmatpush2.msra.mxu0 0.0
      %3097 = vmatprep.subr.mxu0 0.0
      %3098 = vmatpush2.msra.mxu0 0.0
      %3099 = vmatprep.subr.mxu0 0.0
      %3100 = vmatpush2.msra.mxu0 0.0
      %3101 = vmatprep.subr.mxu0 0.0
      %3102 = vmatpush2.msra.mxu0 0.0
      %3103 = vmatprep.subr.mxu0 0.0
      %3104 = vmatpush2.msra.mxu0 0.0
      %3105 = vmatprep.mubr.f32.mxu0 0.0
      %3106 = vmatmul.mubr.f32.gmra.mxu0 %v559
      %v3107 = vpop.f32.mrf.mxu0
      %v3108 = vadd.f32 0.0, %v3107
      %v3109 = vpop.f32.mrf.mxu0
      %3110 = vmatprep.mubr.f32.mxu0 0.0
      %3111 = vmatmul.mubr.f32.gmra.mxu0 %v562
      %v3112 = vpop.f32.mrf.mxu0
      %v3113 = vadd.f32 0.0, %v3112
      %v3114 = vpop.f32.mrf.mxu0
      %3115 = vmatprep.mubr.f32.mxu0 0.0
      %3116 = vmatmul.mubr.f32.gmra.mxu0 %v565
      %v3117 = vpop.f32.mrf.mxu0
      %v3118 = vadd.f32 0.0, %v3117
      %v3119 = vpop.f32.mrf.mxu0
      %3120 = vmatprep.mubr.f32.mxu0 0.0
      %3121 = vmatmul.mubr.f32.gmra.mxu0 %v568
      %v3122 = vpop.f32.mrf.mxu0
      %v3123 = vadd.f32 0.0, %v3122
      %v3124 = vpop.f32.mrf.mxu0
      %3125 = vmatprep.mubr.f32.mxu0 0.0
      %3126 = vmatmul.mubr.f32.gmra.mxu0 %v571
      %v3127 = vpop.f32.mrf.mxu0
      %v3128 = vadd.f32 0.0, %v3127
      %v3129 = vpop.f32.mrf.mxu0
      %3130 = vmatprep.mubr.f32.mxu0 0.0
      %3131 = vmatmul.mubr.f32.gmra.mxu0 %v574
      %v3132 = vpop.f32.mrf.mxu0
      %v3133 = vadd.f32 0.0, %v3132
      %v3134 = vpop.f32.mrf.mxu0
      %3135 = vmatprep.mubr.f32.mxu0 0.0
      %3136 = vmatmul.mubr.f32.gmra.mxu0 %v577
      %v3137 = vpop.f32.mrf.mxu0
      %v3138 = vadd.f32 0.0, %v3137
      %v3139 = vpop.f32.mrf.mxu0
      %3140 = vmatprep.mubr.f32.mxu0 0.0
      %3141 = vmatmul.mubr.f32.gmra.mxu0 %v580
      %v3142 = vpop.f32.mrf.mxu0
      %v3143 = vadd.f32 0.0, %v3142
      %v3144 = vpop.f32.mrf.mxu0
      %3145 = vdwg.mxu0
      %v3146 = vmul.f32 %v3108, %v3019
      %v3147 = vmul.f32 %v3113, %v3019
      %v3148 = vmul.f32 %v3118, %v3019
      %v3149 = vmul.f32 %v3123, %v3019
      %v3150 = vmul.f32 %v3128, %v3019
      %v3151 = vmul.f32 %v3133, %v3019
      %v3152 = vmul.f32 %v3138, %v3019
      %v3153 = vmul.f32 %v3143, %v3019
      %v3154 = vrot.slane %v3146, 4
      %v3155 = vadd.f32 %v3146, %v3154
      %v3156 = vrot.slane %v3155, 2
      %v3157 = vadd.f32 %v3155, %v3156
      %v3158 = vrot.slane %v3157, 1
      %v3159 = vadd.f32 %v3157, %v3158
      %v3160 = vrot.slane %v3147, 4
      %v3161 = vadd.f32 %v3147, %v3160
      %v3162 = vrot.slane %v3161, 2
      %v3163 = vadd.f32 %v3161, %v3162
      %v3164 = vrot.slane %v3163, 1
      %v3165 = vadd.f32 %v3163, %v3164
      %v3166 = vrot.slane %v3148, 4
      %v3167 = vadd.f32 %v3148, %v3166
      %v3168 = vrot.slane %v3167, 2
      %v3169 = vadd.f32 %v3167, %v3168
      %v3170 = vrot.slane %v3169, 1
      %v3171 = vadd.f32 %v3169, %v3170
      %v3172 = vrot.slane %v3149, 4
      %v3173 = vadd.f32 %v3149, %v3172
      %v3174 = vrot.slane %v3173, 2
      %v3175 = vadd.f32 %v3173, %v3174
      %v3176 = vrot.slane %v3175, 1
      %v3177 = vadd.f32 %v3175, %v3176
      %v3178 = vrot.slane %v3150, 4
      %v3179 = vadd.f32 %v3150, %v3178
      %v3180 = vrot.slane %v3179, 2
      %v3181 = vadd.f32 %v3179, %v3180
      %v3182 = vrot.slane %v3181, 1
      %v3183 = vadd.f32 %v3181, %v3182
      %v3184 = vrot.slane %v3151, 4
      %v3185 = vadd.f32 %v3151, %v3184
      %v3186 = vrot.slane %v3185, 2
      %v3187 = vadd.f32 %v3185, %v3186
      %v3188 = vrot.slane %v3187, 1
      %v3189 = vadd.f32 %v3187, %v3188
      %v3190 = vrot.slane %v3152, 4
      %v3191 = vadd.f32 %v3152, %v3190
      %v3192 = vrot.slane %v3191, 2
      %v3193 = vadd.f32 %v3191, %v3192
      %v3194 = vrot.slane %v3193, 1
      %v3195 = vadd.f32 %v3193, %v3194
      %v3196 = vrot.slane %v3153, 4
      %v3197 = vadd.f32 %v3153, %v3196
      %v3198 = vrot.slane %v3197, 2
      %v3199 = vadd.f32 %v3197, %v3198
      %v3200 = vrot.slane %v3199, 1
      %v3201 = vadd.f32 %v3199, %v3200
      %s3202 = scalar_lea.vmem %s4, 64
      %v3203 = vld [vmem:[%s3202] sm:$0xff]
      %v3212 = vsel %vm971, %v3165, %v3159
      %v3213 = vsel %vm973, %v3171, %v3212
      %v3214 = vsel %vm975, %v3177, %v3213
      %v3215 = vsel %vm977, %v3183, %v3214
      %v3216 = vsel %vm979, %v3189, %v3215
      %v3217 = vsel %vm981, %v3195, %v3216
      %v3218 = vsel %vm983, %v3201, %v3217
      %v3221 = vsel %vm557, %v3203, 0
      %3223 = vmatprep.subr.mxu0 0.0
      %3224 = vmatpush1.msra.mxu0 0.0
      %3225 = vmatprep.subr.mxu0 0.0
      %3226 = vmatpush1.msra.mxu0 0.0
      %3227 = vmatprep.subr.mxu0 0.0
      %3228 = vmatpush1.msra.mxu0 0.0
      %3229 = vmatprep.subr.mxu0 0.0
      %3230 = vmatpush1.msra.mxu0 0.0
      %3231 = vmatprep.subr.mxu0 0.0
      %3232 = vmatpush1.msra.mxu0 0.0
      %3233 = vmatprep.subr.mxu0 0.0
      %3234 = vmatpush1.msra.mxu0 0.0
      %3235 = vmatprep.subr.mxu0 0.0
      %3236 = vmatpush1.msra.mxu0 0.0
      %3237 = vmatprep.subr.mxu0 0.0
      %3238 = vmatpush1.msra.mxu0 0.0
      %3239 = vmatprep.subr.mxu0 0.0
      %3240 = vmatpush1.msra.mxu0 0.0
      %3241 = vmatprep.subr.mxu0 0.0
      %3242 = vmatpush1.msra.mxu0 0.0
      %3243 = vmatprep.subr.mxu0 0.0
      %3244 = vmatpush1.msra.mxu0 0.0
      %3245 = vmatprep.subr.mxu0 0.0
      %3246 = vmatpush1.msra.mxu0 0.0
      %3247 = vmatprep.subr.mxu0 0.0
      %3248 = vmatpush1.msra.mxu0 0.0
      %3249 = vmatprep.subr.mxu0 0.0
      %3250 = vmatpush1.msra.mxu0 0.0
      %3251 = vmatprep.subr.mxu0 0.0
      %3252 = vmatpush1.msra.mxu0 0.0
      %3253 = vmatprep.subr.mxu0 0.0
      %3254 = vmatpush1.msra.mxu0 %v3218
      %3255 = vmatprep.subr.mxu0 0.0
      %3256 = vmatpush2.msra.mxu0 0.0
      %3257 = vmatprep.subr.mxu0 0.0
      %3258 = vmatpush2.msra.mxu0 0.0
      %3259 = vmatprep.subr.mxu0 0.0
      %3260 = vmatpush2.msra.mxu0 0.0
      %3261 = vmatprep.subr.mxu0 0.0
      %3262 = vmatpush2.msra.mxu0 0.0
      %3263 = vmatprep.subr.mxu0 0.0
      %3264 = vmatpush2.msra.mxu0 0.0
      %3265 = vmatprep.subr.mxu0 0.0
      %3266 = vmatpush2.msra.mxu0 0.0
      %3267 = vmatprep.subr.mxu0 0.0
      %3268 = vmatpush2.msra.mxu0 0.0
      %3269 = vmatprep.subr.mxu0 0.0
      %3270 = vmatpush2.msra.mxu0 0.0
      %3271 = vmatprep.subr.mxu0 0.0
      %3272 = vmatpush2.msra.mxu0 0.0
      %3273 = vmatprep.subr.mxu0 0.0
      %3274 = vmatpush2.msra.mxu0 0.0
      %3275 = vmatprep.subr.mxu0 0.0
      %3276 = vmatpush2.msra.mxu0 0.0
      %3277 = vmatprep.subr.mxu0 0.0
      %3278 = vmatpush2.msra.mxu0 0.0
      %3279 = vmatprep.subr.mxu0 0.0
      %3280 = vmatpush2.msra.mxu0 0.0
      %3281 = vmatprep.subr.mxu0 0.0
      %3282 = vmatpush2.msra.mxu0 0.0
      %3283 = vmatprep.subr.mxu0 0.0
      %3284 = vmatpush2.msra.mxu0 0.0
      %3285 = vmatprep.subr.mxu0 0.0
      %3286 = vmatpush2.msra.mxu0 0.0
      %3287 = vmatprep.mubr.f32.mxu0 0.0
      %3288 = vmatmul.mubr.f32.gmra.mxu0 %v3221
      %v3289 = vpop.f32.mrf.mxu0
      %v3290 = vadd.f32 0.0, %v3289
      %v3291 = vpop.f32.mrf.mxu0
      %3292 = vdwg.mxu0
      %v3293 = vadd.f32 %v2972, %v3290
      %v3294 = vld [vmem:[%s5] sm:$0xff]
      %3296 = vset.pattern.permute.xlu0 0
      %3297 = vperm.xlu0 %3296, %v3294
      %v3298 = vpop.permute.xlu0 %3297
      %v3300 = vmul.f32 %v3293, %v3298
      %v3301 = vld [vmem:[%s6] sm:$0xff]
      %3303 = vset.pattern.permute.xlu0 0
      %3304 = vperm.xlu0 %3303, %v3301
      %v3305 = vpop.permute.xlu0 %3304
      %v3307 = vadd.f32 %v3300, %v3305
      %v3308 = vmax.f32 %v3307, 0.0
      %3309 = vst [vmem:[%s296] sm:$0xff] %v3308
      %p3310 = scmp.lt.s32.totalorder %s18, 1
      %s3311 = scalar_select %p3310, %s18, 1
      %s3312 = smul.addr %s3311, 8
      %s3313 = scalar_lea.vmem %s7, %s3312
      // Predicated region
      $region49: #{deform_down.3} parent=47 // pred_check
        %p3314 = pneg %p193
      $region50: #{deform_down.3} parent=47 // pred_check_branch
        %3316 = sbr.rel (%p3314) target = $region52
      $region51: #{deform_down.3} parent=47 // pred_region
        _
      $region52: #{deform_down.3} parent=47 // pred_fallthru
        _
    $region48: #{deform_down.3} parent=5 // pred_fallthru
      _
    %p3317 = scmp.le.s32.totalorder 2, %s13
    // Predicated region
    $region53: #{deform_down.3} parent=5 // pred_check
      %p3318 = pneg %p3317
    $region54: #{deform_down.3} parent=5 // pred_check_branch
      %3320 = sbr.rel (%p3318) target = $region56
    $region55: #{deform_down.3} parent=5 // pred_region
      %s3321 = ssub.s32 %s13, 2
      // Predicated region
      $region57: #{deform_down.3} parent=55 // pred_check
        %p3322 = pneg %p199
      $region58: #{deform_down.3} parent=55 // pred_check_branch
        %3324 = sbr.rel (%p3322) target = $region60
      $region59: #{deform_down.3} parent=55 // pred_region
        %p3325 = scmp.lt.s32.totalorder %s19, 1
        %s3326 = scalar_select %p3325, %s19, 1
        %s3327 = smul.addr %s3326, 8
        %s3328 = scalar_lea.vmem %s7, %s3327
      $region60: #{deform_down.3} parent=55 // pred_fallthru
        _
    $region56: #{deform_down.3} parent=5 // pred_fallthru
      _
  $region6: #{deform_down.3} parent=0 // loop_footer
    %s17 = sadd.s32 1, %s13
  $region7: #{deform_down.3} parent=0 // loop_footer_branch
    %12 = sbr.rel target = $region3
  $region8: #{deform_down.3} parent=0 // loop_exit
    _

</llo_original>
